<compile_context>
chip_gen: v7x
topology: tpu7x:2x2x1
jax: 0.10.0
libtpu: 0.0.40
codegen_flags: <defaults>
</compile_context>

<pallas_src>
import numpy as np
import jax
import jax.numpy as jnp
from jax import lax
from jax.experimental import pallas as pl
from jax.experimental.pallas import tpu as pltpu

# ---------------- configuration (small shapes consistent with StarEncoder) ----
N_BANDS = 2                      # n_bands
PTILE_SLEN = 8                   # ptile_slen
MAX_DET = 2                      # max_detections
N_PTILES = 4                     # batch of image ptiles fed to forward()
ENC_CONV_C = 20
ENC_HIDDEN = 256
N_SOURCE_PARAMS = N_BANDS        # n_source_params=None -> n_bands
N_PARAMS_PER_STAR = 4 + 2 * N_SOURCE_PARAMS
DIM_OUT_ALL = int(0.5 * MAX_DET * (MAX_DET + 1) * N_PARAMS_PER_STAR + 1 + MAX_DET)
BN_EPS = 1e-5
# TODO(synk): BatchNorm running-stats buffer updates (momentum=0.5 training
# side effect) are not reproduced; they do not affect forward outputs.

# ---------------- row-planar conv layout constants ----------------------------
H = W = PTILE_SLEN
HP = H + 2                       # padded rows per ptile
WP = W + 2                       # padded column positions per padded row
HBLK = 16                        # slab rows per ptile block (HP rounded to 8k)
GUARD = 8                        # zero guard rows above/below the core
ACT_L = WP * ENC_CONV_C          # 200 activation lanes (= wp*C + c)
SLAB_W = 256                     # activation slab width (20 guard + 200 + pad)
IN_W = 32                        # input slab width (2 guard + 20 + pad)
CONV_OUT_DIM = ENC_CONV_C * H * W


# ---------------- _get_hidden_indices (exact replica, numpy) ------------------
def get_hidden_indices():
    locs_mean = np.full((MAX_DET + 1, 2 * MAX_DET), DIM_OUT_ALL, np.int32)
    locs_var = np.full((MAX_DET + 1, 2 * MAX_DET), DIM_OUT_ALL, np.int32)
    fluxes_mean = np.full((MAX_DET + 1, N_SOURCE_PARAMS * MAX_DET), DIM_OUT_ALL, np.int32)
    fluxes_var = np.full((MAX_DET + 1, N_SOURCE_PARAMS * MAX_DET), DIM_OUT_ALL, np.int32)
    prob_indx = np.zeros((MAX_DET + 1,), np.int32)
    for n in range(1, MAX_DET + 1):
        i0 = int(0.5 * n * (n - 1) * N_PARAMS_PER_STAR) + (n - 1) + 1
        i1 = 2 * n + i0
        i2 = 2 * n * 2 + i0
        locs_mean[n, 0:2 * n] = np.arange(i0, i1)
        locs_var[n, 0:2 * n] = np.arange(i1, i2)
        i3 = i2 + n * N_SOURCE_PARAMS
        i4 = i3 + n * N_SOURCE_PARAMS
        fluxes_mean[n, 0:n * N_SOURCE_PARAMS] = np.arange(i2, i3)
        fluxes_var[n, 0:n * N_SOURCE_PARAMS] = np.arange(i3, i4)
        prob_indx[n] = i4
    idx = dict(locs_mean=locs_mean, locs_var=locs_var,
               fluxes_mean=fluxes_mean, fluxes_var=fluxes_var)
    return idx, prob_indx


# ---------------- fused forward kernel -----------------------------------------
def make_kernel(B):
    """Fused StarEncoder forward for a batch of B image ptiles."""
    nrow = B * HBLK                     # conv core rows (rows = (ptile, padded_h))
    R = nrow + 2 * GUARD                # activation slab rows
    n_valid = float(B * H * W)          # BatchNorm2d population (valid pixels)
    c = ENC_CONV_C

    def conv3x3(slab_val, base, cin, w_ref, blane_ref):
        # 3x3 conv as ONE im2col matmul: 9 statically shifted slab slices
        # concatenated along lanes against a block-diagonal (9*WP*cin, WP*cout)
        # weight.  bf16 operands, f32 accumulation on the MXU.
        shifted = [slab_val[:, base + cin * dw: base + cin * dw + cin * WP]
                   for dw in (-1, 0, 1)]                 # lane-shift CSE (3x not 9x)
        pieces = []
        for dh in (-1, 0, 1):
            for i in range(3):                           # tap order t=(dh+1)*3+(dw+1)
                pieces.append(shifted[i][GUARD + dh: GUARD + dh + nrow, :]
                              .astype(jnp.bfloat16))
        im = jnp.concatenate(pieces, axis=1)             # (nrow, 9*WP*cin) bf16
        y = jnp.dot(im, w_ref[...], preferred_element_type=jnp.float32)
        return y + blane_ref[...]                        # (nrow, WP*C)

    def kernel(x_ref,
               w1_ref, b1_ref,
               w2_ref, b2_ref, g2_ref, be2_ref,
               w3_ref, b3_ref,
               w4_ref, b4_ref, g4_ref, be4_ref,
               fold_ref, bcast_ref,
               fw1_ref, fb1_ref, fg1_ref, fbe1_ref,
               fw2_ref, fb2_ref, fg2_ref, fbe2_ref,
               fw3_ref, fb3_ref, fg3_ref, fbe3_ref,
               ffw_ref, ffb_ref, sel_ref,
               h_ref, lp_ref, slab):
        # ---- static validity masks (valid = interior 8x8 pixels of each ptile)
        ry = lax.broadcasted_iota(jnp.int32, (nrow, 1), 0)
        hp_y = ry % HBLK
        row_ok_y = jnp.logical_and(hp_y >= 1, hp_y <= H)
        ly = lax.broadcasted_iota(jnp.int32, (1, ACT_L), 1)
        lane_ok_y = jnp.logical_and(ly >= c, ly < (W + 1) * c)
        mask_y = jnp.logical_and(row_ok_y, lane_ok_y).astype(jnp.float32)

        rx = lax.broadcasted_iota(jnp.int32, (R, 1), 0)
        hp_x = (rx + (HBLK - GUARD)) % HBLK
        row_ok_x = jnp.logical_and(
            jnp.logical_and(rx >= GUARD, rx < GUARD + nrow),
            jnp.logical_and(hp_x >= 1, hp_x <= H))
        lx = lax.broadcasted_iota(jnp.int32, (1, IN_W), 1)
        lane_ok_x = jnp.logical_and(lx >= 2 * N_BANDS, lx < (W + 2) * N_BANDS)
        valid_x = jnp.logical_and(row_ok_x, lane_ok_x)

        # ---- zero only the guard frame of the activation slab (done once; the
        #      core window is fully overwritten by every per-layer repad) ----
        slab[0:GUARD, :] = jnp.zeros((GUARD, SLAB_W), jnp.float32)
        slab[GUARD + nrow:R, :] = jnp.zeros((GUARD, SLAB_W), jnp.float32)
        slab[GUARD:GUARD + nrow, 0:c] = jnp.zeros((nrow, c), jnp.float32)
        slab[GUARD:GUARD + nrow, c + ACT_L:SLAB_W] = jnp.zeros(
            (nrow, SLAB_W - c - ACT_L), jnp.float32)

        # ---- log(image - image.min() + 1.0); min over valid pixels only ----
        x = x_ref[...]
        xmin = jnp.min(jnp.where(valid_x, x, jnp.inf), keepdims=True)
        logx = jnp.log(jnp.where(valid_x, x - xmin, 0.0) + 1.0)   # pads stay 0

        def repad(y):
            slab[GUARD:GUARD + nrow, c:c + ACT_L] = y

        def bn2d(y, g_ref, be_ref):
            # training-mode BatchNorm2d (biased var); stats over valid (N,H,W)
            # only, all in f32.  Channel fold / broadcast between the 200-lane
            # planar layout and the 20 channels uses tiny one-hot matmuls.
            ym = y * mask_y
            s = jnp.concatenate(
                [jnp.sum(ym, axis=0, keepdims=True),
                 jnp.sum(ym * ym, axis=0, keepdims=True)], axis=0)     # (2, 200)
            ss = jnp.dot(s, fold_ref[...],
                         preferred_element_type=jnp.float32)           # (2, 20)
            mean = ss[0:1, :] * (1.0 / n_valid)
            var = ss[1:2, :] * (1.0 / n_valid) - mean * mean
            a = g_ref[...] * lax.rsqrt(var + BN_EPS)
            bsh = be_ref[...] - mean * a
            ab = jnp.dot(jnp.concatenate([a, bsh], axis=0), bcast_ref[...],
                         preferred_element_type=jnp.float32)            # (2, 200)
            return y * ab[0:1, :] + ab[1:2, :]

        # ---- conv stack: Conv-ReLU, Conv-BN-ReLU, Conv-ReLU, Conv-BN-ReLU ----
        y = conv3x3(logx, N_BANDS, N_BANDS, w1_ref, b1_ref)
        repad(jnp.maximum(y, 0.0) * mask_y)

        y = bn2d(conv3x3(slab[...], c, c, w2_ref, b2_ref), g2_ref, be2_ref)
        repad(jnp.maximum(y, 0.0) * mask_y)

        y = conv3x3(slab[...], c, c, w3_ref, b3_ref)
        repad(jnp.maximum(y, 0.0) * mask_y)

        y = bn2d(conv3x3(slab[...], c, c, w4_ref, b4_ref), g4_ref, be4_ref)
        y4 = jnp.maximum(y, 0.0) * mask_y                # (nrow, 200), no repad

        # ---- flatten to (B, H*W*C) in (h, w, c) order; fw1 rows were permuted
        #      on the host so this exactly matches PyTorch's (C,H,W) Flatten ----
        rows = []
        for b in range(B):
            segs = [y4[b * HBLK + hh: b * HBLK + hh + 1, c:(W + 1) * c]
                    for hh in range(1, H + 1)]
            rows.append(jnp.concatenate(segs, axis=1))            # (1, H*W*C)
        h0 = jnp.concatenate(rows, axis=0).astype(jnp.bfloat16)   # (B, 1280)

        # ---- FC stack: (Linear-BN1d-ReLU) x3 + enc_final + log_softmax ----
        def bn1d(y, g_ref, be_ref):
            mean = jnp.mean(y, axis=0, keepdims=True)
            d = y - mean
            var = jnp.mean(d * d, axis=0, keepdims=True)
            return d * lax.rsqrt(var + BN_EPS) * g_ref[...] + be_ref[...]

        def fc(xb, w_ref, b_ref):
            return jnp.dot(xb, w_ref[...],
                           preferred_element_type=jnp.float32) + b_ref[...]

        hh1 = jnp.maximum(bn1d(fc(h0, fw1_ref, fb1_ref), fg1_ref, fbe1_ref), 0.0)
        hh2 = jnp.maximum(bn1d(fc(hh1.astype(jnp.bfloat16), fw2_ref, fb2_ref),
                               fg2_ref, fbe2_ref), 0.0)
        hh3 = jnp.maximum(bn1d(fc(hh2.astype(jnp.bfloat16), fw3_ref, fb3_ref),
                               fg3_ref, fbe3_ref), 0.0)
        hall = fc(hh3.astype(jnp.bfloat16), ffw_ref, ffb_ref)     # (B, dim_out_all)
        h_ref[...] = hall

        # log_softmax over the free n-star logits (gathered by one-hot matmul)
        fp = jnp.dot(hall, sel_ref[...], preferred_element_type=jnp.float32)
        z = fp - jnp.max(fp, axis=1, keepdims=True)
        lp_ref[...] = z - jnp.log(jnp.sum(jnp.exp(z), axis=1, keepdims=True))

    return kernel, R


# ---------------- parameter init (deterministic, synthetic; module convention) -
def init_params(key):
    # conv weights: (9, cin, cout) with tap t = kh*3+kw (i.e. PyTorch W[co,ci,kh,kw]
    # transposed); linear weights: (in, out) (PyTorch W.T).
    ks = jax.random.split(key, 9)

    def conv_w(k, cin, cout):
        return jax.random.normal(k, (9, cin, cout), jnp.float32) / np.sqrt(9.0 * cin)

    def lin_w(k, cin, cout):
        return jax.random.normal(k, (cin, cout), jnp.float32) / np.sqrt(float(cin))

    ones = lambda n: jnp.ones((1, n), jnp.float32)
    zeros = lambda n: jnp.zeros((1, n), jnp.float32)
    return dict(
        cw1=conv_w(ks[0], N_BANDS, ENC_CONV_C), cb1=zeros(ENC_CONV_C),
        cw2=conv_w(ks[1], ENC_CONV_C, ENC_CONV_C), cb2=zeros(ENC_CONV_C),
        cg2=ones(ENC_CONV_C), cbe2=zeros(ENC_CONV_C),
        cw3=conv_w(ks[2], ENC_CONV_C, ENC_CONV_C), cb3=zeros(ENC_CONV_C),
        cw4=conv_w(ks[3], ENC_CONV_C, ENC_CONV_C), cb4=zeros(ENC_CONV_C),
        cg4=ones(ENC_CONV_C), cbe4=zeros(ENC_CONV_C),
        fw1=lin_w(ks[4], CONV_OUT_DIM, ENC_HIDDEN), fb1=zeros(ENC_HIDDEN),
        fg1=ones(ENC_HIDDEN), fbe1=zeros(ENC_HIDDEN),
        fw2=lin_w(ks[5], ENC_HIDDEN, ENC_HIDDEN), fb2=zeros(ENC_HIDDEN),
        fg2=ones(ENC_HIDDEN), fbe2=zeros(ENC_HIDDEN),
        fw3=lin_w(ks[6], ENC_HIDDEN, ENC_HIDDEN), fb3=zeros(ENC_HIDDEN),
        fg3=ones(ENC_HIDDEN), fbe3=zeros(ENC_HIDDEN),
        ffw=lin_w(ks[7], ENC_HIDDEN, DIM_OUT_ALL),
        ffb=jax.random.normal(ks[8], (1, DIM_OUT_ALL), jnp.float32) * 0.01,
    )


# ---------------- one-time host-side layout plumbing ---------------------------
def prepare_kernel_params(params, prob_indx):
    """Block-diagonal planar conv weights, lane-tiled biases, (C,H,W)->(H,W,C)
    permutation of fw1, bf16 casts, and the BN fold / broadcast / log-softmax
    selection one-hots.  Done once on the host."""
    f32, bf16 = jnp.float32, jnp.bfloat16
    c = ENC_CONV_C

    def conv_planar(w9):
        cin, cout = w9.shape[1], w9.shape[2]
        eye = jnp.eye(WP, dtype=f32)
        big = jnp.einsum("io,tcd->ticod", eye, w9.astype(f32))
        return big.reshape(9 * WP * cin, WP * cout).astype(bf16)

    def lane_bias(b):                                   # (1, cout) -> (1, WP*cout)
        return jnp.tile(b.astype(f32), (1, WP))

    # PyTorch Flatten order is (C, H, W); the kernel emits (H, W, C).
    hh, ww, cc = np.meshgrid(np.arange(H), np.arange(W), np.arange(c), indexing="ij")
    perm = (cc * (H * W) + hh * W + ww).reshape(-1)

    fold = np.kron(np.ones((WP, 1), np.float32), np.eye(c, dtype=np.float32))  # (200,20)
    sel = np.zeros((DIM_OUT_ALL, MAX_DET + 1), np.float32)
    sel[np.asarray(prob_indx), np.arange(MAX_DET + 1)] = 1.0

    return dict(
        w1=conv_planar(params["cw1"]), b1=lane_bias(params["cb1"]),
        w2=conv_planar(params["cw2"]), b2=lane_bias(params["cb2"]),
        g2=params["cg2"].astype(f32), be2=params["cbe2"].astype(f32),
        w3=conv_planar(params["cw3"]), b3=lane_bias(params["cb3"]),
        w4=conv_planar(params["cw4"]), b4=lane_bias(params["cb4"]),
        g4=params["cg4"].astype(f32), be4=params["cbe4"].astype(f32),
        fold=jnp.asarray(fold), bcast=jnp.asarray(fold.T.copy()),
        fw1=params["fw1"][perm, :].astype(bf16), fb1=params["fb1"].astype(f32),
        fg1=params["fg1"].astype(f32), fbe1=params["fbe1"].astype(f32),
        fw2=params["fw2"].astype(bf16), fb2=params["fb2"].astype(f32),
        fg2=params["fg2"].astype(f32), fbe2=params["fbe2"].astype(f32),
        fw3=params["fw3"].astype(bf16), fb3=params["fb3"].astype(f32),
        fg3=params["fg3"].astype(f32), fbe3=params["fbe3"].astype(f32),
        ffw=params["ffw"].astype(bf16), ffb=params["ffb"].astype(f32),
        sel=jnp.asarray(sel),
    )


def to_planar_input(image_ptiles):
    """NCHW ptiles -> row-planar zero-padded slab (R, IN_W), lanes = wp*C + c."""
    B, C, _, _ = image_ptiles.shape
    x = jnp.transpose(image_ptiles, (0, 2, 3, 1))                  # (B, H, W, C)
    x = jnp.pad(x, ((0, 0), (1, 1), (1, 1), (0, 0)))               # (B, HP, WP, C)
    x = x.reshape(B, HP, WP * C)
    x = jnp.pad(x, ((0, 0), (0, HBLK - HP), (C, IN_W - (WP + 1) * C)))
    x = x.reshape(B * HBLK, IN_W)
    return jnp.pad(x, ((GUARD, GUARD), (0, 0)))                    # (R, IN_W)


# ---------------- forward wrapper (== StarEncoder.forward) --------------------
def star_encoder_forward(kparams, image_ptiles, idx_mats):
    B = image_ptiles.shape[0]
    kernel, R = make_kernel(B)
    x_planar = to_planar_input(image_ptiles)

    vmem = pl.BlockSpec(memory_space=pltpu.MemorySpace.VMEM)
    inputs = (x_planar,
              kparams["w1"], kparams["b1"],
              kparams["w2"], kparams["b2"], kparams["g2"], kparams["be2"],
              kparams["w3"], kparams["b3"],
              kparams["w4"], kparams["b4"], kparams["g4"], kparams["be4"],
              kparams["fold"], kparams["bcast"],
              kparams["fw1"], kparams["fb1"], kparams["fg1"], kparams["fbe1"],
              kparams["fw2"], kparams["fb2"], kparams["fg2"], kparams["fbe2"],
              kparams["fw3"], kparams["fb3"], kparams["fg3"], kparams["fbe3"],
              kparams["ffw"], kparams["ffb"], kparams["sel"])

    # TODO(synk): at production N_PTILES, add a B-tiled ("parallel") grid plus a
    # two-pass BatchNorm so both v7x TensorCores are used and VMEM stays within
    # the 64 MiB v7x budget; at B=4 a single gridless block is optimal.
    h, log_probs_n = pl.pallas_call(
        kernel,
        out_shape=(jax.ShapeDtypeStruct((B, DIM_OUT_ALL), jnp.float32),
                   jax.ShapeDtypeStruct((B, MAX_DET + 1), jnp.float32)),
        in_specs=[vmem] * len(inputs),
        out_specs=(vmem, vmem),
        scratch_shapes=[pltpu.VMEM((R, SLAB_W), jnp.float32)],
        compiler_params=pltpu.CompilerParams(vmem_limit_bytes=32 * 1024 * 1024),
    )(*inputs)

    # -------- tail: index bookkeeping in plain JAX (tiny, glue) --------------
    n_stars = jnp.argmax(log_probs_n, axis=1)                        # (B,)
    _h = jnp.concatenate([h, jnp.zeros((B, 1), h.dtype)], axis=1)    # (B, dim+1)

    def gather(mat, last):
        idx = jnp.asarray(mat)[n_stars]                              # (B, k)
        return jnp.take_along_axis(_h, idx, axis=1).reshape(B, MAX_DET, last)

    loc_logit_mean = gather(idx_mats["locs_mean"], 2)
    loc_logvar = gather(idx_mats["locs_var"], 2)
    log_flux_mean = gather(idx_mats["fluxes_mean"], N_SOURCE_PARAMS)
    log_flux_logvar = gather(idx_mats["fluxes_var"], N_SOURCE_PARAMS)
    loc_mean = jax.nn.sigmoid(loc_logit_mean) * (loc_logit_mean != 0).astype(jnp.float32)
    # constrain_logflux_mean=False -> no squaring of log_flux_mean
    return loc_mean, loc_logvar, log_flux_mean, log_flux_logvar, log_probs_n


if __name__ == "__main__":
    key = jax.random.PRNGKey(0)
    k_img, k_par = jax.random.split(key)
    image_ptiles = jax.random.normal(
        k_img, (N_PTILES, N_BANDS, PTILE_SLEN, PTILE_SLEN), jnp.float32)
    params = init_params(k_par)
    idx_mats, prob_indx = get_hidden_indices()
    kparams = prepare_kernel_params(params, prob_indx)

    fwd = jax.jit(star_encoder_forward)
    outs = fwd(kparams, image_ptiles, idx_mats)
    outs = jax.block_until_ready(outs)

    loc_mean, loc_logvar, log_flux_mean, log_flux_logvar, log_probs_n = outs
    assert loc_mean.shape == (N_PTILES, MAX_DET, 2)
    assert loc_logvar.shape == (N_PTILES, MAX_DET, 2)
    assert log_flux_mean.shape == (N_PTILES, MAX_DET, N_SOURCE_PARAMS)
    assert log_flux_logvar.shape == (N_PTILES, MAX_DET, N_SOURCE_PARAMS)
    assert log_probs_n.shape == (N_PTILES, MAX_DET + 1)
    assert bool(jnp.all(jnp.isfinite(log_probs_n)))
    assert bool(jnp.all(jnp.isfinite(loc_mean)))
    print("KERNEL_OK")
</pallas_src>

<mosaic_0001>
module attributes {stable_mosaic.version = 11 : i64} {
  func.func @kernel(%arg0: memref<80x32xf32, #tpu.memory_space<vmem>>, %arg1: memref<180x200xbf16, #tpu.memory_space<vmem>>, %arg2: memref<1x200xf32, #tpu.memory_space<vmem>>, %arg3: memref<1800x200xbf16, #tpu.memory_space<vmem>>, %arg4: memref<1x200xf32, #tpu.memory_space<vmem>>, %arg5: memref<1x20xf32, #tpu.memory_space<vmem>>, %arg6: memref<1x20xf32, #tpu.memory_space<vmem>>, %arg7: memref<1800x200xbf16, #tpu.memory_space<vmem>>, %arg8: memref<1x200xf32, #tpu.memory_space<vmem>>, %arg9: memref<1800x200xbf16, #tpu.memory_space<vmem>>, %arg10: memref<1x200xf32, #tpu.memory_space<vmem>>, %arg11: memref<1x20xf32, #tpu.memory_space<vmem>>, %arg12: memref<1x20xf32, #tpu.memory_space<vmem>>, %arg13: memref<200x20xf32, #tpu.memory_space<vmem>>, %arg14: memref<20x200xf32, #tpu.memory_space<vmem>>, %arg15: memref<1280x256xbf16, #tpu.memory_space<vmem>>, %arg16: memref<1x256xf32, #tpu.memory_space<vmem>>, %arg17: memref<1x256xf32, #tpu.memory_space<vmem>>, %arg18: memref<1x256xf32, #tpu.memory_space<vmem>>, %arg19: memref<256x256xbf16, #tpu.memory_space<vmem>>, %arg20: memref<1x256xf32, #tpu.memory_space<vmem>>, %arg21: memref<1x256xf32, #tpu.memory_space<vmem>>, %arg22: memref<1x256xf32, #tpu.memory_space<vmem>>, %arg23: memref<256x256xbf16, #tpu.memory_space<vmem>>, %arg24: memref<1x256xf32, #tpu.memory_space<vmem>>, %arg25: memref<1x256xf32, #tpu.memory_space<vmem>>, %arg26: memref<1x256xf32, #tpu.memory_space<vmem>>, %arg27: memref<256x27xbf16, #tpu.memory_space<vmem>>, %arg28: memref<1x27xf32, #tpu.memory_space<vmem>>, %arg29: memref<27x3xf32, #tpu.memory_space<vmem>>, %arg30: memref<4x27xf32, #tpu.memory_space<vmem>>, %arg31: memref<4x3xf32, #tpu.memory_space<vmem>>, %arg32: memref<80x256xf32, #tpu.memory_space<vmem>>) attributes {dimension_semantics = [], scalar_prefetch = 0 : i64, scratch_operands = 1 : i64, tpu.core_type = #tpu.core_type<tc>} {
    %0 = tpu.iota {dimensions = array<i32: 0>} : vector<64x1xi32>
    %c16_i32 = arith.constant 16 : i32
    %c0_i32 = arith.constant 0 : i32
    %1 = arith.cmpi eq, %c16_i32, %c0_i32 : i32
    %c1_i32 = arith.constant 1 : i32
    %2 = arith.select %1, %c1_i32, %c16_i32 : i32
    %3 = vector.broadcast %2 : i32 to vector<64x1xi32>
    %4 = arith.remsi %0, %3 : vector<64x1xi32>
    %c0_i32_0 = arith.constant 0 : i32
    %5 = vector.broadcast %c0_i32_0 : i32 to vector<64x1xi32>
    %6 = arith.cmpi ne, %4, %5 : vector<64x1xi32>
    %c0_i32_1 = arith.constant 0 : i32
    %7 = vector.broadcast %c0_i32_1 : i32 to vector<64x1xi32>
    %8 = arith.cmpi slt, %4, %7 : vector<64x1xi32>
    %c0_i32_2 = arith.constant 0 : i32
    %9 = arith.cmpi slt, %2, %c0_i32_2 : i32
    %10 = vector.broadcast %9 : i1 to vector<64x1xi1>
    %11 = vector.broadcast %10 : vector<64x1xi1> to vector<64x1xi1>
    %12 = arith.xori %8, %11 : vector<64x1xi1>
    %13 = arith.andi %12, %6 : vector<64x1xi1>
    %14 = vector.broadcast %2 : i32 to vector<64x1xi32>
    %15 = arith.addi %4, %14 : vector<64x1xi32>
    %16 = arith.select %13, %15, %4 : vector<64x1xi1>, vector<64x1xi32>
    %c1_i32_3 = arith.constant 1 : i32
    %17 = vector.broadcast %c1_i32_3 : i32 to vector<64x1xi32>
    %18 = arith.cmpi sge, %16, %17 : vector<64x1xi32>
    %c8_i32 = arith.constant 8 : i32
    %19 = vector.broadcast %c8_i32 : i32 to vector<64x1xi32>
    %20 = arith.cmpi sle, %16, %19 : vector<64x1xi32>
    %21 = arith.andi %18, %20 : vector<64x1xi1>
    %22 = tpu.iota {dimensions = array<i32: 1>} : vector<1x200xi32>
    %c20_i32 = arith.constant 20 : i32
    %23 = vector.broadcast %c20_i32 : i32 to vector<1x200xi32>
    %24 = arith.cmpi sge, %22, %23 : vector<1x200xi32>
    %c180_i32 = arith.constant 180 : i32
    %25 = vector.broadcast %c180_i32 : i32 to vector<1x200xi32>
    %26 = arith.cmpi slt, %22, %25 : vector<1x200xi32>
    %27 = arith.andi %24, %26 : vector<1x200xi1>
    %28 = vector.broadcast %21 : vector<64x1xi1> to vector<64x200xi1>
    %29 = vector.broadcast %27 : vector<1x200xi1> to vector<64x200xi1>
    %30 = arith.andi %28, %29 : vector<64x200xi1>
    %31 = arith.extui %30 : vector<64x200xi1> to vector<64x200xi32>
    %32 = arith.sitofp %31 : vector<64x200xi32> to vector<64x200xf32>
    %33 = tpu.iota {dimensions = array<i32: 0>} : vector<80x1xi32>
    %c8_i32_4 = arith.constant 8 : i32
    %34 = vector.broadcast %c8_i32_4 : i32 to vector<80x1xi32>
    %35 = arith.addi %33, %34 : vector<80x1xi32>
    %c16_i32_5 = arith.constant 16 : i32
    %c0_i32_6 = arith.constant 0 : i32
    %36 = arith.cmpi eq, %c16_i32_5, %c0_i32_6 : i32
    %c1_i32_7 = arith.constant 1 : i32
    %37 = arith.select %36, %c1_i32_7, %c16_i32_5 : i32
    %38 = vector.broadcast %37 : i32 to vector<80x1xi32>
    %39 = arith.remsi %35, %38 : vector<80x1xi32>
    %c0_i32_8 = arith.constant 0 : i32
    %40 = vector.broadcast %c0_i32_8 : i32 to vector<80x1xi32>
    %41 = arith.cmpi ne, %39, %40 : vector<80x1xi32>
    %c0_i32_9 = arith.constant 0 : i32
    %42 = vector.broadcast %c0_i32_9 : i32 to vector<80x1xi32>
    %43 = arith.cmpi slt, %39, %42 : vector<80x1xi32>
    %c0_i32_10 = arith.constant 0 : i32
    %44 = arith.cmpi slt, %37, %c0_i32_10 : i32
    %45 = vector.broadcast %44 : i1 to vector<80x1xi1>
    %46 = vector.broadcast %45 : vector<80x1xi1> to vector<80x1xi1>
    %47 = arith.xori %43, %46 : vector<80x1xi1>
    %48 = arith.andi %47, %41 : vector<80x1xi1>
    %49 = vector.broadcast %37 : i32 to vector<80x1xi32>
    %50 = arith.addi %39, %49 : vector<80x1xi32>
    %51 = arith.select %48, %50, %39 : vector<80x1xi1>, vector<80x1xi32>
    %c8_i32_11 = arith.constant 8 : i32
    %52 = vector.broadcast %c8_i32_11 : i32 to vector<80x1xi32>
    %53 = arith.cmpi sge, %33, %52 : vector<80x1xi32>
    %c72_i32 = arith.constant 72 : i32
    %54 = vector.broadcast %c72_i32 : i32 to vector<80x1xi32>
    %55 = arith.cmpi slt, %33, %54 : vector<80x1xi32>
    %56 = arith.andi %53, %55 : vector<80x1xi1>
    %c1_i32_12 = arith.constant 1 : i32
    %57 = vector.broadcast %c1_i32_12 : i32 to vector<80x1xi32>
    %58 = arith.cmpi sge, %51, %57 : vector<80x1xi32>
    %c8_i32_13 = arith.constant 8 : i32
    %59 = vector.broadcast %c8_i32_13 : i32 to vector<80x1xi32>
    %60 = arith.cmpi sle, %51, %59 : vector<80x1xi32>
    %61 = arith.andi %58, %60 : vector<80x1xi1>
    %62 = arith.andi %56, %61 : vector<80x1xi1>
    %63 = tpu.iota {dimensions = array<i32: 1>} : vector<1x32xi32>
    %c4_i32 = arith.constant 4 : i32
    %64 = vector.broadcast %c4_i32 : i32 to vector<1x32xi32>
    %65 = arith.cmpi sge, %63, %64 : vector<1x32xi32>
    %c20_i32_14 = arith.constant 20 : i32
    %66 = vector.broadcast %c20_i32_14 : i32 to vector<1x32xi32>
    %67 = arith.cmpi slt, %63, %66 : vector<1x32xi32>
    %68 = arith.andi %65, %67 : vector<1x32xi1>
    %69 = vector.broadcast %62 : vector<80x1xi1> to vector<80x32xi1>
    %70 = vector.broadcast %68 : vector<1x32xi1> to vector<80x32xi1>
    %71 = arith.andi %69, %70 : vector<80x32xi1>
    %cst = arith.constant 0.000000e+00 : f32
    %72 = vector.broadcast %cst : f32 to vector<8x256xf32>
    %c0 = arith.constant 0 : index
    %c0_15 = arith.constant 0 : index
    %73 = vector.load %arg32[%c0, %c0_15] : memref<80x256xf32, #tpu.memory_space<vmem>>, vector<8x256xf32>
    tpu.vector_store %arg32[%c0, %c0_15], %72 {strides = array<i32>} : memref<80x256xf32, #tpu.memory_space<vmem>>, vector<8x256xf32>,
    %cst_16 = arith.constant 0.000000e+00 : f32
    %74 = vector.broadcast %cst_16 : f32 to vector<8x256xf32>
    %c72 = arith.constant 72 : index
    %c0_17 = arith.constant 0 : index
    %75 = vector.load %arg32[%c72, %c0_17] : memref<80x256xf32, #tpu.memory_space<vmem>>, vector<8x256xf32>
    tpu.vector_store %arg32[%c72, %c0_17], %74 {strides = array<i32>} : memref<80x256xf32, #tpu.memory_space<vmem>>, vector<8x256xf32>,
    %cst_18 = arith.constant 0.000000e+00 : f32
    %76 = vector.broadcast %cst_18 : f32 to vector<64x20xf32>
    %c8 = arith.constant 8 : index
    %c0_19 = arith.constant 0 : index
    %77 = vector.load %arg32[%c8, %c0_19] : memref<80x256xf32, #tpu.memory_space<vmem>>, vector<64x20xf32>
    tpu.vector_store %arg32[%c8, %c0_19], %76 {strides = array<i32>} : memref<80x256xf32, #tpu.memory_space<vmem>>, vector<64x20xf32>,
    %cst_20 = arith.constant 0.000000e+00 : f32
    %78 = vector.broadcast %cst_20 : f32 to vector<64x36xf32>
    %c8_21 = arith.constant 8 : index
    %c220 = arith.constant 220 : index
    %79 = vector.load %arg32[%c8_21, %c220] : memref<80x256xf32, #tpu.memory_space<vmem>>, vector<64x36xf32>
    tpu.vector_store %arg32[%c8_21, %c220], %78 {strides = array<i32>} : memref<80x256xf32, #tpu.memory_space<vmem>>, vector<64x36xf32>,
    %c0_22 = arith.constant 0 : index
    %c0_23 = arith.constant 0 : index
    %80 = vector.load %arg0[%c0_22, %c0_23] : memref<80x32xf32, #tpu.memory_space<vmem>>, vector<80x32xf32>
    %cst_24 = arith.constant 0x7F800000 : f32
    %81 = vector.broadcast %cst_24 : f32 to vector<80x32xf32>
    %82 = arith.select %71, %80, %81 : vector<80x32xi1>, vector<80x32xf32>
    %83 = vector.shape_cast %82 : vector<80x32xf32> to vector<1x80x32xf32>
    %cst_25 = arith.constant dense<0x7F800000> : vector<1xf32>
    %84 = vector.multi_reduction <minimumf>, %83, %cst_25 [1, 2] : vector<1x80x32xf32> to vector<1xf32>
    %85 = vector.shape_cast %84 : vector<1xf32> to vector<1x1x1xf32>
    %86 = vector.extract %85[0, 0, 0] : f32 from vector<1x1x1xf32>
    %87 = vector.broadcast %86 : f32 to vector<1x1xf32>
    %88 = vector.broadcast %87 : vector<1x1xf32> to vector<80x32xf32>
    %89 = arith.subf %80, %88 : vector<80x32xf32>
    %cst_26 = arith.constant 0.000000e+00 : f32
    %90 = vector.broadcast %cst_26 : f32 to vector<80x32xf32>
    %91 = arith.select %71, %89, %90 : vector<80x32xi1>, vector<80x32xf32>
    %cst_27 = arith.constant 1.000000e+00 : f32
    %92 = vector.broadcast %cst_27 : f32 to vector<80x32xf32>
    %93 = arith.addf %91, %92 : vector<80x32xf32>
    %94 = math.log %93 : vector<80x32xf32>
    %95 = vector.extract_strided_slice %94 {offsets = [0, 0], sizes = [80, 20], strides = [1, 1]} : vector<80x32xf32> to vector<80x20xf32>
    %96 = vector.extract_strided_slice %94 {offsets = [0, 2], sizes = [80, 20], strides = [1, 1]} : vector<80x32xf32> to vector<80x20xf32>
    %97 = vector.extract_strided_slice %94 {offsets = [0, 4], sizes = [80, 20], strides = [1, 1]} : vector<80x32xf32> to vector<80x20xf32>
    %98 = vector.extract_strided_slice %95 {offsets = [7, 0], sizes = [64, 20], strides = [1, 1]} : vector<80x20xf32> to vector<64x20xf32>
    %99 = arith.truncf %98 : vector<64x20xf32> to vector<64x20xbf16>
    %100 = vector.extract_strided_slice %96 {offsets = [7, 0], sizes = [64, 20], strides = [1, 1]} : vector<80x20xf32> to vector<64x20xf32>
    %101 = arith.truncf %100 : vector<64x20xf32> to vector<64x20xbf16>
    %102 = vector.extract_strided_slice %97 {offsets = [7, 0], sizes = [64, 20], strides = [1, 1]} : vector<80x20xf32> to vector<64x20xf32>
    %103 = arith.truncf %102 : vector<64x20xf32> to vector<64x20xbf16>
    %104 = vector.extract_strided_slice %95 {offsets = [8, 0], sizes = [64, 20], strides = [1, 1]} : vector<80x20xf32> to vector<64x20xf32>
    %105 = arith.truncf %104 : vector<64x20xf32> to vector<64x20xbf16>
    %106 = vector.extract_strided_slice %96 {offsets = [8, 0], sizes = [64, 20], strides = [1, 1]} : vector<80x20xf32> to vector<64x20xf32>
    %107 = arith.truncf %106 : vector<64x20xf32> to vector<64x20xbf16>
    %108 = vector.extract_strided_slice %97 {offsets = [8, 0], sizes = [64, 20], strides = [1, 1]} : vector<80x20xf32> to vector<64x20xf32>
    %109 = arith.truncf %108 : vector<64x20xf32> to vector<64x20xbf16>
    %110 = vector.extract_strided_slice %95 {offsets = [9, 0], sizes = [64, 20], strides = [1, 1]} : vector<80x20xf32> to vector<64x20xf32>
    %111 = arith.truncf %110 : vector<64x20xf32> to vector<64x20xbf16>
    %112 = vector.extract_strided_slice %96 {offsets = [9, 0], sizes = [64, 20], strides = [1, 1]} : vector<80x20xf32> to vector<64x20xf32>
    %113 = arith.truncf %112 : vector<64x20xf32> to vector<64x20xbf16>
    %114 = vector.extract_strided_slice %97 {offsets = [9, 0], sizes = [64, 20], strides = [1, 1]} : vector<80x20xf32> to vector<64x20xf32>
    %115 = arith.truncf %114 : vector<64x20xf32> to vector<64x20xbf16>
    %116 = tpu.concatenate %99, %101, %103, %105, %107, %109, %111, %113, %115 in 1 : vector<64x20xbf16>, vector<64x20xbf16>, vector<64x20xbf16>, vector<64x20xbf16>, vector<64x20xbf16>, vector<64x20xbf16>, vector<64x20xbf16>, vector<64x20xbf16>, vector<64x20xbf16> -> vector<64x180xbf16>
    %c0_28 = arith.constant 0 : index
    %c0_29 = arith.constant 0 : index
    %117 = vector.load %arg1[%c0_28, %c0_29] : memref<180x200xbf16, #tpu.memory_space<vmem>>, vector<180x200xbf16>
    %cst_30 = arith.constant dense<0.000000e+00> : vector<64x200xf32>
    %118 = tpu.matmul %116, %117, %cst_30 {dimension_numbers = #tpu.dot_dimension_numbers<[1], [0], [0], [1], [0, 0, 1, 1], [], []>} : vector<64x180xbf16>, vector<180x200xbf16>, vector<64x200xf32> -> vector<64x200xf32>
    %c0_31 = arith.constant 0 : index
    %c0_32 = arith.constant 0 : index
    %119 = vector.load %arg2[%c0_31, %c0_32] : memref<1x200xf32, #tpu.memory_space<vmem>>, vector<1x200xf32>
    %120 = vector.broadcast %119 : vector<1x200xf32> to vector<64x200xf32>
    %121 = arith.addf %118, %120 : vector<64x200xf32>
    %cst_33 = arith.constant 0.000000e+00 : f32
    %122 = vector.broadcast %cst_33 : f32 to vector<64x200xf32>
    %123 = arith.maximumf %121, %122 : vector<64x200xf32>
    %124 = arith.mulf %123, %32 : vector<64x200xf32>
    %c8_34 = arith.constant 8 : index
    %c20 = arith.constant 20 : index
    %125 = vector.load %arg32[%c8_34, %c20] : memref<80x256xf32, #tpu.memory_space<vmem>>, vector<64x200xf32>
    tpu.vector_store %arg32[%c8_34, %c20], %124 {strides = array<i32>} : memref<80x256xf32, #tpu.memory_space<vmem>>, vector<64x200xf32>,
    %c0_35 = arith.constant 0 : index
    %c0_36 = arith.constant 0 : index
    %126 = vector.load %arg32[%c0_35, %c0_36] : memref<80x256xf32, #tpu.memory_space<vmem>>, vector<80x256xf32>
    %127 = vector.extract_strided_slice %126 {offsets = [0, 0], sizes = [80, 200], strides = [1, 1]} : vector<80x256xf32> to vector<80x200xf32>
    %128 = vector.extract_strided_slice %126 {offsets = [0, 20], sizes = [80, 200], strides = [1, 1]} : vector<80x256xf32> to vector<80x200xf32>
    %129 = vector.extract_strided_slice %126 {offsets = [0, 40], sizes = [80, 200], strides = [1, 1]} : vector<80x256xf32> to vector<80x200xf32>
    %130 = vector.extract_strided_slice %127 {offsets = [7, 0], sizes = [64, 200], strides = [1, 1]} : vector<80x200xf32> to vector<64x200xf32>
    %131 = arith.truncf %130 : vector<64x200xf32> to vector<64x200xbf16>
    %132 = vector.extract_strided_slice %128 {offsets = [7, 0], sizes = [64, 200], strides = [1, 1]} : vector<80x200xf32> to vector<64x200xf32>
    %133 = arith.truncf %132 : vector<64x200xf32> to vector<64x200xbf16>
    %134 = vector.extract_strided_slice %129 {offsets = [7, 0], sizes = [64, 200], strides = [1, 1]} : vector<80x200xf32> to vector<64x200xf32>
    %135 = arith.truncf %134 : vector<64x200xf32> to vector<64x200xbf16>
    %136 = vector.extract_strided_slice %127 {offsets = [8, 0], sizes = [64, 200], strides = [1, 1]} : vector<80x200xf32> to vector<64x200xf32>
    %137 = arith.truncf %136 : vector<64x200xf32> to vector<64x200xbf16>
    %138 = vector.extract_strided_slice %128 {offsets = [8, 0], sizes = [64, 200], strides = [1, 1]} : vector<80x200xf32> to vector<64x200xf32>
    %139 = arith.truncf %138 : vector<64x200xf32> to vector<64x200xbf16>
    %140 = vector.extract_strided_slice %129 {offsets = [8, 0], sizes = [64, 200], strides = [1, 1]} : vector<80x200xf32> to vector<64x200xf32>
    %141 = arith.truncf %140 : vector<64x200xf32> to vector<64x200xbf16>
    %142 = vector.extract_strided_slice %127 {offsets = [9, 0], sizes = [64, 200], strides = [1, 1]} : vector<80x200xf32> to vector<64x200xf32>
    %143 = arith.truncf %142 : vector<64x200xf32> to vector<64x200xbf16>
    %144 = vector.extract_strided_slice %128 {offsets = [9, 0], sizes = [64, 200], strides = [1, 1]} : vector<80x200xf32> to vector<64x200xf32>
    %145 = arith.truncf %144 : vector<64x200xf32> to vector<64x200xbf16>
    %146 = vector.extract_strided_slice %129 {offsets = [9, 0], sizes = [64, 200], strides = [1, 1]} : vector<80x200xf32> to vector<64x200xf32>
    %147 = arith.truncf %146 : vector<64x200xf32> to vector<64x200xbf16>
    %148 = tpu.concatenate %131, %133, %135, %137, %139, %141, %143, %145, %147 in 1 : vector<64x200xbf16>, vector<64x200xbf16>, vector<64x200xbf16>, vector<64x200xbf16>, vector<64x200xbf16>, vector<64x200xbf16>, vector<64x200xbf16>, vector<64x200xbf16>, vector<64x200xbf16> -> vector<64x1800xbf16>
    %c0_37 = arith.constant 0 : index
    %c0_38 = arith.constant 0 : index
    %149 = vector.load %arg3[%c0_37, %c0_38] : memref<1800x200xbf16, #tpu.memory_space<vmem>>, vector<1800x200xbf16>
    %cst_39 = arith.constant dense<0.000000e+00> : vector<64x200xf32>
    %150 = tpu.matmul %148, %149, %cst_39 {dimension_numbers = #tpu.dot_dimension_numbers<[1], [0], [0], [1], [0, 0, 1, 1], [], []>} : vector<64x1800xbf16>, vector<1800x200xbf16>, vector<64x200xf32> -> vector<64x200xf32>
    %c0_40 = arith.constant 0 : index
    %c0_41 = arith.constant 0 : index
    %151 = vector.load %arg4[%c0_40, %c0_41] : memref<1x200xf32, #tpu.memory_space<vmem>>, vector<1x200xf32>
    %152 = vector.broadcast %151 : vector<1x200xf32> to vector<64x200xf32>
    %153 = arith.addf %150, %152 : vector<64x200xf32>
    %154 = arith.mulf %153, %32 : vector<64x200xf32>
    %cst_42 = arith.constant dense<0.000000e+00> : vector<200xf32>
    %155 = vector.multi_reduction <add>, %154, %cst_42 [0] : vector<64x200xf32> to vector<200xf32>
    %156 = vector.shape_cast %155 : vector<200xf32> to vector<1x200xf32>
    %157 = arith.mulf %154, %154 : vector<64x200xf32>
    %cst_43 = arith.constant dense<0.000000e+00> : vector<200xf32>
    %158 = vector.multi_reduction <add>, %157, %cst_43 [0] : vector<64x200xf32> to vector<200xf32>
    %159 = vector.shape_cast %158 : vector<200xf32> to vector<1x200xf32>
    %160 = tpu.concatenate %156, %159 in 0 : vector<1x200xf32>, vector<1x200xf32> -> vector<2x200xf32>
    %c0_44 = arith.constant 0 : index
    %c0_45 = arith.constant 0 : index
    %161 = vector.load %arg13[%c0_44, %c0_45] : memref<200x20xf32, #tpu.memory_space<vmem>>, vector<200x20xf32>
    %cst_46 = arith.constant dense<0.000000e+00> : vector<2x20xf32>
    %162 = tpu.matmul %160, %161, %cst_46 {dimension_numbers = #tpu.dot_dimension_numbers<[1], [0], [0], [1], [0, 0, 1, 1], [], []>} : vector<2x200xf32>, vector<200x20xf32>, vector<2x20xf32> -> vector<2x20xf32>
    %163 = vector.extract_strided_slice %162 {offsets = [0, 0], sizes = [1, 20], strides = [1, 1]} : vector<2x20xf32> to vector<1x20xf32>
    %cst_47 = arith.constant 3.906250e-03 : f32
    %164 = vector.broadcast %cst_47 : f32 to vector<1x20xf32>
    %165 = arith.mulf %163, %164 : vector<1x20xf32>
    %166 = vector.extract_strided_slice %162 {offsets = [1, 0], sizes = [1, 20], strides = [1, 1]} : vector<2x20xf32> to vector<1x20xf32>
    %cst_48 = arith.constant 3.906250e-03 : f32
    %167 = vector.broadcast %cst_48 : f32 to vector<1x20xf32>
    %168 = arith.mulf %166, %167 : vector<1x20xf32>
    %169 = arith.mulf %165, %165 : vector<1x20xf32>
    %170 = arith.subf %168, %169 : vector<1x20xf32>
    %c0_49 = arith.constant 0 : index
    %c0_50 = arith.constant 0 : index
    %171 = vector.load %arg5[%c0_49, %c0_50] : memref<1x20xf32, #tpu.memory_space<vmem>>, vector<1x20xf32>
    %cst_51 = arith.constant 9.99999974E-6 : f32
    %172 = vector.broadcast %cst_51 : f32 to vector<1x20xf32>
    %173 = arith.addf %170, %172 : vector<1x20xf32>
    %174 = math.rsqrt %173 : vector<1x20xf32>
    %175 = arith.mulf %171, %174 : vector<1x20xf32>
    %c0_52 = arith.constant 0 : index
    %c0_53 = arith.constant 0 : index
    %176 = vector.load %arg6[%c0_52, %c0_53] : memref<1x20xf32, #tpu.memory_space<vmem>>, vector<1x20xf32>
    %177 = arith.mulf %165, %175 : vector<1x20xf32>
    %178 = arith.subf %176, %177 : vector<1x20xf32>
    %179 = tpu.concatenate %175, %178 in 0 : vector<1x20xf32>, vector<1x20xf32> -> vector<2x20xf32>
    %c0_54 = arith.constant 0 : index
    %c0_55 = arith.constant 0 : index
    %180 = vector.load %arg14[%c0_54, %c0_55] : memref<20x200xf32, #tpu.memory_space<vmem>>, vector<20x200xf32>
    %cst_56 = arith.constant dense<0.000000e+00> : vector<2x200xf32>
    %181 = tpu.matmul %179, %180, %cst_56 {dimension_numbers = #tpu.dot_dimension_numbers<[1], [0], [0], [1], [0, 0, 1, 1], [], []>} : vector<2x20xf32>, vector<20x200xf32>, vector<2x200xf32> -> vector<2x200xf32>
    %182 = vector.extract_strided_slice %181 {offsets = [0, 0], sizes = [1, 200], strides = [1, 1]} : vector<2x200xf32> to vector<1x200xf32>
    %183 = vector.broadcast %182 : vector<1x200xf32> to vector<64x200xf32>
    %184 = arith.mulf %153, %183 : vector<64x200xf32>
    %185 = vector.extract_strided_slice %181 {offsets = [1, 0], sizes = [1, 200], strides = [1, 1]} : vector<2x200xf32> to vector<1x200xf32>
    %186 = vector.broadcast %185 : vector<1x200xf32> to vector<64x200xf32>
    %187 = arith.addf %184, %186 : vector<64x200xf32>
    %cst_57 = arith.constant 0.000000e+00 : f32
    %188 = vector.broadcast %cst_57 : f32 to vector<64x200xf32>
    %189 = arith.maximumf %187, %188 : vector<64x200xf32>
    %190 = arith.mulf %189, %32 : vector<64x200xf32>
    %c8_58 = arith.constant 8 : index
    %c20_59 = arith.constant 20 : index
    %191 = vector.load %arg32[%c8_58, %c20_59] : memref<80x256xf32, #tpu.memory_space<vmem>>, vector<64x200xf32>
    tpu.vector_store %arg32[%c8_58, %c20_59], %190 {strides = array<i32>} : memref<80x256xf32, #tpu.memory_space<vmem>>, vector<64x200xf32>,
    %c0_60 = arith.constant 0 : index
    %c0_61 = arith.constant 0 : index
    %192 = vector.load %arg32[%c0_60, %c0_61] : memref<80x256xf32, #tpu.memory_space<vmem>>, vector<80x256xf32>
    %193 = vector.extract_strided_slice %192 {offsets = [0, 0], sizes = [80, 200], strides = [1, 1]} : vector<80x256xf32> to vector<80x200xf32>
    %194 = vector.extract_strided_slice %192 {offsets = [0, 20], sizes = [80, 200], strides = [1, 1]} : vector<80x256xf32> to vector<80x200xf32>
    %195 = vector.extract_strided_slice %192 {offsets = [0, 40], sizes = [80, 200], strides = [1, 1]} : vector<80x256xf32> to vector<80x200xf32>
    %196 = vector.extract_strided_slice %193 {offsets = [7, 0], sizes = [64, 200], strides = [1, 1]} : vector<80x200xf32> to vector<64x200xf32>
    %197 = arith.truncf %196 : vector<64x200xf32> to vector<64x200xbf16>
    %198 = vector.extract_strided_slice %194 {offsets = [7, 0], sizes = [64, 200], strides = [1, 1]} : vector<80x200xf32> to vector<64x200xf32>
    %199 = arith.truncf %198 : vector<64x200xf32> to vector<64x200xbf16>
    %200 = vector.extract_strided_slice %195 {offsets = [7, 0], sizes = [64, 200], strides = [1, 1]} : vector<80x200xf32> to vector<64x200xf32>
    %201 = arith.truncf %200 : vector<64x200xf32> to vector<64x200xbf16>
    %202 = vector.extract_strided_slice %193 {offsets = [8, 0], sizes = [64, 200], strides = [1, 1]} : vector<80x200xf32> to vector<64x200xf32>
    %203 = arith.truncf %202 : vector<64x200xf32> to vector<64x200xbf16>
    %204 = vector.extract_strided_slice %194 {offsets = [8, 0], sizes = [64, 200], strides = [1, 1]} : vector<80x200xf32> to vector<64x200xf32>
    %205 = arith.truncf %204 : vector<64x200xf32> to vector<64x200xbf16>
    %206 = vector.extract_strided_slice %195 {offsets = [8, 0], sizes = [64, 200], strides = [1, 1]} : vector<80x200xf32> to vector<64x200xf32>
    %207 = arith.truncf %206 : vector<64x200xf32> to vector<64x200xbf16>
    %208 = vector.extract_strided_slice %193 {offsets = [9, 0], sizes = [64, 200], strides = [1, 1]} : vector<80x200xf32> to vector<64x200xf32>
    %209 = arith.truncf %208 : vector<64x200xf32> to vector<64x200xbf16>
    %210 = vector.extract_strided_slice %194 {offsets = [9, 0], sizes = [64, 200], strides = [1, 1]} : vector<80x200xf32> to vector<64x200xf32>
    %211 = arith.truncf %210 : vector<64x200xf32> to vector<64x200xbf16>
    %212 = vector.extract_strided_slice %195 {offsets = [9, 0], sizes = [64, 200], strides = [1, 1]} : vector<80x200xf32> to vector<64x200xf32>
    %213 = arith.truncf %212 : vector<64x200xf32> to vector<64x200xbf16>
    %214 = tpu.concatenate %197, %199, %201, %203, %205, %207, %209, %211, %213 in 1 : vector<64x200xbf16>, vector<64x200xbf16>, vector<64x200xbf16>, vector<64x200xbf16>, vector<64x200xbf16>, vector<64x200xbf16>, vector<64x200xbf16>, vector<64x200xbf16>, vector<64x200xbf16> -> vector<64x1800xbf16>
    %c0_62 = arith.constant 0 : index
    %c0_63 = arith.constant 0 : index
    %215 = vector.load %arg7[%c0_62, %c0_63] : memref<1800x200xbf16, #tpu.memory_space<vmem>>, vector<1800x200xbf16>
    %cst_64 = arith.constant dense<0.000000e+00> : vector<64x200xf32>
    %216 = tpu.matmul %214, %215, %cst_64 {dimension_numbers = #tpu.dot_dimension_numbers<[1], [0], [0], [1], [0, 0, 1, 1], [], []>} : vector<64x1800xbf16>, vector<1800x200xbf16>, vector<64x200xf32> -> vector<64x200xf32>
    %c0_65 = arith.constant 0 : index
    %c0_66 = arith.constant 0 : index
    %217 = vector.load %arg8[%c0_65, %c0_66] : memref<1x200xf32, #tpu.memory_space<vmem>>, vector<1x200xf32>
    %218 = vector.broadcast %217 : vector<1x200xf32> to vector<64x200xf32>
    %219 = arith.addf %216, %218 : vector<64x200xf32>
    %cst_67 = arith.constant 0.000000e+00 : f32
    %220 = vector.broadcast %cst_67 : f32 to vector<64x200xf32>
    %221 = arith.maximumf %219, %220 : vector<64x200xf32>
    %222 = arith.mulf %221, %32 : vector<64x200xf32>
    %c8_68 = arith.constant 8 : index
    %c20_69 = arith.constant 20 : index
    %223 = vector.load %arg32[%c8_68, %c20_69] : memref<80x256xf32, #tpu.memory_space<vmem>>, vector<64x200xf32>
    tpu.vector_store %arg32[%c8_68, %c20_69], %222 {strides = array<i32>} : memref<80x256xf32, #tpu.memory_space<vmem>>, vector<64x200xf32>,
    %c0_70 = arith.constant 0 : index
    %c0_71 = arith.constant 0 : index
    %224 = vector.load %arg32[%c0_70, %c0_71] : memref<80x256xf32, #tpu.memory_space<vmem>>, vector<80x256xf32>
    %225 = vector.extract_strided_slice %224 {offsets = [0, 0], sizes = [80, 200], strides = [1, 1]} : vector<80x256xf32> to vector<80x200xf32>
    %226 = vector.extract_strided_slice %224 {offsets = [0, 20], sizes = [80, 200], strides = [1, 1]} : vector<80x256xf32> to vector<80x200xf32>
    %227 = vector.extract_strided_slice %224 {offsets = [0, 40], sizes = [80, 200], strides = [1, 1]} : vector<80x256xf32> to vector<80x200xf32>
    %228 = vector.extract_strided_slice %225 {offsets = [7, 0], sizes = [64, 200], strides = [1, 1]} : vector<80x200xf32> to vector<64x200xf32>
    %229 = arith.truncf %228 : vector<64x200xf32> to vector<64x200xbf16>
    %230 = vector.extract_strided_slice %226 {offsets = [7, 0], sizes = [64, 200], strides = [1, 1]} : vector<80x200xf32> to vector<64x200xf32>
    %231 = arith.truncf %230 : vector<64x200xf32> to vector<64x200xbf16>
    %232 = vector.extract_strided_slice %227 {offsets = [7, 0], sizes = [64, 200], strides = [1, 1]} : vector<80x200xf32> to vector<64x200xf32>
    %233 = arith.truncf %232 : vector<64x200xf32> to vector<64x200xbf16>
    %234 = vector.extract_strided_slice %225 {offsets = [8, 0], sizes = [64, 200], strides = [1, 1]} : vector<80x200xf32> to vector<64x200xf32>
    %235 = arith.truncf %234 : vector<64x200xf32> to vector<64x200xbf16>
    %236 = vector.extract_strided_slice %226 {offsets = [8, 0], sizes = [64, 200], strides = [1, 1]} : vector<80x200xf32> to vector<64x200xf32>
    %237 = arith.truncf %236 : vector<64x200xf32> to vector<64x200xbf16>
    %238 = vector.extract_strided_slice %227 {offsets = [8, 0], sizes = [64, 200], strides = [1, 1]} : vector<80x200xf32> to vector<64x200xf32>
    %239 = arith.truncf %238 : vector<64x200xf32> to vector<64x200xbf16>
    %240 = vector.extract_strided_slice %225 {offsets = [9, 0], sizes = [64, 200], strides = [1, 1]} : vector<80x200xf32> to vector<64x200xf32>
    %241 = arith.truncf %240 : vector<64x200xf32> to vector<64x200xbf16>
    %242 = vector.extract_strided_slice %226 {offsets = [9, 0], sizes = [64, 200], strides = [1, 1]} : vector<80x200xf32> to vector<64x200xf32>
    %243 = arith.truncf %242 : vector<64x200xf32> to vector<64x200xbf16>
    %244 = vector.extract_strided_slice %227 {offsets = [9, 0], sizes = [64, 200], strides = [1, 1]} : vector<80x200xf32> to vector<64x200xf32>
    %245 = arith.truncf %244 : vector<64x200xf32> to vector<64x200xbf16>
    %246 = tpu.concatenate %229, %231, %233, %235, %237, %239, %241, %243, %245 in 1 : vector<64x200xbf16>, vector<64x200xbf16>, vector<64x200xbf16>, vector<64x200xbf16>, vector<64x200xbf16>, vector<64x200xbf16>, vector<64x200xbf16>, vector<64x200xbf16>, vector<64x200xbf16> -> vector<64x1800xbf16>
    %c0_72 = arith.constant 0 : index
    %c0_73 = arith.constant 0 : index
    %247 = vector.load %arg9[%c0_72, %c0_73] : memref<1800x200xbf16, #tpu.memory_space<vmem>>, vector<1800x200xbf16>
    %cst_74 = arith.constant dense<0.000000e+00> : vector<64x200xf32>
    %248 = tpu.matmul %246, %247, %cst_74 {dimension_numbers = #tpu.dot_dimension_numbers<[1], [0], [0], [1], [0, 0, 1, 1], [], []>} : vector<64x1800xbf16>, vector<1800x200xbf16>, vector<64x200xf32> -> vector<64x200xf32>
    %c0_75 = arith.constant 0 : index
    %c0_76 = arith.constant 0 : index
    %249 = vector.load %arg10[%c0_75, %c0_76] : memref<1x200xf32, #tpu.memory_space<vmem>>, vector<1x200xf32>
    %250 = vector.broadcast %249 : vector<1x200xf32> to vector<64x200xf32>
    %251 = arith.addf %248, %250 : vector<64x200xf32>
    %252 = arith.mulf %251, %32 : vector<64x200xf32>
    %cst_77 = arith.constant dense<0.000000e+00> : vector<200xf32>
    %253 = vector.multi_reduction <add>, %252, %cst_77 [0] : vector<64x200xf32> to vector<200xf32>
    %254 = vector.shape_cast %253 : vector<200xf32> to vector<1x200xf32>
    %255 = arith.mulf %252, %252 : vector<64x200xf32>
    %cst_78 = arith.constant dense<0.000000e+00> : vector<200xf32>
    %256 = vector.multi_reduction <add>, %255, %cst_78 [0] : vector<64x200xf32> to vector<200xf32>
    %257 = vector.shape_cast %256 : vector<200xf32> to vector<1x200xf32>
    %258 = tpu.concatenate %254, %257 in 0 : vector<1x200xf32>, vector<1x200xf32> -> vector<2x200xf32>
    %c0_79 = arith.constant 0 : index
    %c0_80 = arith.constant 0 : index
    %259 = vector.load %arg13[%c0_79, %c0_80] : memref<200x20xf32, #tpu.memory_space<vmem>>, vector<200x20xf32>
    %cst_81 = arith.constant dense<0.000000e+00> : vector<2x20xf32>
    %260 = tpu.matmul %258, %259, %cst_81 {dimension_numbers = #tpu.dot_dimension_numbers<[1], [0], [0], [1], [0, 0, 1, 1], [], []>} : vector<2x200xf32>, vector<200x20xf32>, vector<2x20xf32> -> vector<2x20xf32>
    %261 = vector.extract_strided_slice %260 {offsets = [0, 0], sizes = [1, 20], strides = [1, 1]} : vector<2x20xf32> to vector<1x20xf32>
    %cst_82 = arith.constant 3.906250e-03 : f32
    %262 = vector.broadcast %cst_82 : f32 to vector<1x20xf32>
    %263 = arith.mulf %261, %262 : vector<1x20xf32>
    %264 = vector.extract_strided_slice %260 {offsets = [1, 0], sizes = [1, 20], strides = [1, 1]} : vector<2x20xf32> to vector<1x20xf32>
    %cst_83 = arith.constant 3.906250e-03 : f32
    %265 = vector.broadcast %cst_83 : f32 to vector<1x20xf32>
    %266 = arith.mulf %264, %265 : vector<1x20xf32>
    %267 = arith.mulf %263, %263 : vector<1x20xf32>
    %268 = arith.subf %266, %267 : vector<1x20xf32>
    %c0_84 = arith.constant 0 : index
    %c0_85 = arith.constant 0 : index
    %269 = vector.load %arg11[%c0_84, %c0_85] : memref<1x20xf32, #tpu.memory_space<vmem>>, vector<1x20xf32>
    %cst_86 = arith.constant 9.99999974E-6 : f32
    %270 = vector.broadcast %cst_86 : f32 to vector<1x20xf32>
    %271 = arith.addf %268, %270 : vector<1x20xf32>
    %272 = math.rsqrt %271 : vector<1x20xf32>
    %273 = arith.mulf %269, %272 : vector<1x20xf32>
    %c0_87 = arith.constant 0 : index
    %c0_88 = arith.constant 0 : index
    %274 = vector.load %arg12[%c0_87, %c0_88] : memref<1x20xf32, #tpu.memory_space<vmem>>, vector<1x20xf32>
    %275 = arith.mulf %263, %273 : vector<1x20xf32>
    %276 = arith.subf %274, %275 : vector<1x20xf32>
    %277 = tpu.concatenate %273, %276 in 0 : vector<1x20xf32>, vector<1x20xf32> -> vector<2x20xf32>
    %c0_89 = arith.constant 0 : index
    %c0_90 = arith.constant 0 : index
    %278 = vector.load %arg14[%c0_89, %c0_90] : memref<20x200xf32, #tpu.memory_space<vmem>>, vector<20x200xf32>
    %cst_91 = arith.constant dense<0.000000e+00> : vector<2x200xf32>
    %279 = tpu.matmul %277, %278, %cst_91 {dimension_numbers = #tpu.dot_dimension_numbers<[1], [0], [0], [1], [0, 0, 1, 1], [], []>} : vector<2x20xf32>, vector<20x200xf32>, vector<2x200xf32> -> vector<2x200xf32>
    %280 = vector.extract_strided_slice %279 {offsets = [0, 0], sizes = [1, 200], strides = [1, 1]} : vector<2x200xf32> to vector<1x200xf32>
    %281 = vector.broadcast %280 : vector<1x200xf32> to vector<64x200xf32>
    %282 = arith.mulf %251, %281 : vector<64x200xf32>
    %283 = vector.extract_strided_slice %279 {offsets = [1, 0], sizes = [1, 200], strides = [1, 1]} : vector<2x200xf32> to vector<1x200xf32>
    %284 = vector.broadcast %283 : vector<1x200xf32> to vector<64x200xf32>
    %285 = arith.addf %282, %284 : vector<64x200xf32>
    %cst_92 = arith.constant 0.000000e+00 : f32
    %286 = vector.broadcast %cst_92 : f32 to vector<64x200xf32>
    %287 = arith.maximumf %285, %286 : vector<64x200xf32>
    %288 = arith.mulf %287, %32 : vector<64x200xf32>
    %289 = vector.extract_strided_slice %288 {offsets = [1, 20], sizes = [1, 160], strides = [1, 1]} : vector<64x200xf32> to vector<1x160xf32>
    %290 = vector.extract_strided_slice %288 {offsets = [2, 20], sizes = [1, 160], strides = [1, 1]} : vector<64x200xf32> to vector<1x160xf32>
    %291 = vector.extract_strided_slice %288 {offsets = [3, 20], sizes = [1, 160], strides = [1, 1]} : vector<64x200xf32> to vector<1x160xf32>
    %292 = vector.extract_strided_slice %288 {offsets = [4, 20], sizes = [1, 160], strides = [1, 1]} : vector<64x200xf32> to vector<1x160xf32>
    %293 = vector.extract_strided_slice %288 {offsets = [5, 20], sizes = [1, 160], strides = [1, 1]} : vector<64x200xf32> to vector<1x160xf32>
    %294 = vector.extract_strided_slice %288 {offsets = [6, 20], sizes = [1, 160], strides = [1, 1]} : vector<64x200xf32> to vector<1x160xf32>
    %295 = vector.extract_strided_slice %288 {offsets = [7, 20], sizes = [1, 160], strides = [1, 1]} : vector<64x200xf32> to vector<1x160xf32>
    %296 = vector.extract_strided_slice %288 {offsets = [8, 20], sizes = [1, 160], strides = [1, 1]} : vector<64x200xf32> to vector<1x160xf32>
    %297 = tpu.concatenate %289, %290, %291, %292, %293, %294, %295, %296 in 1 : vector<1x160xf32>, vector<1x160xf32>, vector<1x160xf32>, vector<1x160xf32>, vector<1x160xf32>, vector<1x160xf32>, vector<1x160xf32>, vector<1x160xf32> -> vector<1x1280xf32>
    %298 = vector.extract_strided_slice %288 {offsets = [17, 20], sizes = [1, 160], strides = [1, 1]} : vector<64x200xf32> to vector<1x160xf32>
    %299 = vector.extract_strided_slice %288 {offsets = [18, 20], sizes = [1, 160], strides = [1, 1]} : vector<64x200xf32> to vector<1x160xf32>
    %300 = vector.extract_strided_slice %288 {offsets = [19, 20], sizes = [1, 160], strides = [1, 1]} : vector<64x200xf32> to vector<1x160xf32>
    %301 = vector.extract_strided_slice %288 {offsets = [20, 20], sizes = [1, 160], strides = [1, 1]} : vector<64x200xf32> to vector<1x160xf32>
    %302 = vector.extract_strided_slice %288 {offsets = [21, 20], sizes = [1, 160], strides = [1, 1]} : vector<64x200xf32> to vector<1x160xf32>
    %303 = vector.extract_strided_slice %288 {offsets = [22, 20], sizes = [1, 160], strides = [1, 1]} : vector<64x200xf32> to vector<1x160xf32>
    %304 = vector.extract_strided_slice %288 {offsets = [23, 20], sizes = [1, 160], strides = [1, 1]} : vector<64x200xf32> to vector<1x160xf32>
    %305 = vector.extract_strided_slice %288 {offsets = [24, 20], sizes = [1, 160], strides = [1, 1]} : vector<64x200xf32> to vector<1x160xf32>
    %306 = tpu.concatenate %298, %299, %300, %301, %302, %303, %304, %305 in 1 : vector<1x160xf32>, vector<1x160xf32>, vector<1x160xf32>, vector<1x160xf32>, vector<1x160xf32>, vector<1x160xf32>, vector<1x160xf32>, vector<1x160xf32> -> vector<1x1280xf32>
    %307 = vector.extract_strided_slice %288 {offsets = [33, 20], sizes = [1, 160], strides = [1, 1]} : vector<64x200xf32> to vector<1x160xf32>
    %308 = vector.extract_strided_slice %288 {offsets = [34, 20], sizes = [1, 160], strides = [1, 1]} : vector<64x200xf32> to vector<1x160xf32>
    %309 = vector.extract_strided_slice %288 {offsets = [35, 20], sizes = [1, 160], strides = [1, 1]} : vector<64x200xf32> to vector<1x160xf32>
    %310 = vector.extract_strided_slice %288 {offsets = [36, 20], sizes = [1, 160], strides = [1, 1]} : vector<64x200xf32> to vector<1x160xf32>
    %311 = vector.extract_strided_slice %288 {offsets = [37, 20], sizes = [1, 160], strides = [1, 1]} : vector<64x200xf32> to vector<1x160xf32>
    %312 = vector.extract_strided_slice %288 {offsets = [38, 20], sizes = [1, 160], strides = [1, 1]} : vector<64x200xf32> to vector<1x160xf32>
    %313 = vector.extract_strided_slice %288 {offsets = [39, 20], sizes = [1, 160], strides = [1, 1]} : vector<64x200xf32> to vector<1x160xf32>
    %314 = vector.extract_strided_slice %288 {offsets = [40, 20], sizes = [1, 160], strides = [1, 1]} : vector<64x200xf32> to vector<1x160xf32>
    %315 = tpu.concatenate %307, %308, %309, %310, %311, %312, %313, %314 in 1 : vector<1x160xf32>, vector<1x160xf32>, vector<1x160xf32>, vector<1x160xf32>, vector<1x160xf32>, vector<1x160xf32>, vector<1x160xf32>, vector<1x160xf32> -> vector<1x1280xf32>
    %316 = vector.extract_strided_slice %288 {offsets = [49, 20], sizes = [1, 160], strides = [1, 1]} : vector<64x200xf32> to vector<1x160xf32>
    %317 = vector.extract_strided_slice %288 {offsets = [50, 20], sizes = [1, 160], strides = [1, 1]} : vector<64x200xf32> to vector<1x160xf32>
    %318 = vector.extract_strided_slice %288 {offsets = [51, 20], sizes = [1, 160], strides = [1, 1]} : vector<64x200xf32> to vector<1x160xf32>
    %319 = vector.extract_strided_slice %288 {offsets = [52, 20], sizes = [1, 160], strides = [1, 1]} : vector<64x200xf32> to vector<1x160xf32>
    %320 = vector.extract_strided_slice %288 {offsets = [53, 20], sizes = [1, 160], strides = [1, 1]} : vector<64x200xf32> to vector<1x160xf32>
    %321 = vector.extract_strided_slice %288 {offsets = [54, 20], sizes = [1, 160], strides = [1, 1]} : vector<64x200xf32> to vector<1x160xf32>
    %322 = vector.extract_strided_slice %288 {offsets = [55, 20], sizes = [1, 160], strides = [1, 1]} : vector<64x200xf32> to vector<1x160xf32>
    %323 = vector.extract_strided_slice %288 {offsets = [56, 20], sizes = [1, 160], strides = [1, 1]} : vector<64x200xf32> to vector<1x160xf32>
    %324 = tpu.concatenate %316, %317, %318, %319, %320, %321, %322, %323 in 1 : vector<1x160xf32>, vector<1x160xf32>, vector<1x160xf32>, vector<1x160xf32>, vector<1x160xf32>, vector<1x160xf32>, vector<1x160xf32>, vector<1x160xf32> -> vector<1x1280xf32>
    %325 = tpu.concatenate %297, %306, %315, %324 in 0 : vector<1x1280xf32>, vector<1x1280xf32>, vector<1x1280xf32>, vector<1x1280xf32> -> vector<4x1280xf32>
    %326 = arith.truncf %325 : vector<4x1280xf32> to vector<4x1280xbf16>
    %c0_93 = arith.constant 0 : index
    %c0_94 = arith.constant 0 : index
    %327 = vector.load %arg15[%c0_93, %c0_94] : memref<1280x256xbf16, #tpu.memory_space<vmem>>, vector<1280x256xbf16>
    %cst_95 = arith.constant dense<0.000000e+00> : vector<4x256xf32>
    %328 = tpu.matmul %326, %327, %cst_95 {dimension_numbers = #tpu.dot_dimension_numbers<[1], [0], [0], [1], [0, 0, 1, 1], [], []>} : vector<4x1280xbf16>, vector<1280x256xbf16>, vector<4x256xf32> -> vector<4x256xf32>
    %c0_96 = arith.constant 0 : index
    %c0_97 = arith.constant 0 : index
    %329 = vector.load %arg16[%c0_96, %c0_97] : memref<1x256xf32, #tpu.memory_space<vmem>>, vector<1x256xf32>
    %330 = vector.broadcast %329 : vector<1x256xf32> to vector<4x256xf32>
    %331 = arith.addf %328, %330 : vector<4x256xf32>
    %cst_98 = arith.constant dense<0.000000e+00> : vector<256xf32>
    %332 = vector.multi_reduction <add>, %331, %cst_98 [0] : vector<4x256xf32> to vector<256xf32>
    %333 = vector.shape_cast %332 : vector<256xf32> to vector<1x256xf32>
    %cst_99 = arith.constant 4.000000e+00 : f32
    %334 = vector.broadcast %cst_99 : f32 to vector<1x256xf32>
    %335 = arith.divf %333, %334 : vector<1x256xf32>
    %336 = vector.broadcast %335 : vector<1x256xf32> to vector<4x256xf32>
    %337 = arith.subf %331, %336 : vector<4x256xf32>
    %338 = arith.mulf %337, %337 : vector<4x256xf32>
    %cst_100 = arith.constant dense<0.000000e+00> : vector<256xf32>
    %339 = vector.multi_reduction <add>, %338, %cst_100 [0] : vector<4x256xf32> to vector<256xf32>
    %340 = vector.shape_cast %339 : vector<256xf32> to vector<1x256xf32>
    %cst_101 = arith.constant 4.000000e+00 : f32
    %341 = vector.broadcast %cst_101 : f32 to vector<1x256xf32>
    %342 = arith.divf %340, %341 : vector<1x256xf32>
    %cst_102 = arith.constant 9.99999974E-6 : f32
    %343 = vector.broadcast %cst_102 : f32 to vector<1x256xf32>
    %344 = arith.addf %342, %343 : vector<1x256xf32>
    %345 = math.rsqrt %344 : vector<1x256xf32>
    %346 = vector.broadcast %345 : vector<1x256xf32> to vector<4x256xf32>
    %347 = arith.mulf %337, %346 : vector<4x256xf32>
    %c0_103 = arith.constant 0 : index
    %c0_104 = arith.constant 0 : index
    %348 = vector.load %arg17[%c0_103, %c0_104] : memref<1x256xf32, #tpu.memory_space<vmem>>, vector<1x256xf32>
    %349 = vector.broadcast %348 : vector<1x256xf32> to vector<4x256xf32>
    %350 = arith.mulf %347, %349 : vector<4x256xf32>
    %c0_105 = arith.constant 0 : index
    %c0_106 = arith.constant 0 : index
    %351 = vector.load %arg18[%c0_105, %c0_106] : memref<1x256xf32, #tpu.memory_space<vmem>>, vector<1x256xf32>
    %352 = vector.broadcast %351 : vector<1x256xf32> to vector<4x256xf32>
    %353 = arith.addf %350, %352 : vector<4x256xf32>
    %cst_107 = arith.constant 0.000000e+00 : f32
    %354 = vector.broadcast %cst_107 : f32 to vector<4x256xf32>
    %355 = arith.maximumf %353, %354 : vector<4x256xf32>
    %356 = arith.truncf %355 : vector<4x256xf32> to vector<4x256xbf16>
    %c0_108 = arith.constant 0 : index
    %c0_109 = arith.constant 0 : index
    %357 = vector.load %arg19[%c0_108, %c0_109] : memref<256x256xbf16, #tpu.memory_space<vmem>>, vector<256x256xbf16>
    %cst_110 = arith.constant dense<0.000000e+00> : vector<4x256xf32>
    %358 = tpu.matmul %356, %357, %cst_110 {dimension_numbers = #tpu.dot_dimension_numbers<[1], [0], [0], [1], [0, 0, 1, 1], [], []>} : vector<4x256xbf16>, vector<256x256xbf16>, vector<4x256xf32> -> vector<4x256xf32>
    %c0_111 = arith.constant 0 : index
    %c0_112 = arith.constant 0 : index
    %359 = vector.load %arg20[%c0_111, %c0_112] : memref<1x256xf32, #tpu.memory_space<vmem>>, vector<1x256xf32>
    %360 = vector.broadcast %359 : vector<1x256xf32> to vector<4x256xf32>
    %361 = arith.addf %358, %360 : vector<4x256xf32>
    %cst_113 = arith.constant dense<0.000000e+00> : vector<256xf32>
    %362 = vector.multi_reduction <add>, %361, %cst_113 [0] : vector<4x256xf32> to vector<256xf32>
    %363 = vector.shape_cast %362 : vector<256xf32> to vector<1x256xf32>
    %cst_114 = arith.constant 4.000000e+00 : f32
    %364 = vector.broadcast %cst_114 : f32 to vector<1x256xf32>
    %365 = arith.divf %363, %364 : vector<1x256xf32>
    %366 = vector.broadcast %365 : vector<1x256xf32> to vector<4x256xf32>
    %367 = arith.subf %361, %366 : vector<4x256xf32>
    %368 = arith.mulf %367, %367 : vector<4x256xf32>
    %cst_115 = arith.constant dense<0.000000e+00> : vector<256xf32>
    %369 = vector.multi_reduction <add>, %368, %cst_115 [0] : vector<4x256xf32> to vector<256xf32>
    %370 = vector.shape_cast %369 : vector<256xf32> to vector<1x256xf32>
    %cst_116 = arith.constant 4.000000e+00 : f32
    %371 = vector.broadcast %cst_116 : f32 to vector<1x256xf32>
    %372 = arith.divf %370, %371 : vector<1x256xf32>
    %cst_117 = arith.constant 9.99999974E-6 : f32
    %373 = vector.broadcast %cst_117 : f32 to vector<1x256xf32>
    %374 = arith.addf %372, %373 : vector<1x256xf32>
    %375 = math.rsqrt %374 : vector<1x256xf32>
    %376 = vector.broadcast %375 : vector<1x256xf32> to vector<4x256xf32>
    %377 = arith.mulf %367, %376 : vector<4x256xf32>
    %c0_118 = arith.constant 0 : index
    %c0_119 = arith.constant 0 : index
    %378 = vector.load %arg21[%c0_118, %c0_119] : memref<1x256xf32, #tpu.memory_space<vmem>>, vector<1x256xf32>
    %379 = vector.broadcast %378 : vector<1x256xf32> to vector<4x256xf32>
    %380 = arith.mulf %377, %379 : vector<4x256xf32>
    %c0_120 = arith.constant 0 : index
    %c0_121 = arith.constant 0 : index
    %381 = vector.load %arg22[%c0_120, %c0_121] : memref<1x256xf32, #tpu.memory_space<vmem>>, vector<1x256xf32>
    %382 = vector.broadcast %381 : vector<1x256xf32> to vector<4x256xf32>
    %383 = arith.addf %380, %382 : vector<4x256xf32>
    %cst_122 = arith.constant 0.000000e+00 : f32
    %384 = vector.broadcast %cst_122 : f32 to vector<4x256xf32>
    %385 = arith.maximumf %383, %384 : vector<4x256xf32>
    %386 = arith.truncf %385 : vector<4x256xf32> to vector<4x256xbf16>
    %c0_123 = arith.constant 0 : index
    %c0_124 = arith.constant 0 : index
    %387 = vector.load %arg23[%c0_123, %c0_124] : memref<256x256xbf16, #tpu.memory_space<vmem>>, vector<256x256xbf16>
    %cst_125 = arith.constant dense<0.000000e+00> : vector<4x256xf32>
    %388 = tpu.matmul %386, %387, %cst_125 {dimension_numbers = #tpu.dot_dimension_numbers<[1], [0], [0], [1], [0, 0, 1, 1], [], []>} : vector<4x256xbf16>, vector<256x256xbf16>, vector<4x256xf32> -> vector<4x256xf32>
    %c0_126 = arith.constant 0 : index
    %c0_127 = arith.constant 0 : index
    %389 = vector.load %arg24[%c0_126, %c0_127] : memref<1x256xf32, #tpu.memory_space<vmem>>, vector<1x256xf32>
    %390 = vector.broadcast %389 : vector<1x256xf32> to vector<4x256xf32>
    %391 = arith.addf %388, %390 : vector<4x256xf32>
    %cst_128 = arith.constant dense<0.000000e+00> : vector<256xf32>
    %392 = vector.multi_reduction <add>, %391, %cst_128 [0] : vector<4x256xf32> to vector<256xf32>
    %393 = vector.shape_cast %392 : vector<256xf32> to vector<1x256xf32>
    %cst_129 = arith.constant 4.000000e+00 : f32
    %394 = vector.broadcast %cst_129 : f32 to vector<1x256xf32>
    %395 = arith.divf %393, %394 : vector<1x256xf32>
    %396 = vector.broadcast %395 : vector<1x256xf32> to vector<4x256xf32>
    %397 = arith.subf %391, %396 : vector<4x256xf32>
    %398 = arith.mulf %397, %397 : vector<4x256xf32>
    %cst_130 = arith.constant dense<0.000000e+00> : vector<256xf32>
    %399 = vector.multi_reduction <add>, %398, %cst_130 [0] : vector<4x256xf32> to vector<256xf32>
    %400 = vector.shape_cast %399 : vector<256xf32> to vector<1x256xf32>
    %cst_131 = arith.constant 4.000000e+00 : f32
    %401 = vector.broadcast %cst_131 : f32 to vector<1x256xf32>
    %402 = arith.divf %400, %401 : vector<1x256xf32>
    %cst_132 = arith.constant 9.99999974E-6 : f32
    %403 = vector.broadcast %cst_132 : f32 to vector<1x256xf32>
    %404 = arith.addf %402, %403 : vector<1x256xf32>
    %405 = math.rsqrt %404 : vector<1x256xf32>
    %406 = vector.broadcast %405 : vector<1x256xf32> to vector<4x256xf32>
    %407 = arith.mulf %397, %406 : vector<4x256xf32>
    %c0_133 = arith.constant 0 : index
    %c0_134 = arith.constant 0 : index
    %408 = vector.load %arg25[%c0_133, %c0_134] : memref<1x256xf32, #tpu.memory_space<vmem>>, vector<1x256xf32>
    %409 = vector.broadcast %408 : vector<1x256xf32> to vector<4x256xf32>
    %410 = arith.mulf %407, %409 : vector<4x256xf32>
    %c0_135 = arith.constant 0 : index
    %c0_136 = arith.constant 0 : index
    %411 = vector.load %arg26[%c0_135, %c0_136] : memref<1x256xf32, #tpu.memory_space<vmem>>, vector<1x256xf32>
    %412 = vector.broadcast %411 : vector<1x256xf32> to vector<4x256xf32>
    %413 = arith.addf %410, %412 : vector<4x256xf32>
    %cst_137 = arith.constant 0.000000e+00 : f32
    %414 = vector.broadcast %cst_137 : f32 to vector<4x256xf32>
    %415 = arith.maximumf %413, %414 : vector<4x256xf32>
    %416 = arith.truncf %415 : vector<4x256xf32> to vector<4x256xbf16>
    %c0_138 = arith.constant 0 : index
    %c0_139 = arith.constant 0 : index
    %417 = vector.load %arg27[%c0_138, %c0_139] : memref<256x27xbf16, #tpu.memory_space<vmem>>, vector<256x27xbf16>
    %cst_140 = arith.constant dense<0.000000e+00> : vector<4x27xf32>
    %418 = tpu.matmul %416, %417, %cst_140 {dimension_numbers = #tpu.dot_dimension_numbers<[1], [0], [0], [1], [0, 0, 1, 1], [], []>} : vector<4x256xbf16>, vector<256x27xbf16>, vector<4x27xf32> -> vector<4x27xf32>
    %c0_141 = arith.constant 0 : index
    %c0_142 = arith.constant 0 : index
    %419 = vector.load %arg28[%c0_141, %c0_142] : memref<1x27xf32, #tpu.memory_space<vmem>>, vector<1x27xf32>
    %420 = vector.broadcast %419 : vector<1x27xf32> to vector<4x27xf32>
    %421 = arith.addf %418, %420 : vector<4x27xf32>
    %c0_143 = arith.constant 0 : index
    %c0_144 = arith.constant 0 : index
    %422 = vector.load %arg30[%c0_143, %c0_144] : memref<4x27xf32, #tpu.memory_space<vmem>>, vector<4x27xf32>
    tpu.vector_store %arg30[%c0_143, %c0_144], %421 {strides = array<i32>} : memref<4x27xf32, #tpu.memory_space<vmem>>, vector<4x27xf32>,
    %c0_145 = arith.constant 0 : index
    %c0_146 = arith.constant 0 : index
    %423 = vector.load %arg29[%c0_145, %c0_146] : memref<27x3xf32, #tpu.memory_space<vmem>>, vector<27x3xf32>
    %cst_147 = arith.constant dense<0.000000e+00> : vector<4x3xf32>
    %424 = tpu.matmul %421, %423, %cst_147 {dimension_numbers = #tpu.dot_dimension_numbers<[1], [0], [0], [1], [0, 0, 1, 1], [], []>} : vector<4x27xf32>, vector<27x3xf32>, vector<4x3xf32> -> vector<4x3xf32>
    %cst_148 = arith.constant dense<0xFF800000> : vector<4xf32>
    %425 = vector.multi_reduction <maximumf>, %424, %cst_148 [1] : vector<4x3xf32> to vector<4xf32>
    %426 = vector.shape_cast %425 : vector<4xf32> to vector<4x1xf32>
    %427 = vector.broadcast %426 : vector<4x1xf32> to vector<4x3xf32>
    %428 = arith.subf %424, %427 : vector<4x3xf32>
    %429 = math.exp %428 : vector<4x3xf32>
    %cst_149 = arith.constant dense<0.000000e+00> : vector<4xf32>
    %430 = vector.multi_reduction <add>, %429, %cst_149 [1] : vector<4x3xf32> to vector<4xf32>
    %431 = vector.shape_cast %430 : vector<4xf32> to vector<4x1xf32>
    %432 = math.log %431 : vector<4x1xf32>
    %433 = vector.broadcast %432 : vector<4x1xf32> to vector<4x3xf32>
    %434 = arith.subf %428, %433 : vector<4x3xf32>
    %c0_150 = arith.constant 0 : index
    %c0_151 = arith.constant 0 : index
    %435 = vector.load %arg31[%c0_150, %c0_151] : memref<4x3xf32, #tpu.memory_space<vmem>>, vector<4x3xf32>
    tpu.vector_store %arg31[%c0_150, %c0_151], %434 {strides = array<i32>} : memref<4x3xf32, #tpu.memory_space<vmem>>, vector<4x3xf32>,
    return
  }
}

</mosaic_0001>

<llo_original>
// kernel: star_encoder_forward.1
$region0: #{star_encoder_forward.1}
  #allocation0 [shape = 'u32[]', space=smem, size = 0x4, offset = 0x4, fixed_abs, tag = 'smem constant byte address 0x4 - core index']
  #allocation1 [shape = 'u32[144,128]{1,0:T(1,128)}', space=vmem, size = 0x12000, scoped, tag = 'internal scratch']
  #allocation2 [shape = 'f32[80,256]{1,0:T(8,128)}', space=vmem, size = 0x14000, scoped, tag = 'scratch operand']
  %s0 = inlined_call_operand.smem [shape: u32[32], index: -1, kind: input, shape index: {}]
  %s1 = sld [smem:[%s0]]
  %s2 = scalar_lea.smem %s0, 1
  %s3 = sld [smem:[%s2]]
  %s4 = scalar_lea.smem %s0, 2
  %s5 = sld [smem:[%s4]]
  %s6 = scalar_lea.smem %s0, 3
  %s7 = sld [smem:[%s6]]
  %s8 = scalar_lea.smem %s0, 4
  %s9 = sld [smem:[%s8]]
  %s10 = scalar_lea.smem %s0, 5
  %s11 = sld [smem:[%s10]]
  %s12 = scalar_lea.smem %s0, 6
  %s13 = sld [smem:[%s12]]
  %s14 = scalar_lea.smem %s0, 7
  %s15 = sld [smem:[%s14]]
  %s16 = scalar_lea.smem %s0, 8
  %s17 = sld [smem:[%s16]]
  %s18 = scalar_lea.smem %s0, 9
  %s19 = sld [smem:[%s18]]
  %s20 = scalar_lea.smem %s0, 10
  %s21 = sld [smem:[%s20]]
  %s22 = scalar_lea.smem %s0, 11
  %s23 = sld [smem:[%s22]]
  %s24 = scalar_lea.smem %s0, 12
  %s25 = sld [smem:[%s24]]
  %s26 = scalar_lea.smem %s0, 13
  %s27 = sld [smem:[%s26]]
  %s28 = scalar_lea.smem %s0, 14
  %s29 = sld [smem:[%s28]]
  %s30 = scalar_lea.smem %s0, 15
  %s31 = sld [smem:[%s30]]
  %s32 = scalar_lea.smem %s0, 16
  %s33 = sld [smem:[%s32]]
  %s34 = scalar_lea.smem %s0, 17
  %s35 = sld [smem:[%s34]]
  %s36 = scalar_lea.smem %s0, 18
  %s37 = sld [smem:[%s36]]
  %s38 = scalar_lea.smem %s0, 19
  %s39 = sld [smem:[%s38]]
  %s40 = scalar_lea.smem %s0, 20
  %s41 = sld [smem:[%s40]]
  %s42 = scalar_lea.smem %s0, 21
  %s43 = sld [smem:[%s42]]
  %s44 = scalar_lea.smem %s0, 22
  %s45 = sld [smem:[%s44]]
  %s46 = scalar_lea.smem %s0, 23
  %s47 = sld [smem:[%s46]]
  %s48 = scalar_lea.smem %s0, 24
  %s49 = sld [smem:[%s48]]
  %s50 = scalar_lea.smem %s0, 25
  %s51 = sld [smem:[%s50]]
  %s52 = scalar_lea.smem %s0, 26
  %s53 = sld [smem:[%s52]]
  %s54 = scalar_lea.smem %s0, 27
  %s55 = sld [smem:[%s54]]
  %s56 = scalar_lea.smem %s0, 28
  %s57 = sld [smem:[%s56]]
  %s58 = scalar_lea.smem %s0, 29
  %s59 = sld [smem:[%s58]]
  %s60 = scalar_lea.smem %s0, 30
  %s61 = sld [smem:[%s60]]
  %s62 = scalar_lea.smem %s0, 31
  %s63 = sld [smem:[%s62]]
  %64 = xla_tuple %s61, %s63
  %s65 = sld [smem:[#allocation0]]
  $region138: #{star_encoder_forward.1} parent=0
    _
  %s67 = ssub.s32 1, %s65
  %s68 = scalar_select 0, %s67, %s65
  // Predicated region
  $region2: #{star_encoder_forward.1} parent=0 // pred_check
    _
  $region3: #{star_encoder_forward.1} parent=0 // pred_check_branch
    %70 = sbr.rel (0) target = $region5
  $region4: #{star_encoder_forward.1} parent=0 // pred_region
    _
  $region5: #{star_encoder_forward.1} parent=0 // pred_fallthru
    _
  // Predicated region
  $region6: #{star_encoder_forward.1} parent=0 // pred_check
    _
  $region7: #{star_encoder_forward.1} parent=0 // pred_check_branch
    %72 = sbr.rel (0) target = $region9
  $region8: #{star_encoder_forward.1} parent=0 // pred_region
    _
  $region9: #{star_encoder_forward.1} parent=0 // pred_fallthru
    _
  // Predicated region
  $region10: #{star_encoder_forward.1} parent=0 // pred_check
    _
  $region11: #{star_encoder_forward.1} parent=0 // pred_check_branch
    %74 = sbr.rel (0) target = $region13
  $region12: #{star_encoder_forward.1} parent=0 // pred_region
    _
  $region13: #{star_encoder_forward.1} parent=0 // pred_fallthru
    _
  // Predicated region
  $region14: #{star_encoder_forward.1} parent=0 // pred_check
    _
  $region15: #{star_encoder_forward.1} parent=0 // pred_check_branch
    %76 = sbr.rel (0) target = $region17
  $region16: #{star_encoder_forward.1} parent=0 // pred_region
    _
  $region17: #{star_encoder_forward.1} parent=0 // pred_fallthru
    _
  // Predicated region
  $region18: #{star_encoder_forward.1} parent=0 // pred_check
    _
  $region19: #{star_encoder_forward.1} parent=0 // pred_check_branch
    %78 = sbr.rel (0) target = $region21
  $region20: #{star_encoder_forward.1} parent=0 // pred_region
    _
  $region21: #{star_encoder_forward.1} parent=0 // pred_fallthru
    _
  // Predicated region
  $region22: #{star_encoder_forward.1} parent=0 // pred_check
    _
  $region23: #{star_encoder_forward.1} parent=0 // pred_check_branch
    %80 = sbr.rel (0) target = $region25
  $region24: #{star_encoder_forward.1} parent=0 // pred_region
    _
  $region25: #{star_encoder_forward.1} parent=0 // pred_fallthru
    _
  // Predicated region
  $region26: #{star_encoder_forward.1} parent=0 // pred_check
    _
  $region27: #{star_encoder_forward.1} parent=0 // pred_check_branch
    %82 = sbr.rel (0) target = $region29
  $region28: #{star_encoder_forward.1} parent=0 // pred_region
    _
  $region29: #{star_encoder_forward.1} parent=0 // pred_fallthru
    _
  // Predicated region
  $region30: #{star_encoder_forward.1} parent=0 // pred_check
    _
  $region31: #{star_encoder_forward.1} parent=0 // pred_check_branch
    %84 = sbr.rel (0) target = $region33
  $region32: #{star_encoder_forward.1} parent=0 // pred_region
    _
  $region33: #{star_encoder_forward.1} parent=0 // pred_fallthru
    _
  // Predicated region
  $region34: #{star_encoder_forward.1} parent=0 // pred_check
    _
  $region35: #{star_encoder_forward.1} parent=0 // pred_check_branch
    %86 = sbr.rel (0) target = $region37
  $region36: #{star_encoder_forward.1} parent=0 // pred_region
    _
  $region37: #{star_encoder_forward.1} parent=0 // pred_fallthru
    _
  // Predicated region
  $region38: #{star_encoder_forward.1} parent=0 // pred_check
    _
  $region39: #{star_encoder_forward.1} parent=0 // pred_check_branch
    %88 = sbr.rel (0) target = $region41
  $region40: #{star_encoder_forward.1} parent=0 // pred_region
    _
  $region41: #{star_encoder_forward.1} parent=0 // pred_fallthru
    _
  // Predicated region
  $region42: #{star_encoder_forward.1} parent=0 // pred_check
    _
  $region43: #{star_encoder_forward.1} parent=0 // pred_check_branch
    %90 = sbr.rel (0) target = $region45
  $region44: #{star_encoder_forward.1} parent=0 // pred_region
    _
  $region45: #{star_encoder_forward.1} parent=0 // pred_fallthru
    _
  // Predicated region
  $region46: #{star_encoder_forward.1} parent=0 // pred_check
    _
  $region47: #{star_encoder_forward.1} parent=0 // pred_check_branch
    %92 = sbr.rel (0) target = $region49
  $region48: #{star_encoder_forward.1} parent=0 // pred_region
    _
  $region49: #{star_encoder_forward.1} parent=0 // pred_fallthru
    _
  // Predicated region
  $region50: #{star_encoder_forward.1} parent=0 // pred_check
    _
  $region51: #{star_encoder_forward.1} parent=0 // pred_check_branch
    %94 = sbr.rel (0) target = $region53
  $region52: #{star_encoder_forward.1} parent=0 // pred_region
    _
  $region53: #{star_encoder_forward.1} parent=0 // pred_fallthru
    _
  // Predicated region
  $region54: #{star_encoder_forward.1} parent=0 // pred_check
    _
  $region55: #{star_encoder_forward.1} parent=0 // pred_check_branch
    %96 = sbr.rel (0) target = $region57
  $region56: #{star_encoder_forward.1} parent=0 // pred_region
    _
  $region57: #{star_encoder_forward.1} parent=0 // pred_fallthru
    _
  // Predicated region
  $region58: #{star_encoder_forward.1} parent=0 // pred_check
    _
  $region59: #{star_encoder_forward.1} parent=0 // pred_check_branch
    %98 = sbr.rel (0) target = $region61
  $region60: #{star_encoder_forward.1} parent=0 // pred_region
    _
  $region61: #{star_encoder_forward.1} parent=0 // pred_fallthru
    _
  // Predicated region
  $region62: #{star_encoder_forward.1} parent=0 // pred_check
    _
  $region63: #{star_encoder_forward.1} parent=0 // pred_check_branch
    %100 = sbr.rel (0) target = $region65
  $region64: #{star_encoder_forward.1} parent=0 // pred_region
    _
  $region65: #{star_encoder_forward.1} parent=0 // pred_fallthru
    _
  // Predicated region
  $region66: #{star_encoder_forward.1} parent=0 // pred_check
    _
  $region67: #{star_encoder_forward.1} parent=0 // pred_check_branch
    %102 = sbr.rel (0) target = $region69
  $region68: #{star_encoder_forward.1} parent=0 // pred_region
    _
  $region69: #{star_encoder_forward.1} parent=0 // pred_fallthru
    _
  // Predicated region
  $region70: #{star_encoder_forward.1} parent=0 // pred_check
    _
  $region71: #{star_encoder_forward.1} parent=0 // pred_check_branch
    %104 = sbr.rel (0) target = $region73
  $region72: #{star_encoder_forward.1} parent=0 // pred_region
    _
  $region73: #{star_encoder_forward.1} parent=0 // pred_fallthru
    _
  // Predicated region
  $region74: #{star_encoder_forward.1} parent=0 // pred_check
    _
  $region75: #{star_encoder_forward.1} parent=0 // pred_check_branch
    %106 = sbr.rel (0) target = $region77
  $region76: #{star_encoder_forward.1} parent=0 // pred_region
    _
  $region77: #{star_encoder_forward.1} parent=0 // pred_fallthru
    _
  // Predicated region
  $region78: #{star_encoder_forward.1} parent=0 // pred_check
    _
  $region79: #{star_encoder_forward.1} parent=0 // pred_check_branch
    %108 = sbr.rel (0) target = $region81
  $region80: #{star_encoder_forward.1} parent=0 // pred_region
    _
  $region81: #{star_encoder_forward.1} parent=0 // pred_fallthru
    _
  // Predicated region
  $region82: #{star_encoder_forward.1} parent=0 // pred_check
    _
  $region83: #{star_encoder_forward.1} parent=0 // pred_check_branch
    %110 = sbr.rel (0) target = $region85
  $region84: #{star_encoder_forward.1} parent=0 // pred_region
    _
  $region85: #{star_encoder_forward.1} parent=0 // pred_fallthru
    _
  // Predicated region
  $region86: #{star_encoder_forward.1} parent=0 // pred_check
    _
  $region87: #{star_encoder_forward.1} parent=0 // pred_check_branch
    %112 = sbr.rel (0) target = $region89
  $region88: #{star_encoder_forward.1} parent=0 // pred_region
    _
  $region89: #{star_encoder_forward.1} parent=0 // pred_fallthru
    _
  // Predicated region
  $region90: #{star_encoder_forward.1} parent=0 // pred_check
    _
  $region91: #{star_encoder_forward.1} parent=0 // pred_check_branch
    %114 = sbr.rel (0) target = $region93
  $region92: #{star_encoder_forward.1} parent=0 // pred_region
    _
  $region93: #{star_encoder_forward.1} parent=0 // pred_fallthru
    _
  // Predicated region
  $region94: #{star_encoder_forward.1} parent=0 // pred_check
    _
  $region95: #{star_encoder_forward.1} parent=0 // pred_check_branch
    %116 = sbr.rel (0) target = $region97
  $region96: #{star_encoder_forward.1} parent=0 // pred_region
    _
  $region97: #{star_encoder_forward.1} parent=0 // pred_fallthru
    _
  // Predicated region
  $region98: #{star_encoder_forward.1} parent=0 // pred_check
    _
  $region99: #{star_encoder_forward.1} parent=0 // pred_check_branch
    %118 = sbr.rel (0) target = $region101
  $region100: #{star_encoder_forward.1} parent=0 // pred_region
    _
  $region101: #{star_encoder_forward.1} parent=0 // pred_fallthru
    _
  // Predicated region
  $region102: #{star_encoder_forward.1} parent=0 // pred_check
    _
  $region103: #{star_encoder_forward.1} parent=0 // pred_check_branch
    %120 = sbr.rel (0) target = $region105
  $region104: #{star_encoder_forward.1} parent=0 // pred_region
    _
  $region105: #{star_encoder_forward.1} parent=0 // pred_fallthru
    _
  // Predicated region
  $region106: #{star_encoder_forward.1} parent=0 // pred_check
    _
  $region107: #{star_encoder_forward.1} parent=0 // pred_check_branch
    %122 = sbr.rel (0) target = $region109
  $region108: #{star_encoder_forward.1} parent=0 // pred_region
    _
  $region109: #{star_encoder_forward.1} parent=0 // pred_fallthru
    _
  // Predicated region
  $region110: #{star_encoder_forward.1} parent=0 // pred_check
    _
  $region111: #{star_encoder_forward.1} parent=0 // pred_check_branch
    %124 = sbr.rel (0) target = $region113
  $region112: #{star_encoder_forward.1} parent=0 // pred_region
    _
  $region113: #{star_encoder_forward.1} parent=0 // pred_fallthru
    _
  // Predicated region
  $region114: #{star_encoder_forward.1} parent=0 // pred_check
    _
  $region115: #{star_encoder_forward.1} parent=0 // pred_check_branch
    %126 = sbr.rel (0) target = $region117
  $region116: #{star_encoder_forward.1} parent=0 // pred_region
    _
  $region117: #{star_encoder_forward.1} parent=0 // pred_fallthru
    _
  // Predicated region
  $region118: #{star_encoder_forward.1} parent=0 // pred_check
    _
  $region119: #{star_encoder_forward.1} parent=0 // pred_check_branch
    %128 = sbr.rel (0) target = $region121
  $region120: #{star_encoder_forward.1} parent=0 // pred_region
    _
  $region121: #{star_encoder_forward.1} parent=0 // pred_fallthru
    _
  %v130 = vlaneseq
  %v131 = vshrl.u32 %v130, 7
  %v132 = vadd.s32 %v131, 8
  %v133 = vadd.s32 %v131, 16
  %v134 = vadd.s32 %v131, 24
  %v135 = vadd.s32 %v131, 32
  %v136 = vadd.s32 %v131, 40
  %v137 = vadd.s32 %v131, 48
  %v138 = vadd.s32 %v131, 56
  %vm139 = vcmp.lt.s32.totalorder %v131, 0
  %v140 = vsub.s32 0, %v131
  %v141 = vsel %vm139, %v140, %v131
  %v142 = vshrl.u32 %v141, 4
  %v143 = vand.u32 %v141, 15
  %v144 = vsub.s32 0, %v143
  %v145 = vsel %vm139, %v144, %v143
  %vm146 = vcmp.lt.s32.totalorder %v132, 0
  %v147 = vsub.s32 0, %v132
  %v148 = vsel %vm146, %v147, %v132
  %v149 = vshrl.u32 %v148, 4
  %v150 = vand.u32 %v148, 15
  %v151 = vsub.s32 0, %v150
  %v152 = vsel %vm146, %v151, %v150
  %vm153 = vcmp.lt.s32.totalorder %v133, 0
  %v154 = vsub.s32 0, %v133
  %v155 = vsel %vm153, %v154, %v133
  %v156 = vshrl.u32 %v155, 4
  %v157 = vand.u32 %v155, 15
  %v158 = vsub.s32 0, %v157
  %v159 = vsel %vm153, %v158, %v157
  %vm160 = vcmp.lt.s32.totalorder %v134, 0
  %v161 = vsub.s32 0, %v134
  %v162 = vsel %vm160, %v161, %v134
  %v163 = vshrl.u32 %v162, 4
  %v164 = vand.u32 %v162, 15
  %v165 = vsub.s32 0, %v164
  %v166 = vsel %vm160, %v165, %v164
  %vm167 = vcmp.lt.s32.totalorder %v135, 0
  %v168 = vsub.s32 0, %v135
  %v169 = vsel %vm167, %v168, %v135
  %v170 = vshrl.u32 %v169, 4
  %v171 = vand.u32 %v169, 15
  %v172 = vsub.s32 0, %v171
  %v173 = vsel %vm167, %v172, %v171
  %vm174 = vcmp.lt.s32.totalorder %v136, 0
  %v175 = vsub.s32 0, %v136
  %v176 = vsel %vm174, %v175, %v136
  %v177 = vshrl.u32 %v176, 4
  %v178 = vand.u32 %v176, 15
  %v179 = vsub.s32 0, %v178
  %v180 = vsel %vm174, %v179, %v178
  %vm181 = vcmp.lt.s32.totalorder %v137, 0
  %v182 = vsub.s32 0, %v137
  %v183 = vsel %vm181, %v182, %v137
  %v184 = vshrl.u32 %v183, 4
  %v185 = vand.u32 %v183, 15
  %v186 = vsub.s32 0, %v185
  %v187 = vsel %vm181, %v186, %v185
  %vm188 = vcmp.lt.s32.totalorder %v138, 0
  %v189 = vsub.s32 0, %v138
  %v190 = vsel %vm188, %v189, %v138
  %v191 = vshrl.u32 %v190, 4
  %v192 = vand.u32 %v190, 15
  %v193 = vsub.s32 0, %v192
  %v194 = vsel %vm188, %v193, %v192
  %vm195 = vcmp.ne.s32.totalorder %v145, 0
  %vm196 = vcmp.ne.s32.totalorder %v152, 0
  %vm197 = vcmp.ne.s32.totalorder %v159, 0
  %vm198 = vcmp.ne.s32.totalorder %v166, 0
  %vm199 = vcmp.ne.s32.totalorder %v173, 0
  %vm200 = vcmp.ne.s32.totalorder %v180, 0
  %vm201 = vcmp.ne.s32.totalorder %v187, 0
  %vm202 = vcmp.ne.s32.totalorder %v194, 0
  %vm203 = vcmp.lt.s32.totalorder %v145, 0
  %vm204 = vcmp.lt.s32.totalorder %v152, 0
  %vm205 = vcmp.lt.s32.totalorder %v159, 0
  %vm206 = vcmp.lt.s32.totalorder %v166, 0
  %vm207 = vcmp.lt.s32.totalorder %v173, 0
  %vm208 = vcmp.lt.s32.totalorder %v180, 0
  %vm209 = vcmp.lt.s32.totalorder %v187, 0
  %vm210 = vcmp.lt.s32.totalorder %v194, 0
  %vm211 = vmand %vm203, %vm195
  %vm212 = vmand %vm204, %vm196
  %vm213 = vmand %vm205, %vm197
  %vm214 = vmand %vm206, %vm198
  %vm215 = vmand %vm207, %vm199
  %vm216 = vmand %vm208, %vm200
  %vm217 = vmand %vm209, %vm201
  %vm218 = vmand %vm210, %vm202
  %v219 = vadd.s32 %v145, 16
  %v220 = vadd.s32 %v152, 16
  %v221 = vadd.s32 %v159, 16
  %v222 = vadd.s32 %v166, 16
  %v223 = vadd.s32 %v173, 16
  %v224 = vadd.s32 %v180, 16
  %v225 = vadd.s32 %v187, 16
  %v226 = vadd.s32 %v194, 16
  %v227 = vsel %vm211, %v219, %v145
  %v228 = vsel %vm212, %v220, %v152
  %v229 = vsel %vm213, %v221, %v159
  %v230 = vsel %vm214, %v222, %v166
  %v231 = vsel %vm215, %v223, %v173
  %v232 = vsel %vm216, %v224, %v180
  %v233 = vsel %vm217, %v225, %v187
  %v234 = vsel %vm218, %v226, %v194
  %vm235 = vcmp.ge.s32.totalorder %v227, 1
  %vm236 = vcmp.ge.s32.totalorder %v228, 1
  %vm237 = vcmp.ge.s32.totalorder %v229, 1
  %vm238 = vcmp.ge.s32.totalorder %v230, 1
  %vm239 = vcmp.ge.s32.totalorder %v231, 1
  %vm240 = vcmp.ge.s32.totalorder %v232, 1
  %vm241 = vcmp.ge.s32.totalorder %v233, 1
  %vm242 = vcmp.ge.s32.totalorder %v234, 1
  %vm243 = vcmp.le.s32.totalorder %v227, 8
  %vm244 = vcmp.le.s32.totalorder %v228, 8
  %vm245 = vcmp.le.s32.totalorder %v229, 8
  %vm246 = vcmp.le.s32.totalorder %v230, 8
  %vm247 = vcmp.le.s32.totalorder %v231, 8
  %vm248 = vcmp.le.s32.totalorder %v232, 8
  %vm249 = vcmp.le.s32.totalorder %v233, 8
  %vm250 = vcmp.le.s32.totalorder %v234, 8
  %vm251 = vmand %vm235, %vm243
  %vm252 = vmand %vm236, %vm244
  %vm253 = vmand %vm237, %vm245
  %vm254 = vmand %vm238, %vm246
  %vm255 = vmand %vm239, %vm247
  %vm256 = vmand %vm240, %vm248
  %vm257 = vmand %vm241, %vm249
  %vm258 = vmand %vm242, %vm250
  %v259 = vlaneseq
  %v260 = vand.u32 %v259, 127
  %v261 = vadd.s32 %v260, 128
  %vm262 = vcmp.ge.s32.totalorder %v260, 20
  %vm263 = vcmp.ge.s32.totalorder %v261, 20
  %vm264 = vcmp.lt.s32.totalorder %v260, 180
  %vm265 = vcmp.lt.s32.totalorder %v261, 180
  %vm266 = vmand %vm262, %vm264
  %vm267 = vmand %vm263, %vm265
  %v268 = vsel %vm251, 1, 0
  %v269 = vsel %vm252, 1, 0
  %v270 = vsel %vm253, 1, 0
  %v271 = vsel %vm254, 1, 0
  %v272 = vsel %vm255, 1, 0
  %v273 = vsel %vm256, 1, 0
  %v274 = vsel %vm257, 1, 0
  %v275 = vsel %vm258, 1, 0
  %vm276 = vcmp.eq.s32.totalorder %v268, 1
  %vm277 = vcmp.eq.s32.totalorder %v269, 1
  %vm278 = vcmp.eq.s32.totalorder %v270, 1
  %vm279 = vcmp.eq.s32.totalorder %v271, 1
  %vm280 = vcmp.eq.s32.totalorder %v272, 1
  %vm281 = vcmp.eq.s32.totalorder %v273, 1
  %vm282 = vcmp.eq.s32.totalorder %v274, 1
  %vm283 = vcmp.eq.s32.totalorder %v275, 1
  %v284 = vsel %vm266, 1, 0
  %v285 = vsel %vm267, 1, 0
  %vm286 = vcmp.eq.s32.totalorder %v284, 1
  %vm287 = vcmp.eq.s32.totalorder %v285, 1
  %vm288 = vmand %vm276, %vm286
  %vm289 = vmand %vm276, %vm287
  %vm290 = vmand %vm277, %vm286
  %vm291 = vmand %vm277, %vm287
  %vm292 = vmand %vm278, %vm286
  %vm293 = vmand %vm278, %vm287
  %vm294 = vmand %vm279, %vm286
  %vm295 = vmand %vm279, %vm287
  %vm296 = vmand %vm280, %vm286
  %vm297 = vmand %vm280, %vm287
  %vm298 = vmand %vm281, %vm286
  %vm299 = vmand %vm281, %vm287
  %vm300 = vmand %vm282, %vm286
  %vm301 = vmand %vm282, %vm287
  %vm302 = vmand %vm283, %vm286
  %vm303 = vmand %vm283, %vm287
  %v304 = vsel %vm288, 1, 0
  %v305 = vsel %vm289, 1, 0
  %v306 = vsel %vm290, 1, 0
  %v307 = vsel %vm291, 1, 0
  %v308 = vsel %vm292, 1, 0
  %v309 = vsel %vm293, 1, 0
  %v310 = vsel %vm294, 1, 0
  %v311 = vsel %vm295, 1, 0
  %v312 = vsel %vm296, 1, 0
  %v313 = vsel %vm297, 1, 0
  %v314 = vsel %vm298, 1, 0
  %v315 = vsel %vm299, 1, 0
  %v316 = vsel %vm300, 1, 0
  %v317 = vsel %vm301, 1, 0
  %v318 = vsel %vm302, 1, 0
  %v319 = vsel %vm303, 1, 0
  %v320 = vcvt.s32.f32 %v304
  %v321 = vcvt.s32.f32 %v305
  %v322 = vcvt.s32.f32 %v306
  %v323 = vcvt.s32.f32 %v307
  %v324 = vcvt.s32.f32 %v308
  %v325 = vcvt.s32.f32 %v309
  %v326 = vcvt.s32.f32 %v310
  %v327 = vcvt.s32.f32 %v311
  %v328 = vcvt.s32.f32 %v312
  %v329 = vcvt.s32.f32 %v313
  %v330 = vcvt.s32.f32 %v314
  %v331 = vcvt.s32.f32 %v315
  %v332 = vcvt.s32.f32 %v316
  %v333 = vcvt.s32.f32 %v317
  %v334 = vcvt.s32.f32 %v318
  %v335 = vcvt.s32.f32 %v319
  %v336 = vadd.s32 %v131, 64
  %v337 = vadd.s32 %v131, 72
  %v338 = vadd.s32 %v132, 8
  %v339 = vadd.s32 %v133, 8
  %v340 = vadd.s32 %v134, 8
  %v341 = vadd.s32 %v135, 8
  %v342 = vadd.s32 %v136, 8
  %v343 = vadd.s32 %v137, 8
  %v344 = vadd.s32 %v138, 8
  %v345 = vadd.s32 %v336, 8
  %v346 = vadd.s32 %v337, 8
  %vm347 = vcmp.lt.s32.totalorder %v338, 0
  %v348 = vsub.s32 0, %v338
  %v349 = vsel %vm347, %v348, %v338
  %v350 = vshrl.u32 %v349, 4
  %v351 = vand.u32 %v349, 15
  %v352 = vsub.s32 0, %v351
  %v353 = vsel %vm347, %v352, %v351
  %vm354 = vcmp.lt.s32.totalorder %v339, 0
  %v355 = vsub.s32 0, %v339
  %v356 = vsel %vm354, %v355, %v339
  %v357 = vshrl.u32 %v356, 4
  %v358 = vand.u32 %v356, 15
  %v359 = vsub.s32 0, %v358
  %v360 = vsel %vm354, %v359, %v358
  %vm361 = vcmp.lt.s32.totalorder %v340, 0
  %v362 = vsub.s32 0, %v340
  %v363 = vsel %vm361, %v362, %v340
  %v364 = vshrl.u32 %v363, 4
  %v365 = vand.u32 %v363, 15
  %v366 = vsub.s32 0, %v365
  %v367 = vsel %vm361, %v366, %v365
  %vm368 = vcmp.lt.s32.totalorder %v341, 0
  %v369 = vsub.s32 0, %v341
  %v370 = vsel %vm368, %v369, %v341
  %v371 = vshrl.u32 %v370, 4
  %v372 = vand.u32 %v370, 15
  %v373 = vsub.s32 0, %v372
  %v374 = vsel %vm368, %v373, %v372
  %vm375 = vcmp.lt.s32.totalorder %v342, 0
  %v376 = vsub.s32 0, %v342
  %v377 = vsel %vm375, %v376, %v342
  %v378 = vshrl.u32 %v377, 4
  %v379 = vand.u32 %v377, 15
  %v380 = vsub.s32 0, %v379
  %v381 = vsel %vm375, %v380, %v379
  %vm382 = vcmp.lt.s32.totalorder %v343, 0
  %v383 = vsub.s32 0, %v343
  %v384 = vsel %vm382, %v383, %v343
  %v385 = vshrl.u32 %v384, 4
  %v386 = vand.u32 %v384, 15
  %v387 = vsub.s32 0, %v386
  %v388 = vsel %vm382, %v387, %v386
  %vm389 = vcmp.lt.s32.totalorder %v344, 0
  %v390 = vsub.s32 0, %v344
  %v391 = vsel %vm389, %v390, %v344
  %v392 = vshrl.u32 %v391, 4
  %v393 = vand.u32 %v391, 15
  %v394 = vsub.s32 0, %v393
  %v395 = vsel %vm389, %v394, %v393
  %vm396 = vcmp.lt.s32.totalorder %v345, 0
  %v397 = vsub.s32 0, %v345
  %v398 = vsel %vm396, %v397, %v345
  %v399 = vshrl.u32 %v398, 4
  %v400 = vand.u32 %v398, 15
  %v401 = vsub.s32 0, %v400
  %v402 = vsel %vm396, %v401, %v400
  %vm403 = vcmp.lt.s32.totalorder %v346, 0
  %v404 = vsub.s32 0, %v346
  %v405 = vsel %vm403, %v404, %v346
  %v406 = vshrl.u32 %v405, 4
  %v407 = vand.u32 %v405, 15
  %v408 = vsub.s32 0, %v407
  %v409 = vsel %vm403, %v408, %v407
  %vm410 = vcmp.ne.s32.totalorder %v353, 0
  %vm411 = vcmp.ne.s32.totalorder %v360, 0
  %vm412 = vcmp.ne.s32.totalorder %v367, 0
  %vm413 = vcmp.ne.s32.totalorder %v374, 0
  %vm414 = vcmp.ne.s32.totalorder %v381, 0
  %vm415 = vcmp.ne.s32.totalorder %v388, 0
  %vm416 = vcmp.ne.s32.totalorder %v395, 0
  %vm417 = vcmp.ne.s32.totalorder %v402, 0
  %vm418 = vcmp.ne.s32.totalorder %v409, 0
  %vm419 = vcmp.lt.s32.totalorder %v353, 0
  %vm420 = vcmp.lt.s32.totalorder %v360, 0
  %vm421 = vcmp.lt.s32.totalorder %v367, 0
  %vm422 = vcmp.lt.s32.totalorder %v374, 0
  %vm423 = vcmp.lt.s32.totalorder %v381, 0
  %vm424 = vcmp.lt.s32.totalorder %v388, 0
  %vm425 = vcmp.lt.s32.totalorder %v395, 0
  %vm426 = vcmp.lt.s32.totalorder %v402, 0
  %vm427 = vcmp.lt.s32.totalorder %v409, 0
  %vm428 = vmand %vm419, %vm410
  %vm429 = vmand %vm420, %vm411
  %vm430 = vmand %vm421, %vm412
  %vm431 = vmand %vm422, %vm413
  %vm432 = vmand %vm423, %vm414
  %vm433 = vmand %vm424, %vm415
  %vm434 = vmand %vm425, %vm416
  %vm435 = vmand %vm426, %vm417
  %vm436 = vmand %vm427, %vm418
  %v437 = vadd.s32 %v353, 16
  %v438 = vadd.s32 %v360, 16
  %v439 = vadd.s32 %v367, 16
  %v440 = vadd.s32 %v374, 16
  %v441 = vadd.s32 %v381, 16
  %v442 = vadd.s32 %v388, 16
  %v443 = vadd.s32 %v395, 16
  %v444 = vadd.s32 %v402, 16
  %v445 = vadd.s32 %v409, 16
  %v446 = vsel %vm428, %v437, %v353
  %v447 = vsel %vm429, %v438, %v360
  %v448 = vsel %vm430, %v439, %v367
  %v449 = vsel %vm431, %v440, %v374
  %v450 = vsel %vm432, %v441, %v381
  %v451 = vsel %vm433, %v442, %v388
  %v452 = vsel %vm434, %v443, %v395
  %v453 = vsel %vm435, %v444, %v402
  %v454 = vsel %vm436, %v445, %v409
  %vm455 = vcmp.ge.s32.totalorder %v131, 8
  %vm456 = vcmp.ge.s32.totalorder %v132, 8
  %vm457 = vcmp.ge.s32.totalorder %v133, 8
  %vm458 = vcmp.ge.s32.totalorder %v134, 8
  %vm459 = vcmp.ge.s32.totalorder %v135, 8
  %vm460 = vcmp.ge.s32.totalorder %v136, 8
  %vm461 = vcmp.ge.s32.totalorder %v137, 8
  %vm462 = vcmp.ge.s32.totalorder %v138, 8
  %vm463 = vcmp.ge.s32.totalorder %v336, 8
  %vm464 = vcmp.ge.s32.totalorder %v337, 8
  %vm465 = vcmp.lt.s32.totalorder %v131, 72
  %vm466 = vcmp.lt.s32.totalorder %v132, 72
  %vm467 = vcmp.lt.s32.totalorder %v133, 72
  %vm468 = vcmp.lt.s32.totalorder %v134, 72
  %vm469 = vcmp.lt.s32.totalorder %v135, 72
  %vm470 = vcmp.lt.s32.totalorder %v136, 72
  %vm471 = vcmp.lt.s32.totalorder %v137, 72
  %vm472 = vcmp.lt.s32.totalorder %v138, 72
  %vm473 = vcmp.lt.s32.totalorder %v336, 72
  %vm474 = vcmp.lt.s32.totalorder %v337, 72
  %vm475 = vmand %vm455, %vm465
  %vm476 = vmand %vm456, %vm466
  %vm477 = vmand %vm457, %vm467
  %vm478 = vmand %vm458, %vm468
  %vm479 = vmand %vm459, %vm469
  %vm480 = vmand %vm460, %vm470
  %vm481 = vmand %vm461, %vm471
  %vm482 = vmand %vm462, %vm472
  %vm483 = vmand %vm463, %vm473
  %vm484 = vmand %vm464, %vm474
  %vm485 = vcmp.ge.s32.totalorder %v446, 1
  %vm486 = vcmp.ge.s32.totalorder %v447, 1
  %vm487 = vcmp.ge.s32.totalorder %v448, 1
  %vm488 = vcmp.ge.s32.totalorder %v449, 1
  %vm489 = vcmp.ge.s32.totalorder %v450, 1
  %vm490 = vcmp.ge.s32.totalorder %v451, 1
  %vm491 = vcmp.ge.s32.totalorder %v452, 1
  %vm492 = vcmp.ge.s32.totalorder %v453, 1
  %vm493 = vcmp.ge.s32.totalorder %v454, 1
  %vm494 = vcmp.le.s32.totalorder %v446, 8
  %vm495 = vcmp.le.s32.totalorder %v447, 8
  %vm496 = vcmp.le.s32.totalorder %v448, 8
  %vm497 = vcmp.le.s32.totalorder %v449, 8
  %vm498 = vcmp.le.s32.totalorder %v450, 8
  %vm499 = vcmp.le.s32.totalorder %v451, 8
  %vm500 = vcmp.le.s32.totalorder %v452, 8
  %vm501 = vcmp.le.s32.totalorder %v453, 8
  %vm502 = vcmp.le.s32.totalorder %v454, 8
  %vm503 = vmand %vm485, %vm494
  %vm504 = vmand %vm486, %vm495
  %vm505 = vmand %vm487, %vm496
  %vm506 = vmand %vm488, %vm497
  %vm507 = vmand %vm489, %vm498
  %vm508 = vmand %vm490, %vm499
  %vm509 = vmand %vm491, %vm500
  %vm510 = vmand %vm492, %vm501
  %vm511 = vmand %vm493, %vm502
  %vm512 = vmand %vm475, %vm252
  %vm513 = vmand %vm476, %vm503
  %vm514 = vmand %vm477, %vm504
  %vm515 = vmand %vm478, %vm505
  %vm516 = vmand %vm479, %vm506
  %vm517 = vmand %vm480, %vm507
  %vm518 = vmand %vm481, %vm508
  %vm519 = vmand %vm482, %vm509
  %vm520 = vmand %vm483, %vm510
  %vm521 = vmand %vm484, %vm511
  %vm522 = vcmp.ge.s32.totalorder %v260, 4
  %vm523 = vcmp.lt.s32.totalorder %v260, 20
  %vm524 = vmand %vm522, %vm523
  %v525 = vsel %vm512, 1, 0
  %v526 = vsel %vm513, 1, 0
  %v527 = vsel %vm514, 1, 0
  %v528 = vsel %vm515, 1, 0
  %v529 = vsel %vm516, 1, 0
  %v530 = vsel %vm517, 1, 0
  %v531 = vsel %vm518, 1, 0
  %v532 = vsel %vm519, 1, 0
  %v533 = vsel %vm520, 1, 0
  %v534 = vsel %vm521, 1, 0
  %vm535 = vcmp.eq.s32.totalorder %v525, 1
  %vm536 = vcmp.eq.s32.totalorder %v526, 1
  %vm537 = vcmp.eq.s32.totalorder %v527, 1
  %vm538 = vcmp.eq.s32.totalorder %v528, 1
  %vm539 = vcmp.eq.s32.totalorder %v529, 1
  %vm540 = vcmp.eq.s32.totalorder %v530, 1
  %vm541 = vcmp.eq.s32.totalorder %v531, 1
  %vm542 = vcmp.eq.s32.totalorder %v532, 1
  %vm543 = vcmp.eq.s32.totalorder %v533, 1
  %vm544 = vcmp.eq.s32.totalorder %v534, 1
  %v545 = vsel %vm524, 1, 0
  %vm546 = vcmp.eq.s32.totalorder %v545, 1
  %vm547 = vmand %vm535, %vm546
  %vm548 = vmand %vm536, %vm546
  %vm549 = vmand %vm537, %vm546
  %vm550 = vmand %vm538, %vm546
  %vm551 = vmand %vm539, %vm546
  %vm552 = vmand %vm540, %vm546
  %vm553 = vmand %vm541, %vm546
  %vm554 = vmand %vm542, %vm546
  %vm555 = vmand %vm543, %vm546
  %vm556 = vmand %vm544, %vm546
  %557 = vst [vmem:[#allocation2] sm:$0xff] 0.0
  %558 = vst [vmem:[#allocation2 + $0x8] sm:$0xff] 0.0
  %559 = vst [vmem:[#allocation2 + $0x90] sm:$0xff] 0.0
  %560 = vst [vmem:[#allocation2 + $0x98] sm:$0xff] 0.0
  %vm561 = vcmask 162816
  %562 = vst.msk [vmem:[#allocation2 + $0x10] sm:$0xff] %vm561, 0.0
  %563 = vst.msk [vmem:[#allocation2 + $0x20] sm:$0xff] %vm561, 0.0
  %564 = vst.msk [vmem:[#allocation2 + $0x30] sm:$0xff] %vm561, 0.0
  %565 = vst.msk [vmem:[#allocation2 + $0x40] sm:$0xff] %vm561, 0.0
  %566 = vst.msk [vmem:[#allocation2 + $0x50] sm:$0xff] %vm561, 0.0
  %567 = vst.msk [vmem:[#allocation2 + $0x60] sm:$0xff] %vm561, 0.0
  %568 = vst.msk [vmem:[#allocation2 + $0x70] sm:$0xff] %vm561, 0.0
  %569 = vst.msk [vmem:[#allocation2 + $0x80] sm:$0xff] %vm561, 0.0
  %vm570 = vcmask 1048288
  %571 = vst.msk [vmem:[#allocation2 + $0x18] sm:$0xff] %vm570, 0.0
  %572 = vst.msk [vmem:[#allocation2 + $0x28] sm:$0xff] %vm570, 0.0
  %573 = vst.msk [vmem:[#allocation2 + $0x38] sm:$0xff] %vm570, 0.0
  %574 = vst.msk [vmem:[#allocation2 + $0x48] sm:$0xff] %vm570, 0.0
  %575 = vst.msk [vmem:[#allocation2 + $0x58] sm:$0xff] %vm570, 0.0
  %576 = vst.msk [vmem:[#allocation2 + $0x68] sm:$0xff] %vm570, 0.0
  %577 = vst.msk [vmem:[#allocation2 + $0x78] sm:$0xff] %vm570, 0.0
  %578 = vst.msk [vmem:[#allocation2 + $0x88] sm:$0xff] %vm570, 0.0
  %v579 = vld [vmem:[%s1] sm:$0xff]
  %v580 = vld [vmem:[%s1 + $0x8] sm:$0xff]
  %v581 = vld [vmem:[%s1 + $0x10] sm:$0xff]
  %v582 = vld [vmem:[%s1 + $0x18] sm:$0xff]
  %v583 = vld [vmem:[%s1 + $0x20] sm:$0xff]
  %v584 = vld [vmem:[%s1 + $0x28] sm:$0xff]
  %v585 = vld [vmem:[%s1 + $0x30] sm:$0xff]
  %v586 = vld [vmem:[%s1 + $0x38] sm:$0xff]
  %v587 = vld [vmem:[%s1 + $0x40] sm:$0xff]
  %v588 = vld [vmem:[%s1 + $0x48] sm:$0xff]
  %v589 = vsel %vm547, %v579, inf
  %v590 = vsel %vm548, %v580, inf
  %v591 = vsel %vm549, %v581, inf
  %v592 = vsel %vm550, %v582, inf
  %v593 = vsel %vm551, %v583, inf
  %v594 = vsel %vm552, %v584, inf
  %v595 = vsel %vm553, %v585, inf
  %v596 = vsel %vm554, %v586, inf
  %v597 = vsel %vm555, %v587, inf
  %v598 = vsel %vm556, %v588, inf
  %vm599 = vcmask 261120
  %v600 = vsel %vm599, %v589, inf
  %v601 = vsel %vm599, %v590, inf
  %v602 = vsel %vm599, %v591, inf
  %v603 = vsel %vm599, %v592, inf
  %v604 = vsel %vm599, %v593, inf
  %v605 = vmin.f32 %v600, %v604
  %v606 = vsel %vm599, %v594, inf
  %v607 = vmin.f32 %v601, %v606
  %v608 = vsel %vm599, %v595, inf
  %v609 = vmin.f32 %v602, %v608
  %v610 = vsel %vm599, %v596, inf
  %v611 = vmin.f32 %v603, %v610
  %v612 = vsel %vm599, %v597, inf
  %v613 = vmin.f32 %v605, %v612
  %v614 = vsel %vm599, %v598, inf
  %v615 = vmin.f32 %v607, %v614
  %v616 = vmin.f32 %v613, %v615
  %v617 = vmin.f32 %v609, %v611
  %v618 = vmin.f32 %v616, %v617
  %619 = vmin.xlane.f32.xlu0 %v618
  %v620 = vpop.xlane.xlu0 %619
  %v621 = vrot.slane %v620, 4
  %v622 = vmin.f32 %v620, %v621
  %v623 = vrot.slane %v622, 2
  %v624 = vmin.f32 %v622, %v623
  %v625 = vrot.slane %v624, 1
  %v626 = vmin.f32 %v624, %v625
  %s627 = vtos %v626
  %v628 = vstv %s627
  %v629 = vsub.f32 %v579, %v628
  %v630 = vsub.f32 %v580, %v628
  %v631 = vsub.f32 %v581, %v628
  %v632 = vsub.f32 %v582, %v628
  %v633 = vsub.f32 %v583, %v628
  %v634 = vsub.f32 %v584, %v628
  %v635 = vsub.f32 %v585, %v628
  %v636 = vsub.f32 %v586, %v628
  %v637 = vsub.f32 %v587, %v628
  %v638 = vsub.f32 %v588, %v628
  %v639 = vsel %vm547, %v629, 0.0
  %v640 = vsel %vm548, %v630, 0.0
  %v641 = vsel %vm549, %v631, 0.0
  %v642 = vsel %vm550, %v632, 0.0
  %v643 = vsel %vm551, %v633, 0.0
  %v644 = vsel %vm552, %v634, 0.0
  %v645 = vsel %vm553, %v635, 0.0
  %v646 = vsel %vm554, %v636, 0.0
  %v647 = vsel %vm555, %v637, 0.0
  %v648 = vsel %vm556, %v638, 0.0
  %v649 = vadd.f32 %v639, 1.0
  %v650 = vadd.f32 %v640, 1.0
  %v651 = vadd.f32 %v641, 1.0
  %v652 = vadd.f32 %v642, 1.0
  %v653 = vadd.f32 %v643, 1.0
  %v654 = vadd.f32 %v644, 1.0
  %v655 = vadd.f32 %v645, 1.0
  %v656 = vadd.f32 %v646, 1.0
  %v657 = vadd.f32 %v647, 1.0
  %v658 = vadd.f32 %v648, 1.0
  %v659 = vlog2.pop %v649
  %v660 = vmul.f32 %v659, 0.6931472
  %v661 = vlog2.pop %v650
  %v662 = vmul.f32 %v661, 0.6931472
  %v663 = vlog2.pop %v651
  %v664 = vmul.f32 %v663, 0.6931472
  %v665 = vlog2.pop %v652
  %v666 = vmul.f32 %v665, 0.6931472
  %v667 = vlog2.pop %v653
  %v668 = vmul.f32 %v667, 0.6931472
  %v669 = vlog2.pop %v654
  %v670 = vmul.f32 %v669, 0.6931472
  %v671 = vlog2.pop %v655
  %v672 = vmul.f32 %v671, 0.6931472
  %v673 = vlog2.pop %v656
  %v674 = vmul.f32 %v673, 0.6931472
  %v675 = vlog2.pop %v657
  %v676 = vmul.f32 %v675, 0.6931472
  %v677 = vlog2.pop %v658
  %v678 = vmul.f32 %v677, 0.6931472
  %v679 = vpack.c.bf16 %v662, %v660
  %v680 = vpack.c.bf16 %v666, %v664
  %v681 = vpack.c.bf16 %v670, %v668
  %v682 = vpack.c.bf16 %v674, %v672
  %v683 = vpack.c.bf16 %v676, %v676
  %v684 = vpack.c.bf16 %v664, %v662
  %v685 = vpack.c.bf16 %v668, %v666
  %v686 = vpack.c.bf16 %v672, %v670
  %v687 = vpack.c.bf16 %v676, %v674
  %v688 = vpack.c.bf16 %v678, %v678
  %694 = vrot.lane.b32.xlu0 %v679, 18
  %v695 = vpop.permute.xlu0 %694
  %696 = vrot.lane.b32.xlu0 %v680, 18
  %v697 = vpop.permute.xlu0 %696
  %698 = vrot.lane.b32.xlu0 %v681, 18
  %v699 = vpop.permute.xlu0 %698
  %700 = vrot.lane.b32.xlu0 %v682, 18
  %v701 = vpop.permute.xlu0 %700
  %702 = vrot.lane.b32.xlu0 %v683, 18
  %v703 = vpop.permute.xlu0 %702
  %704 = vrot.lane.b32.xlu0 %v679, 36
  %v705 = vpop.permute.xlu0 %704
  %706 = vrot.lane.b32.xlu0 %v680, 36
  %v707 = vpop.permute.xlu0 %706
  %708 = vrot.lane.b32.xlu0 %v681, 36
  %v709 = vpop.permute.xlu0 %708
  %710 = vrot.lane.b32.xlu0 %v682, 36
  %v711 = vpop.permute.xlu0 %710
  %712 = vrot.lane.b32.xlu0 %v683, 36
  %v713 = vpop.permute.xlu0 %712
  %vm714 = vsmask.f32 3328
  %v716 = vshrl.u32 %v684, 16
  %v718 = vrot.slane %v716, 4
  %v719 = vshll.u32 %v684, 16
  %v721 = vrot.slane %v719, 5
  %v722 = vor.u32 %v718, %v721
  %v724 = vshrl.u32 %v685, 16
  %v726 = vrot.slane %v724, 4
  %v727 = vshll.u32 %v685, 16
  %v729 = vrot.slane %v727, 5
  %v730 = vor.u32 %v726, %v729
  %v731 = vsel %vm714, %v722, %v730
  %v733 = vshrl.u32 %v686, 16
  %v735 = vrot.slane %v733, 4
  %v736 = vshll.u32 %v686, 16
  %v738 = vrot.slane %v736, 5
  %v739 = vor.u32 %v735, %v738
  %v740 = vsel %vm714, %v730, %v739
  %v742 = vshrl.u32 %v687, 16
  %v744 = vrot.slane %v742, 4
  %v745 = vshll.u32 %v687, 16
  %v747 = vrot.slane %v745, 5
  %v748 = vor.u32 %v744, %v747
  %v749 = vsel %vm714, %v739, %v748
  %750 = vrot.lane.b32.xlu0 %v722, 60
  %v751 = vpop.permute.xlu0 %750
  %752 = vrot.lane.b32.xlu0 %v731, 60
  %v753 = vpop.permute.xlu0 %752
  %754 = vrot.lane.b32.xlu0 %v740, 60
  %v755 = vpop.permute.xlu0 %754
  %756 = vrot.lane.b32.xlu0 %v749, 60
  %v757 = vpop.permute.xlu0 %756
  %758 = vrot.lane.b32.xlu0 %v748, 60
  %v759 = vpop.permute.xlu0 %758
  %760 = vrot.lane.b32.xlu0 %v722, 78
  %v761 = vpop.permute.xlu0 %760
  %762 = vrot.lane.b32.xlu0 %v731, 78
  %v763 = vpop.permute.xlu0 %762
  %764 = vrot.lane.b32.xlu0 %v740, 78
  %v765 = vpop.permute.xlu0 %764
  %766 = vrot.lane.b32.xlu0 %v749, 78
  %v767 = vpop.permute.xlu0 %766
  %768 = vrot.lane.b32.xlu0 %v748, 78
  %v769 = vpop.permute.xlu0 %768
  %770 = vrot.lane.b32.xlu0 %v722, 96
  %v771 = vpop.permute.xlu0 %770
  %772 = vrot.lane.b32.xlu0 %v731, 96
  %v773 = vpop.permute.xlu0 %772
  %774 = vrot.lane.b32.xlu0 %v740, 96
  %v775 = vpop.permute.xlu0 %774
  %776 = vrot.lane.b32.xlu0 %v749, 96
  %v777 = vpop.permute.xlu0 %776
  %778 = vrot.lane.b32.xlu0 %v748, 96
  %v779 = vpop.permute.xlu0 %778
  %vm785 = vcmask 1042432
  %v786 = vrot.slane %v684, 5
  %v787 = vrot.slane %v685, 5
  %v788 = vsel %vm785, %v786, %v787
  %v789 = vrot.slane %v686, 5
  %v790 = vsel %vm785, %v787, %v789
  %v791 = vrot.slane %v687, 5
  %v792 = vsel %vm785, %v789, %v791
  %v793 = vrot.slane %v688, 5
  %v794 = vsel %vm785, %v791, %v793
  %795 = vrot.lane.b32.xlu0 %v786, 120
  %v796 = vpop.permute.xlu0 %795
  %797 = vrot.lane.b32.xlu0 %v788, 120
  %v798 = vpop.permute.xlu0 %797
  %799 = vrot.lane.b32.xlu0 %v790, 120
  %v800 = vpop.permute.xlu0 %799
  %801 = vrot.lane.b32.xlu0 %v792, 120
  %v802 = vpop.permute.xlu0 %801
  %803 = vrot.lane.b32.xlu0 %v794, 120
  %v804 = vpop.permute.xlu0 %803
  %805 = vrot.lane.b32.xlu0 %v786, 10
  %v806 = vpop.permute.xlu0 %805
  %807 = vrot.lane.b32.xlu0 %v788, 10
  %v808 = vpop.permute.xlu0 %807
  %809 = vrot.lane.b32.xlu0 %v790, 10
  %v810 = vpop.permute.xlu0 %809
  %811 = vrot.lane.b32.xlu0 %v792, 10
  %v812 = vpop.permute.xlu0 %811
  %813 = vrot.lane.b32.xlu0 %v794, 10
  %v814 = vpop.permute.xlu0 %813
  %815 = vrot.lane.b32.xlu0 %v786, 28
  %v816 = vpop.permute.xlu0 %815
  %817 = vrot.lane.b32.xlu0 %v788, 28
  %v818 = vpop.permute.xlu0 %817
  %819 = vrot.lane.b32.xlu0 %v790, 28
  %v820 = vpop.permute.xlu0 %819
  %821 = vrot.lane.b32.xlu0 %v792, 28
  %v822 = vpop.permute.xlu0 %821
  %823 = vrot.lane.b32.xlu0 %v794, 28
  %v824 = vpop.permute.xlu0 %823
  %v827 = vsel %vm561, %v679, %v695
  %v830 = vsel %vm561, %v680, %v697
  %v833 = vsel %vm561, %v681, %v699
  %v836 = vsel %vm561, %v682, %v701
  %v839 = vsel %vm561, %v683, %v703
  %vm840 = vcmask 326656
  %v842 = vsel %vm840, %v827, %v705
  %v844 = vsel %vm840, %v830, %v707
  %v846 = vsel %vm840, %v833, %v709
  %v848 = vsel %vm840, %v836, %v711
  %v850 = vsel %vm840, %v839, %v713
  %vm851 = vcmask 490496
  %v853 = vsel %vm851, %v842, %v751
  %v855 = vsel %vm851, %v844, %v753
  %v857 = vsel %vm851, %v846, %v755
  %v859 = vsel %vm851, %v848, %v757
  %v861 = vsel %vm851, %v850, %v759
  %vm862 = vcmask 654336
  %v864 = vsel %vm862, %v853, %v761
  %v866 = vsel %vm862, %v855, %v763
  %v868 = vsel %vm862, %v857, %v765
  %v870 = vsel %vm862, %v859, %v767
  %v872 = vsel %vm862, %v861, %v769
  %vm873 = vcmask 818176
  %v875 = vsel %vm873, %v864, %v771
  %v877 = vsel %vm873, %v866, %v773
  %v879 = vsel %vm873, %v868, %v775
  %v881 = vsel %vm873, %v870, %v777
  %v883 = vsel %vm873, %v872, %v779
  %vm884 = vcmask 982016
  %v886 = vsel %vm884, %v875, %v796
  %v888 = vsel %vm884, %v877, %v798
  %v890 = vsel %vm884, %v879, %v800
  %v892 = vsel %vm884, %v881, %v802
  %v894 = vsel %vm884, %v883, %v804
  %vm895 = vcmask 97280
  %v897 = vsel %vm895, %v796, %v806
  %v899 = vsel %vm895, %v798, %v808
  %v901 = vsel %vm895, %v800, %v810
  %v903 = vsel %vm895, %v802, %v812
  %v905 = vsel %vm895, %v804, %v814
  %v907 = vsel %vm599, %v897, %v816
  %v909 = vsel %vm599, %v899, %v818
  %v911 = vsel %vm599, %v901, %v820
  %v913 = vsel %vm599, %v903, %v822
  %v915 = vsel %vm599, %v905, %v824
  %v916 = vld [vmem:[%s3] sm:$0xff]
  %v917 = vld [vmem:[%s3 + $0x8] sm:$0xff]
  %v918 = vld [vmem:[%s3 + $0x10] sm:$0xff]
  %v919 = vld [vmem:[%s3 + $0x18] sm:$0xff]
  %v920 = vld [vmem:[%s3 + $0x20] sm:$0xff]
  %v921 = vld [vmem:[%s3 + $0x28] sm:$0xff]
  %v922 = vld [vmem:[%s3 + $0x30] sm:$0xff]
  %v923 = vld [vmem:[%s3 + $0x38] sm:$0xff]
  %v924 = vld [vmem:[%s3 + $0x40] sm:$0xff]
  %v925 = vld [vmem:[%s3 + $0x48] sm:$0xff]
  %v926 = vld [vmem:[%s3 + $0x50] sm:$0xff]
  %v927 = vld [vmem:[%s3 + $0x58] sm:$0xff]
  %v928 = vld [vmem:[%s3 + $0x60] sm:$0xff]
  %v929 = vld [vmem:[%s3 + $0x68] sm:$0xff]
  %v930 = vld [vmem:[%s3 + $0x70] sm:$0xff]
  %v931 = vld [vmem:[%s3 + $0x78] sm:$0xff]
  %v932 = vld [vmem:[%s3 + $0x80] sm:$0xff]
  %v933 = vld [vmem:[%s3 + $0x88] sm:$0xff]
  %v934 = vld [vmem:[%s3 + $0x90] sm:$0xff]
  %v935 = vld [vmem:[%s3 + $0x98] sm:$0xff]
  %v936 = vld [vmem:[%s3 + $0xa0] sm:$0xff]
  %v937 = vld [vmem:[%s3 + $0xa8] sm:$0xff]
  %v938 = vld [vmem:[%s3 + $0xb0] sm:$0x33]
  %v939 = vld [vmem:[%s5] sm:$0x3]
  %v941 = vlaneseq
  %v942 = vshrl.u32 %v941, 7
  %v943 = vsub.s32 0, %v942
  %v944 = vrot.slane %v939, %v943
  %v945 = vlaneseq
  %v946 = vshrl.u32 %v945, 7
  %v947 = vsub.s32 1, %v946
  %v948 = vrot.slane %v939, %v947
  %vm951 = vsmask.f32 4352
  %v952 = vshrl.u32 %v886, 16
  %v954 = vrot.slane %v952, 3
  %v955 = vshll.u32 %v886, 16
  %v957 = vrot.slane %v955, 4
  %v958 = vor.u32 %v954, %v957
  %v959 = vshrl.u32 %v888, 16
  %v961 = vrot.slane %v959, 3
  %v962 = vshll.u32 %v888, 16
  %v964 = vrot.slane %v962, 4
  %v965 = vor.u32 %v961, %v964
  %v966 = vsel %vm951, %v958, %v965
  %v967 = vshrl.u32 %v907, 16
  %v969 = vrot.slane %v967, 3
  %v970 = vshll.u32 %v907, 16
  %v972 = vrot.slane %v970, 4
  %v973 = vor.u32 %v969, %v972
  %v974 = vshrl.u32 %v909, 16
  %v976 = vrot.slane %v974, 3
  %v977 = vshll.u32 %v909, 16
  %v979 = vrot.slane %v977, 4
  %v980 = vor.u32 %v976, %v979
  %v981 = vsel %vm951, %v973, %v980
  %v982 = vshrl.u32 %v890, 16
  %v984 = vrot.slane %v982, 3
  %v985 = vshll.u32 %v890, 16
  %v987 = vrot.slane %v985, 4
  %v988 = vor.u32 %v984, %v987
  %v989 = vsel %vm951, %v965, %v988
  %v990 = vshrl.u32 %v911, 16
  %v992 = vrot.slane %v990, 3
  %v993 = vshll.u32 %v911, 16
  %v995 = vrot.slane %v993, 4
  %v996 = vor.u32 %v992, %v995
  %v997 = vsel %vm951, %v980, %v996
  %v998 = vshrl.u32 %v892, 16
  %v1000 = vrot.slane %v998, 3
  %v1001 = vshll.u32 %v892, 16
  %v1003 = vrot.slane %v1001, 4
  %v1004 = vor.u32 %v1000, %v1003
  %v1005 = vsel %vm951, %v988, %v1004
  %v1006 = vshrl.u32 %v913, 16
  %v1008 = vrot.slane %v1006, 3
  %v1009 = vshll.u32 %v913, 16
  %v1011 = vrot.slane %v1009, 4
  %v1012 = vor.u32 %v1008, %v1011
  %v1013 = vsel %vm951, %v996, %v1012
  %v1014 = vshrl.u32 %v894, 16
  %v1016 = vrot.slane %v1014, 3
  %v1017 = vshll.u32 %v894, 16
  %v1019 = vrot.slane %v1017, 4
  %v1020 = vor.u32 %v1016, %v1019
  %v1021 = vsel %vm951, %v1004, %v1020
  %v1022 = vshrl.u32 %v915, 16
  %v1024 = vrot.slane %v1022, 3
  %v1025 = vshll.u32 %v915, 16
  %v1027 = vrot.slane %v1025, 4
  %v1028 = vor.u32 %v1024, %v1027
  %v1029 = vsel %vm951, %v1012, %v1028
  %v1057 = vunpack.c.l.b16 %v916
  %v1058 = vunpack.c.h.b16 %v916
  %v1059 = vunpack.c.l.b16 %v917
  %v1060 = vunpack.c.h.b16 %v917
  %v1061 = vunpack.c.l.b16 %v918
  %v1062 = vunpack.c.h.b16 %v918
  %v1063 = vunpack.c.l.b16 %v919
  %v1064 = vunpack.c.h.b16 %v919
  %v1065 = vunpack.c.l.b16 %v920
  %v1066 = vunpack.c.h.b16 %v920
  %v1067 = vunpack.c.l.b16 %v921
  %v1068 = vunpack.c.h.b16 %v921
  %v1069 = vunpack.c.l.b16 %v922
  %v1070 = vunpack.c.h.b16 %v922
  %v1071 = vunpack.c.l.b16 %v923
  %v1072 = vunpack.c.h.b16 %v923
  %v1073 = vunpack.c.l.b16 %v924
  %v1074 = vunpack.c.h.b16 %v924
  %v1075 = vunpack.c.l.b16 %v925
  %v1076 = vunpack.c.h.b16 %v925
  %v1077 = vunpack.c.l.b16 %v926
  %v1078 = vunpack.c.h.b16 %v926
  %v1079 = vunpack.c.l.b16 %v927
  %v1080 = vunpack.c.h.b16 %v927
  %v1081 = vunpack.c.l.b16 %v928
  %v1082 = vunpack.c.h.b16 %v928
  %v1083 = vunpack.c.l.b16 %v929
  %v1084 = vunpack.c.h.b16 %v929
  %v1085 = vunpack.c.l.b16 %v930
  %v1086 = vunpack.c.h.b16 %v930
  %v1087 = vunpack.c.l.b16 %v931
  %v1088 = vunpack.c.h.b16 %v931
  %v1089 = vunpack.c.l.b16 %v932
  %v1090 = vunpack.c.h.b16 %v932
  %v1091 = vunpack.c.l.b16 %v933
  %v1092 = vunpack.c.h.b16 %v933
  %v1093 = vunpack.c.l.b16 %v934
  %v1094 = vunpack.c.h.b16 %v934
  %v1095 = vunpack.c.l.b16 %v935
  %v1096 = vunpack.c.h.b16 %v935
  %v1097 = vunpack.c.l.b16 %v936
  %v1098 = vunpack.c.h.b16 %v936
  %v1099 = vunpack.c.l.b16 %v937
  %v1100 = vunpack.c.h.b16 %v937
  %v1101 = vunpack.c.l.b16 %v938
  %v1102 = vunpack.c.h.b16 %v938
  %v1103 = vpack.c.b16 %v1059, %v1057
  %v1104 = vpack.c.b16 %v1060, %v1058
  %v1105 = vpack.c.b16 %v1063, %v1061
  %v1106 = vpack.c.b16 %v1064, %v1062
  %v1107 = vpack.c.b16 %v1067, %v1065
  %v1108 = vpack.c.b16 %v1068, %v1066
  %v1109 = vpack.c.b16 %v1071, %v1069
  %v1110 = vpack.c.b16 %v1072, %v1070
  %v1111 = vpack.c.b16 %v1075, %v1073
  %v1112 = vpack.c.b16 %v1076, %v1074
  %v1113 = vpack.c.b16 %v1079, %v1077
  %v1114 = vpack.c.b16 %v1080, %v1078
  %v1115 = vpack.c.b16 %v1083, %v1081
  %v1116 = vpack.c.b16 %v1084, %v1082
  %v1117 = vpack.c.b16 %v1087, %v1085
  %v1118 = vpack.c.b16 %v1088, %v1086
  %v1119 = vpack.c.b16 %v1091, %v1089
  %v1120 = vpack.c.b16 %v1092, %v1090
  %v1121 = vpack.c.b16 %v1095, %v1093
  %v1122 = vpack.c.b16 %v1096, %v1094
  %v1123 = vpack.c.b16 %v1099, %v1097
  %v1124 = vpack.c.b16 %v1100, %v1098
  %v1125 = vpack.c.b16 %v1101, %v1101
  %v1126 = vpack.c.b16 %v1102, %v1102
  %vm1149 = vcmask 424960
  %v1151 = vsel %vm1149, %v981, 0
  %v1154 = vsel %vm1149, %v997, 0
  %v1157 = vsel %vm1149, %v1013, 0
  %v1160 = vsel %vm1149, %v1029, 0
  %vm1162 = vcmask 1041408
  %v1164 = vsel %vm1162, %v1125, 0
  %v1167 = vsel %vm1162, %v1126, 0
  %1169 = vmatprep.subr.bf16.mxu0 %v1104
  %1170 = vmatpush1.bf16.msra.mxu0 %v1103
  %1171 = vmatprep.subr.bf16.mxu0 %v1106
  %1172 = vmatpush1.bf16.msra.mxu0 %v1105
  %1173 = vmatprep.subr.bf16.mxu0 %v1108
  %1174 = vmatpush1.bf16.msra.mxu0 %v1107
  %1175 = vmatprep.subr.bf16.mxu0 %v1110
  %1176 = vmatpush1.bf16.msra.mxu0 %v1109
  %1177 = vmatprep.subr.bf16.mxu0 %v1112
  %1178 = vmatpush1.bf16.msra.mxu0 %v1111
  %1179 = vmatprep.subr.bf16.mxu0 %v1114
  %1180 = vmatpush1.bf16.msra.mxu0 %v1113
  %1181 = vmatprep.subr.bf16.mxu0 %v1116
  %1182 = vmatpush1.bf16.msra.mxu0 %v1115
  %1183 = vmatprep.subr.bf16.mxu0 %v1118
  %1184 = vmatpush1.bf16.msra.mxu0 %v1117
  %1185 = vmatprep.subr.bf16.mxu0 %v1120
  %1186 = vmatpush1.bf16.msra.mxu0 %v1119
  %1187 = vmatprep.subr.bf16.mxu0 %v1122
  %1188 = vmatpush1.bf16.msra.mxu0 %v1121
  %1189 = vmatprep.subr.bf16.mxu0 %v1124
  %1190 = vmatpush1.bf16.msra.mxu0 %v1123
  %1191 = vmatprep.subr.bf16.mxu0 %v1167
  %1192 = vmatpush1.bf16.msra.mxu0 %v1164
  %1193 = vmatprep.subr.bf16.mxu0 0
  %1194 = vmatpush1.bf16.msra.mxu0 0
  %1195 = vmatprep.subr.bf16.mxu0 0
  %1196 = vmatpush1.bf16.msra.mxu0 0
  %1197 = vmatprep.subr.bf16.mxu0 0
  %1198 = vmatpush1.bf16.msra.mxu0 0
  %1199 = vmatprep.subr.bf16.mxu0 0
  %1200 = vmatpush1.bf16.msra.mxu0 0
  %1201 = vmatprep.mubr.bf16.mxu0 %v1151
  %1202 = vmatmul.mubr.bf16.gmra.mrb[0].mxu0 %v966
  %v1203 = vpop.f32.mrb[0].mxu0
  %v1204 = vadd.f32 %v944, %v1203
  %v1205 = vpop.f32.mrb[0].mxu0
  %v1206 = vadd.f32 %v948, %v1205
  %v1207 = vpop.f32.mrb[0].mxu0
  %v1208 = vadd.f32 %v944, %v1207
  %v1209 = vpop.f32.mrb[0].mxu0
  %v1210 = vadd.f32 %v948, %v1209
  %1211 = vmatprep.mubr.bf16.mxu0 %v1154
  %1212 = vmatmul.mubr.bf16.gmra.mrb[0].mxu0 %v989
  %v1213 = vpop.f32.mrb[0].mxu0
  %v1214 = vadd.f32 %v944, %v1213
  %v1215 = vpop.f32.mrb[0].mxu0
  %v1216 = vadd.f32 %v948, %v1215
  %v1217 = vpop.f32.mrb[0].mxu0
  %v1218 = vadd.f32 %v944, %v1217
  %v1219 = vpop.f32.mrb[0].mxu0
  %v1220 = vadd.f32 %v948, %v1219
  %1221 = vmatprep.mubr.bf16.mxu0 %v1157
  %1222 = vmatmul.mubr.bf16.gmra.mrb[0].mxu0 %v1005
  %v1223 = vpop.f32.mrb[0].mxu0
  %v1224 = vadd.f32 %v944, %v1223
  %v1225 = vpop.f32.mrb[0].mxu0
  %v1226 = vadd.f32 %v948, %v1225
  %v1227 = vpop.f32.mrb[0].mxu0
  %v1228 = vadd.f32 %v944, %v1227
  %v1229 = vpop.f32.mrb[0].mxu0
  %v1230 = vadd.f32 %v948, %v1229
  %1231 = vmatprep.mubr.bf16.mxu0 %v1160
  %1232 = vmatmul.mubr.bf16.gmra.mrb[0].mxu0 %v1021
  %v1233 = vpop.f32.mrb[0].mxu0
  %v1234 = vadd.f32 %v944, %v1233
  %v1235 = vpop.f32.mrb[0].mxu0
  %v1236 = vadd.f32 %v948, %v1235
  %v1237 = vpop.f32.mrb[0].mxu0
  %v1238 = vadd.f32 %v944, %v1237
  %v1239 = vpop.f32.mrb[0].mxu0
  %v1240 = vadd.f32 %v948, %v1239
  %1241 = vdwg.mxu0
  %v1242 = vmax.f32 %v1204, 0.0
  %v1243 = vmax.f32 %v1206, 0.0
  %v1244 = vmax.f32 %v1208, 0.0
  %v1245 = vmax.f32 %v1210, 0.0
  %v1246 = vmax.f32 %v1214, 0.0
  %v1247 = vmax.f32 %v1216, 0.0
  %v1248 = vmax.f32 %v1218, 0.0
  %v1249 = vmax.f32 %v1220, 0.0
  %v1250 = vmax.f32 %v1224, 0.0
  %v1251 = vmax.f32 %v1226, 0.0
  %v1252 = vmax.f32 %v1228, 0.0
  %v1253 = vmax.f32 %v1230, 0.0
  %v1254 = vmax.f32 %v1234, 0.0
  %v1255 = vmax.f32 %v1236, 0.0
  %v1256 = vmax.f32 %v1238, 0.0
  %v1257 = vmax.f32 %v1240, 0.0
  %v1258 = vmul.f32 %v1242, %v320
  %v1259 = vmul.f32 %v1243, %v321
  %v1260 = vmul.f32 %v1244, %v322
  %v1261 = vmul.f32 %v1245, %v323
  %v1262 = vmul.f32 %v1246, %v324
  %v1263 = vmul.f32 %v1247, %v325
  %v1264 = vmul.f32 %v1248, %v326
  %v1265 = vmul.f32 %v1249, %v327
  %v1266 = vmul.f32 %v1250, %v328
  %v1267 = vmul.f32 %v1251, %v329
  %v1268 = vmul.f32 %v1252, %v330
  %v1269 = vmul.f32 %v1253, %v331
  %v1270 = vmul.f32 %v1254, %v332
  %v1271 = vmul.f32 %v1255, %v333
  %v1272 = vmul.f32 %v1256, %v334
  %v1273 = vmul.f32 %v1257, %v335
  %1290 = vrot.lane.b32.xlu0 %v1258, 20
  %v1291 = vpop.permute.xlu0 %1290
  %1292 = vrot.lane.b32.xlu0 %v1259, 20
  %v1293 = vpop.permute.xlu0 %1292
  %1294 = vrot.lane.b32.xlu0 %v1260, 20
  %v1295 = vpop.permute.xlu0 %1294
  %1296 = vrot.lane.b32.xlu0 %v1261, 20
  %v1297 = vpop.permute.xlu0 %1296
  %1298 = vrot.lane.b32.xlu0 %v1262, 20
  %v1299 = vpop.permute.xlu0 %1298
  %1300 = vrot.lane.b32.xlu0 %v1263, 20
  %v1301 = vpop.permute.xlu0 %1300
  %1302 = vrot.lane.b32.xlu0 %v1264, 20
  %v1303 = vpop.permute.xlu0 %1302
  %1304 = vrot.lane.b32.xlu0 %v1265, 20
  %v1305 = vpop.permute.xlu0 %1304
  %1306 = vrot.lane.b32.xlu0 %v1266, 20
  %v1307 = vpop.permute.xlu0 %1306
  %1308 = vrot.lane.b32.xlu0 %v1267, 20
  %v1309 = vpop.permute.xlu0 %1308
  %1310 = vrot.lane.b32.xlu0 %v1268, 20
  %v1311 = vpop.permute.xlu0 %1310
  %1312 = vrot.lane.b32.xlu0 %v1269, 20
  %v1313 = vpop.permute.xlu0 %1312
  %1314 = vrot.lane.b32.xlu0 %v1270, 20
  %v1315 = vpop.permute.xlu0 %1314
  %1316 = vrot.lane.b32.xlu0 %v1271, 20
  %v1317 = vpop.permute.xlu0 %1316
  %1318 = vrot.lane.b32.xlu0 %v1272, 20
  %v1319 = vpop.permute.xlu0 %1318
  %1320 = vrot.lane.b32.xlu0 %v1273, 20
  %v1321 = vpop.permute.xlu0 %1320
  %v1322 = vsel %vm561, %v1291, %v1293
  %v1323 = vsel %vm561, %v1295, %v1297
  %v1324 = vsel %vm561, %v1299, %v1301
  %v1325 = vsel %vm561, %v1303, %v1305
  %v1326 = vsel %vm561, %v1307, %v1309
  %v1327 = vsel %vm561, %v1311, %v1313
  %v1328 = vsel %vm561, %v1315, %v1317
  %v1329 = vsel %vm561, %v1319, %v1321
  %vm1346 = vcmask 1047712
  %1347 = vst.msk [vmem:[#allocation2 + $0x10] sm:$0xff] %vm1346, %v1291
  %vm1348 = vcmask 752640
  %1349 = vst.msk [vmem:[#allocation2 + $0x18] sm:$0xff] %vm1348, %v1322
  %1350 = vst.msk [vmem:[#allocation2 + $0x20] sm:$0xff] %vm1346, %v1295
  %1351 = vst.msk [vmem:[#allocation2 + $0x28] sm:$0xff] %vm1348, %v1323
  %1352 = vst.msk [vmem:[#allocation2 + $0x30] sm:$0xff] %vm1346, %v1299
  %1353 = vst.msk [vmem:[#allocation2 + $0x38] sm:$0xff] %vm1348, %v1324
  %1354 = vst.msk [vmem:[#allocation2 + $0x40] sm:$0xff] %vm1346, %v1303
  %1355 = vst.msk [vmem:[#allocation2 + $0x48] sm:$0xff] %vm1348, %v1325
  %1356 = vst.msk [vmem:[#allocation2 + $0x50] sm:$0xff] %vm1346, %v1307
  %1357 = vst.msk [vmem:[#allocation2 + $0x58] sm:$0xff] %vm1348, %v1326
  %1358 = vst.msk [vmem:[#allocation2 + $0x60] sm:$0xff] %vm1346, %v1311
  %1359 = vst.msk [vmem:[#allocation2 + $0x68] sm:$0xff] %vm1348, %v1327
  %1360 = vst.msk [vmem:[#allocation2 + $0x70] sm:$0xff] %vm1346, %v1315
  %1361 = vst.msk [vmem:[#allocation2 + $0x78] sm:$0xff] %vm1348, %v1328
  %1362 = vst.msk [vmem:[#allocation2 + $0x80] sm:$0xff] %vm1346, %v1319
  %1363 = vst.msk [vmem:[#allocation2 + $0x88] sm:$0xff] %vm1348, %v1329
  %v1364 = vld [vmem:[#allocation2] sm:$0xff]
  %v1365 = vld [vmem:[#allocation2 + $0x8] sm:$0xff]
  %v1366 = vld [vmem:[#allocation2 + $0x10] sm:$0xff]
  %v1367 = vld [vmem:[#allocation2 + $0x18] sm:$0xff]
  %v1368 = vld [vmem:[#allocation2 + $0x20] sm:$0xff]
  %v1369 = vld [vmem:[#allocation2 + $0x28] sm:$0xff]
  %v1370 = vld [vmem:[#allocation2 + $0x30] sm:$0xff]
  %v1371 = vld [vmem:[#allocation2 + $0x38] sm:$0xff]
  %v1372 = vld [vmem:[#allocation2 + $0x40] sm:$0xff]
  %v1373 = vld [vmem:[#allocation2 + $0x48] sm:$0xff]
  %v1374 = vld [vmem:[#allocation2 + $0x50] sm:$0xff]
  %v1375 = vld [vmem:[#allocation2 + $0x58] sm:$0xff]
  %v1376 = vld [vmem:[#allocation2 + $0x60] sm:$0xff]
  %v1377 = vld [vmem:[#allocation2 + $0x68] sm:$0xff]
  %v1378 = vld [vmem:[#allocation2 + $0x70] sm:$0xff]
  %v1379 = vld [vmem:[#allocation2 + $0x78] sm:$0xff]
  %v1380 = vld [vmem:[#allocation2 + $0x80] sm:$0xff]
  %v1381 = vld [vmem:[#allocation2 + $0x88] sm:$0xff]
  %v1382 = vld [vmem:[#allocation2 + $0x90] sm:$0xff]
  %v1383 = vld [vmem:[#allocation2 + $0x98] sm:$0xff]
  %v1384 = vpack.c.bf16 %v1366, %v1364
  %v1385 = vpack.c.bf16 %v1367, %v1365
  %v1386 = vpack.c.bf16 %v1370, %v1368
  %v1387 = vpack.c.bf16 %v1371, %v1369
  %v1388 = vpack.c.bf16 %v1374, %v1372
  %v1389 = vpack.c.bf16 %v1375, %v1373
  %v1390 = vpack.c.bf16 %v1378, %v1376
  %v1391 = vpack.c.bf16 %v1379, %v1377
  %v1392 = vpack.c.bf16 %v1380, %v1380
  %v1393 = vpack.c.bf16 %v1381, %v1381
  %v1394 = vpack.c.bf16 %v1368, %v1366
  %v1395 = vpack.c.bf16 %v1369, %v1367
  %v1396 = vpack.c.bf16 %v1372, %v1370
  %v1397 = vpack.c.bf16 %v1373, %v1371
  %v1398 = vpack.c.bf16 %v1376, %v1374
  %v1399 = vpack.c.bf16 %v1377, %v1375
  %v1400 = vpack.c.bf16 %v1380, %v1378
  %v1401 = vpack.c.bf16 %v1381, %v1379
  %v1402 = vpack.c.bf16 %v1382, %v1382
  %v1403 = vpack.c.bf16 %v1383, %v1383
  %1414 = vrot.lane.b32.xlu0 %v1384, 52
  %v1415 = vpop.permute.xlu0 %1414
  %1416 = vrot.lane.b32.xlu0 %v1385, 52
  %v1417 = vpop.permute.xlu0 %1416
  %1418 = vrot.lane.b32.xlu0 %v1386, 52
  %v1419 = vpop.permute.xlu0 %1418
  %1420 = vrot.lane.b32.xlu0 %v1387, 52
  %v1421 = vpop.permute.xlu0 %1420
  %1422 = vrot.lane.b32.xlu0 %v1388, 52
  %v1423 = vpop.permute.xlu0 %1422
  %1424 = vrot.lane.b32.xlu0 %v1389, 52
  %v1425 = vpop.permute.xlu0 %1424
  %1426 = vrot.lane.b32.xlu0 %v1390, 52
  %v1427 = vpop.permute.xlu0 %1426
  %1428 = vrot.lane.b32.xlu0 %v1391, 52
  %v1429 = vpop.permute.xlu0 %1428
  %1430 = vrot.lane.b32.xlu0 %v1392, 52
  %v1431 = vpop.permute.xlu0 %1430
  %1432 = vrot.lane.b32.xlu0 %v1393, 52
  %v1433 = vpop.permute.xlu0 %1432
  %vm1434 = vcmask 424960
  %v1435 = vsel %vm1434, %v1415, %v1417
  %v1436 = vsel %vm1434, %v1419, %v1421
  %v1437 = vsel %vm1434, %v1423, %v1425
  %v1438 = vsel %vm1434, %v1427, %v1429
  %v1439 = vsel %vm1434, %v1431, %v1433
  %1440 = vrot.lane.b32.xlu0 %v1384, 104
  %v1441 = vpop.permute.xlu0 %1440
  %1442 = vrot.lane.b32.xlu0 %v1385, 104
  %v1443 = vpop.permute.xlu0 %1442
  %1444 = vrot.lane.b32.xlu0 %v1386, 104
  %v1445 = vpop.permute.xlu0 %1444
  %1446 = vrot.lane.b32.xlu0 %v1387, 104
  %v1447 = vpop.permute.xlu0 %1446
  %1448 = vrot.lane.b32.xlu0 %v1388, 104
  %v1449 = vpop.permute.xlu0 %1448
  %1450 = vrot.lane.b32.xlu0 %v1389, 104
  %v1451 = vpop.permute.xlu0 %1450
  %1452 = vrot.lane.b32.xlu0 %v1390, 104
  %v1453 = vpop.permute.xlu0 %1452
  %1454 = vrot.lane.b32.xlu0 %v1391, 104
  %v1455 = vpop.permute.xlu0 %1454
  %1456 = vrot.lane.b32.xlu0 %v1392, 104
  %v1457 = vpop.permute.xlu0 %1456
  %1458 = vrot.lane.b32.xlu0 %v1393, 104
  %v1459 = vpop.permute.xlu0 %1458
  %vm1460 = vcmask 850944
  %v1461 = vsel %vm1460, %v1441, %v1443
  %v1462 = vsel %vm1460, %v1445, %v1447
  %v1463 = vsel %vm1460, %v1449, %v1451
  %v1464 = vsel %vm1460, %v1453, %v1455
  %v1465 = vsel %vm1460, %v1457, %v1459
  %v1467 = vshrl.u32 %v1394, 16
  %v1469 = vrot.slane %v1467, 4
  %v1470 = vshll.u32 %v1394, 16
  %v1472 = vrot.slane %v1470, 5
  %v1473 = vor.u32 %v1469, %v1472
  %v1475 = vshrl.u32 %v1395, 16
  %v1477 = vrot.slane %v1475, 4
  %v1478 = vshll.u32 %v1395, 16
  %v1480 = vrot.slane %v1478, 5
  %v1481 = vor.u32 %v1477, %v1480
  %v1483 = vshrl.u32 %v1396, 16
  %v1485 = vrot.slane %v1483, 4
  %v1486 = vshll.u32 %v1396, 16
  %v1488 = vrot.slane %v1486, 5
  %v1489 = vor.u32 %v1485, %v1488
  %v1490 = vsel %vm714, %v1473, %v1489
  %v1492 = vshrl.u32 %v1397, 16
  %v1494 = vrot.slane %v1492, 4
  %v1495 = vshll.u32 %v1397, 16
  %v1497 = vrot.slane %v1495, 5
  %v1498 = vor.u32 %v1494, %v1497
  %v1499 = vsel %vm714, %v1481, %v1498
  %v1501 = vshrl.u32 %v1398, 16
  %v1503 = vrot.slane %v1501, 4
  %v1504 = vshll.u32 %v1398, 16
  %v1506 = vrot.slane %v1504, 5
  %v1507 = vor.u32 %v1503, %v1506
  %v1508 = vsel %vm714, %v1489, %v1507
  %v1510 = vshrl.u32 %v1399, 16
  %v1512 = vrot.slane %v1510, 4
  %v1513 = vshll.u32 %v1399, 16
  %v1515 = vrot.slane %v1513, 5
  %v1516 = vor.u32 %v1512, %v1515
  %v1517 = vsel %vm714, %v1498, %v1516
  %v1519 = vshrl.u32 %v1400, 16
  %v1521 = vrot.slane %v1519, 4
  %v1522 = vshll.u32 %v1400, 16
  %v1524 = vrot.slane %v1522, 5
  %v1525 = vor.u32 %v1521, %v1524
  %v1526 = vsel %vm714, %v1507, %v1525
  %v1528 = vshrl.u32 %v1401, 16
  %v1530 = vrot.slane %v1528, 4
  %v1531 = vshll.u32 %v1401, 16
  %v1533 = vrot.slane %v1531, 5
  %v1534 = vor.u32 %v1530, %v1533
  %v1535 = vsel %vm714, %v1516, %v1534
  %1536 = vrot.lane.b32.xlu0 %v1473, 88
  %v1537 = vpop.permute.xlu0 %1536
  %1538 = vrot.lane.b32.xlu0 %v1481, 88
  %v1539 = vpop.permute.xlu0 %1538
  %1540 = vrot.lane.b32.xlu0 %v1490, 88
  %v1541 = vpop.permute.xlu0 %1540
  %1542 = vrot.lane.b32.xlu0 %v1499, 88
  %v1543 = vpop.permute.xlu0 %1542
  %1544 = vrot.lane.b32.xlu0 %v1508, 88
  %v1545 = vpop.permute.xlu0 %1544
  %1546 = vrot.lane.b32.xlu0 %v1517, 88
  %v1547 = vpop.permute.xlu0 %1546
  %1548 = vrot.lane.b32.xlu0 %v1526, 88
  %v1549 = vpop.permute.xlu0 %1548
  %1550 = vrot.lane.b32.xlu0 %v1535, 88
  %v1551 = vpop.permute.xlu0 %1550
  %1552 = vrot.lane.b32.xlu0 %v1525, 88
  %v1553 = vpop.permute.xlu0 %1552
  %1554 = vrot.lane.b32.xlu0 %v1534, 88
  %v1555 = vpop.permute.xlu0 %1554
  %vm1556 = vcmask 719872
  %v1557 = vsel %vm1556, %v1537, %v1539
  %v1558 = vsel %vm1556, %v1541, %v1543
  %v1559 = vsel %vm1556, %v1545, %v1547
  %v1560 = vsel %vm1556, %v1549, %v1551
  %v1561 = vsel %vm1556, %v1553, %v1555
  %1562 = vrot.lane.b32.xlu0 %v1473, 12
  %v1563 = vpop.permute.xlu0 %1562
  %1564 = vrot.lane.b32.xlu0 %v1481, 12
  %v1565 = vpop.permute.xlu0 %1564
  %1566 = vrot.lane.b32.xlu0 %v1490, 12
  %v1567 = vpop.permute.xlu0 %1566
  %1568 = vrot.lane.b32.xlu0 %v1499, 12
  %v1569 = vpop.permute.xlu0 %1568
  %1570 = vrot.lane.b32.xlu0 %v1508, 12
  %v1571 = vpop.permute.xlu0 %1570
  %1572 = vrot.lane.b32.xlu0 %v1517, 12
  %v1573 = vpop.permute.xlu0 %1572
  %1574 = vrot.lane.b32.xlu0 %v1526, 12
  %v1575 = vpop.permute.xlu0 %1574
  %1576 = vrot.lane.b32.xlu0 %v1535, 12
  %v1577 = vpop.permute.xlu0 %1576
  %1578 = vrot.lane.b32.xlu0 %v1525, 12
  %v1579 = vpop.permute.xlu0 %1578
  %1580 = vrot.lane.b32.xlu0 %v1534, 12
  %v1581 = vpop.permute.xlu0 %1580
  %vm1582 = vcmask 97280
  %v1583 = vsel %vm1582, %v1563, %v1565
  %v1584 = vsel %vm1582, %v1567, %v1569
  %v1585 = vsel %vm1582, %v1571, %v1573
  %v1586 = vsel %vm1582, %v1575, %v1577
  %v1587 = vsel %vm1582, %v1579, %v1581
  %1588 = vrot.lane.b32.xlu0 %v1473, 64
  %v1589 = vpop.permute.xlu0 %1588
  %1590 = vrot.lane.b32.xlu0 %v1481, 64
  %v1591 = vpop.permute.xlu0 %1590
  %1592 = vrot.lane.b32.xlu0 %v1490, 64
  %v1593 = vpop.permute.xlu0 %1592
  %1594 = vrot.lane.b32.xlu0 %v1499, 64
  %v1595 = vpop.permute.xlu0 %1594
  %1596 = vrot.lane.b32.xlu0 %v1508, 64
  %v1597 = vpop.permute.xlu0 %1596
  %1598 = vrot.lane.b32.xlu0 %v1517, 64
  %v1599 = vpop.permute.xlu0 %1598
  %1600 = vrot.lane.b32.xlu0 %v1526, 64
  %v1601 = vpop.permute.xlu0 %1600
  %1602 = vrot.lane.b32.xlu0 %v1535, 64
  %v1603 = vpop.permute.xlu0 %1602
  %1604 = vrot.lane.b32.xlu0 %v1525, 64
  %v1605 = vpop.permute.xlu0 %1604
  %1606 = vrot.lane.b32.xlu0 %v1534, 64
  %v1607 = vpop.permute.xlu0 %1606
  %vm1608 = vcmask 523264
  %v1609 = vsel %vm1608, %v1589, %v1591
  %v1610 = vsel %vm1608, %v1593, %v1595
  %v1611 = vsel %vm1608, %v1597, %v1599
  %v1612 = vsel %vm1608, %v1601, %v1603
  %v1613 = vsel %vm1608, %v1605, %v1607
  %v1624 = vrot.slane %v1394, 5
  %v1625 = vrot.slane %v1395, 5
  %v1626 = vrot.slane %v1396, 5
  %v1627 = vsel %vm785, %v1624, %v1626
  %v1628 = vrot.slane %v1397, 5
  %v1629 = vsel %vm785, %v1625, %v1628
  %v1630 = vrot.slane %v1398, 5
  %v1631 = vsel %vm785, %v1626, %v1630
  %v1632 = vrot.slane %v1399, 5
  %v1633 = vsel %vm785, %v1628, %v1632
  %v1634 = vrot.slane %v1400, 5
  %v1635 = vsel %vm785, %v1630, %v1634
  %v1636 = vrot.slane %v1401, 5
  %v1637 = vsel %vm785, %v1632, %v1636
  %v1638 = vrot.slane %v1402, 5
  %v1639 = vsel %vm785, %v1634, %v1638
  %v1640 = vrot.slane %v1403, 5
  %v1641 = vsel %vm785, %v1636, %v1640
  %1642 = vrot.lane.b32.xlu0 %v1624, 48
  %v1643 = vpop.permute.xlu0 %1642
  %1644 = vrot.lane.b32.xlu0 %v1625, 48
  %v1645 = vpop.permute.xlu0 %1644
  %1646 = vrot.lane.b32.xlu0 %v1627, 48
  %v1647 = vpop.permute.xlu0 %1646
  %1648 = vrot.lane.b32.xlu0 %v1629, 48
  %v1649 = vpop.permute.xlu0 %1648
  %1650 = vrot.lane.b32.xlu0 %v1631, 48
  %v1651 = vpop.permute.xlu0 %1650
  %1652 = vrot.lane.b32.xlu0 %v1633, 48
  %v1653 = vpop.permute.xlu0 %1652
  %1654 = vrot.lane.b32.xlu0 %v1635, 48
  %v1655 = vpop.permute.xlu0 %1654
  %1656 = vrot.lane.b32.xlu0 %v1637, 48
  %v1657 = vpop.permute.xlu0 %1656
  %1658 = vrot.lane.b32.xlu0 %v1639, 48
  %v1659 = vpop.permute.xlu0 %1658
  %1660 = vrot.lane.b32.xlu0 %v1641, 48
  %v1661 = vpop.permute.xlu0 %1660
  %vm1662 = vcmask 392192
  %v1663 = vsel %vm1662, %v1643, %v1645
  %v1664 = vsel %vm1662, %v1647, %v1649
  %v1665 = vsel %vm1662, %v1651, %v1653
  %v1666 = vsel %vm1662, %v1655, %v1657
  %v1667 = vsel %vm1662, %v1659, %v1661
  %1668 = vrot.lane.b32.xlu0 %v1624, 100
  %v1669 = vpop.permute.xlu0 %1668
  %1670 = vrot.lane.b32.xlu0 %v1625, 100
  %v1671 = vpop.permute.xlu0 %1670
  %1672 = vrot.lane.b32.xlu0 %v1627, 100
  %v1673 = vpop.permute.xlu0 %1672
  %1674 = vrot.lane.b32.xlu0 %v1629, 100
  %v1675 = vpop.permute.xlu0 %1674
  %1676 = vrot.lane.b32.xlu0 %v1631, 100
  %v1677 = vpop.permute.xlu0 %1676
  %1678 = vrot.lane.b32.xlu0 %v1633, 100
  %v1679 = vpop.permute.xlu0 %1678
  %1680 = vrot.lane.b32.xlu0 %v1635, 100
  %v1681 = vpop.permute.xlu0 %1680
  %1682 = vrot.lane.b32.xlu0 %v1637, 100
  %v1683 = vpop.permute.xlu0 %1682
  %1684 = vrot.lane.b32.xlu0 %v1639, 100
  %v1685 = vpop.permute.xlu0 %1684
  %1686 = vrot.lane.b32.xlu0 %v1641, 100
  %v1687 = vpop.permute.xlu0 %1686
  %vm1688 = vcmask 818176
  %v1689 = vsel %vm1688, %v1669, %v1671
  %v1690 = vsel %vm1688, %v1673, %v1675
  %v1691 = vsel %vm1688, %v1677, %v1679
  %v1692 = vsel %vm1688, %v1681, %v1683
  %v1693 = vsel %vm1688, %v1685, %v1687
  %1694 = vrot.lane.b32.xlu0 %v1624, 24
  %v1695 = vpop.permute.xlu0 %1694
  %1696 = vrot.lane.b32.xlu0 %v1625, 24
  %v1697 = vpop.permute.xlu0 %1696
  %1698 = vrot.lane.b32.xlu0 %v1627, 24
  %v1699 = vpop.permute.xlu0 %1698
  %1700 = vrot.lane.b32.xlu0 %v1629, 24
  %v1701 = vpop.permute.xlu0 %1700
  %1702 = vrot.lane.b32.xlu0 %v1631, 24
  %v1703 = vpop.permute.xlu0 %1702
  %1704 = vrot.lane.b32.xlu0 %v1633, 24
  %v1705 = vpop.permute.xlu0 %1704
  %1706 = vrot.lane.b32.xlu0 %v1635, 24
  %v1707 = vpop.permute.xlu0 %1706
  %1708 = vrot.lane.b32.xlu0 %v1637, 24
  %v1709 = vpop.permute.xlu0 %1708
  %1710 = vrot.lane.b32.xlu0 %v1639, 24
  %v1711 = vpop.permute.xlu0 %1710
  %1712 = vrot.lane.b32.xlu0 %v1641, 24
  %v1713 = vpop.permute.xlu0 %1712
  %vm1714 = vcmask 195584
  %v1715 = vsel %vm1714, %v1695, %v1697
  %v1716 = vsel %vm1714, %v1699, %v1701
  %v1717 = vsel %vm1714, %v1703, %v1705
  %v1718 = vsel %vm1714, %v1707, %v1709
  %v1719 = vsel %vm1714, %v1711, %v1713
  %vm1720 = vcmask 588800
  %v1723 = vsel %vm1720, %v1385, %v1415
  %v1726 = vsel %vm1720, %v1387, %v1419
  %v1729 = vsel %vm1720, %v1389, %v1423
  %v1732 = vsel %vm1720, %v1391, %v1427
  %v1735 = vsel %vm1720, %v1393, %v1431
  %vm1736 = vcmask 130048
  %v1739 = vsel %vm1736, %v1417, %v1461
  %v1742 = vsel %vm1736, %v1421, %v1462
  %v1745 = vsel %vm1736, %v1425, %v1463
  %v1748 = vsel %vm1736, %v1429, %v1464
  %v1751 = vsel %vm1736, %v1433, %v1465
  %vm1752 = vcmask 719872
  %v1755 = vsel %vm1752, %v1443, %v1537
  %v1758 = vsel %vm1752, %v1447, %v1541
  %v1761 = vsel %vm1752, %v1451, %v1545
  %v1764 = vsel %vm1752, %v1455, %v1549
  %v1767 = vsel %vm1752, %v1459, %v1553
  %v1770 = vsel %vm599, %v1539, %v1563
  %v1773 = vsel %vm599, %v1543, %v1567
  %v1776 = vsel %vm599, %v1547, %v1571
  %v1779 = vsel %vm599, %v1551, %v1575
  %v1782 = vsel %vm599, %v1555, %v1579
  %vm1783 = vcmask 850944
  %v1786 = vsel %vm1783, %v1583, %v1589
  %v1789 = vsel %vm1783, %v1584, %v1593
  %v1792 = vsel %vm1783, %v1585, %v1597
  %v1795 = vsel %vm1783, %v1586, %v1601
  %v1798 = vsel %vm1783, %v1587, %v1605
  %vm1799 = vcmask 392192
  %v1802 = vsel %vm1799, %v1591, %v1643
  %v1805 = vsel %vm1799, %v1595, %v1647
  %v1808 = vsel %vm1799, %v1599, %v1651
  %v1811 = vsel %vm1799, %v1603, %v1655
  %v1814 = vsel %vm1799, %v1607, %v1659
  %v1817 = vsel %vm884, %v1663, %v1669
  %v1820 = vsel %vm884, %v1664, %v1673
  %v1823 = vsel %vm884, %v1665, %v1677
  %v1826 = vsel %vm884, %v1666, %v1681
  %v1829 = vsel %vm884, %v1667, %v1685
  %vm1830 = vcmask 523264
  %v1833 = vsel %vm1830, %v1671, %v1695
  %v1836 = vsel %vm1830, %v1675, %v1699
  %v1839 = vsel %vm1830, %v1679, %v1703
  %v1842 = vsel %vm1830, %v1683, %v1707
  %v1845 = vsel %vm1830, %v1687, %v1711
  %v1846 = vld [vmem:[%s7] sm:$0xff]
  %v1847 = vld [vmem:[%s7 + $0x8] sm:$0xff]
  %v1848 = vld [vmem:[%s7 + $0x10] sm:$0xff]
  %v1849 = vld [vmem:[%s7 + $0x18] sm:$0xff]
  %v1850 = vld [vmem:[%s7 + $0x20] sm:$0xff]
  %v1851 = vld [vmem:[%s7 + $0x28] sm:$0xff]
  %v1852 = vld [vmem:[%s7 + $0x30] sm:$0xff]
  %v1853 = vld [vmem:[%s7 + $0x38] sm:$0xff]
  %v1854 = vld [vmem:[%s7 + $0x40] sm:$0xff]
  %v1855 = vld [vmem:[%s7 + $0x48] sm:$0xff]
  %v1856 = vld [vmem:[%s7 + $0x50] sm:$0xff]
  %v1857 = vld [vmem:[%s7 + $0x58] sm:$0xff]
  %v1858 = vld [vmem:[%s7 + $0x60] sm:$0xff]
  %v1859 = vld [vmem:[%s7 + $0x68] sm:$0xff]
  %v1860 = vld [vmem:[%s7 + $0x70] sm:$0xff]
  %v1861 = vld [vmem:[%s7 + $0x78] sm:$0xff]
  %v1862 = vld [vmem:[%s7 + $0x80] sm:$0xff]
  %v1863 = vld [vmem:[%s7 + $0x88] sm:$0xff]
  %v1864 = vld [vmem:[%s7 + $0x90] sm:$0xff]
  %v1865 = vld [vmem:[%s7 + $0x98] sm:$0xff]
  %v1866 = vld [vmem:[%s7 + $0xa0] sm:$0xff]
  %v1867 = vld [vmem:[%s7 + $0xa8] sm:$0xff]
  %v1868 = vld [vmem:[%s7 + $0xb0] sm:$0xff]
  %v1869 = vld [vmem:[%s7 + $0xb8] sm:$0xff]
  %v1870 = vld [vmem:[%s7 + $0xc0] sm:$0xff]
  %v1871 = vld [vmem:[%s7 + $0xc8] sm:$0xff]
  %v1872 = vld [vmem:[%s7 + $0xd0] sm:$0xff]
  %v1873 = vld [vmem:[%s7 + $0xd8] sm:$0xff]
  %v1874 = vld [vmem:[%s7 + $0xe0] sm:$0xff]
  %v1875 = vld [vmem:[%s7 + $0xe8] sm:$0xff]
  %v1876 = vld [vmem:[%s7 + $0xf0] sm:$0xff]
  %v1877 = vld [vmem:[%s7 + $0xf8] sm:$0xff]
  %v1878 = vld [vmem:[%s7 + $0x100] sm:$0xff]
  %v1879 = vld [vmem:[%s7 + $0x108] sm:$0xff]
  %v1880 = vld [vmem:[%s7 + $0x110] sm:$0xff]
  %v1881 = vld [vmem:[%s7 + $0x118] sm:$0xff]
  %v1882 = vld [vmem:[%s7 + $0x120] sm:$0xff]
  %v1883 = vld [vmem:[%s7 + $0x128] sm:$0xff]
  %v1884 = vld [vmem:[%s7 + $0x130] sm:$0xff]
  %v1885 = vld [vmem:[%s7 + $0x138] sm:$0xff]
  %v1886 = vld [vmem:[%s7 + $0x140] sm:$0xff]
  %v1887 = vld [vmem:[%s7 + $0x148] sm:$0xff]
  %v1888 = vld [vmem:[%s7 + $0x150] sm:$0xff]
  %v1889 = vld [vmem:[%s7 + $0x158] sm:$0xff]
  %v1890 = vld [vmem:[%s7 + $0x160] sm:$0xff]
  %v1891 = vld [vmem:[%s7 + $0x168] sm:$0xff]
  %v1892 = vld [vmem:[%s7 + $0x170] sm:$0xff]
  %v1893 = vld [vmem:[%s7 + $0x178] sm:$0xff]
  %v1894 = vld [vmem:[%s7 + $0x180] sm:$0xff]
  %v1895 = vld [vmem:[%s7 + $0x188] sm:$0xff]
  %v1896 = vld [vmem:[%s7 + $0x190] sm:$0xff]
  %v1897 = vld [vmem:[%s7 + $0x198] sm:$0xff]
  %v1898 = vld [vmem:[%s7 + $0x1a0] sm:$0xff]
  %v1899 = vld [vmem:[%s7 + $0x1a8] sm:$0xff]
  %v1900 = vld [vmem:[%s7 + $0x1b0] sm:$0xff]
  %v1901 = vld [vmem:[%s7 + $0x1b8] sm:$0xff]
  %v1902 = vld [vmem:[%s7 + $0x1c0] sm:$0xff]
  %v1903 = vld [vmem:[%s7 + $0x1c8] sm:$0xff]
  %v1904 = vld [vmem:[%s7 + $0x1d0] sm:$0xff]
  %v1905 = vld [vmem:[%s7 + $0x1d8] sm:$0xff]
  %v1906 = vld [vmem:[%s7 + $0x1e0] sm:$0xff]
  %v1907 = vld [vmem:[%s7 + $0x1e8] sm:$0xff]
  %v1908 = vld [vmem:[%s7 + $0x1f0] sm:$0xff]
  %v1909 = vld [vmem:[%s7 + $0x1f8] sm:$0xff]
  %v1910 = vld [vmem:[%s7 + $0x200] sm:$0xff]
  %v1911 = vld [vmem:[%s7 + $0x208] sm:$0xff]
  %v1912 = vld [vmem:[%s7 + $0x210] sm:$0xff]
  %v1913 = vld [vmem:[%s7 + $0x218] sm:$0xff]
  %v1914 = vld [vmem:[%s7 + $0x220] sm:$0xff]
  %v1915 = vld [vmem:[%s7 + $0x228] sm:$0xff]
  %v1916 = vld [vmem:[%s7 + $0x230] sm:$0xff]
  %v1917 = vld [vmem:[%s7 + $0x238] sm:$0xff]
  %v1918 = vld [vmem:[%s7 + $0x240] sm:$0xff]
  %v1919 = vld [vmem:[%s7 + $0x248] sm:$0xff]
  %v1920 = vld [vmem:[%s7 + $0x250] sm:$0xff]
  %v1921 = vld [vmem:[%s7 + $0x258] sm:$0xff]
  %v1922 = vld [vmem:[%s7 + $0x260] sm:$0xff]
  %v1923 = vld [vmem:[%s7 + $0x268] sm:$0xff]
  %v1924 = vld [vmem:[%s7 + $0x270] sm:$0xff]
  %v1925 = vld [vmem:[%s7 + $0x278] sm:$0xff]
  %v1926 = vld [vmem:[%s7 + $0x280] sm:$0xff]
  %v1927 = vld [vmem:[%s7 + $0x288] sm:$0xff]
  %v1928 = vld [vmem:[%s7 + $0x290] sm:$0xff]
  %v1929 = vld [vmem:[%s7 + $0x298] sm:$0xff]
  %v1930 = vld [vmem:[%s7 + $0x2a0] sm:$0xff]
  %v1931 = vld [vmem:[%s7 + $0x2a8] sm:$0xff]
  %v1932 = vld [vmem:[%s7 + $0x2b0] sm:$0xff]
  %v1933 = vld [vmem:[%s7 + $0x2b8] sm:$0xff]
  %v1934 = vld [vmem:[%s7 + $0x2c0] sm:$0xff]
  %v1935 = vld [vmem:[%s7 + $0x2c8] sm:$0xff]
  %v1936 = vld [vmem:[%s7 + $0x2d0] sm:$0xff]
  %v1937 = vld [vmem:[%s7 + $0x2d8] sm:$0xff]
  %v1938 = vld [vmem:[%s7 + $0x2e0] sm:$0xff]
  %v1939 = vld [vmem:[%s7 + $0x2e8] sm:$0xff]
  %v1940 = vld [vmem:[%s7 + $0x2f0] sm:$0xff]
  %v1941 = vld [vmem:[%s7 + $0x2f8] sm:$0xff]
  %v1942 = vld [vmem:[%s7 + $0x300] sm:$0xff]
  %v1943 = vld [vmem:[%s7 + $0x308] sm:$0xff]
  %v1944 = vld [vmem:[%s7 + $0x310] sm:$0xff]
  %v1945 = vld [vmem:[%s7 + $0x318] sm:$0xff]
  %v1946 = vld [vmem:[%s7 + $0x320] sm:$0xff]
  %v1947 = vld [vmem:[%s7 + $0x328] sm:$0xff]
  %v1948 = vld [vmem:[%s7 + $0x330] sm:$0xff]
  %v1949 = vld [vmem:[%s7 + $0x338] sm:$0xff]
  %v1950 = vld [vmem:[%s7 + $0x340] sm:$0xff]
  %v1951 = vld [vmem:[%s7 + $0x348] sm:$0xff]
  %v1952 = vld [vmem:[%s7 + $0x350] sm:$0xff]
  %v1953 = vld [vmem:[%s7 + $0x358] sm:$0xff]
  %v1954 = vld [vmem:[%s7 + $0x360] sm:$0xff]
  %v1955 = vld [vmem:[%s7 + $0x368] sm:$0xff]
  %v1956 = vld [vmem:[%s7 + $0x370] sm:$0xff]
  %v1957 = vld [vmem:[%s7 + $0x378] sm:$0xff]
  %v1958 = vld [vmem:[%s7 + $0x380] sm:$0xff]
  %v1959 = vld [vmem:[%s7 + $0x388] sm:$0xff]
  %v1960 = vld [vmem:[%s7 + $0x390] sm:$0xff]
  %v1961 = vld [vmem:[%s7 + $0x398] sm:$0xff]
  %v1962 = vld [vmem:[%s7 + $0x3a0] sm:$0xff]
  %v1963 = vld [vmem:[%s7 + $0x3a8] sm:$0xff]
  %v1964 = vld [vmem:[%s7 + $0x3b0] sm:$0xff]
  %v1965 = vld [vmem:[%s7 + $0x3b8] sm:$0xff]
  %v1966 = vld [vmem:[%s7 + $0x3c0] sm:$0xff]
  %v1967 = vld [vmem:[%s7 + $0x3c8] sm:$0xff]
  %v1968 = vld [vmem:[%s7 + $0x3d0] sm:$0xff]
  %v1969 = vld [vmem:[%s7 + $0x3d8] sm:$0xff]
  %v1970 = vld [vmem:[%s7 + $0x3e0] sm:$0xff]
  %v1971 = vld [vmem:[%s7 + $0x3e8] sm:$0xff]
  %v1972 = vld [vmem:[%s7 + $0x3f0] sm:$0xff]
  %v1973 = vld [vmem:[%s7 + $0x3f8] sm:$0xff]
  %v1974 = vld [vmem:[%s7 + $0x400] sm:$0xff]
  %v1975 = vld [vmem:[%s7 + $0x408] sm:$0xff]
  %v1976 = vld [vmem:[%s7 + $0x410] sm:$0xff]
  %v1977 = vld [vmem:[%s7 + $0x418] sm:$0xff]
  %v1978 = vld [vmem:[%s7 + $0x420] sm:$0xff]
  %v1979 = vld [vmem:[%s7 + $0x428] sm:$0xff]
  %v1980 = vld [vmem:[%s7 + $0x430] sm:$0xff]
  %v1981 = vld [vmem:[%s7 + $0x438] sm:$0xff]
  %v1982 = vld [vmem:[%s7 + $0x440] sm:$0xff]
  %v1983 = vld [vmem:[%s7 + $0x448] sm:$0xff]
  %v1984 = vld [vmem:[%s7 + $0x450] sm:$0xff]
  %v1985 = vld [vmem:[%s7 + $0x458] sm:$0xff]
  %v1986 = vld [vmem:[%s7 + $0x460] sm:$0xff]
  %v1987 = vld [vmem:[%s7 + $0x468] sm:$0xff]
  %v1988 = vld [vmem:[%s7 + $0x470] sm:$0xff]
  %v1989 = vld [vmem:[%s7 + $0x478] sm:$0xff]
  %v1990 = vld [vmem:[%s7 + $0x480] sm:$0xff]
  %v1991 = vld [vmem:[%s7 + $0x488] sm:$0xff]
  %v1992 = vld [vmem:[%s7 + $0x490] sm:$0xff]
  %v1993 = vld [vmem:[%s7 + $0x498] sm:$0xff]
  %v1994 = vld [vmem:[%s7 + $0x4a0] sm:$0xff]
  %v1995 = vld [vmem:[%s7 + $0x4a8] sm:$0xff]
  %v1996 = vld [vmem:[%s7 + $0x4b0] sm:$0xff]
  %v1997 = vld [vmem:[%s7 + $0x4b8] sm:$0xff]
  %v1998 = vld [vmem:[%s7 + $0x4c0] sm:$0xff]
  %v1999 = vld [vmem:[%s7 + $0x4c8] sm:$0xff]
  %v2000 = vld [vmem:[%s7 + $0x4d0] sm:$0xff]
  %v2001 = vld [vmem:[%s7 + $0x4d8] sm:$0xff]
  %v2002 = vld [vmem:[%s7 + $0x4e0] sm:$0xff]
  %v2003 = vld [vmem:[%s7 + $0x4e8] sm:$0xff]
  %v2004 = vld [vmem:[%s7 + $0x4f0] sm:$0xff]
  %v2005 = vld [vmem:[%s7 + $0x4f8] sm:$0xff]
  %v2006 = vld [vmem:[%s7 + $0x500] sm:$0xff]
  %v2007 = vld [vmem:[%s7 + $0x508] sm:$0xff]
  %v2008 = vld [vmem:[%s7 + $0x510] sm:$0xff]
  %v2009 = vld [vmem:[%s7 + $0x518] sm:$0xff]
  %v2010 = vld [vmem:[%s7 + $0x520] sm:$0xff]
  %v2011 = vld [vmem:[%s7 + $0x528] sm:$0xff]
  %v2012 = vld [vmem:[%s7 + $0x530] sm:$0xff]
  %v2013 = vld [vmem:[%s7 + $0x538] sm:$0xff]
  %v2014 = vld [vmem:[%s7 + $0x540] sm:$0xff]
  %v2015 = vld [vmem:[%s7 + $0x548] sm:$0xff]
  %v2016 = vld [vmem:[%s7 + $0x550] sm:$0xff]
  %v2017 = vld [vmem:[%s7 + $0x558] sm:$0xff]
  %v2018 = vld [vmem:[%s7 + $0x560] sm:$0xff]
  %v2019 = vld [vmem:[%s7 + $0x568] sm:$0xff]
  %v2020 = vld [vmem:[%s7 + $0x570] sm:$0xff]
  %v2021 = vld [vmem:[%s7 + $0x578] sm:$0xff]
  %v2022 = vld [vmem:[%s7 + $0x580] sm:$0xff]
  %v2023 = vld [vmem:[%s7 + $0x588] sm:$0xff]
  %v2024 = vld [vmem:[%s7 + $0x590] sm:$0xff]
  %v2025 = vld [vmem:[%s7 + $0x598] sm:$0xff]
  %v2026 = vld [vmem:[%s7 + $0x5a0] sm:$0xff]
  %v2027 = vld [vmem:[%s7 + $0x5a8] sm:$0xff]
  %v2028 = vld [vmem:[%s7 + $0x5b0] sm:$0xff]
  %v2029 = vld [vmem:[%s7 + $0x5b8] sm:$0xff]
  %v2030 = vld [vmem:[%s7 + $0x5c0] sm:$0xff]
  %v2031 = vld [vmem:[%s7 + $0x5c8] sm:$0xff]
  %v2032 = vld [vmem:[%s7 + $0x5d0] sm:$0xff]
  %v2033 = vld [vmem:[%s7 + $0x5d8] sm:$0xff]
  %v2034 = vld [vmem:[%s7 + $0x5e0] sm:$0xff]
  %v2035 = vld [vmem:[%s7 + $0x5e8] sm:$0xff]
  %v2036 = vld [vmem:[%s7 + $0x5f0] sm:$0xff]
  %v2037 = vld [vmem:[%s7 + $0x5f8] sm:$0xff]
  %v2038 = vld [vmem:[%s7 + $0x600] sm:$0xff]
  %v2039 = vld [vmem:[%s7 + $0x608] sm:$0xff]
  %v2040 = vld [vmem:[%s7 + $0x610] sm:$0xff]
  %v2041 = vld [vmem:[%s7 + $0x618] sm:$0xff]
  %v2042 = vld [vmem:[%s7 + $0x620] sm:$0xff]
  %v2043 = vld [vmem:[%s7 + $0x628] sm:$0xff]
  %v2044 = vld [vmem:[%s7 + $0x630] sm:$0xff]
  %v2045 = vld [vmem:[%s7 + $0x638] sm:$0xff]
  %v2046 = vld [vmem:[%s7 + $0x640] sm:$0xff]
  %v2047 = vld [vmem:[%s7 + $0x648] sm:$0xff]
  %v2048 = vld [vmem:[%s7 + $0x650] sm:$0xff]
  %v2049 = vld [vmem:[%s7 + $0x658] sm:$0xff]
  %v2050 = vld [vmem:[%s7 + $0x660] sm:$0xff]
  %v2051 = vld [vmem:[%s7 + $0x668] sm:$0xff]
  %v2052 = vld [vmem:[%s7 + $0x670] sm:$0xff]
  %v2053 = vld [vmem:[%s7 + $0x678] sm:$0xff]
  %v2054 = vld [vmem:[%s7 + $0x680] sm:$0xff]
  %v2055 = vld [vmem:[%s7 + $0x688] sm:$0xff]
  %v2056 = vld [vmem:[%s7 + $0x690] sm:$0xff]
  %v2057 = vld [vmem:[%s7 + $0x698] sm:$0xff]
  %v2058 = vld [vmem:[%s7 + $0x6a0] sm:$0xff]
  %v2059 = vld [vmem:[%s7 + $0x6a8] sm:$0xff]
  %v2060 = vld [vmem:[%s7 + $0x6b0] sm:$0xff]
  %v2061 = vld [vmem:[%s7 + $0x6b8] sm:$0xff]
  %v2062 = vld [vmem:[%s7 + $0x6c0] sm:$0xff]
  %v2063 = vld [vmem:[%s7 + $0x6c8] sm:$0xff]
  %v2064 = vld [vmem:[%s7 + $0x6d0] sm:$0xff]
  %v2065 = vld [vmem:[%s7 + $0x6d8] sm:$0xff]
  %v2066 = vld [vmem:[%s7 + $0x6e0] sm:$0xff]
  %v2067 = vld [vmem:[%s7 + $0x6e8] sm:$0xff]
  %v2068 = vld [vmem:[%s7 + $0x6f0] sm:$0xff]
  %v2069 = vld [vmem:[%s7 + $0x6f8] sm:$0xff]
  %v2070 = vld [vmem:[%s7 + $0x700] sm:$0xff]
  %v2071 = vld [vmem:[%s9] sm:$0x3]
  %v2073 = vlaneseq
  %v2074 = vshrl.u32 %v2073, 7
  %v2075 = vsub.s32 0, %v2074
  %v2076 = vrot.slane %v2071, %v2075
  %v2077 = vlaneseq
  %v2078 = vshrl.u32 %v2077, 7
  %v2079 = vsub.s32 1, %v2078
  %v2080 = vrot.slane %v2071, %v2079
  %v2084 = vshrl.u32 %v1384, 16
  %v2086 = vrot.slane %v2084, 3
  %v2087 = vshll.u32 %v1384, 16
  %v2089 = vrot.slane %v2087, 4
  %v2090 = vor.u32 %v2086, %v2089
  %v2092 = vshrl.u32 %v1386, 16
  %v2094 = vrot.slane %v2092, 3
  %v2095 = vshll.u32 %v1386, 16
  %v2097 = vrot.slane %v2095, 4
  %v2098 = vor.u32 %v2094, %v2097
  %v2099 = vsel %vm951, %v2090, %v2098
  %v2100 = vshrl.u32 %v1723, 16
  %v2102 = vrot.slane %v2100, 3
  %v2103 = vshll.u32 %v1723, 16
  %v2105 = vrot.slane %v2103, 4
  %v2106 = vor.u32 %v2102, %v2105
  %v2107 = vshrl.u32 %v1726, 16
  %v2109 = vrot.slane %v2107, 3
  %v2110 = vshll.u32 %v1726, 16
  %v2112 = vrot.slane %v2110, 4
  %v2113 = vor.u32 %v2109, %v2112
  %v2114 = vsel %vm951, %v2106, %v2113
  %v2116 = vshrl.u32 %v1435, 16
  %v2118 = vrot.slane %v2116, 3
  %v2119 = vshll.u32 %v1435, 16
  %v2121 = vrot.slane %v2119, 4
  %v2122 = vor.u32 %v2118, %v2121
  %v2124 = vshrl.u32 %v1436, 16
  %v2126 = vrot.slane %v2124, 3
  %v2127 = vshll.u32 %v1436, 16
  %v2129 = vrot.slane %v2127, 4
  %v2130 = vor.u32 %v2126, %v2129
  %v2131 = vsel %vm951, %v2122, %v2130
  %v2132 = vshrl.u32 %v1739, 16
  %v2134 = vrot.slane %v2132, 3
  %v2135 = vshll.u32 %v1739, 16
  %v2137 = vrot.slane %v2135, 4
  %v2138 = vor.u32 %v2134, %v2137
  %v2139 = vshrl.u32 %v1742, 16
  %v2141 = vrot.slane %v2139, 3
  %v2142 = vshll.u32 %v1742, 16
  %v2144 = vrot.slane %v2142, 4
  %v2145 = vor.u32 %v2141, %v2144
  %v2146 = vsel %vm951, %v2138, %v2145
  %v2147 = vshrl.u32 %v1755, 16
  %v2149 = vrot.slane %v2147, 3
  %v2150 = vshll.u32 %v1755, 16
  %v2152 = vrot.slane %v2150, 4
  %v2153 = vor.u32 %v2149, %v2152
  %v2154 = vshrl.u32 %v1758, 16
  %v2156 = vrot.slane %v2154, 3
  %v2157 = vshll.u32 %v1758, 16
  %v2159 = vrot.slane %v2157, 4
  %v2160 = vor.u32 %v2156, %v2159
  %v2161 = vsel %vm951, %v2153, %v2160
  %v2163 = vshrl.u32 %v1557, 16
  %v2165 = vrot.slane %v2163, 3
  %v2166 = vshll.u32 %v1557, 16
  %v2168 = vrot.slane %v2166, 4
  %v2169 = vor.u32 %v2165, %v2168
  %v2171 = vshrl.u32 %v1558, 16
  %v2173 = vrot.slane %v2171, 3
  %v2174 = vshll.u32 %v1558, 16
  %v2176 = vrot.slane %v2174, 4
  %v2177 = vor.u32 %v2173, %v2176
  %v2178 = vsel %vm951, %v2169, %v2177
  %v2179 = vshrl.u32 %v1770, 16
  %v2181 = vrot.slane %v2179, 3
  %v2182 = vshll.u32 %v1770, 16
  %v2184 = vrot.slane %v2182, 4
  %v2185 = vor.u32 %v2181, %v2184
  %v2186 = vshrl.u32 %v1773, 16
  %v2188 = vrot.slane %v2186, 3
  %v2189 = vshll.u32 %v1773, 16
  %v2191 = vrot.slane %v2189, 4
  %v2192 = vor.u32 %v2188, %v2191
  %v2193 = vsel %vm951, %v2185, %v2192
  %v2194 = vshrl.u32 %v1786, 16
  %v2196 = vrot.slane %v2194, 3
  %v2197 = vshll.u32 %v1786, 16
  %v2199 = vrot.slane %v2197, 4
  %v2200 = vor.u32 %v2196, %v2199
  %v2201 = vshrl.u32 %v1789, 16
  %v2203 = vrot.slane %v2201, 3
  %v2204 = vshll.u32 %v1789, 16
  %v2206 = vrot.slane %v2204, 4
  %v2207 = vor.u32 %v2203, %v2206
  %v2208 = vsel %vm951, %v2200, %v2207
  %v2210 = vshrl.u32 %v1609, 16
  %v2212 = vrot.slane %v2210, 3
  %v2213 = vshll.u32 %v1609, 16
  %v2215 = vrot.slane %v2213, 4
  %v2216 = vor.u32 %v2212, %v2215
  %v2218 = vshrl.u32 %v1610, 16
  %v2220 = vrot.slane %v2218, 3
  %v2221 = vshll.u32 %v1610, 16
  %v2223 = vrot.slane %v2221, 4
  %v2224 = vor.u32 %v2220, %v2223
  %v2225 = vsel %vm951, %v2216, %v2224
  %v2226 = vshrl.u32 %v1802, 16
  %v2228 = vrot.slane %v2226, 3
  %v2229 = vshll.u32 %v1802, 16
  %v2231 = vrot.slane %v2229, 4
  %v2232 = vor.u32 %v2228, %v2231
  %v2233 = vshrl.u32 %v1805, 16
  %v2235 = vrot.slane %v2233, 3
  %v2236 = vshll.u32 %v1805, 16
  %v2238 = vrot.slane %v2236, 4
  %v2239 = vor.u32 %v2235, %v2238
  %v2240 = vsel %vm951, %v2232, %v2239
  %v2241 = vshrl.u32 %v1817, 16
  %v2243 = vrot.slane %v2241, 3
  %v2244 = vshll.u32 %v1817, 16
  %v2246 = vrot.slane %v2244, 4
  %v2247 = vor.u32 %v2243, %v2246
  %v2248 = vshrl.u32 %v1820, 16
  %v2250 = vrot.slane %v2248, 3
  %v2251 = vshll.u32 %v1820, 16
  %v2253 = vrot.slane %v2251, 4
  %v2254 = vor.u32 %v2250, %v2253
  %v2255 = vsel %vm951, %v2247, %v2254
  %v2257 = vshrl.u32 %v1689, 16
  %v2259 = vrot.slane %v2257, 3
  %v2260 = vshll.u32 %v1689, 16
  %v2262 = vrot.slane %v2260, 4
  %v2263 = vor.u32 %v2259, %v2262
  %v2265 = vshrl.u32 %v1690, 16
  %v2267 = vrot.slane %v2265, 3
  %v2268 = vshll.u32 %v1690, 16
  %v2270 = vrot.slane %v2268, 4
  %v2271 = vor.u32 %v2267, %v2270
  %v2272 = vsel %vm951, %v2263, %v2271
  %v2273 = vshrl.u32 %v1833, 16
  %v2275 = vrot.slane %v2273, 3
  %v2276 = vshll.u32 %v1833, 16
  %v2278 = vrot.slane %v2276, 4
  %v2279 = vor.u32 %v2275, %v2278
  %v2280 = vshrl.u32 %v1836, 16
  %v2282 = vrot.slane %v2280, 3
  %v2283 = vshll.u32 %v1836, 16
  %v2285 = vrot.slane %v2283, 4
  %v2286 = vor.u32 %v2282, %v2285
  %v2287 = vsel %vm951, %v2279, %v2286
  %v2289 = vshrl.u32 %v1715, 16
  %v2291 = vrot.slane %v2289, 3
  %v2292 = vshll.u32 %v1715, 16
  %v2294 = vrot.slane %v2292, 4
  %v2295 = vor.u32 %v2291, %v2294
  %v2297 = vshrl.u32 %v1716, 16
  %v2299 = vrot.slane %v2297, 3
  %v2300 = vshll.u32 %v1716, 16
  %v2302 = vrot.slane %v2300, 4
  %v2303 = vor.u32 %v2299, %v2302
  %v2304 = vsel %vm951, %v2295, %v2303
  %v2306 = vshrl.u32 %v1697, 16
  %v2308 = vrot.slane %v2306, 3
  %v2309 = vshll.u32 %v1697, 16
  %v2311 = vrot.slane %v2309, 4
  %v2312 = vor.u32 %v2308, %v2311
  %v2314 = vshrl.u32 %v1701, 16
  %v2316 = vrot.slane %v2314, 3
  %v2317 = vshll.u32 %v1701, 16
  %v2319 = vrot.slane %v2317, 4
  %v2320 = vor.u32 %v2316, %v2319
  %v2321 = vsel %vm951, %v2312, %v2320
  %v2323 = vshrl.u32 %v1388, 16
  %v2325 = vrot.slane %v2323, 3
  %v2326 = vshll.u32 %v1388, 16
  %v2328 = vrot.slane %v2326, 4
  %v2329 = vor.u32 %v2325, %v2328
  %v2330 = vsel %vm951, %v2098, %v2329
  %v2331 = vshrl.u32 %v1729, 16
  %v2333 = vrot.slane %v2331, 3
  %v2334 = vshll.u32 %v1729, 16
  %v2336 = vrot.slane %v2334, 4
  %v2337 = vor.u32 %v2333, %v2336
  %v2338 = vsel %vm951, %v2113, %v2337
  %v2340 = vshrl.u32 %v1437, 16
  %v2342 = vrot.slane %v2340, 3
  %v2343 = vshll.u32 %v1437, 16
  %v2345 = vrot.slane %v2343, 4
  %v2346 = vor.u32 %v2342, %v2345
  %v2347 = vsel %vm951, %v2130, %v2346
  %v2348 = vshrl.u32 %v1745, 16
  %v2350 = vrot.slane %v2348, 3
  %v2351 = vshll.u32 %v1745, 16
  %v2353 = vrot.slane %v2351, 4
  %v2354 = vor.u32 %v2350, %v2353
  %v2355 = vsel %vm951, %v2145, %v2354
  %v2356 = vshrl.u32 %v1761, 16
  %v2358 = vrot.slane %v2356, 3
  %v2359 = vshll.u32 %v1761, 16
  %v2361 = vrot.slane %v2359, 4
  %v2362 = vor.u32 %v2358, %v2361
  %v2363 = vsel %vm951, %v2160, %v2362
  %v2365 = vshrl.u32 %v1559, 16
  %v2367 = vrot.slane %v2365, 3
  %v2368 = vshll.u32 %v1559, 16
  %v2370 = vrot.slane %v2368, 4
  %v2371 = vor.u32 %v2367, %v2370
  %v2372 = vsel %vm951, %v2177, %v2371
  %v2373 = vshrl.u32 %v1776, 16
  %v2375 = vrot.slane %v2373, 3
  %v2376 = vshll.u32 %v1776, 16
  %v2378 = vrot.slane %v2376, 4
  %v2379 = vor.u32 %v2375, %v2378
  %v2380 = vsel %vm951, %v2192, %v2379
  %v2381 = vshrl.u32 %v1792, 16
  %v2383 = vrot.slane %v2381, 3
  %v2384 = vshll.u32 %v1792, 16
  %v2386 = vrot.slane %v2384, 4
  %v2387 = vor.u32 %v2383, %v2386
  %v2388 = vsel %vm951, %v2207, %v2387
  %v2390 = vshrl.u32 %v1611, 16
  %v2392 = vrot.slane %v2390, 3
  %v2393 = vshll.u32 %v1611, 16
  %v2395 = vrot.slane %v2393, 4
  %v2396 = vor.u32 %v2392, %v2395
  %v2397 = vsel %vm951, %v2224, %v2396
  %v2398 = vshrl.u32 %v1808, 16
  %v2400 = vrot.slane %v2398, 3
  %v2401 = vshll.u32 %v1808, 16
  %v2403 = vrot.slane %v2401, 4
  %v2404 = vor.u32 %v2400, %v2403
  %v2405 = vsel %vm951, %v2239, %v2404
  %v2406 = vshrl.u32 %v1823, 16
  %v2408 = vrot.slane %v2406, 3
  %v2409 = vshll.u32 %v1823, 16
  %v2411 = vrot.slane %v2409, 4
  %v2412 = vor.u32 %v2408, %v2411
  %v2413 = vsel %vm951, %v2254, %v2412
  %v2415 = vshrl.u32 %v1691, 16
  %v2417 = vrot.slane %v2415, 3
  %v2418 = vshll.u32 %v1691, 16
  %v2420 = vrot.slane %v2418, 4
  %v2421 = vor.u32 %v2417, %v2420
  %v2422 = vsel %vm951, %v2271, %v2421
  %v2423 = vshrl.u32 %v1839, 16
  %v2425 = vrot.slane %v2423, 3
  %v2426 = vshll.u32 %v1839, 16
  %v2428 = vrot.slane %v2426, 4
  %v2429 = vor.u32 %v2425, %v2428
  %v2430 = vsel %vm951, %v2286, %v2429
  %v2432 = vshrl.u32 %v1717, 16
  %v2434 = vrot.slane %v2432, 3
  %v2435 = vshll.u32 %v1717, 16
  %v2437 = vrot.slane %v2435, 4
  %v2438 = vor.u32 %v2434, %v2437
  %v2439 = vsel %vm951, %v2303, %v2438
  %v2441 = vshrl.u32 %v1705, 16
  %v2443 = vrot.slane %v2441, 3
  %v2444 = vshll.u32 %v1705, 16
  %v2446 = vrot.slane %v2444, 4
  %v2447 = vor.u32 %v2443, %v2446
  %v2448 = vsel %vm951, %v2320, %v2447
  %v2450 = vshrl.u32 %v1390, 16
  %v2452 = vrot.slane %v2450, 3
  %v2453 = vshll.u32 %v1390, 16
  %v2455 = vrot.slane %v2453, 4
  %v2456 = vor.u32 %v2452, %v2455
  %v2457 = vsel %vm951, %v2329, %v2456
  %v2458 = vshrl.u32 %v1732, 16
  %v2460 = vrot.slane %v2458, 3
  %v2461 = vshll.u32 %v1732, 16
  %v2463 = vrot.slane %v2461, 4
  %v2464 = vor.u32 %v2460, %v2463
  %v2465 = vsel %vm951, %v2337, %v2464
  %v2467 = vshrl.u32 %v1438, 16
  %v2469 = vrot.slane %v2467, 3
  %v2470 = vshll.u32 %v1438, 16
  %v2472 = vrot.slane %v2470, 4
  %v2473 = vor.u32 %v2469, %v2472
  %v2474 = vsel %vm951, %v2346, %v2473
  %v2475 = vshrl.u32 %v1748, 16
  %v2477 = vrot.slane %v2475, 3
  %v2478 = vshll.u32 %v1748, 16
  %v2480 = vrot.slane %v2478, 4
  %v2481 = vor.u32 %v2477, %v2480
  %v2482 = vsel %vm951, %v2354, %v2481
  %v2483 = vshrl.u32 %v1764, 16
  %v2485 = vrot.slane %v2483, 3
  %v2486 = vshll.u32 %v1764, 16
  %v2488 = vrot.slane %v2486, 4
  %v2489 = vor.u32 %v2485, %v2488
  %v2490 = vsel %vm951, %v2362, %v2489
  %v2492 = vshrl.u32 %v1560, 16
  %v2494 = vrot.slane %v2492, 3
  %v2495 = vshll.u32 %v1560, 16
  %v2497 = vrot.slane %v2495, 4
  %v2498 = vor.u32 %v2494, %v2497
  %v2499 = vsel %vm951, %v2371, %v2498
  %v2500 = vshrl.u32 %v1779, 16
  %v2502 = vrot.slane %v2500, 3
  %v2503 = vshll.u32 %v1779, 16
  %v2505 = vrot.slane %v2503, 4
  %v2506 = vor.u32 %v2502, %v2505
  %v2507 = vsel %vm951, %v2379, %v2506
  %v2508 = vshrl.u32 %v1795, 16
  %v2510 = vrot.slane %v2508, 3
  %v2511 = vshll.u32 %v1795, 16
  %v2513 = vrot.slane %v2511, 4
  %v2514 = vor.u32 %v2510, %v2513
  %v2515 = vsel %vm951, %v2387, %v2514
  %v2517 = vshrl.u32 %v1612, 16
  %v2519 = vrot.slane %v2517, 3
  %v2520 = vshll.u32 %v1612, 16
  %v2522 = vrot.slane %v2520, 4
  %v2523 = vor.u32 %v2519, %v2522
  %v2524 = vsel %vm951, %v2396, %v2523
  %v2525 = vshrl.u32 %v1811, 16
  %v2527 = vrot.slane %v2525, 3
  %v2528 = vshll.u32 %v1811, 16
  %v2530 = vrot.slane %v2528, 4
  %v2531 = vor.u32 %v2527, %v2530
  %v2532 = vsel %vm951, %v2404, %v2531
  %v2533 = vshrl.u32 %v1826, 16
  %v2535 = vrot.slane %v2533, 3
  %v2536 = vshll.u32 %v1826, 16
  %v2538 = vrot.slane %v2536, 4
  %v2539 = vor.u32 %v2535, %v2538
  %v2540 = vsel %vm951, %v2412, %v2539
  %v2542 = vshrl.u32 %v1692, 16
  %v2544 = vrot.slane %v2542, 3
  %v2545 = vshll.u32 %v1692, 16
  %v2547 = vrot.slane %v2545, 4
  %v2548 = vor.u32 %v2544, %v2547
  %v2549 = vsel %vm951, %v2421, %v2548
  %v2550 = vshrl.u32 %v1842, 16
  %v2552 = vrot.slane %v2550, 3
  %v2553 = vshll.u32 %v1842, 16
  %v2555 = vrot.slane %v2553, 4
  %v2556 = vor.u32 %v2552, %v2555
  %v2557 = vsel %vm951, %v2429, %v2556
  %v2559 = vshrl.u32 %v1718, 16
  %v2561 = vrot.slane %v2559, 3
  %v2562 = vshll.u32 %v1718, 16
  %v2564 = vrot.slane %v2562, 4
  %v2565 = vor.u32 %v2561, %v2564
  %v2566 = vsel %vm951, %v2438, %v2565
  %v2568 = vshrl.u32 %v1709, 16
  %v2570 = vrot.slane %v2568, 3
  %v2571 = vshll.u32 %v1709, 16
  %v2573 = vrot.slane %v2571, 4
  %v2574 = vor.u32 %v2570, %v2573
  %v2575 = vsel %vm951, %v2447, %v2574
  %v2577 = vshrl.u32 %v1392, 16
  %v2579 = vrot.slane %v2577, 3
  %v2580 = vshll.u32 %v1392, 16
  %v2582 = vrot.slane %v2580, 4
  %v2583 = vor.u32 %v2579, %v2582
  %v2584 = vsel %vm951, %v2456, %v2583
  %v2585 = vshrl.u32 %v1735, 16
  %v2587 = vrot.slane %v2585, 3
  %v2588 = vshll.u32 %v1735, 16
  %v2590 = vrot.slane %v2588, 4
  %v2591 = vor.u32 %v2587, %v2590
  %v2592 = vsel %vm951, %v2464, %v2591
  %v2594 = vshrl.u32 %v1439, 16
  %v2596 = vrot.slane %v2594, 3
  %v2597 = vshll.u32 %v1439, 16
  %v2599 = vrot.slane %v2597, 4
  %v2600 = vor.u32 %v2596, %v2599
  %v2601 = vsel %vm951, %v2473, %v2600
  %v2602 = vshrl.u32 %v1751, 16
  %v2604 = vrot.slane %v2602, 3
  %v2605 = vshll.u32 %v1751, 16
  %v2607 = vrot.slane %v2605, 4
  %v2608 = vor.u32 %v2604, %v2607
  %v2609 = vsel %vm951, %v2481, %v2608
  %v2610 = vshrl.u32 %v1767, 16
  %v2612 = vrot.slane %v2610, 3
  %v2613 = vshll.u32 %v1767, 16
  %v2615 = vrot.slane %v2613, 4
  %v2616 = vor.u32 %v2612, %v2615
  %v2617 = vsel %vm951, %v2489, %v2616
  %v2619 = vshrl.u32 %v1561, 16
  %v2621 = vrot.slane %v2619, 3
  %v2622 = vshll.u32 %v1561, 16
  %v2624 = vrot.slane %v2622, 4
  %v2625 = vor.u32 %v2621, %v2624
  %v2626 = vsel %vm951, %v2498, %v2625
  %v2627 = vshrl.u32 %v1782, 16
  %v2629 = vrot.slane %v2627, 3
  %v2630 = vshll.u32 %v1782, 16
  %v2632 = vrot.slane %v2630, 4
  %v2633 = vor.u32 %v2629, %v2632
  %v2634 = vsel %vm951, %v2506, %v2633
  %v2635 = vshrl.u32 %v1798, 16
  %v2637 = vrot.slane %v2635, 3
  %v2638 = vshll.u32 %v1798, 16
  %v2640 = vrot.slane %v2638, 4
  %v2641 = vor.u32 %v2637, %v2640
  %v2642 = vsel %vm951, %v2514, %v2641
  %v2644 = vshrl.u32 %v1613, 16
  %v2646 = vrot.slane %v2644, 3
  %v2647 = vshll.u32 %v1613, 16
  %v2649 = vrot.slane %v2647, 4
  %v2650 = vor.u32 %v2646, %v2649
  %v2651 = vsel %vm951, %v2523, %v2650
  %v2652 = vshrl.u32 %v1814, 16
  %v2654 = vrot.slane %v2652, 3
  %v2655 = vshll.u32 %v1814, 16
  %v2657 = vrot.slane %v2655, 4
  %v2658 = vor.u32 %v2654, %v2657
  %v2659 = vsel %vm951, %v2531, %v2658
  %v2660 = vshrl.u32 %v1829, 16
  %v2662 = vrot.slane %v2660, 3
  %v2663 = vshll.u32 %v1829, 16
  %v2665 = vrot.slane %v2663, 4
  %v2666 = vor.u32 %v2662, %v2665
  %v2667 = vsel %vm951, %v2539, %v2666
  %v2669 = vshrl.u32 %v1693, 16
  %v2671 = vrot.slane %v2669, 3
  %v2672 = vshll.u32 %v1693, 16
  %v2674 = vrot.slane %v2672, 4
  %v2675 = vor.u32 %v2671, %v2674
  %v2676 = vsel %vm951, %v2548, %v2675
  %v2677 = vshrl.u32 %v1845, 16
  %v2679 = vrot.slane %v2677, 3
  %v2680 = vshll.u32 %v1845, 16
  %v2682 = vrot.slane %v2680, 4
  %v2683 = vor.u32 %v2679, %v2682
  %v2684 = vsel %vm951, %v2556, %v2683
  %v2686 = vshrl.u32 %v1719, 16
  %v2688 = vrot.slane %v2686, 3
  %v2689 = vshll.u32 %v1719, 16
  %v2691 = vrot.slane %v2689, 4
  %v2692 = vor.u32 %v2688, %v2691
  %v2693 = vsel %vm951, %v2565, %v2692
  %v2695 = vshrl.u32 %v1713, 16
  %v2697 = vrot.slane %v2695, 3
  %v2698 = vshll.u32 %v1713, 16
  %v2700 = vrot.slane %v2698, 4
  %v2701 = vor.u32 %v2697, %v2700
  %v2702 = vsel %vm951, %v2574, %v2701
  %v2984 = vunpack.c.l.b16 %v1846
  %v2985 = vunpack.c.h.b16 %v1846
  %v2986 = vunpack.c.l.b16 %v1847
  %v2987 = vunpack.c.h.b16 %v1847
  %v2988 = vunpack.c.l.b16 %v1848
  %v2989 = vunpack.c.h.b16 %v1848
  %v2990 = vunpack.c.l.b16 %v1849
  %v2991 = vunpack.c.h.b16 %v1849
  %v2992 = vunpack.c.l.b16 %v1850
  %v2993 = vunpack.c.h.b16 %v1850
  %v2994 = vunpack.c.l.b16 %v1851
  %v2995 = vunpack.c.h.b16 %v1851
  %v2996 = vunpack.c.l.b16 %v1852
  %v2997 = vunpack.c.h.b16 %v1852
  %v2998 = vunpack.c.l.b16 %v1853
  %v2999 = vunpack.c.h.b16 %v1853
  %v3000 = vunpack.c.l.b16 %v1854
  %v3001 = vunpack.c.h.b16 %v1854
  %v3002 = vunpack.c.l.b16 %v1855
  %v3003 = vunpack.c.h.b16 %v1855
  %v3004 = vunpack.c.l.b16 %v1856
  %v3005 = vunpack.c.h.b16 %v1856
  %v3006 = vunpack.c.l.b16 %v1857
  %v3007 = vunpack.c.h.b16 %v1857
  %v3008 = vunpack.c.l.b16 %v1858
  %v3009 = vunpack.c.h.b16 %v1858
  %v3010 = vunpack.c.l.b16 %v1859
  %v3011 = vunpack.c.h.b16 %v1859
  %v3012 = vunpack.c.l.b16 %v1860
  %v3013 = vunpack.c.h.b16 %v1860
  %v3014 = vunpack.c.l.b16 %v1861
  %v3015 = vunpack.c.h.b16 %v1861
  %v3016 = vunpack.c.l.b16 %v1862
  %v3017 = vunpack.c.h.b16 %v1862
  %v3018 = vunpack.c.l.b16 %v1863
  %v3019 = vunpack.c.h.b16 %v1863
  %v3020 = vunpack.c.l.b16 %v1864
  %v3021 = vunpack.c.h.b16 %v1864
  %v3022 = vunpack.c.l.b16 %v1865
  %v3023 = vunpack.c.h.b16 %v1865
  %v3024 = vunpack.c.l.b16 %v1866
  %v3025 = vunpack.c.h.b16 %v1866
  %v3026 = vunpack.c.l.b16 %v1867
  %v3027 = vunpack.c.h.b16 %v1867
  %v3028 = vunpack.c.l.b16 %v1868
  %v3029 = vunpack.c.h.b16 %v1868
  %v3030 = vunpack.c.l.b16 %v1869
  %v3031 = vunpack.c.h.b16 %v1869
  %v3032 = vunpack.c.l.b16 %v1870
  %v3033 = vunpack.c.h.b16 %v1870
  %v3034 = vunpack.c.l.b16 %v1871
  %v3035 = vunpack.c.h.b16 %v1871
  %v3036 = vunpack.c.l.b16 %v1872
  %v3037 = vunpack.c.h.b16 %v1872
  %v3038 = vunpack.c.l.b16 %v1873
  %v3039 = vunpack.c.h.b16 %v1873
  %v3040 = vunpack.c.l.b16 %v1874
  %v3041 = vunpack.c.h.b16 %v1874
  %v3042 = vunpack.c.l.b16 %v1875
  %v3043 = vunpack.c.h.b16 %v1875
  %v3044 = vunpack.c.l.b16 %v1876
  %v3045 = vunpack.c.h.b16 %v1876
  %v3046 = vunpack.c.l.b16 %v1877
  %v3047 = vunpack.c.h.b16 %v1877
  %v3048 = vunpack.c.l.b16 %v1878
  %v3049 = vunpack.c.h.b16 %v1878
  %v3050 = vunpack.c.l.b16 %v1879
  %v3051 = vunpack.c.h.b16 %v1879
  %v3052 = vunpack.c.l.b16 %v1880
  %v3053 = vunpack.c.h.b16 %v1880
  %v3054 = vunpack.c.l.b16 %v1881
  %v3055 = vunpack.c.h.b16 %v1881
  %v3056 = vunpack.c.l.b16 %v1882
  %v3057 = vunpack.c.h.b16 %v1882
  %v3058 = vunpack.c.l.b16 %v1883
  %v3059 = vunpack.c.h.b16 %v1883
  %v3060 = vunpack.c.l.b16 %v1884
  %v3061 = vunpack.c.h.b16 %v1884
  %v3062 = vunpack.c.l.b16 %v1885
  %v3063 = vunpack.c.h.b16 %v1885
  %v3064 = vunpack.c.l.b16 %v1886
  %v3065 = vunpack.c.h.b16 %v1886
  %v3066 = vunpack.c.l.b16 %v1887
  %v3067 = vunpack.c.h.b16 %v1887
  %v3068 = vunpack.c.l.b16 %v1888
  %v3069 = vunpack.c.h.b16 %v1888
  %v3070 = vunpack.c.l.b16 %v1889
  %v3071 = vunpack.c.h.b16 %v1889
  %v3072 = vunpack.c.l.b16 %v1890
  %v3073 = vunpack.c.h.b16 %v1890
  %v3074 = vunpack.c.l.b16 %v1891
  %v3075 = vunpack.c.h.b16 %v1891
  %v3076 = vunpack.c.l.b16 %v1892
  %v3077 = vunpack.c.h.b16 %v1892
  %v3078 = vunpack.c.l.b16 %v1893
  %v3079 = vunpack.c.h.b16 %v1893
  %v3080 = vunpack.c.l.b16 %v1894
  %v3081 = vunpack.c.h.b16 %v1894
  %v3082 = vunpack.c.l.b16 %v1895
  %v3083 = vunpack.c.h.b16 %v1895
  %v3084 = vunpack.c.l.b16 %v1896
  %v3085 = vunpack.c.h.b16 %v1896
  %v3086 = vunpack.c.l.b16 %v1897
  %v3087 = vunpack.c.h.b16 %v1897
  %v3088 = vunpack.c.l.b16 %v1898
  %v3089 = vunpack.c.h.b16 %v1898
  %v3090 = vunpack.c.l.b16 %v1899
  %v3091 = vunpack.c.h.b16 %v1899
  %v3092 = vunpack.c.l.b16 %v1900
  %v3093 = vunpack.c.h.b16 %v1900
  %v3094 = vunpack.c.l.b16 %v1901
  %v3095 = vunpack.c.h.b16 %v1901
  %v3096 = vunpack.c.l.b16 %v1902
  %v3097 = vunpack.c.h.b16 %v1902
  %v3098 = vunpack.c.l.b16 %v1903
  %v3099 = vunpack.c.h.b16 %v1903
  %v3100 = vunpack.c.l.b16 %v1904
  %v3101 = vunpack.c.h.b16 %v1904
  %v3102 = vunpack.c.l.b16 %v1905
  %v3103 = vunpack.c.h.b16 %v1905
  %v3104 = vunpack.c.l.b16 %v1906
  %v3105 = vunpack.c.h.b16 %v1906
  %v3106 = vunpack.c.l.b16 %v1907
  %v3107 = vunpack.c.h.b16 %v1907
  %v3108 = vunpack.c.l.b16 %v1908
  %v3109 = vunpack.c.h.b16 %v1908
  %v3110 = vunpack.c.l.b16 %v1909
  %v3111 = vunpack.c.h.b16 %v1909
  %v3112 = vunpack.c.l.b16 %v1910
  %v3113 = vunpack.c.h.b16 %v1910
  %v3114 = vunpack.c.l.b16 %v1911
  %v3115 = vunpack.c.h.b16 %v1911
  %v3116 = vunpack.c.l.b16 %v1912
  %v3117 = vunpack.c.h.b16 %v1912
  %v3118 = vunpack.c.l.b16 %v1913
  %v3119 = vunpack.c.h.b16 %v1913
  %v3120 = vunpack.c.l.b16 %v1914
  %v3121 = vunpack.c.h.b16 %v1914
  %v3122 = vunpack.c.l.b16 %v1915
  %v3123 = vunpack.c.h.b16 %v1915
  %v3124 = vunpack.c.l.b16 %v1916
  %v3125 = vunpack.c.h.b16 %v1916
  %v3126 = vunpack.c.l.b16 %v1917
  %v3127 = vunpack.c.h.b16 %v1917
  %v3128 = vunpack.c.l.b16 %v1918
  %v3129 = vunpack.c.h.b16 %v1918
  %v3130 = vunpack.c.l.b16 %v1919
  %v3131 = vunpack.c.h.b16 %v1919
  %v3132 = vunpack.c.l.b16 %v1920
  %v3133 = vunpack.c.h.b16 %v1920
  %v3134 = vunpack.c.l.b16 %v1921
  %v3135 = vunpack.c.h.b16 %v1921
  %v3136 = vunpack.c.l.b16 %v1922
  %v3137 = vunpack.c.h.b16 %v1922
  %v3138 = vunpack.c.l.b16 %v1923
  %v3139 = vunpack.c.h.b16 %v1923
  %v3140 = vunpack.c.l.b16 %v1924
  %v3141 = vunpack.c.h.b16 %v1924
  %v3142 = vunpack.c.l.b16 %v1925
  %v3143 = vunpack.c.h.b16 %v1925
  %v3144 = vunpack.c.l.b16 %v1926
  %v3145 = vunpack.c.h.b16 %v1926
  %v3146 = vunpack.c.l.b16 %v1927
  %v3147 = vunpack.c.h.b16 %v1927
  %v3148 = vunpack.c.l.b16 %v1928
  %v3149 = vunpack.c.h.b16 %v1928
  %v3150 = vunpack.c.l.b16 %v1929
  %v3151 = vunpack.c.h.b16 %v1929
  %v3152 = vunpack.c.l.b16 %v1930
  %v3153 = vunpack.c.h.b16 %v1930
  %v3154 = vunpack.c.l.b16 %v1931
  %v3155 = vunpack.c.h.b16 %v1931
  %v3156 = vunpack.c.l.b16 %v1932
  %v3157 = vunpack.c.h.b16 %v1932
  %v3158 = vunpack.c.l.b16 %v1933
  %v3159 = vunpack.c.h.b16 %v1933
  %v3160 = vunpack.c.l.b16 %v1934
  %v3161 = vunpack.c.h.b16 %v1934
  %v3162 = vunpack.c.l.b16 %v1935
  %v3163 = vunpack.c.h.b16 %v1935
  %v3164 = vunpack.c.l.b16 %v1936
  %v3165 = vunpack.c.h.b16 %v1936
  %v3166 = vunpack.c.l.b16 %v1937
  %v3167 = vunpack.c.h.b16 %v1937
  %v3168 = vunpack.c.l.b16 %v1938
  %v3169 = vunpack.c.h.b16 %v1938
  %v3170 = vunpack.c.l.b16 %v1939
  %v3171 = vunpack.c.h.b16 %v1939
  %v3172 = vunpack.c.l.b16 %v1940
  %v3173 = vunpack.c.h.b16 %v1940
  %v3174 = vunpack.c.l.b16 %v1941
  %v3175 = vunpack.c.h.b16 %v1941
  %v3176 = vunpack.c.l.b16 %v1942
  %v3177 = vunpack.c.h.b16 %v1942
  %v3178 = vunpack.c.l.b16 %v1943
  %v3179 = vunpack.c.h.b16 %v1943
  %v3180 = vunpack.c.l.b16 %v1944
  %v3181 = vunpack.c.h.b16 %v1944
  %v3182 = vunpack.c.l.b16 %v1945
  %v3183 = vunpack.c.h.b16 %v1945
  %v3184 = vunpack.c.l.b16 %v1946
  %v3185 = vunpack.c.h.b16 %v1946
  %v3186 = vunpack.c.l.b16 %v1947
  %v3187 = vunpack.c.h.b16 %v1947
  %v3188 = vunpack.c.l.b16 %v1948
  %v3189 = vunpack.c.h.b16 %v1948
  %v3190 = vunpack.c.l.b16 %v1949
  %v3191 = vunpack.c.h.b16 %v1949
  %v3192 = vunpack.c.l.b16 %v1950
  %v3193 = vunpack.c.h.b16 %v1950
  %v3194 = vunpack.c.l.b16 %v1951
  %v3195 = vunpack.c.h.b16 %v1951
  %v3196 = vunpack.c.l.b16 %v1952
  %v3197 = vunpack.c.h.b16 %v1952
  %v3198 = vunpack.c.l.b16 %v1953
  %v3199 = vunpack.c.h.b16 %v1953
  %v3200 = vunpack.c.l.b16 %v1954
  %v3201 = vunpack.c.h.b16 %v1954
  %v3202 = vunpack.c.l.b16 %v1955
  %v3203 = vunpack.c.h.b16 %v1955
  %v3204 = vunpack.c.l.b16 %v1956
  %v3205 = vunpack.c.h.b16 %v1956
  %v3206 = vunpack.c.l.b16 %v1957
  %v3207 = vunpack.c.h.b16 %v1957
  %v3208 = vunpack.c.l.b16 %v1958
  %v3209 = vunpack.c.h.b16 %v1958
  %v3210 = vunpack.c.l.b16 %v1959
  %v3211 = vunpack.c.h.b16 %v1959
  %v3212 = vunpack.c.l.b16 %v1960
  %v3213 = vunpack.c.h.b16 %v1960
  %v3214 = vunpack.c.l.b16 %v1961
  %v3215 = vunpack.c.h.b16 %v1961
  %v3216 = vunpack.c.l.b16 %v1962
  %v3217 = vunpack.c.h.b16 %v1962
  %v3218 = vunpack.c.l.b16 %v1963
  %v3219 = vunpack.c.h.b16 %v1963
  %v3220 = vunpack.c.l.b16 %v1964
  %v3221 = vunpack.c.h.b16 %v1964
  %v3222 = vunpack.c.l.b16 %v1965
  %v3223 = vunpack.c.h.b16 %v1965
  %v3224 = vunpack.c.l.b16 %v1966
  %v3225 = vunpack.c.h.b16 %v1966
  %v3226 = vunpack.c.l.b16 %v1967
  %v3227 = vunpack.c.h.b16 %v1967
  %v3228 = vunpack.c.l.b16 %v1968
  %v3229 = vunpack.c.h.b16 %v1968
  %v3230 = vunpack.c.l.b16 %v1969
  %v3231 = vunpack.c.h.b16 %v1969
  %v3232 = vunpack.c.l.b16 %v1970
  %v3233 = vunpack.c.h.b16 %v1970
  %v3234 = vunpack.c.l.b16 %v1971
  %v3235 = vunpack.c.h.b16 %v1971
  %v3236 = vunpack.c.l.b16 %v1972
  %v3237 = vunpack.c.h.b16 %v1972
  %v3238 = vunpack.c.l.b16 %v1973
  %v3239 = vunpack.c.h.b16 %v1973
  %v3240 = vunpack.c.l.b16 %v1974
  %v3241 = vunpack.c.h.b16 %v1974
  %v3242 = vunpack.c.l.b16 %v1975
  %v3243 = vunpack.c.h.b16 %v1975
  %v3244 = vunpack.c.l.b16 %v1976
  %v3245 = vunpack.c.h.b16 %v1976
  %v3246 = vunpack.c.l.b16 %v1977
  %v3247 = vunpack.c.h.b16 %v1977
  %v3248 = vunpack.c.l.b16 %v1978
  %v3249 = vunpack.c.h.b16 %v1978
  %v3250 = vunpack.c.l.b16 %v1979
  %v3251 = vunpack.c.h.b16 %v1979
  %v3252 = vunpack.c.l.b16 %v1980
  %v3253 = vunpack.c.h.b16 %v1980
  %v3254 = vunpack.c.l.b16 %v1981
  %v3255 = vunpack.c.h.b16 %v1981
  %v3256 = vunpack.c.l.b16 %v1982
  %v3257 = vunpack.c.h.b16 %v1982
  %v3258 = vunpack.c.l.b16 %v1983
  %v3259 = vunpack.c.h.b16 %v1983
  %v3260 = vunpack.c.l.b16 %v1984
  %v3261 = vunpack.c.h.b16 %v1984
  %v3262 = vunpack.c.l.b16 %v1985
  %v3263 = vunpack.c.h.b16 %v1985
  %v3264 = vunpack.c.l.b16 %v1986
  %v3265 = vunpack.c.h.b16 %v1986
  %v3266 = vunpack.c.l.b16 %v1987
  %v3267 = vunpack.c.h.b16 %v1987
  %v3268 = vunpack.c.l.b16 %v1988
  %v3269 = vunpack.c.h.b16 %v1988
  %v3270 = vunpack.c.l.b16 %v1989
  %v3271 = vunpack.c.h.b16 %v1989
  %v3272 = vunpack.c.l.b16 %v1990
  %v3273 = vunpack.c.h.b16 %v1990
  %v3274 = vunpack.c.l.b16 %v1991
  %v3275 = vunpack.c.h.b16 %v1991
  %v3276 = vunpack.c.l.b16 %v1992
  %v3277 = vunpack.c.h.b16 %v1992
  %v3278 = vunpack.c.l.b16 %v1993
  %v3279 = vunpack.c.h.b16 %v1993
  %v3280 = vunpack.c.l.b16 %v1994
  %v3281 = vunpack.c.h.b16 %v1994
  %v3282 = vunpack.c.l.b16 %v1995
  %v3283 = vunpack.c.h.b16 %v1995
  %v3284 = vunpack.c.l.b16 %v1996
  %v3285 = vunpack.c.h.b16 %v1996
  %v3286 = vunpack.c.l.b16 %v1997
  %v3287 = vunpack.c.h.b16 %v1997
  %v3288 = vunpack.c.l.b16 %v1998
  %v3289 = vunpack.c.h.b16 %v1998
  %v3290 = vunpack.c.l.b16 %v1999
  %v3291 = vunpack.c.h.b16 %v1999
  %v3292 = vunpack.c.l.b16 %v2000
  %v3293 = vunpack.c.h.b16 %v2000
  %v3294 = vunpack.c.l.b16 %v2001
  %v3295 = vunpack.c.h.b16 %v2001
  %v3296 = vunpack.c.l.b16 %v2002
  %v3297 = vunpack.c.h.b16 %v2002
  %v3298 = vunpack.c.l.b16 %v2003
  %v3299 = vunpack.c.h.b16 %v2003
  %v3300 = vunpack.c.l.b16 %v2004
  %v3301 = vunpack.c.h.b16 %v2004
  %v3302 = vunpack.c.l.b16 %v2005
  %v3303 = vunpack.c.h.b16 %v2005
  %v3304 = vunpack.c.l.b16 %v2006
  %v3305 = vunpack.c.h.b16 %v2006
  %v3306 = vunpack.c.l.b16 %v2007
  %v3307 = vunpack.c.h.b16 %v2007
  %v3308 = vunpack.c.l.b16 %v2008
  %v3309 = vunpack.c.h.b16 %v2008
  %v3310 = vunpack.c.l.b16 %v2009
  %v3311 = vunpack.c.h.b16 %v2009
  %v3312 = vunpack.c.l.b16 %v2010
  %v3313 = vunpack.c.h.b16 %v2010
  %v3314 = vunpack.c.l.b16 %v2011
  %v3315 = vunpack.c.h.b16 %v2011
  %v3316 = vunpack.c.l.b16 %v2012
  %v3317 = vunpack.c.h.b16 %v2012
  %v3318 = vunpack.c.l.b16 %v2013
  %v3319 = vunpack.c.h.b16 %v2013
  %v3320 = vunpack.c.l.b16 %v2014
  %v3321 = vunpack.c.h.b16 %v2014
  %v3322 = vunpack.c.l.b16 %v2015
  %v3323 = vunpack.c.h.b16 %v2015
  %v3324 = vunpack.c.l.b16 %v2016
  %v3325 = vunpack.c.h.b16 %v2016
  %v3326 = vunpack.c.l.b16 %v2017
  %v3327 = vunpack.c.h.b16 %v2017
  %v3328 = vunpack.c.l.b16 %v2018
  %v3329 = vunpack.c.h.b16 %v2018
  %v3330 = vunpack.c.l.b16 %v2019
  %v3331 = vunpack.c.h.b16 %v2019
  %v3332 = vunpack.c.l.b16 %v2020
  %v3333 = vunpack.c.h.b16 %v2020
  %v3334 = vunpack.c.l.b16 %v2021
  %v3335 = vunpack.c.h.b16 %v2021
  %v3336 = vunpack.c.l.b16 %v2022
  %v3337 = vunpack.c.h.b16 %v2022
  %v3338 = vunpack.c.l.b16 %v2023
  %v3339 = vunpack.c.h.b16 %v2023
  %v3340 = vunpack.c.l.b16 %v2024
  %v3341 = vunpack.c.h.b16 %v2024
  %v3342 = vunpack.c.l.b16 %v2025
  %v3343 = vunpack.c.h.b16 %v2025
  %v3344 = vunpack.c.l.b16 %v2026
  %v3345 = vunpack.c.h.b16 %v2026
  %v3346 = vunpack.c.l.b16 %v2027
  %v3347 = vunpack.c.h.b16 %v2027
  %v3348 = vunpack.c.l.b16 %v2028
  %v3349 = vunpack.c.h.b16 %v2028
  %v3350 = vunpack.c.l.b16 %v2029
  %v3351 = vunpack.c.h.b16 %v2029
  %v3352 = vunpack.c.l.b16 %v2030
  %v3353 = vunpack.c.h.b16 %v2030
  %v3354 = vunpack.c.l.b16 %v2031
  %v3355 = vunpack.c.h.b16 %v2031
  %v3356 = vunpack.c.l.b16 %v2032
  %v3357 = vunpack.c.h.b16 %v2032
  %v3358 = vunpack.c.l.b16 %v2033
  %v3359 = vunpack.c.h.b16 %v2033
  %v3360 = vunpack.c.l.b16 %v2034
  %v3361 = vunpack.c.h.b16 %v2034
  %v3362 = vunpack.c.l.b16 %v2035
  %v3363 = vunpack.c.h.b16 %v2035
  %v3364 = vunpack.c.l.b16 %v2036
  %v3365 = vunpack.c.h.b16 %v2036
  %v3366 = vunpack.c.l.b16 %v2037
  %v3367 = vunpack.c.h.b16 %v2037
  %v3368 = vunpack.c.l.b16 %v2038
  %v3369 = vunpack.c.h.b16 %v2038
  %v3370 = vunpack.c.l.b16 %v2039
  %v3371 = vunpack.c.h.b16 %v2039
  %v3372 = vunpack.c.l.b16 %v2040
  %v3373 = vunpack.c.h.b16 %v2040
  %v3374 = vunpack.c.l.b16 %v2041
  %v3375 = vunpack.c.h.b16 %v2041
  %v3376 = vunpack.c.l.b16 %v2042
  %v3377 = vunpack.c.h.b16 %v2042
  %v3378 = vunpack.c.l.b16 %v2043
  %v3379 = vunpack.c.h.b16 %v2043
  %v3380 = vunpack.c.l.b16 %v2044
  %v3381 = vunpack.c.h.b16 %v2044
  %v3382 = vunpack.c.l.b16 %v2045
  %v3383 = vunpack.c.h.b16 %v2045
  %v3384 = vunpack.c.l.b16 %v2046
  %v3385 = vunpack.c.h.b16 %v2046
  %v3386 = vunpack.c.l.b16 %v2047
  %v3387 = vunpack.c.h.b16 %v2047
  %v3388 = vunpack.c.l.b16 %v2048
  %v3389 = vunpack.c.h.b16 %v2048
  %v3390 = vunpack.c.l.b16 %v2049
  %v3391 = vunpack.c.h.b16 %v2049
  %v3392 = vunpack.c.l.b16 %v2050
  %v3393 = vunpack.c.h.b16 %v2050
  %v3394 = vunpack.c.l.b16 %v2051
  %v3395 = vunpack.c.h.b16 %v2051
  %v3396 = vunpack.c.l.b16 %v2052
  %v3397 = vunpack.c.h.b16 %v2052
  %v3398 = vunpack.c.l.b16 %v2053
  %v3399 = vunpack.c.h.b16 %v2053
  %v3400 = vunpack.c.l.b16 %v2054
  %v3401 = vunpack.c.h.b16 %v2054
  %v3402 = vunpack.c.l.b16 %v2055
  %v3403 = vunpack.c.h.b16 %v2055
  %v3404 = vunpack.c.l.b16 %v2056
  %v3405 = vunpack.c.h.b16 %v2056
  %v3406 = vunpack.c.l.b16 %v2057
  %v3407 = vunpack.c.h.b16 %v2057
  %v3408 = vunpack.c.l.b16 %v2058
  %v3409 = vunpack.c.h.b16 %v2058
  %v3410 = vunpack.c.l.b16 %v2059
  %v3411 = vunpack.c.h.b16 %v2059
  %v3412 = vunpack.c.l.b16 %v2060
  %v3413 = vunpack.c.h.b16 %v2060
  %v3414 = vunpack.c.l.b16 %v2061
  %v3415 = vunpack.c.h.b16 %v2061
  %v3416 = vunpack.c.l.b16 %v2062
  %v3417 = vunpack.c.h.b16 %v2062
  %v3418 = vunpack.c.l.b16 %v2063
  %v3419 = vunpack.c.h.b16 %v2063
  %v3420 = vunpack.c.l.b16 %v2064
  %v3421 = vunpack.c.h.b16 %v2064
  %v3422 = vunpack.c.l.b16 %v2065
  %v3423 = vunpack.c.h.b16 %v2065
  %v3424 = vunpack.c.l.b16 %v2066
  %v3425 = vunpack.c.h.b16 %v2066
  %v3426 = vunpack.c.l.b16 %v2067
  %v3427 = vunpack.c.h.b16 %v2067
  %v3428 = vunpack.c.l.b16 %v2068
  %v3429 = vunpack.c.h.b16 %v2068
  %v3430 = vunpack.c.l.b16 %v2069
  %v3431 = vunpack.c.h.b16 %v2069
  %v3432 = vunpack.c.l.b16 %v2070
  %v3433 = vunpack.c.h.b16 %v2070
  %v3434 = vpack.c.b16 %v2986, %v2984
  %v3435 = vpack.c.b16 %v2987, %v2985
  %v3436 = vpack.c.b16 %v2990, %v2988
  %v3437 = vpack.c.b16 %v2991, %v2989
  %v3438 = vpack.c.b16 %v2994, %v2992
  %v3439 = vpack.c.b16 %v2995, %v2993
  %v3440 = vpack.c.b16 %v2998, %v2996
  %v3441 = vpack.c.b16 %v2999, %v2997
  %v3442 = vpack.c.b16 %v3002, %v3000
  %v3443 = vpack.c.b16 %v3003, %v3001
  %v3444 = vpack.c.b16 %v3006, %v3004
  %v3445 = vpack.c.b16 %v3007, %v3005
  %v3446 = vpack.c.b16 %v3010, %v3008
  %v3447 = vpack.c.b16 %v3011, %v3009
  %v3448 = vpack.c.b16 %v3014, %v3012
  %v3449 = vpack.c.b16 %v3015, %v3013
  %v3450 = vpack.c.b16 %v3018, %v3016
  %v3451 = vpack.c.b16 %v3019, %v3017
  %v3452 = vpack.c.b16 %v3022, %v3020
  %v3453 = vpack.c.b16 %v3023, %v3021
  %v3454 = vpack.c.b16 %v3026, %v3024
  %v3455 = vpack.c.b16 %v3027, %v3025
  %v3456 = vpack.c.b16 %v3030, %v3028
  %v3457 = vpack.c.b16 %v3031, %v3029
  %v3458 = vpack.c.b16 %v3034, %v3032
  %v3459 = vpack.c.b16 %v3035, %v3033
  %v3460 = vpack.c.b16 %v3038, %v3036
  %v3461 = vpack.c.b16 %v3039, %v3037
  %v3462 = vpack.c.b16 %v3042, %v3040
  %v3463 = vpack.c.b16 %v3043, %v3041
  %v3464 = vpack.c.b16 %v3046, %v3044
  %v3465 = vpack.c.b16 %v3047, %v3045
  %v3466 = vpack.c.b16 %v3050, %v3048
  %v3467 = vpack.c.b16 %v3051, %v3049
  %v3468 = vpack.c.b16 %v3054, %v3052
  %v3469 = vpack.c.b16 %v3055, %v3053
  %v3470 = vpack.c.b16 %v3058, %v3056
  %v3471 = vpack.c.b16 %v3059, %v3057
  %v3472 = vpack.c.b16 %v3062, %v3060
  %v3473 = vpack.c.b16 %v3063, %v3061
  %v3474 = vpack.c.b16 %v3066, %v3064
  %v3475 = vpack.c.b16 %v3067, %v3065
  %v3476 = vpack.c.b16 %v3070, %v3068
  %v3477 = vpack.c.b16 %v3071, %v3069
  %v3478 = vpack.c.b16 %v3074, %v3072
  %v3479 = vpack.c.b16 %v3075, %v3073
  %v3480 = vpack.c.b16 %v3078, %v3076
  %v3481 = vpack.c.b16 %v3079, %v3077
  %v3482 = vpack.c.b16 %v3082, %v3080
  %v3483 = vpack.c.b16 %v3083, %v3081
  %v3484 = vpack.c.b16 %v3086, %v3084
  %v3485 = vpack.c.b16 %v3087, %v3085
  %v3486 = vpack.c.b16 %v3090, %v3088
  %v3487 = vpack.c.b16 %v3091, %v3089
  %v3488 = vpack.c.b16 %v3094, %v3092
  %v3489 = vpack.c.b16 %v3095, %v3093
  %v3490 = vpack.c.b16 %v3098, %v3096
  %v3491 = vpack.c.b16 %v3099, %v3097
  %v3492 = vpack.c.b16 %v3102, %v3100
  %v3493 = vpack.c.b16 %v3103, %v3101
  %v3494 = vpack.c.b16 %v3106, %v3104
  %v3495 = vpack.c.b16 %v3107, %v3105
  %v3496 = vpack.c.b16 %v3110, %v3108
  %v3497 = vpack.c.b16 %v3111, %v3109
  %v3498 = vpack.c.b16 %v3114, %v3112
  %v3499 = vpack.c.b16 %v3115, %v3113
  %v3500 = vpack.c.b16 %v3118, %v3116
  %v3501 = vpack.c.b16 %v3119, %v3117
  %v3502 = vpack.c.b16 %v3122, %v3120
  %v3503 = vpack.c.b16 %v3123, %v3121
  %v3504 = vpack.c.b16 %v3126, %v3124
  %v3505 = vpack.c.b16 %v3127, %v3125
  %v3506 = vpack.c.b16 %v3130, %v3128
  %v3507 = vpack.c.b16 %v3131, %v3129
  %v3508 = vpack.c.b16 %v3134, %v3132
  %v3509 = vpack.c.b16 %v3135, %v3133
  %v3510 = vpack.c.b16 %v3138, %v3136
  %v3511 = vpack.c.b16 %v3139, %v3137
  %v3512 = vpack.c.b16 %v3142, %v3140
  %v3513 = vpack.c.b16 %v3143, %v3141
  %v3514 = vpack.c.b16 %v3146, %v3144
  %v3515 = vpack.c.b16 %v3147, %v3145
  %v3516 = vpack.c.b16 %v3150, %v3148
  %v3517 = vpack.c.b16 %v3151, %v3149
  %v3518 = vpack.c.b16 %v3154, %v3152
  %v3519 = vpack.c.b16 %v3155, %v3153
  %v3520 = vpack.c.b16 %v3158, %v3156
  %v3521 = vpack.c.b16 %v3159, %v3157
  %v3522 = vpack.c.b16 %v3162, %v3160
  %v3523 = vpack.c.b16 %v3163, %v3161
  %v3524 = vpack.c.b16 %v3166, %v3164
  %v3525 = vpack.c.b16 %v3167, %v3165
  %v3526 = vpack.c.b16 %v3170, %v3168
  %v3527 = vpack.c.b16 %v3171, %v3169
  %v3528 = vpack.c.b16 %v3174, %v3172
  %v3529 = vpack.c.b16 %v3175, %v3173
  %v3530 = vpack.c.b16 %v3178, %v3176
  %v3531 = vpack.c.b16 %v3179, %v3177
  %v3532 = vpack.c.b16 %v3182, %v3180
  %v3533 = vpack.c.b16 %v3183, %v3181
  %v3534 = vpack.c.b16 %v3186, %v3184
  %v3535 = vpack.c.b16 %v3187, %v3185
  %v3536 = vpack.c.b16 %v3190, %v3188
  %v3537 = vpack.c.b16 %v3191, %v3189
  %v3538 = vpack.c.b16 %v3194, %v3192
  %v3539 = vpack.c.b16 %v3195, %v3193
  %v3540 = vpack.c.b16 %v3198, %v3196
  %v3541 = vpack.c.b16 %v3199, %v3197
  %v3542 = vpack.c.b16 %v3202, %v3200
  %v3543 = vpack.c.b16 %v3203, %v3201
  %v3544 = vpack.c.b16 %v3206, %v3204
  %v3545 = vpack.c.b16 %v3207, %v3205
  %v3546 = vpack.c.b16 %v3210, %v3208
  %v3547 = vpack.c.b16 %v3211, %v3209
  %v3548 = vpack.c.b16 %v3214, %v3212
  %v3549 = vpack.c.b16 %v3215, %v3213
  %v3550 = vpack.c.b16 %v3218, %v3216
  %v3551 = vpack.c.b16 %v3219, %v3217
  %v3552 = vpack.c.b16 %v3222, %v3220
  %v3553 = vpack.c.b16 %v3223, %v3221
  %v3554 = vpack.c.b16 %v3226, %v3224
  %v3555 = vpack.c.b16 %v3227, %v3225
  %v3556 = vpack.c.b16 %v3230, %v3228
  %v3557 = vpack.c.b16 %v3231, %v3229
  %v3558 = vpack.c.b16 %v3234, %v3232
  %v3559 = vpack.c.b16 %v3235, %v3233
  %v3560 = vpack.c.b16 %v3238, %v3236
  %v3561 = vpack.c.b16 %v3239, %v3237
  %v3562 = vpack.c.b16 %v3242, %v3240
  %v3563 = vpack.c.b16 %v3243, %v3241
  %v3564 = vpack.c.b16 %v3246, %v3244
  %v3565 = vpack.c.b16 %v3247, %v3245
  %v3566 = vpack.c.b16 %v3250, %v3248
  %v3567 = vpack.c.b16 %v3251, %v3249
  %v3568 = vpack.c.b16 %v3254, %v3252
  %v3569 = vpack.c.b16 %v3255, %v3253
  %v3570 = vpack.c.b16 %v3258, %v3256
  %v3571 = vpack.c.b16 %v3259, %v3257
  %v3572 = vpack.c.b16 %v3262, %v3260
  %v3573 = vpack.c.b16 %v3263, %v3261
  %v3574 = vpack.c.b16 %v3266, %v3264
  %v3575 = vpack.c.b16 %v3267, %v3265
  %v3576 = vpack.c.b16 %v3270, %v3268
  %v3577 = vpack.c.b16 %v3271, %v3269
  %v3578 = vpack.c.b16 %v3274, %v3272
  %v3579 = vpack.c.b16 %v3275, %v3273
  %v3580 = vpack.c.b16 %v3278, %v3276
  %v3581 = vpack.c.b16 %v3279, %v3277
  %v3582 = vpack.c.b16 %v3282, %v3280
  %v3583 = vpack.c.b16 %v3283, %v3281
  %v3584 = vpack.c.b16 %v3286, %v3284
  %v3585 = vpack.c.b16 %v3287, %v3285
  %v3586 = vpack.c.b16 %v3290, %v3288
  %v3587 = vpack.c.b16 %v3291, %v3289
  %v3588 = vpack.c.b16 %v3294, %v3292
  %v3589 = vpack.c.b16 %v3295, %v3293
  %v3590 = vpack.c.b16 %v3298, %v3296
  %v3591 = vpack.c.b16 %v3299, %v3297
  %v3592 = vpack.c.b16 %v3302, %v3300
  %v3593 = vpack.c.b16 %v3303, %v3301
  %v3594 = vpack.c.b16 %v3306, %v3304
  %v3595 = vpack.c.b16 %v3307, %v3305
  %v3596 = vpack.c.b16 %v3310, %v3308
  %v3597 = vpack.c.b16 %v3311, %v3309
  %v3598 = vpack.c.b16 %v3314, %v3312
  %v3599 = vpack.c.b16 %v3315, %v3313
  %v3600 = vpack.c.b16 %v3318, %v3316
  %v3601 = vpack.c.b16 %v3319, %v3317
  %v3602 = vpack.c.b16 %v3322, %v3320
  %v3603 = vpack.c.b16 %v3323, %v3321
  %v3604 = vpack.c.b16 %v3326, %v3324
  %v3605 = vpack.c.b16 %v3327, %v3325
  %v3606 = vpack.c.b16 %v3330, %v3328
  %v3607 = vpack.c.b16 %v3331, %v3329
  %v3608 = vpack.c.b16 %v3334, %v3332
  %v3609 = vpack.c.b16 %v3335, %v3333
  %v3610 = vpack.c.b16 %v3338, %v3336
  %v3611 = vpack.c.b16 %v3339, %v3337
  %v3612 = vpack.c.b16 %v3342, %v3340
  %v3613 = vpack.c.b16 %v3343, %v3341
  %v3614 = vpack.c.b16 %v3346, %v3344
  %v3615 = vpack.c.b16 %v3347, %v3345
  %v3616 = vpack.c.b16 %v3350, %v3348
  %v3617 = vpack.c.b16 %v3351, %v3349
  %v3618 = vpack.c.b16 %v3354, %v3352
  %v3619 = vpack.c.b16 %v3355, %v3353
  %v3620 = vpack.c.b16 %v3358, %v3356
  %v3621 = vpack.c.b16 %v3359, %v3357
  %v3622 = vpack.c.b16 %v3362, %v3360
  %v3623 = vpack.c.b16 %v3363, %v3361
  %v3624 = vpack.c.b16 %v3366, %v3364
  %v3625 = vpack.c.b16 %v3367, %v3365
  %v3626 = vpack.c.b16 %v3370, %v3368
  %v3627 = vpack.c.b16 %v3371, %v3369
  %v3628 = vpack.c.b16 %v3374, %v3372
  %v3629 = vpack.c.b16 %v3375, %v3373
  %v3630 = vpack.c.b16 %v3378, %v3376
  %v3631 = vpack.c.b16 %v3379, %v3377
  %v3632 = vpack.c.b16 %v3382, %v3380
  %v3633 = vpack.c.b16 %v3383, %v3381
  %v3634 = vpack.c.b16 %v3386, %v3384
  %v3635 = vpack.c.b16 %v3387, %v3385
  %v3636 = vpack.c.b16 %v3390, %v3388
  %v3637 = vpack.c.b16 %v3391, %v3389
  %v3638 = vpack.c.b16 %v3394, %v3392
  %v3639 = vpack.c.b16 %v3395, %v3393
  %v3640 = vpack.c.b16 %v3398, %v3396
  %v3641 = vpack.c.b16 %v3399, %v3397
  %v3642 = vpack.c.b16 %v3402, %v3400
  %v3643 = vpack.c.b16 %v3403, %v3401
  %v3644 = vpack.c.b16 %v3406, %v3404
  %v3645 = vpack.c.b16 %v3407, %v3405
  %v3646 = vpack.c.b16 %v3410, %v3408
  %v3647 = vpack.c.b16 %v3411, %v3409
  %v3648 = vpack.c.b16 %v3414, %v3412
  %v3649 = vpack.c.b16 %v3415, %v3413
  %v3650 = vpack.c.b16 %v3418, %v3416
  %v3651 = vpack.c.b16 %v3419, %v3417
  %v3652 = vpack.c.b16 %v3422, %v3420
  %v3653 = vpack.c.b16 %v3423, %v3421
  %v3654 = vpack.c.b16 %v3426, %v3424
  %v3655 = vpack.c.b16 %v3427, %v3425
  %v3656 = vpack.c.b16 %v3430, %v3428
  %v3657 = vpack.c.b16 %v3431, %v3429
  %v3658 = vpack.c.b16 %v3432, %v3432
  %v3659 = vpack.c.b16 %v3433, %v3433
  %vm3884 = vcmask 64512
  %v3886 = vsel %vm3884, %v2321, 0
  %v3889 = vsel %vm3884, %v2448, 0
  %v3892 = vsel %vm3884, %v2575, 0
  %v3895 = vsel %vm3884, %v2702, 0
  %vm3897 = vcmask 1043456
  %v3899 = vsel %vm3897, %v3658, 0
  %v3902 = vsel %vm3897, %v3659, 0
  %3904 = vmatprep.subr.bf16.mxu0 %v3435
  %3905 = vmatpush1.bf16.msra.mxu0 %v3434
  %3906 = vmatprep.subr.bf16.mxu0 %v3437
  %3907 = vmatpush1.bf16.msra.mxu0 %v3436
  %3908 = vmatprep.subr.bf16.mxu0 %v3439
  %3909 = vmatpush1.bf16.msra.mxu0 %v3438
  %3910 = vmatprep.subr.bf16.mxu0 %v3441
  %3911 = vmatpush1.bf16.msra.mxu0 %v3440
  %3912 = vmatprep.subr.bf16.mxu0 %v3443
  %3913 = vmatpush1.bf16.msra.mxu0 %v3442
  %3914 = vmatprep.subr.bf16.mxu0 %v3445
  %3915 = vmatpush1.bf16.msra.mxu0 %v3444
  %3916 = vmatprep.subr.bf16.mxu0 %v3447
  %3917 = vmatpush1.bf16.msra.mxu0 %v3446
  %3918 = vmatprep.subr.bf16.mxu0 %v3449
  %3919 = vmatpush1.bf16.msra.mxu0 %v3448
  %3920 = vmatprep.subr.bf16.mxu0 %v3451
  %3921 = vmatpush1.bf16.msra.mxu0 %v3450
  %3922 = vmatprep.subr.bf16.mxu0 %v3453
  %3923 = vmatpush1.bf16.msra.mxu0 %v3452
  %3924 = vmatprep.subr.bf16.mxu0 %v3455
  %3925 = vmatpush1.bf16.msra.mxu0 %v3454
  %3926 = vmatprep.subr.bf16.mxu0 %v3457
  %3927 = vmatpush1.bf16.msra.mxu0 %v3456
  %3928 = vmatprep.subr.bf16.mxu0 %v3459
  %3929 = vmatpush1.bf16.msra.mxu0 %v3458
  %3930 = vmatprep.subr.bf16.mxu0 %v3461
  %3931 = vmatpush1.bf16.msra.mxu0 %v3460
  %3932 = vmatprep.subr.bf16.mxu0 %v3463
  %3933 = vmatpush1.bf16.msra.mxu0 %v3462
  %3934 = vmatprep.subr.bf16.mxu0 %v3465
  %3935 = vmatpush1.bf16.msra.mxu0 %v3464
  %3936 = vmatprep.mubr.bf16.mxu0 %v2114
  %3937 = vmatmul.mubr.bf16.gmra.mrb[0].mxu0 %v2099
  %v3938 = vpop.f32.mrb[0].mxu0
  %v3939 = vadd.f32 %v2076, %v3938
  %v3940 = vpop.f32.mrb[0].mxu0
  %v3941 = vadd.f32 %v2080, %v3940
  %v3942 = vpop.f32.mrb[0].mxu0
  %v3943 = vadd.f32 %v2076, %v3942
  %v3944 = vpop.f32.mrb[0].mxu0
  %v3945 = vadd.f32 %v2080, %v3944
  %3946 = vmatprep.mubr.bf16.mxu0 %v2338
  %3947 = vmatmul.mubr.bf16.gmra.mrb[0].mxu0 %v2330
  %v3948 = vpop.f32.mrb[0].mxu0
  %v3949 = vadd.f32 %v2076, %v3948
  %v3950 = vpop.f32.mrb[0].mxu0
  %v3951 = vadd.f32 %v2080, %v3950
  %v3952 = vpop.f32.mrb[0].mxu0
  %v3953 = vadd.f32 %v2076, %v3952
  %v3954 = vpop.f32.mrb[0].mxu0
  %v3955 = vadd.f32 %v2080, %v3954
  %3956 = vmatprep.mubr.bf16.mxu0 %v2465
  %3957 = vmatmul.mubr.bf16.gmra.mrb[0].mxu0 %v2457
  %v3958 = vpop.f32.mrb[0].mxu0
  %v3959 = vadd.f32 %v2076, %v3958
  %v3960 = vpop.f32.mrb[0].mxu0
  %v3961 = vadd.f32 %v2080, %v3960
  %v3962 = vpop.f32.mrb[0].mxu0
  %v3963 = vadd.f32 %v2076, %v3962
  %v3964 = vpop.f32.mrb[0].mxu0
  %v3965 = vadd.f32 %v2080, %v3964
  %3966 = vmatprep.mubr.bf16.mxu0 %v2592
  %3967 = vmatmul.mubr.bf16.gmra.mrb[0].mxu0 %v2584
  %v3968 = vpop.f32.mrb[0].mxu0
  %v3969 = vadd.f32 %v2076, %v3968
  %v3970 = vpop.f32.mrb[0].mxu0
  %v3971 = vadd.f32 %v2080, %v3970
  %v3972 = vpop.f32.mrb[0].mxu0
  %v3973 = vadd.f32 %v2076, %v3972
  %v3974 = vpop.f32.mrb[0].mxu0
  %v3975 = vadd.f32 %v2080, %v3974
  %3976 = vdwg.mxu0
  %3977 = vmatprep.subr.bf16.mxu0 %v3467
  %3978 = vmatpush1.bf16.msra.mxu0 %v3466
  %3979 = vmatprep.subr.bf16.mxu0 %v3469
  %3980 = vmatpush1.bf16.msra.mxu0 %v3468
  %3981 = vmatprep.subr.bf16.mxu0 %v3471
  %3982 = vmatpush1.bf16.msra.mxu0 %v3470
  %3983 = vmatprep.subr.bf16.mxu0 %v3473
  %3984 = vmatpush1.bf16.msra.mxu0 %v3472
  %3985 = vmatprep.subr.bf16.mxu0 %v3475
  %3986 = vmatpush1.bf16.msra.mxu0 %v3474
  %3987 = vmatprep.subr.bf16.mxu0 %v3477
  %3988 = vmatpush1.bf16.msra.mxu0 %v3476
  %3989 = vmatprep.subr.bf16.mxu0 %v3479
  %3990 = vmatpush1.bf16.msra.mxu0 %v3478
  %3991 = vmatprep.subr.bf16.mxu0 %v3481
  %3992 = vmatpush1.bf16.msra.mxu0 %v3480
  %3993 = vmatprep.subr.bf16.mxu0 %v3483
  %3994 = vmatpush1.bf16.msra.mxu0 %v3482
  %3995 = vmatprep.subr.bf16.mxu0 %v3485
  %3996 = vmatpush1.bf16.msra.mxu0 %v3484
  %3997 = vmatprep.subr.bf16.mxu0 %v3487
  %3998 = vmatpush1.bf16.msra.mxu0 %v3486
  %3999 = vmatprep.subr.bf16.mxu0 %v3489
  %4000 = vmatpush1.bf16.msra.mxu0 %v3488
  %4001 = vmatprep.subr.bf16.mxu0 %v3491
  %4002 = vmatpush1.bf16.msra.mxu0 %v3490
  %4003 = vmatprep.subr.bf16.mxu0 %v3493
  %4004 = vmatpush1.bf16.msra.mxu0 %v3492
  %4005 = vmatprep.subr.bf16.mxu0 %v3495
  %4006 = vmatpush1.bf16.msra.mxu0 %v3494
  %4007 = vmatprep.subr.bf16.mxu0 %v3497
  %4008 = vmatpush1.bf16.msra.mxu0 %v3496
  %4009 = vmatprep.mubr.bf16.mxu0 %v2146
  %4010 = vmatmul.mubr.bf16.gmra.mrb[0].mxu0 %v2131
  %v4011 = vpop.f32.mrb[0].mxu0
  %v4012 = vadd.f32 %v3939, %v4011
  %v4013 = vpop.f32.mrb[0].mxu0
  %v4014 = vadd.f32 %v3941, %v4013
  %v4015 = vpop.f32.mrb[0].mxu0
  %v4016 = vadd.f32 %v3943, %v4015
  %v4017 = vpop.f32.mrb[0].mxu0
  %v4018 = vadd.f32 %v3945, %v4017
  %4019 = vmatprep.mubr.bf16.mxu0 %v2355
  %4020 = vmatmul.mubr.bf16.gmra.mrb[0].mxu0 %v2347
  %v4021 = vpop.f32.mrb[0].mxu0
  %v4022 = vadd.f32 %v3949, %v4021
  %v4023 = vpop.f32.mrb[0].mxu0
  %v4024 = vadd.f32 %v3951, %v4023
  %v4025 = vpop.f32.mrb[0].mxu0
  %v4026 = vadd.f32 %v3953, %v4025
  %v4027 = vpop.f32.mrb[0].mxu0
  %v4028 = vadd.f32 %v3955, %v4027
  %4029 = vmatprep.mubr.bf16.mxu0 %v2482
  %4030 = vmatmul.mubr.bf16.gmra.mrb[0].mxu0 %v2474
  %v4031 = vpop.f32.mrb[0].mxu0
  %v4032 = vadd.f32 %v3959, %v4031
  %v4033 = vpop.f32.mrb[0].mxu0
  %v4034 = vadd.f32 %v3961, %v4033
  %v4035 = vpop.f32.mrb[0].mxu0
  %v4036 = vadd.f32 %v3963, %v4035
  %v4037 = vpop.f32.mrb[0].mxu0
  %v4038 = vadd.f32 %v3965, %v4037
  %4039 = vmatprep.mubr.bf16.mxu0 %v2609
  %4040 = vmatmul.mubr.bf16.gmra.mrb[0].mxu0 %v2601
  %v4041 = vpop.f32.mrb[0].mxu0
  %v4042 = vadd.f32 %v3969, %v4041
  %v4043 = vpop.f32.mrb[0].mxu0
  %v4044 = vadd.f32 %v3971, %v4043
  %v4045 = vpop.f32.mrb[0].mxu0
  %v4046 = vadd.f32 %v3973, %v4045
  %v4047 = vpop.f32.mrb[0].mxu0
  %v4048 = vadd.f32 %v3975, %v4047
  %4049 = vdwg.mxu0
  %4050 = vmatprep.subr.bf16.mxu0 %v3499
  %4051 = vmatpush1.bf16.msra.mxu0 %v3498
  %4052 = vmatprep.subr.bf16.mxu0 %v3501
  %4053 = vmatpush1.bf16.msra.mxu0 %v3500
  %4054 = vmatprep.subr.bf16.mxu0 %v3503
  %4055 = vmatpush1.bf16.msra.mxu0 %v3502
  %4056 = vmatprep.subr.bf16.mxu0 %v3505
  %4057 = vmatpush1.bf16.msra.mxu0 %v3504
  %4058 = vmatprep.subr.bf16.mxu0 %v3507
  %4059 = vmatpush1.bf16.msra.mxu0 %v3506
  %4060 = vmatprep.subr.bf16.mxu0 %v3509
  %4061 = vmatpush1.bf16.msra.mxu0 %v3508
  %4062 = vmatprep.subr.bf16.mxu0 %v3511
  %4063 = vmatpush1.bf16.msra.mxu0 %v3510
  %4064 = vmatprep.subr.bf16.mxu0 %v3513
  %4065 = vmatpush1.bf16.msra.mxu0 %v3512
  %4066 = vmatprep.subr.bf16.mxu0 %v3515
  %4067 = vmatpush1.bf16.msra.mxu0 %v3514
  %4068 = vmatprep.subr.bf16.mxu0 %v3517
  %4069 = vmatpush1.bf16.msra.mxu0 %v3516
  %4070 = vmatprep.subr.bf16.mxu0 %v3519
  %4071 = vmatpush1.bf16.msra.mxu0 %v3518
  %4072 = vmatprep.subr.bf16.mxu0 %v3521
  %4073 = vmatpush1.bf16.msra.mxu0 %v3520
  %4074 = vmatprep.subr.bf16.mxu0 %v3523
  %4075 = vmatpush1.bf16.msra.mxu0 %v3522
  %4076 = vmatprep.subr.bf16.mxu0 %v3525
  %4077 = vmatpush1.bf16.msra.mxu0 %v3524
  %4078 = vmatprep.subr.bf16.mxu0 %v3527
  %4079 = vmatpush1.bf16.msra.mxu0 %v3526
  %4080 = vmatprep.subr.bf16.mxu0 %v3529
  %4081 = vmatpush1.bf16.msra.mxu0 %v3528
  %4082 = vmatprep.mubr.bf16.mxu0 %v2178
  %4083 = vmatmul.mubr.bf16.gmra.mrb[0].mxu0 %v2161
  %v4084 = vpop.f32.mrb[0].mxu0
  %v4085 = vadd.f32 %v4012, %v4084
  %v4086 = vpop.f32.mrb[0].mxu0
  %v4087 = vadd.f32 %v4014, %v4086
  %v4088 = vpop.f32.mrb[0].mxu0
  %v4089 = vadd.f32 %v4016, %v4088
  %v4090 = vpop.f32.mrb[0].mxu0
  %v4091 = vadd.f32 %v4018, %v4090
  %4092 = vmatprep.mubr.bf16.mxu0 %v2372
  %4093 = vmatmul.mubr.bf16.gmra.mrb[0].mxu0 %v2363
  %v4094 = vpop.f32.mrb[0].mxu0
  %v4095 = vadd.f32 %v4022, %v4094
  %v4096 = vpop.f32.mrb[0].mxu0
  %v4097 = vadd.f32 %v4024, %v4096
  %v4098 = vpop.f32.mrb[0].mxu0
  %v4099 = vadd.f32 %v4026, %v4098
  %v4100 = vpop.f32.mrb[0].mxu0
  %v4101 = vadd.f32 %v4028, %v4100
  %4102 = vmatprep.mubr.bf16.mxu0 %v2499
  %4103 = vmatmul.mubr.bf16.gmra.mrb[0].mxu0 %v2490
  %v4104 = vpop.f32.mrb[0].mxu0
  %v4105 = vadd.f32 %v4032, %v4104
  %v4106 = vpop.f32.mrb[0].mxu0
  %v4107 = vadd.f32 %v4034, %v4106
  %v4108 = vpop.f32.mrb[0].mxu0
  %v4109 = vadd.f32 %v4036, %v4108
  %v4110 = vpop.f32.mrb[0].mxu0
  %v4111 = vadd.f32 %v4038, %v4110
  %4112 = vmatprep.mubr.bf16.mxu0 %v2626
  %4113 = vmatmul.mubr.bf16.gmra.mrb[0].mxu0 %v2617
  %v4114 = vpop.f32.mrb[0].mxu0
  %v4115 = vadd.f32 %v4042, %v4114
  %v4116 = vpop.f32.mrb[0].mxu0
  %v4117 = vadd.f32 %v4044, %v4116
  %v4118 = vpop.f32.mrb[0].mxu0
  %v4119 = vadd.f32 %v4046, %v4118
  %v4120 = vpop.f32.mrb[0].mxu0
  %v4121 = vadd.f32 %v4048, %v4120
  %4122 = vdwg.mxu0
  %4123 = vmatprep.subr.bf16.mxu0 %v3531
  %4124 = vmatpush1.bf16.msra.mxu0 %v3530
  %4125 = vmatprep.subr.bf16.mxu0 %v3533
  %4126 = vmatpush1.bf16.msra.mxu0 %v3532
  %4127 = vmatprep.subr.bf16.mxu0 %v3535
  %4128 = vmatpush1.bf16.msra.mxu0 %v3534
  %4129 = vmatprep.subr.bf16.mxu0 %v3537
  %4130 = vmatpush1.bf16.msra.mxu0 %v3536
  %4131 = vmatprep.subr.bf16.mxu0 %v3539
  %4132 = vmatpush1.bf16.msra.mxu0 %v3538
  %4133 = vmatprep.subr.bf16.mxu0 %v3541
  %4134 = vmatpush1.bf16.msra.mxu0 %v3540
  %4135 = vmatprep.subr.bf16.mxu0 %v3543
  %4136 = vmatpush1.bf16.msra.mxu0 %v3542
  %4137 = vmatprep.subr.bf16.mxu0 %v3545
  %4138 = vmatpush1.bf16.msra.mxu0 %v3544
  %4139 = vmatprep.subr.bf16.mxu0 %v3547
  %4140 = vmatpush1.bf16.msra.mxu0 %v3546
  %4141 = vmatprep.subr.bf16.mxu0 %v3549
  %4142 = vmatpush1.bf16.msra.mxu0 %v3548
  %4143 = vmatprep.subr.bf16.mxu0 %v3551
  %4144 = vmatpush1.bf16.msra.mxu0 %v3550
  %4145 = vmatprep.subr.bf16.mxu0 %v3553
  %4146 = vmatpush1.bf16.msra.mxu0 %v3552
  %4147 = vmatprep.subr.bf16.mxu0 %v3555
  %4148 = vmatpush1.bf16.msra.mxu0 %v3554
  %4149 = vmatprep.subr.bf16.mxu0 %v3557
  %4150 = vmatpush1.bf16.msra.mxu0 %v3556
  %4151 = vmatprep.subr.bf16.mxu0 %v3559
  %4152 = vmatpush1.bf16.msra.mxu0 %v3558
  %4153 = vmatprep.subr.bf16.mxu0 %v3561
  %4154 = vmatpush1.bf16.msra.mxu0 %v3560
  %4155 = vmatprep.mubr.bf16.mxu0 %v2208
  %4156 = vmatmul.mubr.bf16.gmra.mrb[0].mxu0 %v2193
  %v4157 = vpop.f32.mrb[0].mxu0
  %v4158 = vadd.f32 %v4085, %v4157
  %v4159 = vpop.f32.mrb[0].mxu0
  %v4160 = vadd.f32 %v4087, %v4159
  %v4161 = vpop.f32.mrb[0].mxu0
  %v4162 = vadd.f32 %v4089, %v4161
  %v4163 = vpop.f32.mrb[0].mxu0
  %v4164 = vadd.f32 %v4091, %v4163
  %4165 = vmatprep.mubr.bf16.mxu0 %v2388
  %4166 = vmatmul.mubr.bf16.gmra.mrb[0].mxu0 %v2380
  %v4167 = vpop.f32.mrb[0].mxu0
  %v4168 = vadd.f32 %v4095, %v4167
  %v4169 = vpop.f32.mrb[0].mxu0
  %v4170 = vadd.f32 %v4097, %v4169
  %v4171 = vpop.f32.mrb[0].mxu0
  %v4172 = vadd.f32 %v4099, %v4171
  %v4173 = vpop.f32.mrb[0].mxu0
  %v4174 = vadd.f32 %v4101, %v4173
  %4175 = vmatprep.mubr.bf16.mxu0 %v2515
  %4176 = vmatmul.mubr.bf16.gmra.mrb[0].mxu0 %v2507
  %v4177 = vpop.f32.mrb[0].mxu0
  %v4178 = vadd.f32 %v4105, %v4177
  %v4179 = vpop.f32.mrb[0].mxu0
  %v4180 = vadd.f32 %v4107, %v4179
  %v4181 = vpop.f32.mrb[0].mxu0
  %v4182 = vadd.f32 %v4109, %v4181
  %v4183 = vpop.f32.mrb[0].mxu0
  %v4184 = vadd.f32 %v4111, %v4183
  %4185 = vmatprep.mubr.bf16.mxu0 %v2642
  %4186 = vmatmul.mubr.bf16.gmra.mrb[0].mxu0 %v2634
  %v4187 = vpop.f32.mrb[0].mxu0
  %v4188 = vadd.f32 %v4115, %v4187
  %v4189 = vpop.f32.mrb[0].mxu0
  %v4190 = vadd.f32 %v4117, %v4189
  %v4191 = vpop.f32.mrb[0].mxu0
  %v4192 = vadd.f32 %v4119, %v4191
  %v4193 = vpop.f32.mrb[0].mxu0
  %v4194 = vadd.f32 %v4121, %v4193
  %4195 = vdwg.mxu0
  %4196 = vmatprep.subr.bf16.mxu0 %v3563
  %4197 = vmatpush1.bf16.msra.mxu0 %v3562
  %4198 = vmatprep.subr.bf16.mxu0 %v3565
  %4199 = vmatpush1.bf16.msra.mxu0 %v3564
  %4200 = vmatprep.subr.bf16.mxu0 %v3567
  %4201 = vmatpush1.bf16.msra.mxu0 %v3566
  %4202 = vmatprep.subr.bf16.mxu0 %v3569
  %4203 = vmatpush1.bf16.msra.mxu0 %v3568
  %4204 = vmatprep.subr.bf16.mxu0 %v3571
  %4205 = vmatpush1.bf16.msra.mxu0 %v3570
  %4206 = vmatprep.subr.bf16.mxu0 %v3573
  %4207 = vmatpush1.bf16.msra.mxu0 %v3572
  %4208 = vmatprep.subr.bf16.mxu0 %v3575
  %4209 = vmatpush1.bf16.msra.mxu0 %v3574
  %4210 = vmatprep.subr.bf16.mxu0 %v3577
  %4211 = vmatpush1.bf16.msra.mxu0 %v3576
  %4212 = vmatprep.subr.bf16.mxu0 %v3579
  %4213 = vmatpush1.bf16.msra.mxu0 %v3578
  %4214 = vmatprep.subr.bf16.mxu0 %v3581
  %4215 = vmatpush1.bf16.msra.mxu0 %v3580
  %4216 = vmatprep.subr.bf16.mxu0 %v3583
  %4217 = vmatpush1.bf16.msra.mxu0 %v3582
  %4218 = vmatprep.subr.bf16.mxu0 %v3585
  %4219 = vmatpush1.bf16.msra.mxu0 %v3584
  %4220 = vmatprep.subr.bf16.mxu0 %v3587
  %4221 = vmatpush1.bf16.msra.mxu0 %v3586
  %4222 = vmatprep.subr.bf16.mxu0 %v3589
  %4223 = vmatpush1.bf16.msra.mxu0 %v3588
  %4224 = vmatprep.subr.bf16.mxu0 %v3591
  %4225 = vmatpush1.bf16.msra.mxu0 %v3590
  %4226 = vmatprep.subr.bf16.mxu0 %v3593
  %4227 = vmatpush1.bf16.msra.mxu0 %v3592
  %4228 = vmatprep.mubr.bf16.mxu0 %v2240
  %4229 = vmatmul.mubr.bf16.gmra.mrb[0].mxu0 %v2225
  %v4230 = vpop.f32.mrb[0].mxu0
  %v4231 = vadd.f32 %v4158, %v4230
  %v4232 = vpop.f32.mrb[0].mxu0
  %v4233 = vadd.f32 %v4160, %v4232
  %v4234 = vpop.f32.mrb[0].mxu0
  %v4235 = vadd.f32 %v4162, %v4234
  %v4236 = vpop.f32.mrb[0].mxu0
  %v4237 = vadd.f32 %v4164, %v4236
  %4238 = vmatprep.mubr.bf16.mxu0 %v2405
  %4239 = vmatmul.mubr.bf16.gmra.mrb[0].mxu0 %v2397
  %v4240 = vpop.f32.mrb[0].mxu0
  %v4241 = vadd.f32 %v4168, %v4240
  %v4242 = vpop.f32.mrb[0].mxu0
  %v4243 = vadd.f32 %v4170, %v4242
  %v4244 = vpop.f32.mrb[0].mxu0
  %v4245 = vadd.f32 %v4172, %v4244
  %v4246 = vpop.f32.mrb[0].mxu0
  %v4247 = vadd.f32 %v4174, %v4246
  %4248 = vmatprep.mubr.bf16.mxu0 %v2532
  %4249 = vmatmul.mubr.bf16.gmra.mrb[0].mxu0 %v2524
  %v4250 = vpop.f32.mrb[0].mxu0
  %v4251 = vadd.f32 %v4178, %v4250
  %v4252 = vpop.f32.mrb[0].mxu0
  %v4253 = vadd.f32 %v4180, %v4252
  %v4254 = vpop.f32.mrb[0].mxu0
  %v4255 = vadd.f32 %v4182, %v4254
  %v4256 = vpop.f32.mrb[0].mxu0
  %v4257 = vadd.f32 %v4184, %v4256
  %4258 = vmatprep.mubr.bf16.mxu0 %v2659
  %4259 = vmatmul.mubr.bf16.gmra.mrb[0].mxu0 %v2651
  %v4260 = vpop.f32.mrb[0].mxu0
  %v4261 = vadd.f32 %v4188, %v4260
  %v4262 = vpop.f32.mrb[0].mxu0
  %v4263 = vadd.f32 %v4190, %v4262
  %v4264 = vpop.f32.mrb[0].mxu0
  %v4265 = vadd.f32 %v4192, %v4264
  %v4266 = vpop.f32.mrb[0].mxu0
  %v4267 = vadd.f32 %v4194, %v4266
  %4268 = vdwg.mxu0
  %4269 = vmatprep.subr.bf16.mxu0 %v3595
  %4270 = vmatpush1.bf16.msra.mxu0 %v3594
  %4271 = vmatprep.subr.bf16.mxu0 %v3597
  %4272 = vmatpush1.bf16.msra.mxu0 %v3596
  %4273 = vmatprep.subr.bf16.mxu0 %v3599
  %4274 = vmatpush1.bf16.msra.mxu0 %v3598
  %4275 = vmatprep.subr.bf16.mxu0 %v3601
  %4276 = vmatpush1.bf16.msra.mxu0 %v3600
  %4277 = vmatprep.subr.bf16.mxu0 %v3603
  %4278 = vmatpush1.bf16.msra.mxu0 %v3602
  %4279 = vmatprep.subr.bf16.mxu0 %v3605
  %4280 = vmatpush1.bf16.msra.mxu0 %v3604
  %4281 = vmatprep.subr.bf16.mxu0 %v3607
  %4282 = vmatpush1.bf16.msra.mxu0 %v3606
  %4283 = vmatprep.subr.bf16.mxu0 %v3609
  %4284 = vmatpush1.bf16.msra.mxu0 %v3608
  %4285 = vmatprep.subr.bf16.mxu0 %v3611
  %4286 = vmatpush1.bf16.msra.mxu0 %v3610
  %4287 = vmatprep.subr.bf16.mxu0 %v3613
  %4288 = vmatpush1.bf16.msra.mxu0 %v3612
  %4289 = vmatprep.subr.bf16.mxu0 %v3615
  %4290 = vmatpush1.bf16.msra.mxu0 %v3614
  %4291 = vmatprep.subr.bf16.mxu0 %v3617
  %4292 = vmatpush1.bf16.msra.mxu0 %v3616
  %4293 = vmatprep.subr.bf16.mxu0 %v3619
  %4294 = vmatpush1.bf16.msra.mxu0 %v3618
  %4295 = vmatprep.subr.bf16.mxu0 %v3621
  %4296 = vmatpush1.bf16.msra.mxu0 %v3620
  %4297 = vmatprep.subr.bf16.mxu0 %v3623
  %4298 = vmatpush1.bf16.msra.mxu0 %v3622
  %4299 = vmatprep.subr.bf16.mxu0 %v3625
  %4300 = vmatpush1.bf16.msra.mxu0 %v3624
  %4301 = vmatprep.mubr.bf16.mxu0 %v2272
  %4302 = vmatmul.mubr.bf16.gmra.mrb[0].mxu0 %v2255
  %v4303 = vpop.f32.mrb[0].mxu0
  %v4304 = vadd.f32 %v4231, %v4303
  %v4305 = vpop.f32.mrb[0].mxu0
  %v4306 = vadd.f32 %v4233, %v4305
  %v4307 = vpop.f32.mrb[0].mxu0
  %v4308 = vadd.f32 %v4235, %v4307
  %v4309 = vpop.f32.mrb[0].mxu0
  %v4310 = vadd.f32 %v4237, %v4309
  %4311 = vmatprep.mubr.bf16.mxu0 %v2422
  %4312 = vmatmul.mubr.bf16.gmra.mrb[0].mxu0 %v2413
  %v4313 = vpop.f32.mrb[0].mxu0
  %v4314 = vadd.f32 %v4241, %v4313
  %v4315 = vpop.f32.mrb[0].mxu0
  %v4316 = vadd.f32 %v4243, %v4315
  %v4317 = vpop.f32.mrb[0].mxu0
  %v4318 = vadd.f32 %v4245, %v4317
  %v4319 = vpop.f32.mrb[0].mxu0
  %v4320 = vadd.f32 %v4247, %v4319
  %4321 = vmatprep.mubr.bf16.mxu0 %v2549
  %4322 = vmatmul.mubr.bf16.gmra.mrb[0].mxu0 %v2540
  %v4323 = vpop.f32.mrb[0].mxu0
  %v4324 = vadd.f32 %v4251, %v4323
  %v4325 = vpop.f32.mrb[0].mxu0
  %v4326 = vadd.f32 %v4253, %v4325
  %v4327 = vpop.f32.mrb[0].mxu0
  %v4328 = vadd.f32 %v4255, %v4327
  %v4329 = vpop.f32.mrb[0].mxu0
  %v4330 = vadd.f32 %v4257, %v4329
  %4331 = vmatprep.mubr.bf16.mxu0 %v2676
  %4332 = vmatmul.mubr.bf16.gmra.mrb[0].mxu0 %v2667
  %v4333 = vpop.f32.mrb[0].mxu0
  %v4334 = vadd.f32 %v4261, %v4333
  %v4335 = vpop.f32.mrb[0].mxu0
  %v4336 = vadd.f32 %v4263, %v4335
  %v4337 = vpop.f32.mrb[0].mxu0
  %v4338 = vadd.f32 %v4265, %v4337
  %v4339 = vpop.f32.mrb[0].mxu0
  %v4340 = vadd.f32 %v4267, %v4339
  %4341 = vdwg.mxu0
  %4342 = vmatprep.subr.bf16.mxu0 %v3627
  %4343 = vmatpush1.bf16.msra.mxu0 %v3626
  %4344 = vmatprep.subr.bf16.mxu0 %v3629
  %4345 = vmatpush1.bf16.msra.mxu0 %v3628
  %4346 = vmatprep.subr.bf16.mxu0 %v3631
  %4347 = vmatpush1.bf16.msra.mxu0 %v3630
  %4348 = vmatprep.subr.bf16.mxu0 %v3633
  %4349 = vmatpush1.bf16.msra.mxu0 %v3632
  %4350 = vmatprep.subr.bf16.mxu0 %v3635
  %4351 = vmatpush1.bf16.msra.mxu0 %v3634
  %4352 = vmatprep.subr.bf16.mxu0 %v3637
  %4353 = vmatpush1.bf16.msra.mxu0 %v3636
  %4354 = vmatprep.subr.bf16.mxu0 %v3639
  %4355 = vmatpush1.bf16.msra.mxu0 %v3638
  %4356 = vmatprep.subr.bf16.mxu0 %v3641
  %4357 = vmatpush1.bf16.msra.mxu0 %v3640
  %4358 = vmatprep.subr.bf16.mxu0 %v3643
  %4359 = vmatpush1.bf16.msra.mxu0 %v3642
  %4360 = vmatprep.subr.bf16.mxu0 %v3645
  %4361 = vmatpush1.bf16.msra.mxu0 %v3644
  %4362 = vmatprep.subr.bf16.mxu0 %v3647
  %4363 = vmatpush1.bf16.msra.mxu0 %v3646
  %4364 = vmatprep.subr.bf16.mxu0 %v3649
  %4365 = vmatpush1.bf16.msra.mxu0 %v3648
  %4366 = vmatprep.subr.bf16.mxu0 %v3651
  %4367 = vmatpush1.bf16.msra.mxu0 %v3650
  %4368 = vmatprep.subr.bf16.mxu0 %v3653
  %4369 = vmatpush1.bf16.msra.mxu0 %v3652
  %4370 = vmatprep.subr.bf16.mxu0 %v3655
  %4371 = vmatpush1.bf16.msra.mxu0 %v3654
  %4372 = vmatprep.subr.bf16.mxu0 %v3657
  %4373 = vmatpush1.bf16.msra.mxu0 %v3656
  %4374 = vmatprep.mubr.bf16.mxu0 %v2304
  %4375 = vmatmul.mubr.bf16.gmra.mrb[0].mxu0 %v2287
  %v4376 = vpop.f32.mrb[0].mxu0
  %v4377 = vadd.f32 %v4304, %v4376
  %v4378 = vpop.f32.mrb[0].mxu0
  %v4379 = vadd.f32 %v4306, %v4378
  %v4380 = vpop.f32.mrb[0].mxu0
  %v4381 = vadd.f32 %v4308, %v4380
  %v4382 = vpop.f32.mrb[0].mxu0
  %v4383 = vadd.f32 %v4310, %v4382
  %4384 = vmatprep.mubr.bf16.mxu0 %v2439
  %4385 = vmatmul.mubr.bf16.gmra.mrb[0].mxu0 %v2430
  %v4386 = vpop.f32.mrb[0].mxu0
  %v4387 = vadd.f32 %v4314, %v4386
  %v4388 = vpop.f32.mrb[0].mxu0
  %v4389 = vadd.f32 %v4316, %v4388
  %v4390 = vpop.f32.mrb[0].mxu0
  %v4391 = vadd.f32 %v4318, %v4390
  %v4392 = vpop.f32.mrb[0].mxu0
  %v4393 = vadd.f32 %v4320, %v4392
  %4394 = vmatprep.mubr.bf16.mxu0 %v2566
  %4395 = vmatmul.mubr.bf16.gmra.mrb[0].mxu0 %v2557
  %v4396 = vpop.f32.mrb[0].mxu0
  %v4397 = vadd.f32 %v4324, %v4396
  %v4398 = vpop.f32.mrb[0].mxu0
  %v4399 = vadd.f32 %v4326, %v4398
  %v4400 = vpop.f32.mrb[0].mxu0
  %v4401 = vadd.f32 %v4328, %v4400
  %v4402 = vpop.f32.mrb[0].mxu0
  %v4403 = vadd.f32 %v4330, %v4402
  %4404 = vmatprep.mubr.bf16.mxu0 %v2693
  %4405 = vmatmul.mubr.bf16.gmra.mrb[0].mxu0 %v2684
  %v4406 = vpop.f32.mrb[0].mxu0
  %v4407 = vadd.f32 %v4334, %v4406
  %v4408 = vpop.f32.mrb[0].mxu0
  %v4409 = vadd.f32 %v4336, %v4408
  %v4410 = vpop.f32.mrb[0].mxu0
  %v4411 = vadd.f32 %v4338, %v4410
  %v4412 = vpop.f32.mrb[0].mxu0
  %v4413 = vadd.f32 %v4340, %v4412
  %4414 = vdwg.mxu0
  %4415 = vmatprep.subr.bf16.mxu0 %v3902
  %4416 = vmatpush1.bf16.msra.mxu0 %v3899
  %4417 = vmatprep.subr.bf16.mxu0 0
  %4418 = vmatpush1.bf16.msra.mxu0 0
  %4419 = vmatprep.subr.bf16.mxu0 0
  %4420 = vmatpush1.bf16.msra.mxu0 0
  %4421 = vmatprep.subr.bf16.mxu0 0
  %4422 = vmatpush1.bf16.msra.mxu0 0
  %4423 = vmatprep.subr.bf16.mxu0 0
  %4424 = vmatpush1.bf16.msra.mxu0 0
  %4425 = vmatprep.subr.bf16.mxu0 0
  %4426 = vmatpush1.bf16.msra.mxu0 0
  %4427 = vmatprep.subr.bf16.mxu0 0
  %4428 = vmatpush1.bf16.msra.mxu0 0
  %4429 = vmatprep.subr.bf16.mxu0 0
  %4430 = vmatpush1.bf16.msra.mxu0 0
  %4431 = vmatprep.subr.bf16.mxu0 0
  %4432 = vmatpush1.bf16.msra.mxu0 0
  %4433 = vmatprep.subr.bf16.mxu0 0
  %4434 = vmatpush1.bf16.msra.mxu0 0
  %4435 = vmatprep.subr.bf16.mxu0 0
  %4436 = vmatpush1.bf16.msra.mxu0 0
  %4437 = vmatprep.subr.bf16.mxu0 0
  %4438 = vmatpush1.bf16.msra.mxu0 0
  %4439 = vmatprep.subr.bf16.mxu0 0
  %4440 = vmatpush1.bf16.msra.mxu0 0
  %4441 = vmatprep.subr.bf16.mxu0 0
  %4442 = vmatpush1.bf16.msra.mxu0 0
  %4443 = vmatprep.subr.bf16.mxu0 0
  %4444 = vmatpush1.bf16.msra.mxu0 0
  %4445 = vmatprep.subr.bf16.mxu0 0
  %4446 = vmatpush1.bf16.msra.mxu0 0
  %4447 = vmatprep.mubr.bf16.mxu0 0
  %4448 = vmatmul.mubr.bf16.gmra.mrb[0].mxu0 %v3886
  %v4449 = vpop.f32.mrb[0].mxu0
  %v4450 = vadd.f32 %v4377, %v4449
  %v4451 = vpop.f32.mrb[0].mxu0
  %v4452 = vadd.f32 %v4379, %v4451
  %v4453 = vpop.f32.mrb[0].mxu0
  %v4454 = vadd.f32 %v4381, %v4453
  %v4455 = vpop.f32.mrb[0].mxu0
  %v4456 = vadd.f32 %v4383, %v4455
  %4457 = vmatprep.mubr.bf16.mxu0 0
  %4458 = vmatmul.mubr.bf16.gmra.mrb[0].mxu0 %v3889
  %v4459 = vpop.f32.mrb[0].mxu0
  %v4460 = vadd.f32 %v4387, %v4459
  %v4461 = vpop.f32.mrb[0].mxu0
  %v4462 = vadd.f32 %v4389, %v4461
  %v4463 = vpop.f32.mrb[0].mxu0
  %v4464 = vadd.f32 %v4391, %v4463
  %v4465 = vpop.f32.mrb[0].mxu0
  %v4466 = vadd.f32 %v4393, %v4465
  %4467 = vmatprep.mubr.bf16.mxu0 0
  %4468 = vmatmul.mubr.bf16.gmra.mrb[0].mxu0 %v3892
  %v4469 = vpop.f32.mrb[0].mxu0
  %v4470 = vadd.f32 %v4397, %v4469
  %v4471 = vpop.f32.mrb[0].mxu0
  %v4472 = vadd.f32 %v4399, %v4471
  %v4473 = vpop.f32.mrb[0].mxu0
  %v4474 = vadd.f32 %v4401, %v4473
  %v4475 = vpop.f32.mrb[0].mxu0
  %v4476 = vadd.f32 %v4403, %v4475
  %4477 = vmatprep.mubr.bf16.mxu0 0
  %4478 = vmatmul.mubr.bf16.gmra.mrb[0].mxu0 %v3895
  %v4479 = vpop.f32.mrb[0].mxu0
  %v4480 = vadd.f32 %v4407, %v4479
  %v4481 = vpop.f32.mrb[0].mxu0
  %v4482 = vadd.f32 %v4409, %v4481
  %v4483 = vpop.f32.mrb[0].mxu0
  %v4484 = vadd.f32 %v4411, %v4483
  %v4485 = vpop.f32.mrb[0].mxu0
  %v4486 = vadd.f32 %v4413, %v4485
  %4487 = vdwg.mxu0
  %v4488 = vmul.f32 %v4450, %v320
  %v4489 = vmul.f32 %v4452, %v321
  %v4490 = vmul.f32 %v4454, %v322
  %v4491 = vmul.f32 %v4456, %v323
  %v4492 = vmul.f32 %v4460, %v324
  %v4493 = vmul.f32 %v4462, %v325
  %v4494 = vmul.f32 %v4464, %v326
  %v4495 = vmul.f32 %v4466, %v327
  %v4496 = vmul.f32 %v4470, %v328
  %v4497 = vmul.f32 %v4472, %v329
  %v4498 = vmul.f32 %v4474, %v330
  %v4499 = vmul.f32 %v4476, %v331
  %v4500 = vmul.f32 %v4480, %v332
  %v4501 = vmul.f32 %v4482, %v333
  %v4502 = vmul.f32 %v4484, %v334
  %v4503 = vmul.f32 %v4486, %v335
  %v4504 = vadd.f32 %v4488, %v4490
  %v4505 = vadd.f32 %v4504, %v4492
  %v4506 = vadd.f32 %v4505, %v4494
  %v4507 = vadd.f32 %v4506, %v4496
  %v4508 = vadd.f32 %v4507, %v4498
  %v4509 = vadd.f32 %v4508, %v4500
  %v4510 = vadd.f32 %v4509, %v4502
  %v4511 = vrot.slane %v4510, 4
  %v4512 = vadd.f32 %v4510, %v4511
  %v4513 = vrot.slane %v4512, 2
  %v4514 = vadd.f32 %v4512, %v4513
  %v4515 = vrot.slane %v4514, 1
  %v4516 = vadd.f32 %v4514, %v4515
  %v4517 = vsel %vm1720, %v4489, 0.0
  %v4518 = vsel %vm1720, %v4491, 0.0
  %v4519 = vadd.f32 %v4517, %v4518
  %v4520 = vsel %vm1720, %v4493, 0.0
  %v4521 = vadd.f32 %v4519, %v4520
  %v4522 = vsel %vm1720, %v4495, 0.0
  %v4523 = vadd.f32 %v4521, %v4522
  %v4524 = vsel %vm1720, %v4497, 0.0
  %v4525 = vadd.f32 %v4523, %v4524
  %v4526 = vsel %vm1720, %v4499, 0.0
  %v4527 = vadd.f32 %v4525, %v4526
  %v4528 = vsel %vm1720, %v4501, 0.0
  %v4529 = vadd.f32 %v4527, %v4528
  %v4530 = vsel %vm1720, %v4503, 0.0
  %v4531 = vadd.f32 %v4529, %v4530
  %v4532 = vrot.slane %v4531, 4
  %v4533 = vadd.f32 %v4531, %v4532
  %v4534 = vrot.slane %v4533, 2
  %v4535 = vadd.f32 %v4533, %v4534
  %v4536 = vrot.slane %v4535, 1
  %v4537 = vadd.f32 %v4535, %v4536
  %v4538 = vmul.f32 %v4488, %v4488
  %v4539 = vmul.f32 %v4489, %v4489
  %v4540 = vmul.f32 %v4490, %v4490
  %v4541 = vmul.f32 %v4491, %v4491
  %v4542 = vmul.f32 %v4492, %v4492
  %v4543 = vmul.f32 %v4493, %v4493
  %v4544 = vmul.f32 %v4494, %v4494
  %v4545 = vmul.f32 %v4495, %v4495
  %v4546 = vmul.f32 %v4496, %v4496
  %v4547 = vmul.f32 %v4497, %v4497
  %v4548 = vmul.f32 %v4498, %v4498
  %v4549 = vmul.f32 %v4499, %v4499
  %v4550 = vmul.f32 %v4500, %v4500
  %v4551 = vmul.f32 %v4501, %v4501
  %v4552 = vmul.f32 %v4502, %v4502
  %v4553 = vmul.f32 %v4503, %v4503
  %v4554 = vadd.f32 %v4538, %v4540
  %v4555 = vadd.f32 %v4554, %v4542
  %v4556 = vadd.f32 %v4555, %v4544
  %v4557 = vadd.f32 %v4556, %v4546
  %v4558 = vadd.f32 %v4557, %v4548
  %v4559 = vadd.f32 %v4558, %v4550
  %v4560 = vadd.f32 %v4559, %v4552
  %v4561 = vrot.slane %v4560, 4
  %v4562 = vadd.f32 %v4560, %v4561
  %v4563 = vrot.slane %v4562, 2
  %v4564 = vadd.f32 %v4562, %v4563
  %v4565 = vrot.slane %v4564, 1
  %v4566 = vadd.f32 %v4564, %v4565
  %v4567 = vsel %vm1720, %v4539, 0.0
  %v4568 = vsel %vm1720, %v4541, 0.0
  %v4569 = vadd.f32 %v4567, %v4568
  %v4570 = vsel %vm1720, %v4543, 0.0
  %v4571 = vadd.f32 %v4569, %v4570
  %v4572 = vsel %vm1720, %v4545, 0.0
  %v4573 = vadd.f32 %v4571, %v4572
  %v4574 = vsel %vm1720, %v4547, 0.0
  %v4575 = vadd.f32 %v4573, %v4574
  %v4576 = vsel %vm1720, %v4549, 0.0
  %v4577 = vadd.f32 %v4575, %v4576
  %v4578 = vsel %vm1720, %v4551, 0.0
  %v4579 = vadd.f32 %v4577, %v4578
  %v4580 = vsel %vm1720, %v4553, 0.0
  %v4581 = vadd.f32 %v4579, %v4580
  %v4582 = vrot.slane %v4581, 4
  %v4583 = vadd.f32 %v4581, %v4582
  %v4584 = vrot.slane %v4583, 2
  %v4585 = vadd.f32 %v4583, %v4584
  %v4586 = vrot.slane %v4585, 1
  %v4587 = vadd.f32 %v4585, %v4586
  %vm4588 = vcmask 1040384
  %v4589 = vsel %vm4588, %v4516, %v4566
  %v4590 = vsel %vm4588, %v4537, %v4587
  %v4591 = vld [vmem:[%s27] sm:$0xff]
  %v4592 = vld [vmem:[%s27 + $0x8] sm:$0xff]
  %v4593 = vld [vmem:[%s27 + $0x10] sm:$0xff]
  %v4594 = vld [vmem:[%s27 + $0x18] sm:$0xff]
  %v4595 = vld [vmem:[%s27 + $0x20] sm:$0xff]
  %v4596 = vld [vmem:[%s27 + $0x28] sm:$0xff]
  %v4597 = vld [vmem:[%s27 + $0x30] sm:$0xff]
  %v4598 = vld [vmem:[%s27 + $0x38] sm:$0xff]
  %v4599 = vld [vmem:[%s27 + $0x40] sm:$0xff]
  %v4600 = vld [vmem:[%s27 + $0x48] sm:$0xff]
  %v4601 = vld [vmem:[%s27 + $0x50] sm:$0xff]
  %v4602 = vld [vmem:[%s27 + $0x58] sm:$0xff]
  %v4603 = vld [vmem:[%s27 + $0x60] sm:$0xff]
  %v4604 = vld [vmem:[%s27 + $0x68] sm:$0xff]
  %v4605 = vld [vmem:[%s27 + $0x70] sm:$0xff]
  %v4606 = vld [vmem:[%s27 + $0x78] sm:$0xff]
  %v4607 = vld [vmem:[%s27 + $0x80] sm:$0xff]
  %v4608 = vld [vmem:[%s27 + $0x88] sm:$0xff]
  %v4609 = vld [vmem:[%s27 + $0x90] sm:$0xff]
  %v4610 = vld [vmem:[%s27 + $0x98] sm:$0xff]
  %v4611 = vld [vmem:[%s27 + $0xa0] sm:$0xff]
  %v4612 = vld [vmem:[%s27 + $0xa8] sm:$0xff]
  %v4613 = vld [vmem:[%s27 + $0xb0] sm:$0xff]
  %v4614 = vld [vmem:[%s27 + $0xb8] sm:$0xff]
  %v4615 = vld [vmem:[%s27 + $0xc0] sm:$0xff]
  %v4617 = vsel %vm1720, %v4590, 0
  %4619 = vmatprep.subr.mxu0 0.0
  %4620 = vmatpush1.msra.mxu0 %v4591
  %4621 = vmatprep.subr.mxu0 0.0
  %4622 = vmatpush1.msra.mxu0 %v4592
  %4623 = vmatprep.subr.mxu0 0.0
  %4624 = vmatpush1.msra.mxu0 %v4593
  %4625 = vmatprep.subr.mxu0 0.0
  %4626 = vmatpush1.msra.mxu0 %v4594
  %4627 = vmatprep.subr.mxu0 0.0
  %4628 = vmatpush1.msra.mxu0 %v4595
  %4629 = vmatprep.subr.mxu0 0.0
  %4630 = vmatpush1.msra.mxu0 %v4596
  %4631 = vmatprep.subr.mxu0 0.0
  %4632 = vmatpush1.msra.mxu0 %v4597
  %4633 = vmatprep.subr.mxu0 0.0
  %4634 = vmatpush1.msra.mxu0 %v4598
  %4635 = vmatprep.subr.mxu0 0.0
  %4636 = vmatpush1.msra.mxu0 %v4599
  %4637 = vmatprep.subr.mxu0 0.0
  %4638 = vmatpush1.msra.mxu0 %v4600
  %4639 = vmatprep.subr.mxu0 0.0
  %4640 = vmatpush1.msra.mxu0 %v4601
  %4641 = vmatprep.subr.mxu0 0.0
  %4642 = vmatpush1.msra.mxu0 %v4602
  %4643 = vmatprep.subr.mxu0 0.0
  %4644 = vmatpush1.msra.mxu0 %v4603
  %4645 = vmatprep.subr.mxu0 0.0
  %4646 = vmatpush1.msra.mxu0 %v4604
  %4647 = vmatprep.subr.mxu0 0.0
  %4648 = vmatpush1.msra.mxu0 %v4605
  %4649 = vmatprep.subr.mxu0 0.0
  %4650 = vmatpush1.msra.mxu0 %v4606
  %4651 = vmatprep.subr.mxu0 0.0
  %4652 = vmatpush1.msra.mxu0 %v4607
  %4653 = vmatprep.subr.mxu0 0.0
  %4654 = vmatpush1.msra.mxu0 %v4608
  %4655 = vmatprep.subr.mxu0 0.0
  %4656 = vmatpush1.msra.mxu0 %v4609
  %4657 = vmatprep.subr.mxu0 0.0
  %4658 = vmatpush1.msra.mxu0 %v4610
  %4659 = vmatprep.subr.mxu0 0.0
  %4660 = vmatpush1.msra.mxu0 %v4611
  %4661 = vmatprep.subr.mxu0 0.0
  %4662 = vmatpush1.msra.mxu0 %v4612
  %4663 = vmatprep.subr.mxu0 0.0
  %4664 = vmatpush1.msra.mxu0 %v4613
  %4665 = vmatprep.subr.mxu0 0.0
  %4666 = vmatpush1.msra.mxu0 %v4614
  %4667 = vmatprep.subr.mxu0 0.0
  %4668 = vmatpush1.msra.mxu0 %v4615
  %4669 = vmatprep.subr.mxu0 0.0
  %4670 = vmatpush1.msra.mxu0 0.0
  %4671 = vmatprep.subr.mxu0 0.0
  %4672 = vmatpush1.msra.mxu0 0.0
  %4673 = vmatprep.subr.mxu0 0.0
  %4674 = vmatpush1.msra.mxu0 0.0
  %4675 = vmatprep.subr.mxu0 0.0
  %4676 = vmatpush1.msra.mxu0 0.0
  %4677 = vmatprep.subr.mxu0 0.0
  %4678 = vmatpush1.msra.mxu0 0.0
  %4679 = vmatprep.subr.mxu0 0.0
  %4680 = vmatpush1.msra.mxu0 0.0
  %4681 = vmatprep.subr.mxu0 0.0
  %4682 = vmatpush1.msra.mxu0 0.0
  %4683 = vmatprep.mubr.f32.mxu0 %v4617
  %4684 = vmatmul.mubr.f32.gmra.mrb[0].mxu0 %v4589
  %v4685 = vpop.f32.mrb[0].mxu0
  %v4686 = vadd.f32 0.0, %v4685
  %v4687 = vpop.f32.mrb[0].mxu0
  %4688 = vdwg.mxu0
  %v4689 = vmul.f32 %v4686, 0.00390625
  %v4690 = vmul.f32 %v4689, %v4689
  %v4692 = vrot.slane %v4690, 7
  %v4694 = vsub.f32 %v4689, %v4692
  %v4695 = vld [vmem:[%s11] sm:$0x1]
  %v4696 = vadd.f32 %v4694, 1e-05
  %v4697 = vrsqrt.pop %v4696
  %v4700 = vunpack.c.l.s4 1966171168
  %v4701 = vunpack.c.0.s8 %v4700
  %v4702 = vlaneseq
  %v4703 = vshrl.u32 %v4702, 7
  %v4704 = vsub.s32 %v4701, %v4703
  %v4705 = vrot.slane %v4697, %v4704
  %v4706 = vcombine.high %v4705, %v4705
  %v4708 = vunpack.c.l.s4 1966171168
  %v4709 = vunpack.c.0.s8 %v4708
  %v4710 = vlaneseq
  %v4711 = vshrl.u32 %v4710, 7
  %v4712 = vsub.s32 %v4709, %v4711
  %v4713 = vrot.slane %v4706, %v4712
  %v4715 = vmul.f32 %v4695, %v4713
  %v4716 = vld [vmem:[%s13] sm:$0x1]
  %v4717 = vmul.f32 %v4689, %v4715
  %v4718 = vsub.f32 %v4716, %v4717
  %v4720 = vlaneseq
  %v4721 = vshrl.u32 %v4720, 7
  %v4722 = vsub.s32 0, %v4721
  %v4723 = vrot.slane %v4718, %v4722
  %v4725 = vsel %vm4588, %v4715, %v4723
  %v4726 = vld [vmem:[%s29] sm:$0xff]
  %v4727 = vld [vmem:[%s29 + $0x8] sm:$0xff]
  %v4728 = vld [vmem:[%s29 + $0x10] sm:$0xff]
  %v4729 = vld [vmem:[%s29 + $0x18] sm:$0xff]
  %v4730 = vld [vmem:[%s29 + $0x20] sm:$0xf]
  %v4731 = vld [vmem:[%s29 + $0x28] sm:$0xf]
  %v4733 = vsel %vm561, %v4725, 0
  %v4736 = vsel %vm3897, %v4730, 0
  %v4739 = vsel %vm3897, %v4731, 0
  %4741 = vmatprep.subr.mxu0 %v4727
  %4742 = vmatpush1.msra.mxu0 %v4726
  %4743 = vmatprep.subr.mxu0 %v4729
  %4744 = vmatpush1.msra.mxu0 %v4728
  %4745 = vmatprep.subr.mxu0 %v4739
  %4746 = vmatpush1.msra.mxu0 %v4736
  %4747 = vmatprep.subr.mxu0 0.0
  %4748 = vmatpush1.msra.mxu0 0.0
  %4749 = vmatprep.subr.mxu0 0.0
  %4750 = vmatpush1.msra.mxu0 0.0
  %4751 = vmatprep.subr.mxu0 0.0
  %4752 = vmatpush1.msra.mxu0 0.0
  %4753 = vmatprep.subr.mxu0 0.0
  %4754 = vmatpush1.msra.mxu0 0.0
  %4755 = vmatprep.subr.mxu0 0.0
  %4756 = vmatpush1.msra.mxu0 0.0
  %4757 = vmatprep.subr.mxu0 0.0
  %4758 = vmatpush1.msra.mxu0 0.0
  %4759 = vmatprep.subr.mxu0 0.0
  %4760 = vmatpush1.msra.mxu0 0.0
  %4761 = vmatprep.subr.mxu0 0.0
  %4762 = vmatpush1.msra.mxu0 0.0
  %4763 = vmatprep.subr.mxu0 0.0
  %4764 = vmatpush1.msra.mxu0 0.0
  %4765 = vmatprep.subr.mxu0 0.0
  %4766 = vmatpush1.msra.mxu0 0.0
  %4767 = vmatprep.subr.mxu0 0.0
  %4768 = vmatpush1.msra.mxu0 0.0
  %4769 = vmatprep.subr.mxu0 0.0
  %4770 = vmatpush1.msra.mxu0 0.0
  %4771 = vmatprep.subr.mxu0 0.0
  %4772 = vmatpush1.msra.mxu0 0.0
  %4773 = vmatprep.subr.mxu0 0.0
  %4774 = vmatpush1.msra.mxu0 0.0
  %4775 = vmatprep.subr.mxu0 0.0
  %4776 = vmatpush1.msra.mxu0 0.0
  %4777 = vmatprep.subr.mxu0 0.0
  %4778 = vmatpush1.msra.mxu0 0.0
  %4779 = vmatprep.subr.mxu0 0.0
  %4780 = vmatpush1.msra.mxu0 0.0
  %4781 = vmatprep.subr.mxu0 0.0
  %4782 = vmatpush1.msra.mxu0 0.0
  %4783 = vmatprep.subr.mxu0 0.0
  %4784 = vmatpush1.msra.mxu0 0.0
  %4785 = vmatprep.subr.mxu0 0.0
  %4786 = vmatpush1.msra.mxu0 0.0
  %4787 = vmatprep.subr.mxu0 0.0
  %4788 = vmatpush1.msra.mxu0 0.0
  %4789 = vmatprep.subr.mxu0 0.0
  %4790 = vmatpush1.msra.mxu0 0.0
  %4791 = vmatprep.subr.mxu0 0.0
  %4792 = vmatpush1.msra.mxu0 0.0
  %4793 = vmatprep.subr.mxu0 0.0
  %4794 = vmatpush1.msra.mxu0 0.0
  %4795 = vmatprep.subr.mxu0 0.0
  %4796 = vmatpush1.msra.mxu0 0.0
  %4797 = vmatprep.subr.mxu0 0.0
  %4798 = vmatpush1.msra.mxu0 0.0
  %4799 = vmatprep.subr.mxu0 0.0
  %4800 = vmatpush1.msra.mxu0 0.0
  %4801 = vmatprep.subr.mxu0 0.0
  %4802 = vmatpush1.msra.mxu0 0.0
  %4803 = vmatprep.subr.mxu0 0.0
  %4804 = vmatpush1.msra.mxu0 0.0
  %4805 = vmatprep.mubr.f32.mxu0 0.0
  %4806 = vmatmul.mubr.f32.gmra.mrb[0].mxu0 %v4733
  %v4807 = vpop.f32.mrb[0].mxu0
  %v4808 = vadd.f32 0.0, %v4807
  %v4809 = vpop.f32.mrb[0].mxu0
  %v4810 = vadd.f32 0.0, %v4809
  %4811 = vdwg.mxu0
  %v4812 = vlaneseq
  %v4813 = vshrl.u32 %v4812, 7
  %v4814 = vsub.s32 0, %v4813
  %v4815 = vrot.slane %v4808, %v4814
  %v4816 = vlaneseq
  %v4817 = vshrl.u32 %v4816, 7
  %v4818 = vsub.s32 0, %v4817
  %v4819 = vrot.slane %v4810, %v4818
  %v4820 = vmul.f32 %v4450, %v4815
  %v4821 = vmul.f32 %v4452, %v4819
  %v4822 = vmul.f32 %v4454, %v4815
  %v4823 = vmul.f32 %v4456, %v4819
  %v4824 = vmul.f32 %v4460, %v4815
  %v4825 = vmul.f32 %v4462, %v4819
  %v4826 = vmul.f32 %v4464, %v4815
  %v4827 = vmul.f32 %v4466, %v4819
  %v4828 = vmul.f32 %v4470, %v4815
  %v4829 = vmul.f32 %v4472, %v4819
  %v4830 = vmul.f32 %v4474, %v4815
  %v4831 = vmul.f32 %v4476, %v4819
  %v4832 = vmul.f32 %v4480, %v4815
  %v4833 = vmul.f32 %v4482, %v4819
  %v4834 = vmul.f32 %v4484, %v4815
  %v4835 = vmul.f32 %v4486, %v4819
  %v4836 = vlaneseq
  %v4837 = vshrl.u32 %v4836, 7
  %v4838 = vsub.s32 1, %v4837
  %v4839 = vrot.slane %v4808, %v4838
  %v4840 = vlaneseq
  %v4841 = vshrl.u32 %v4840, 7
  %v4842 = vsub.s32 1, %v4841
  %v4843 = vrot.slane %v4810, %v4842
  %v4844 = vadd.f32 %v4820, %v4839
  %v4845 = vadd.f32 %v4821, %v4843
  %v4846 = vadd.f32 %v4822, %v4839
  %v4847 = vadd.f32 %v4823, %v4843
  %v4848 = vadd.f32 %v4824, %v4839
  %v4849 = vadd.f32 %v4825, %v4843
  %v4850 = vadd.f32 %v4826, %v4839
  %v4851 = vadd.f32 %v4827, %v4843
  %v4852 = vadd.f32 %v4828, %v4839
  %v4853 = vadd.f32 %v4829, %v4843
  %v4854 = vadd.f32 %v4830, %v4839
  %v4855 = vadd.f32 %v4831, %v4843
  %v4856 = vadd.f32 %v4832, %v4839
  %v4857 = vadd.f32 %v4833, %v4843
  %v4858 = vadd.f32 %v4834, %v4839
  %v4859 = vadd.f32 %v4835, %v4843
  %v4860 = vmax.f32 %v4844, 0.0
  %v4861 = vmax.f32 %v4845, 0.0
  %v4862 = vmax.f32 %v4846, 0.0
  %v4863 = vmax.f32 %v4847, 0.0
  %v4864 = vmax.f32 %v4848, 0.0
  %v4865 = vmax.f32 %v4849, 0.0
  %v4866 = vmax.f32 %v4850, 0.0
  %v4867 = vmax.f32 %v4851, 0.0
  %v4868 = vmax.f32 %v4852, 0.0
  %v4869 = vmax.f32 %v4853, 0.0
  %v4870 = vmax.f32 %v4854, 0.0
  %v4871 = vmax.f32 %v4855, 0.0
  %v4872 = vmax.f32 %v4856, 0.0
  %v4873 = vmax.f32 %v4857, 0.0
  %v4874 = vmax.f32 %v4858, 0.0
  %v4875 = vmax.f32 %v4859, 0.0
  %v4876 = vmul.f32 %v4860, %v320
  %v4877 = vmul.f32 %v4861, %v321
  %v4878 = vmul.f32 %v4862, %v322
  %v4879 = vmul.f32 %v4863, %v323
  %v4880 = vmul.f32 %v4864, %v324
  %v4881 = vmul.f32 %v4865, %v325
  %v4882 = vmul.f32 %v4866, %v326
  %v4883 = vmul.f32 %v4867, %v327
  %v4884 = vmul.f32 %v4868, %v328
  %v4885 = vmul.f32 %v4869, %v329
  %v4886 = vmul.f32 %v4870, %v330
  %v4887 = vmul.f32 %v4871, %v331
  %v4888 = vmul.f32 %v4872, %v332
  %v4889 = vmul.f32 %v4873, %v333
  %v4890 = vmul.f32 %v4874, %v334
  %v4891 = vmul.f32 %v4875, %v335
  %4908 = vrot.lane.b32.xlu0 %v4876, 20
  %v4909 = vpop.permute.xlu0 %4908
  %4910 = vrot.lane.b32.xlu0 %v4877, 20
  %v4911 = vpop.permute.xlu0 %4910
  %4912 = vrot.lane.b32.xlu0 %v4878, 20
  %v4913 = vpop.permute.xlu0 %4912
  %4914 = vrot.lane.b32.xlu0 %v4879, 20
  %v4915 = vpop.permute.xlu0 %4914
  %4916 = vrot.lane.b32.xlu0 %v4880, 20
  %v4917 = vpop.permute.xlu0 %4916
  %4918 = vrot.lane.b32.xlu0 %v4881, 20
  %v4919 = vpop.permute.xlu0 %4918
  %4920 = vrot.lane.b32.xlu0 %v4882, 20
  %v4921 = vpop.permute.xlu0 %4920
  %4922 = vrot.lane.b32.xlu0 %v4883, 20
  %v4923 = vpop.permute.xlu0 %4922
  %4924 = vrot.lane.b32.xlu0 %v4884, 20
  %v4925 = vpop.permute.xlu0 %4924
  %4926 = vrot.lane.b32.xlu0 %v4885, 20
  %v4927 = vpop.permute.xlu0 %4926
  %4928 = vrot.lane.b32.xlu0 %v4886, 20
  %v4929 = vpop.permute.xlu0 %4928
  %4930 = vrot.lane.b32.xlu0 %v4887, 20
  %v4931 = vpop.permute.xlu0 %4930
  %4932 = vrot.lane.b32.xlu0 %v4888, 20
  %v4933 = vpop.permute.xlu0 %4932
  %4934 = vrot.lane.b32.xlu0 %v4889, 20
  %v4935 = vpop.permute.xlu0 %4934
  %4936 = vrot.lane.b32.xlu0 %v4890, 20
  %v4937 = vpop.permute.xlu0 %4936
  %4938 = vrot.lane.b32.xlu0 %v4891, 20
  %v4939 = vpop.permute.xlu0 %4938
  %v4940 = vsel %vm561, %v4909, %v4911
  %v4941 = vsel %vm561, %v4913, %v4915
  %v4942 = vsel %vm561, %v4917, %v4919
  %v4943 = vsel %vm561, %v4921, %v4923
  %v4944 = vsel %vm561, %v4925, %v4927
  %v4945 = vsel %vm561, %v4929, %v4931
  %v4946 = vsel %vm561, %v4933, %v4935
  %v4947 = vsel %vm561, %v4937, %v4939
  %4964 = vst.msk [vmem:[#allocation2 + $0x10] sm:$0xff] %vm1346, %v4909
  %4965 = vst.msk [vmem:[#allocation2 + $0x18] sm:$0xff] %vm1348, %v4940
  %4966 = vst.msk [vmem:[#allocation2 + $0x20] sm:$0xff] %vm1346, %v4913
  %4967 = vst.msk [vmem:[#allocation2 + $0x28] sm:$0xff] %vm1348, %v4941
  %4968 = vst.msk [vmem:[#allocation2 + $0x30] sm:$0xff] %vm1346, %v4917
  %4969 = vst.msk [vmem:[#allocation2 + $0x38] sm:$0xff] %vm1348, %v4942
  %4970 = vst.msk [vmem:[#allocation2 + $0x40] sm:$0xff] %vm1346, %v4921
  %4971 = vst.msk [vmem:[#allocation2 + $0x48] sm:$0xff] %vm1348, %v4943
  %4972 = vst.msk [vmem:[#allocation2 + $0x50] sm:$0xff] %vm1346, %v4925
  %4973 = vst.msk [vmem:[#allocation2 + $0x58] sm:$0xff] %vm1348, %v4944
  %4974 = vst.msk [vmem:[#allocation2 + $0x60] sm:$0xff] %vm1346, %v4929
  %4975 = vst.msk [vmem:[#allocation2 + $0x68] sm:$0xff] %vm1348, %v4945
  %4976 = vst.msk [vmem:[#allocation2 + $0x70] sm:$0xff] %vm1346, %v4933
  %4977 = vst.msk [vmem:[#allocation2 + $0x78] sm:$0xff] %vm1348, %v4946
  %4978 = vst.msk [vmem:[#allocation2 + $0x80] sm:$0xff] %vm1346, %v4937
  %4979 = vst.msk [vmem:[#allocation2 + $0x88] sm:$0xff] %vm1348, %v4947
  %v4980 = vld [vmem:[#allocation2] sm:$0xff]
  %v4981 = vld [vmem:[#allocation2 + $0x8] sm:$0xff]
  %v4982 = vld [vmem:[#allocation2 + $0x10] sm:$0xff]
  %v4983 = vld [vmem:[#allocation2 + $0x18] sm:$0xff]
  %v4984 = vld [vmem:[#allocation2 + $0x20] sm:$0xff]
  %v4985 = vld [vmem:[#allocation2 + $0x28] sm:$0xff]
  %v4986 = vld [vmem:[#allocation2 + $0x30] sm:$0xff]
  %v4987 = vld [vmem:[#allocation2 + $0x38] sm:$0xff]
  %v4988 = vld [vmem:[#allocation2 + $0x40] sm:$0xff]
  %v4989 = vld [vmem:[#allocation2 + $0x48] sm:$0xff]
  %v4990 = vld [vmem:[#allocation2 + $0x50] sm:$0xff]
  %v4991 = vld [vmem:[#allocation2 + $0x58] sm:$0xff]
  %v4992 = vld [vmem:[#allocation2 + $0x60] sm:$0xff]
  %v4993 = vld [vmem:[#allocation2 + $0x68] sm:$0xff]
  %v4994 = vld [vmem:[#allocation2 + $0x70] sm:$0xff]
  %v4995 = vld [vmem:[#allocation2 + $0x78] sm:$0xff]
  %v4996 = vld [vmem:[#allocation2 + $0x80] sm:$0xff]
  %v4997 = vld [vmem:[#allocation2 + $0x88] sm:$0xff]
  %v4998 = vld [vmem:[#allocation2 + $0x90] sm:$0xff]
  %v4999 = vld [vmem:[#allocation2 + $0x98] sm:$0xff]
  %v5000 = vpack.c.bf16 %v4982, %v4980
  %v5001 = vpack.c.bf16 %v4983, %v4981
  %v5002 = vpack.c.bf16 %v4986, %v4984
  %v5003 = vpack.c.bf16 %v4987, %v4985
  %v5004 = vpack.c.bf16 %v4990, %v4988
  %v5005 = vpack.c.bf16 %v4991, %v4989
  %v5006 = vpack.c.bf16 %v4994, %v4992
  %v5007 = vpack.c.bf16 %v4995, %v4993
  %v5008 = vpack.c.bf16 %v4996, %v4996
  %v5009 = vpack.c.bf16 %v4997, %v4997
  %v5010 = vpack.c.bf16 %v4984, %v4982
  %v5011 = vpack.c.bf16 %v4985, %v4983
  %v5012 = vpack.c.bf16 %v4988, %v4986
  %v5013 = vpack.c.bf16 %v4989, %v4987
  %v5014 = vpack.c.bf16 %v4992, %v4990
  %v5015 = vpack.c.bf16 %v4993, %v4991
  %v5016 = vpack.c.bf16 %v4996, %v4994
  %v5017 = vpack.c.bf16 %v4997, %v4995
  %v5018 = vpack.c.bf16 %v4998, %v4998
  %v5019 = vpack.c.bf16 %v4999, %v4999
  %5030 = vrot.lane.b32.xlu0 %v5000, 52
  %v5031 = vpop.permute.xlu0 %5030
  %5032 = vrot.lane.b32.xlu0 %v5001, 52
  %v5033 = vpop.permute.xlu0 %5032
  %5034 = vrot.lane.b32.xlu0 %v5002, 52
  %v5035 = vpop.permute.xlu0 %5034
  %5036 = vrot.lane.b32.xlu0 %v5003, 52
  %v5037 = vpop.permute.xlu0 %5036
  %5038 = vrot.lane.b32.xlu0 %v5004, 52
  %v5039 = vpop.permute.xlu0 %5038
  %5040 = vrot.lane.b32.xlu0 %v5005, 52
  %v5041 = vpop.permute.xlu0 %5040
  %5042 = vrot.lane.b32.xlu0 %v5006, 52
  %v5043 = vpop.permute.xlu0 %5042
  %5044 = vrot.lane.b32.xlu0 %v5007, 52
  %v5045 = vpop.permute.xlu0 %5044
  %5046 = vrot.lane.b32.xlu0 %v5008, 52
  %v5047 = vpop.permute.xlu0 %5046
  %5048 = vrot.lane.b32.xlu0 %v5009, 52
  %v5049 = vpop.permute.xlu0 %5048
  %v5050 = vsel %vm1434, %v5031, %v5033
  %v5051 = vsel %vm1434, %v5035, %v5037
  %v5052 = vsel %vm1434, %v5039, %v5041
  %v5053 = vsel %vm1434, %v5043, %v5045
  %v5054 = vsel %vm1434, %v5047, %v5049
  %5055 = vrot.lane.b32.xlu0 %v5000, 104
  %v5056 = vpop.permute.xlu0 %5055
  %5057 = vrot.lane.b32.xlu0 %v5001, 104
  %v5058 = vpop.permute.xlu0 %5057
  %5059 = vrot.lane.b32.xlu0 %v5002, 104
  %v5060 = vpop.permute.xlu0 %5059
  %5061 = vrot.lane.b32.xlu0 %v5003, 104
  %v5062 = vpop.permute.xlu0 %5061
  %5063 = vrot.lane.b32.xlu0 %v5004, 104
  %v5064 = vpop.permute.xlu0 %5063
  %5065 = vrot.lane.b32.xlu0 %v5005, 104
  %v5066 = vpop.permute.xlu0 %5065
  %5067 = vrot.lane.b32.xlu0 %v5006, 104
  %v5068 = vpop.permute.xlu0 %5067
  %5069 = vrot.lane.b32.xlu0 %v5007, 104
  %v5070 = vpop.permute.xlu0 %5069
  %5071 = vrot.lane.b32.xlu0 %v5008, 104
  %v5072 = vpop.permute.xlu0 %5071
  %5073 = vrot.lane.b32.xlu0 %v5009, 104
  %v5074 = vpop.permute.xlu0 %5073
  %v5075 = vsel %vm1460, %v5056, %v5058
  %v5076 = vsel %vm1460, %v5060, %v5062
  %v5077 = vsel %vm1460, %v5064, %v5066
  %v5078 = vsel %vm1460, %v5068, %v5070
  %v5079 = vsel %vm1460, %v5072, %v5074
  %v5081 = vshrl.u32 %v5010, 16
  %v5083 = vrot.slane %v5081, 4
  %v5084 = vshll.u32 %v5010, 16
  %v5086 = vrot.slane %v5084, 5
  %v5087 = vor.u32 %v5083, %v5086
  %v5089 = vshrl.u32 %v5011, 16
  %v5091 = vrot.slane %v5089, 4
  %v5092 = vshll.u32 %v5011, 16
  %v5094 = vrot.slane %v5092, 5
  %v5095 = vor.u32 %v5091, %v5094
  %v5097 = vshrl.u32 %v5012, 16
  %v5099 = vrot.slane %v5097, 4
  %v5100 = vshll.u32 %v5012, 16
  %v5102 = vrot.slane %v5100, 5
  %v5103 = vor.u32 %v5099, %v5102
  %v5104 = vsel %vm714, %v5087, %v5103
  %v5106 = vshrl.u32 %v5013, 16
  %v5108 = vrot.slane %v5106, 4
  %v5109 = vshll.u32 %v5013, 16
  %v5111 = vrot.slane %v5109, 5
  %v5112 = vor.u32 %v5108, %v5111
  %v5113 = vsel %vm714, %v5095, %v5112
  %v5115 = vshrl.u32 %v5014, 16
  %v5117 = vrot.slane %v5115, 4
  %v5118 = vshll.u32 %v5014, 16
  %v5120 = vrot.slane %v5118, 5
  %v5121 = vor.u32 %v5117, %v5120
  %v5122 = vsel %vm714, %v5103, %v5121
  %v5124 = vshrl.u32 %v5015, 16
  %v5126 = vrot.slane %v5124, 4
  %v5127 = vshll.u32 %v5015, 16
  %v5129 = vrot.slane %v5127, 5
  %v5130 = vor.u32 %v5126, %v5129
  %v5131 = vsel %vm714, %v5112, %v5130
  %v5133 = vshrl.u32 %v5016, 16
  %v5135 = vrot.slane %v5133, 4
  %v5136 = vshll.u32 %v5016, 16
  %v5138 = vrot.slane %v5136, 5
  %v5139 = vor.u32 %v5135, %v5138
  %v5140 = vsel %vm714, %v5121, %v5139
  %v5142 = vshrl.u32 %v5017, 16
  %v5144 = vrot.slane %v5142, 4
  %v5145 = vshll.u32 %v5017, 16
  %v5147 = vrot.slane %v5145, 5
  %v5148 = vor.u32 %v5144, %v5147
  %v5149 = vsel %vm714, %v5130, %v5148
  %5150 = vrot.lane.b32.xlu0 %v5087, 88
  %v5151 = vpop.permute.xlu0 %5150
  %5152 = vrot.lane.b32.xlu0 %v5095, 88
  %v5153 = vpop.permute.xlu0 %5152
  %5154 = vrot.lane.b32.xlu0 %v5104, 88
  %v5155 = vpop.permute.xlu0 %5154
  %5156 = vrot.lane.b32.xlu0 %v5113, 88
  %v5157 = vpop.permute.xlu0 %5156
  %5158 = vrot.lane.b32.xlu0 %v5122, 88
  %v5159 = vpop.permute.xlu0 %5158
  %5160 = vrot.lane.b32.xlu0 %v5131, 88
  %v5161 = vpop.permute.xlu0 %5160
  %5162 = vrot.lane.b32.xlu0 %v5140, 88
  %v5163 = vpop.permute.xlu0 %5162
  %5164 = vrot.lane.b32.xlu0 %v5149, 88
  %v5165 = vpop.permute.xlu0 %5164
  %5166 = vrot.lane.b32.xlu0 %v5139, 88
  %v5167 = vpop.permute.xlu0 %5166
  %5168 = vrot.lane.b32.xlu0 %v5148, 88
  %v5169 = vpop.permute.xlu0 %5168
  %v5170 = vsel %vm1556, %v5151, %v5153
  %v5171 = vsel %vm1556, %v5155, %v5157
  %v5172 = vsel %vm1556, %v5159, %v5161
  %v5173 = vsel %vm1556, %v5163, %v5165
  %v5174 = vsel %vm1556, %v5167, %v5169
  %5175 = vrot.lane.b32.xlu0 %v5087, 12
  %v5176 = vpop.permute.xlu0 %5175
  %5177 = vrot.lane.b32.xlu0 %v5095, 12
  %v5178 = vpop.permute.xlu0 %5177
  %5179 = vrot.lane.b32.xlu0 %v5104, 12
  %v5180 = vpop.permute.xlu0 %5179
  %5181 = vrot.lane.b32.xlu0 %v5113, 12
  %v5182 = vpop.permute.xlu0 %5181
  %5183 = vrot.lane.b32.xlu0 %v5122, 12
  %v5184 = vpop.permute.xlu0 %5183
  %5185 = vrot.lane.b32.xlu0 %v5131, 12
  %v5186 = vpop.permute.xlu0 %5185
  %5187 = vrot.lane.b32.xlu0 %v5140, 12
  %v5188 = vpop.permute.xlu0 %5187
  %5189 = vrot.lane.b32.xlu0 %v5149, 12
  %v5190 = vpop.permute.xlu0 %5189
  %5191 = vrot.lane.b32.xlu0 %v5139, 12
  %v5192 = vpop.permute.xlu0 %5191
  %5193 = vrot.lane.b32.xlu0 %v5148, 12
  %v5194 = vpop.permute.xlu0 %5193
  %v5195 = vsel %vm1582, %v5176, %v5178
  %v5196 = vsel %vm1582, %v5180, %v5182
  %v5197 = vsel %vm1582, %v5184, %v5186
  %v5198 = vsel %vm1582, %v5188, %v5190
  %v5199 = vsel %vm1582, %v5192, %v5194
  %5200 = vrot.lane.b32.xlu0 %v5087, 64
  %v5201 = vpop.permute.xlu0 %5200
  %5202 = vrot.lane.b32.xlu0 %v5095, 64
  %v5203 = vpop.permute.xlu0 %5202
  %5204 = vrot.lane.b32.xlu0 %v5104, 64
  %v5205 = vpop.permute.xlu0 %5204
  %5206 = vrot.lane.b32.xlu0 %v5113, 64
  %v5207 = vpop.permute.xlu0 %5206
  %5208 = vrot.lane.b32.xlu0 %v5122, 64
  %v5209 = vpop.permute.xlu0 %5208
  %5210 = vrot.lane.b32.xlu0 %v5131, 64
  %v5211 = vpop.permute.xlu0 %5210
  %5212 = vrot.lane.b32.xlu0 %v5140, 64
  %v5213 = vpop.permute.xlu0 %5212
  %5214 = vrot.lane.b32.xlu0 %v5149, 64
  %v5215 = vpop.permute.xlu0 %5214
  %5216 = vrot.lane.b32.xlu0 %v5139, 64
  %v5217 = vpop.permute.xlu0 %5216
  %5218 = vrot.lane.b32.xlu0 %v5148, 64
  %v5219 = vpop.permute.xlu0 %5218
  %v5220 = vsel %vm1608, %v5201, %v5203
  %v5221 = vsel %vm1608, %v5205, %v5207
  %v5222 = vsel %vm1608, %v5209, %v5211
  %v5223 = vsel %vm1608, %v5213, %v5215
  %v5224 = vsel %vm1608, %v5217, %v5219
  %v5235 = vrot.slane %v5010, 5
  %v5236 = vrot.slane %v5011, 5
  %v5237 = vrot.slane %v5012, 5
  %v5238 = vsel %vm785, %v5235, %v5237
  %v5239 = vrot.slane %v5013, 5
  %v5240 = vsel %vm785, %v5236, %v5239
  %v5241 = vrot.slane %v5014, 5
  %v5242 = vsel %vm785, %v5237, %v5241
  %v5243 = vrot.slane %v5015, 5
  %v5244 = vsel %vm785, %v5239, %v5243
  %v5245 = vrot.slane %v5016, 5
  %v5246 = vsel %vm785, %v5241, %v5245
  %v5247 = vrot.slane %v5017, 5
  %v5248 = vsel %vm785, %v5243, %v5247
  %v5249 = vrot.slane %v5018, 5
  %v5250 = vsel %vm785, %v5245, %v5249
  %v5251 = vrot.slane %v5019, 5
  %v5252 = vsel %vm785, %v5247, %v5251
  %5253 = vrot.lane.b32.xlu0 %v5235, 48
  %v5254 = vpop.permute.xlu0 %5253
  %5255 = vrot.lane.b32.xlu0 %v5236, 48
  %v5256 = vpop.permute.xlu0 %5255
  %5257 = vrot.lane.b32.xlu0 %v5238, 48
  %v5258 = vpop.permute.xlu0 %5257
  %5259 = vrot.lane.b32.xlu0 %v5240, 48
  %v5260 = vpop.permute.xlu0 %5259
  %5261 = vrot.lane.b32.xlu0 %v5242, 48
  %v5262 = vpop.permute.xlu0 %5261
  %5263 = vrot.lane.b32.xlu0 %v5244, 48
  %v5264 = vpop.permute.xlu0 %5263
  %5265 = vrot.lane.b32.xlu0 %v5246, 48
  %v5266 = vpop.permute.xlu0 %5265
  %5267 = vrot.lane.b32.xlu0 %v5248, 48
  %v5268 = vpop.permute.xlu0 %5267
  %5269 = vrot.lane.b32.xlu0 %v5250, 48
  %v5270 = vpop.permute.xlu0 %5269
  %5271 = vrot.lane.b32.xlu0 %v5252, 48
  %v5272 = vpop.permute.xlu0 %5271
  %v5273 = vsel %vm1662, %v5254, %v5256
  %v5274 = vsel %vm1662, %v5258, %v5260
  %v5275 = vsel %vm1662, %v5262, %v5264
  %v5276 = vsel %vm1662, %v5266, %v5268
  %v5277 = vsel %vm1662, %v5270, %v5272
  %5278 = vrot.lane.b32.xlu0 %v5235, 100
  %v5279 = vpop.permute.xlu0 %5278
  %5280 = vrot.lane.b32.xlu0 %v5236, 100
  %v5281 = vpop.permute.xlu0 %5280
  %5282 = vrot.lane.b32.xlu0 %v5238, 100
  %v5283 = vpop.permute.xlu0 %5282
  %5284 = vrot.lane.b32.xlu0 %v5240, 100
  %v5285 = vpop.permute.xlu0 %5284
  %5286 = vrot.lane.b32.xlu0 %v5242, 100
  %v5287 = vpop.permute.xlu0 %5286
  %5288 = vrot.lane.b32.xlu0 %v5244, 100
  %v5289 = vpop.permute.xlu0 %5288
  %5290 = vrot.lane.b32.xlu0 %v5246, 100
  %v5291 = vpop.permute.xlu0 %5290
  %5292 = vrot.lane.b32.xlu0 %v5248, 100
  %v5293 = vpop.permute.xlu0 %5292
  %5294 = vrot.lane.b32.xlu0 %v5250, 100
  %v5295 = vpop.permute.xlu0 %5294
  %5296 = vrot.lane.b32.xlu0 %v5252, 100
  %v5297 = vpop.permute.xlu0 %5296
  %v5298 = vsel %vm1688, %v5279, %v5281
  %v5299 = vsel %vm1688, %v5283, %v5285
  %v5300 = vsel %vm1688, %v5287, %v5289
  %v5301 = vsel %vm1688, %v5291, %v5293
  %v5302 = vsel %vm1688, %v5295, %v5297
  %5303 = vrot.lane.b32.xlu0 %v5235, 24
  %v5304 = vpop.permute.xlu0 %5303
  %5305 = vrot.lane.b32.xlu0 %v5236, 24
  %v5306 = vpop.permute.xlu0 %5305
  %5307 = vrot.lane.b32.xlu0 %v5238, 24
  %v5308 = vpop.permute.xlu0 %5307
  %5309 = vrot.lane.b32.xlu0 %v5240, 24
  %v5310 = vpop.permute.xlu0 %5309
  %5311 = vrot.lane.b32.xlu0 %v5242, 24
  %v5312 = vpop.permute.xlu0 %5311
  %5313 = vrot.lane.b32.xlu0 %v5244, 24
  %v5314 = vpop.permute.xlu0 %5313
  %5315 = vrot.lane.b32.xlu0 %v5246, 24
  %v5316 = vpop.permute.xlu0 %5315
  %5317 = vrot.lane.b32.xlu0 %v5248, 24
  %v5318 = vpop.permute.xlu0 %5317
  %5319 = vrot.lane.b32.xlu0 %v5250, 24
  %v5320 = vpop.permute.xlu0 %5319
  %5321 = vrot.lane.b32.xlu0 %v5252, 24
  %v5322 = vpop.permute.xlu0 %5321
  %v5323 = vsel %vm1714, %v5304, %v5306
  %v5324 = vsel %vm1714, %v5308, %v5310
  %v5325 = vsel %vm1714, %v5312, %v5314
  %v5326 = vsel %vm1714, %v5316, %v5318
  %v5327 = vsel %vm1714, %v5320, %v5322
  %v5330 = vsel %vm1720, %v5001, %v5031
  %v5333 = vsel %vm1720, %v5003, %v5035
  %v5336 = vsel %vm1720, %v5005, %v5039
  %v5339 = vsel %vm1720, %v5007, %v5043
  %v5342 = vsel %vm1720, %v5009, %v5047
  %v5345 = vsel %vm1736, %v5033, %v5075
  %v5348 = vsel %vm1736, %v5037, %v5076
  %v5351 = vsel %vm1736, %v5041, %v5077
  %v5354 = vsel %vm1736, %v5045, %v5078
  %v5357 = vsel %vm1736, %v5049, %v5079
  %v5360 = vsel %vm1752, %v5058, %v5151
  %v5363 = vsel %vm1752, %v5062, %v5155
  %v5366 = vsel %vm1752, %v5066, %v5159
  %v5369 = vsel %vm1752, %v5070, %v5163
  %v5372 = vsel %vm1752, %v5074, %v5167
  %v5375 = vsel %vm599, %v5153, %v5176
  %v5378 = vsel %vm599, %v5157, %v5180
  %v5381 = vsel %vm599, %v5161, %v5184
  %v5384 = vsel %vm599, %v5165, %v5188
  %v5387 = vsel %vm599, %v5169, %v5192
  %v5390 = vsel %vm1783, %v5195, %v5201
  %v5393 = vsel %vm1783, %v5196, %v5205
  %v5396 = vsel %vm1783, %v5197, %v5209
  %v5399 = vsel %vm1783, %v5198, %v5213
  %v5402 = vsel %vm1783, %v5199, %v5217
  %v5405 = vsel %vm1799, %v5203, %v5254
  %v5408 = vsel %vm1799, %v5207, %v5258
  %v5411 = vsel %vm1799, %v5211, %v5262
  %v5414 = vsel %vm1799, %v5215, %v5266
  %v5417 = vsel %vm1799, %v5219, %v5270
  %v5420 = vsel %vm884, %v5273, %v5279
  %v5423 = vsel %vm884, %v5274, %v5283
  %v5426 = vsel %vm884, %v5275, %v5287
  %v5429 = vsel %vm884, %v5276, %v5291
  %v5432 = vsel %vm884, %v5277, %v5295
  %v5435 = vsel %vm1830, %v5281, %v5304
  %v5438 = vsel %vm1830, %v5285, %v5308
  %v5441 = vsel %vm1830, %v5289, %v5312
  %v5444 = vsel %vm1830, %v5293, %v5316
  %v5447 = vsel %vm1830, %v5297, %v5320
  %v5448 = vld [vmem:[%s15] sm:$0xff]
  %v5449 = vld [vmem:[%s15 + $0x8] sm:$0xff]
  %v5450 = vld [vmem:[%s15 + $0x10] sm:$0xff]
  %v5451 = vld [vmem:[%s15 + $0x18] sm:$0xff]
  %v5452 = vld [vmem:[%s15 + $0x20] sm:$0xff]
  %v5453 = vld [vmem:[%s15 + $0x28] sm:$0xff]
  %v5454 = vld [vmem:[%s15 + $0x30] sm:$0xff]
  %v5455 = vld [vmem:[%s15 + $0x38] sm:$0xff]
  %v5456 = vld [vmem:[%s15 + $0x40] sm:$0xff]
  %v5457 = vld [vmem:[%s15 + $0x48] sm:$0xff]
  %v5458 = vld [vmem:[%s15 + $0x50] sm:$0xff]
  %v5459 = vld [vmem:[%s15 + $0x58] sm:$0xff]
  %v5460 = vld [vmem:[%s15 + $0x60] sm:$0xff]
  %v5461 = vld [vmem:[%s15 + $0x68] sm:$0xff]
  %v5462 = vld [vmem:[%s15 + $0x70] sm:$0xff]
  %v5463 = vld [vmem:[%s15 + $0x78] sm:$0xff]
  %v5464 = vld [vmem:[%s15 + $0x80] sm:$0xff]
  %v5465 = vld [vmem:[%s15 + $0x88] sm:$0xff]
  %v5466 = vld [vmem:[%s15 + $0x90] sm:$0xff]
  %v5467 = vld [vmem:[%s15 + $0x98] sm:$0xff]
  %v5468 = vld [vmem:[%s15 + $0xa0] sm:$0xff]
  %v5469 = vld [vmem:[%s15 + $0xa8] sm:$0xff]
  %v5470 = vld [vmem:[%s15 + $0xb0] sm:$0xff]
  %v5471 = vld [vmem:[%s15 + $0xb8] sm:$0xff]
  %v5472 = vld [vmem:[%s15 + $0xc0] sm:$0xff]
  %v5473 = vld [vmem:[%s15 + $0xc8] sm:$0xff]
  %v5474 = vld [vmem:[%s15 + $0xd0] sm:$0xff]
  %v5475 = vld [vmem:[%s15 + $0xd8] sm:$0xff]
  %v5476 = vld [vmem:[%s15 + $0xe0] sm:$0xff]
  %v5477 = vld [vmem:[%s15 + $0xe8] sm:$0xff]
  %v5478 = vld [vmem:[%s15 + $0xf0] sm:$0xff]
  %v5479 = vld [vmem:[%s15 + $0xf8] sm:$0xff]
  %v5480 = vld [vmem:[%s15 + $0x100] sm:$0xff]
  %v5481 = vld [vmem:[%s15 + $0x108] sm:$0xff]
  %v5482 = vld [vmem:[%s15 + $0x110] sm:$0xff]
  %v5483 = vld [vmem:[%s15 + $0x118] sm:$0xff]
  %v5484 = vld [vmem:[%s15 + $0x120] sm:$0xff]
  %v5485 = vld [vmem:[%s15 + $0x128] sm:$0xff]
  %v5486 = vld [vmem:[%s15 + $0x130] sm:$0xff]
  %v5487 = vld [vmem:[%s15 + $0x138] sm:$0xff]
  %v5488 = vld [vmem:[%s15 + $0x140] sm:$0xff]
  %v5489 = vld [vmem:[%s15 + $0x148] sm:$0xff]
  %v5490 = vld [vmem:[%s15 + $0x150] sm:$0xff]
  %v5491 = vld [vmem:[%s15 + $0x158] sm:$0xff]
  %v5492 = vld [vmem:[%s15 + $0x160] sm:$0xff]
  %v5493 = vld [vmem:[%s15 + $0x168] sm:$0xff]
  %v5494 = vld [vmem:[%s15 + $0x170] sm:$0xff]
  %v5495 = vld [vmem:[%s15 + $0x178] sm:$0xff]
  %v5496 = vld [vmem:[%s15 + $0x180] sm:$0xff]
  %v5497 = vld [vmem:[%s15 + $0x188] sm:$0xff]
  %v5498 = vld [vmem:[%s15 + $0x190] sm:$0xff]
  %v5499 = vld [vmem:[%s15 + $0x198] sm:$0xff]
  %v5500 = vld [vmem:[%s15 + $0x1a0] sm:$0xff]
  %v5501 = vld [vmem:[%s15 + $0x1a8] sm:$0xff]
  %v5502 = vld [vmem:[%s15 + $0x1b0] sm:$0xff]
  %v5503 = vld [vmem:[%s15 + $0x1b8] sm:$0xff]
  %v5504 = vld [vmem:[%s15 + $0x1c0] sm:$0xff]
  %v5505 = vld [vmem:[%s15 + $0x1c8] sm:$0xff]
  %v5506 = vld [vmem:[%s15 + $0x1d0] sm:$0xff]
  %v5507 = vld [vmem:[%s15 + $0x1d8] sm:$0xff]
  %v5508 = vld [vmem:[%s15 + $0x1e0] sm:$0xff]
  %v5509 = vld [vmem:[%s15 + $0x1e8] sm:$0xff]
  %v5510 = vld [vmem:[%s15 + $0x1f0] sm:$0xff]
  %v5511 = vld [vmem:[%s15 + $0x1f8] sm:$0xff]
  %v5512 = vld [vmem:[%s15 + $0x200] sm:$0xff]
  %v5513 = vld [vmem:[%s15 + $0x208] sm:$0xff]
  %v5514 = vld [vmem:[%s15 + $0x210] sm:$0xff]
  %v5515 = vld [vmem:[%s15 + $0x218] sm:$0xff]
  %v5516 = vld [vmem:[%s15 + $0x220] sm:$0xff]
  %v5517 = vld [vmem:[%s15 + $0x228] sm:$0xff]
  %v5518 = vld [vmem:[%s15 + $0x230] sm:$0xff]
  %v5519 = vld [vmem:[%s15 + $0x238] sm:$0xff]
  %v5520 = vld [vmem:[%s15 + $0x240] sm:$0xff]
  %v5521 = vld [vmem:[%s15 + $0x248] sm:$0xff]
  %v5522 = vld [vmem:[%s15 + $0x250] sm:$0xff]
  %v5523 = vld [vmem:[%s15 + $0x258] sm:$0xff]
  %v5524 = vld [vmem:[%s15 + $0x260] sm:$0xff]
  %v5525 = vld [vmem:[%s15 + $0x268] sm:$0xff]
  %v5526 = vld [vmem:[%s15 + $0x270] sm:$0xff]
  %v5527 = vld [vmem:[%s15 + $0x278] sm:$0xff]
  %v5528 = vld [vmem:[%s15 + $0x280] sm:$0xff]
  %v5529 = vld [vmem:[%s15 + $0x288] sm:$0xff]
  %v5530 = vld [vmem:[%s15 + $0x290] sm:$0xff]
  %v5531 = vld [vmem:[%s15 + $0x298] sm:$0xff]
  %v5532 = vld [vmem:[%s15 + $0x2a0] sm:$0xff]
  %v5533 = vld [vmem:[%s15 + $0x2a8] sm:$0xff]
  %v5534 = vld [vmem:[%s15 + $0x2b0] sm:$0xff]
  %v5535 = vld [vmem:[%s15 + $0x2b8] sm:$0xff]
  %v5536 = vld [vmem:[%s15 + $0x2c0] sm:$0xff]
  %v5537 = vld [vmem:[%s15 + $0x2c8] sm:$0xff]
  %v5538 = vld [vmem:[%s15 + $0x2d0] sm:$0xff]
  %v5539 = vld [vmem:[%s15 + $0x2d8] sm:$0xff]
  %v5540 = vld [vmem:[%s15 + $0x2e0] sm:$0xff]
  %v5541 = vld [vmem:[%s15 + $0x2e8] sm:$0xff]
  %v5542 = vld [vmem:[%s15 + $0x2f0] sm:$0xff]
  %v5543 = vld [vmem:[%s15 + $0x2f8] sm:$0xff]
  %v5544 = vld [vmem:[%s15 + $0x300] sm:$0xff]
  %v5545 = vld [vmem:[%s15 + $0x308] sm:$0xff]
  %v5546 = vld [vmem:[%s15 + $0x310] sm:$0xff]
  %v5547 = vld [vmem:[%s15 + $0x318] sm:$0xff]
  %v5548 = vld [vmem:[%s15 + $0x320] sm:$0xff]
  %v5549 = vld [vmem:[%s15 + $0x328] sm:$0xff]
  %v5550 = vld [vmem:[%s15 + $0x330] sm:$0xff]
  %v5551 = vld [vmem:[%s15 + $0x338] sm:$0xff]
  %v5552 = vld [vmem:[%s15 + $0x340] sm:$0xff]
  %v5553 = vld [vmem:[%s15 + $0x348] sm:$0xff]
  %v5554 = vld [vmem:[%s15 + $0x350] sm:$0xff]
  %v5555 = vld [vmem:[%s15 + $0x358] sm:$0xff]
  %v5556 = vld [vmem:[%s15 + $0x360] sm:$0xff]
  %v5557 = vld [vmem:[%s15 + $0x368] sm:$0xff]
  %v5558 = vld [vmem:[%s15 + $0x370] sm:$0xff]
  %v5559 = vld [vmem:[%s15 + $0x378] sm:$0xff]
  %v5560 = vld [vmem:[%s15 + $0x380] sm:$0xff]
  %v5561 = vld [vmem:[%s15 + $0x388] sm:$0xff]
  %v5562 = vld [vmem:[%s15 + $0x390] sm:$0xff]
  %v5563 = vld [vmem:[%s15 + $0x398] sm:$0xff]
  %v5564 = vld [vmem:[%s15 + $0x3a0] sm:$0xff]
  %v5565 = vld [vmem:[%s15 + $0x3a8] sm:$0xff]
  %v5566 = vld [vmem:[%s15 + $0x3b0] sm:$0xff]
  %v5567 = vld [vmem:[%s15 + $0x3b8] sm:$0xff]
  %v5568 = vld [vmem:[%s15 + $0x3c0] sm:$0xff]
  %v5569 = vld [vmem:[%s15 + $0x3c8] sm:$0xff]
  %v5570 = vld [vmem:[%s15 + $0x3d0] sm:$0xff]
  %v5571 = vld [vmem:[%s15 + $0x3d8] sm:$0xff]
  %v5572 = vld [vmem:[%s15 + $0x3e0] sm:$0xff]
  %v5573 = vld [vmem:[%s15 + $0x3e8] sm:$0xff]
  %v5574 = vld [vmem:[%s15 + $0x3f0] sm:$0xff]
  %v5575 = vld [vmem:[%s15 + $0x3f8] sm:$0xff]
  %v5576 = vld [vmem:[%s15 + $0x400] sm:$0xff]
  %v5577 = vld [vmem:[%s15 + $0x408] sm:$0xff]
  %v5578 = vld [vmem:[%s15 + $0x410] sm:$0xff]
  %v5579 = vld [vmem:[%s15 + $0x418] sm:$0xff]
  %v5580 = vld [vmem:[%s15 + $0x420] sm:$0xff]
  %v5581 = vld [vmem:[%s15 + $0x428] sm:$0xff]
  %v5582 = vld [vmem:[%s15 + $0x430] sm:$0xff]
  %v5583 = vld [vmem:[%s15 + $0x438] sm:$0xff]
  %v5584 = vld [vmem:[%s15 + $0x440] sm:$0xff]
  %v5585 = vld [vmem:[%s15 + $0x448] sm:$0xff]
  %v5586 = vld [vmem:[%s15 + $0x450] sm:$0xff]
  %v5587 = vld [vmem:[%s15 + $0x458] sm:$0xff]
  %v5588 = vld [vmem:[%s15 + $0x460] sm:$0xff]
  %v5589 = vld [vmem:[%s15 + $0x468] sm:$0xff]
  %v5590 = vld [vmem:[%s15 + $0x470] sm:$0xff]
  %v5591 = vld [vmem:[%s15 + $0x478] sm:$0xff]
  %v5592 = vld [vmem:[%s15 + $0x480] sm:$0xff]
  %v5593 = vld [vmem:[%s15 + $0x488] sm:$0xff]
  %v5594 = vld [vmem:[%s15 + $0x490] sm:$0xff]
  %v5595 = vld [vmem:[%s15 + $0x498] sm:$0xff]
  %v5596 = vld [vmem:[%s15 + $0x4a0] sm:$0xff]
  %v5597 = vld [vmem:[%s15 + $0x4a8] sm:$0xff]
  %v5598 = vld [vmem:[%s15 + $0x4b0] sm:$0xff]
  %v5599 = vld [vmem:[%s15 + $0x4b8] sm:$0xff]
  %v5600 = vld [vmem:[%s15 + $0x4c0] sm:$0xff]
  %v5601 = vld [vmem:[%s15 + $0x4c8] sm:$0xff]
  %v5602 = vld [vmem:[%s15 + $0x4d0] sm:$0xff]
  %v5603 = vld [vmem:[%s15 + $0x4d8] sm:$0xff]
  %v5604 = vld [vmem:[%s15 + $0x4e0] sm:$0xff]
  %v5605 = vld [vmem:[%s15 + $0x4e8] sm:$0xff]
  %v5606 = vld [vmem:[%s15 + $0x4f0] sm:$0xff]
  %v5607 = vld [vmem:[%s15 + $0x4f8] sm:$0xff]
  %v5608 = vld [vmem:[%s15 + $0x500] sm:$0xff]
  %v5609 = vld [vmem:[%s15 + $0x508] sm:$0xff]
  %v5610 = vld [vmem:[%s15 + $0x510] sm:$0xff]
  %v5611 = vld [vmem:[%s15 + $0x518] sm:$0xff]
  %v5612 = vld [vmem:[%s15 + $0x520] sm:$0xff]
  %v5613 = vld [vmem:[%s15 + $0x528] sm:$0xff]
  %v5614 = vld [vmem:[%s15 + $0x530] sm:$0xff]
  %v5615 = vld [vmem:[%s15 + $0x538] sm:$0xff]
  %v5616 = vld [vmem:[%s15 + $0x540] sm:$0xff]
  %v5617 = vld [vmem:[%s15 + $0x548] sm:$0xff]
  %v5618 = vld [vmem:[%s15 + $0x550] sm:$0xff]
  %v5619 = vld [vmem:[%s15 + $0x558] sm:$0xff]
  %v5620 = vld [vmem:[%s15 + $0x560] sm:$0xff]
  %v5621 = vld [vmem:[%s15 + $0x568] sm:$0xff]
  %v5622 = vld [vmem:[%s15 + $0x570] sm:$0xff]
  %v5623 = vld [vmem:[%s15 + $0x578] sm:$0xff]
  %v5624 = vld [vmem:[%s15 + $0x580] sm:$0xff]
  %v5625 = vld [vmem:[%s15 + $0x588] sm:$0xff]
  %v5626 = vld [vmem:[%s15 + $0x590] sm:$0xff]
  %v5627 = vld [vmem:[%s15 + $0x598] sm:$0xff]
  %v5628 = vld [vmem:[%s15 + $0x5a0] sm:$0xff]
  %v5629 = vld [vmem:[%s15 + $0x5a8] sm:$0xff]
  %v5630 = vld [vmem:[%s15 + $0x5b0] sm:$0xff]
  %v5631 = vld [vmem:[%s15 + $0x5b8] sm:$0xff]
  %v5632 = vld [vmem:[%s15 + $0x5c0] sm:$0xff]
  %v5633 = vld [vmem:[%s15 + $0x5c8] sm:$0xff]
  %v5634 = vld [vmem:[%s15 + $0x5d0] sm:$0xff]
  %v5635 = vld [vmem:[%s15 + $0x5d8] sm:$0xff]
  %v5636 = vld [vmem:[%s15 + $0x5e0] sm:$0xff]
  %v5637 = vld [vmem:[%s15 + $0x5e8] sm:$0xff]
  %v5638 = vld [vmem:[%s15 + $0x5f0] sm:$0xff]
  %v5639 = vld [vmem:[%s15 + $0x5f8] sm:$0xff]
  %v5640 = vld [vmem:[%s15 + $0x600] sm:$0xff]
  %v5641 = vld [vmem:[%s15 + $0x608] sm:$0xff]
  %v5642 = vld [vmem:[%s15 + $0x610] sm:$0xff]
  %v5643 = vld [vmem:[%s15 + $0x618] sm:$0xff]
  %v5644 = vld [vmem:[%s15 + $0x620] sm:$0xff]
  %v5645 = vld [vmem:[%s15 + $0x628] sm:$0xff]
  %v5646 = vld [vmem:[%s15 + $0x630] sm:$0xff]
  %v5647 = vld [vmem:[%s15 + $0x638] sm:$0xff]
  %v5648 = vld [vmem:[%s15 + $0x640] sm:$0xff]
  %v5649 = vld [vmem:[%s15 + $0x648] sm:$0xff]
  %v5650 = vld [vmem:[%s15 + $0x650] sm:$0xff]
  %v5651 = vld [vmem:[%s15 + $0x658] sm:$0xff]
  %v5652 = vld [vmem:[%s15 + $0x660] sm:$0xff]
  %v5653 = vld [vmem:[%s15 + $0x668] sm:$0xff]
  %v5654 = vld [vmem:[%s15 + $0x670] sm:$0xff]
  %v5655 = vld [vmem:[%s15 + $0x678] sm:$0xff]
  %v5656 = vld [vmem:[%s15 + $0x680] sm:$0xff]
  %v5657 = vld [vmem:[%s15 + $0x688] sm:$0xff]
  %v5658 = vld [vmem:[%s15 + $0x690] sm:$0xff]
  %v5659 = vld [vmem:[%s15 + $0x698] sm:$0xff]
  %v5660 = vld [vmem:[%s15 + $0x6a0] sm:$0xff]
  %v5661 = vld [vmem:[%s15 + $0x6a8] sm:$0xff]
  %v5662 = vld [vmem:[%s15 + $0x6b0] sm:$0xff]
  %v5663 = vld [vmem:[%s15 + $0x6b8] sm:$0xff]
  %v5664 = vld [vmem:[%s15 + $0x6c0] sm:$0xff]
  %v5665 = vld [vmem:[%s15 + $0x6c8] sm:$0xff]
  %v5666 = vld [vmem:[%s15 + $0x6d0] sm:$0xff]
  %v5667 = vld [vmem:[%s15 + $0x6d8] sm:$0xff]
  %v5668 = vld [vmem:[%s15 + $0x6e0] sm:$0xff]
  %v5669 = vld [vmem:[%s15 + $0x6e8] sm:$0xff]
  %v5670 = vld [vmem:[%s15 + $0x6f0] sm:$0xff]
  %v5671 = vld [vmem:[%s15 + $0x6f8] sm:$0xff]
  %v5672 = vld [vmem:[%s15 + $0x700] sm:$0xff]
  %v5673 = vld [vmem:[%s17] sm:$0x3]
  %v5675 = vlaneseq
  %v5676 = vshrl.u32 %v5675, 7
  %v5677 = vsub.s32 0, %v5676
  %v5678 = vrot.slane %v5673, %v5677
  %v5679 = vlaneseq
  %v5680 = vshrl.u32 %v5679, 7
  %v5681 = vsub.s32 1, %v5680
  %v5682 = vrot.slane %v5673, %v5681
  %v5686 = vshrl.u32 %v5000, 16
  %v5688 = vrot.slane %v5686, 3
  %v5689 = vshll.u32 %v5000, 16
  %v5691 = vrot.slane %v5689, 4
  %v5692 = vor.u32 %v5688, %v5691
  %v5694 = vshrl.u32 %v5002, 16
  %v5696 = vrot.slane %v5694, 3
  %v5697 = vshll.u32 %v5002, 16
  %v5699 = vrot.slane %v5697, 4
  %v5700 = vor.u32 %v5696, %v5699
  %v5701 = vsel %vm951, %v5692, %v5700
  %v5702 = vshrl.u32 %v5330, 16
  %v5704 = vrot.slane %v5702, 3
  %v5705 = vshll.u32 %v5330, 16
  %v5707 = vrot.slane %v5705, 4
  %v5708 = vor.u32 %v5704, %v5707
  %v5709 = vshrl.u32 %v5333, 16
  %v5711 = vrot.slane %v5709, 3
  %v5712 = vshll.u32 %v5333, 16
  %v5714 = vrot.slane %v5712, 4
  %v5715 = vor.u32 %v5711, %v5714
  %v5716 = vsel %vm951, %v5708, %v5715
  %v5718 = vshrl.u32 %v5050, 16
  %v5720 = vrot.slane %v5718, 3
  %v5721 = vshll.u32 %v5050, 16
  %v5723 = vrot.slane %v5721, 4
  %v5724 = vor.u32 %v5720, %v5723
  %v5726 = vshrl.u32 %v5051, 16
  %v5728 = vrot.slane %v5726, 3
  %v5729 = vshll.u32 %v5051, 16
  %v5731 = vrot.slane %v5729, 4
  %v5732 = vor.u32 %v5728, %v5731
  %v5733 = vsel %vm951, %v5724, %v5732
  %v5734 = vshrl.u32 %v5345, 16
  %v5736 = vrot.slane %v5734, 3
  %v5737 = vshll.u32 %v5345, 16
  %v5739 = vrot.slane %v5737, 4
  %v5740 = vor.u32 %v5736, %v5739
  %v5741 = vshrl.u32 %v5348, 16
  %v5743 = vrot.slane %v5741, 3
  %v5744 = vshll.u32 %v5348, 16
  %v5746 = vrot.slane %v5744, 4
  %v5747 = vor.u32 %v5743, %v5746
  %v5748 = vsel %vm951, %v5740, %v5747
  %v5749 = vshrl.u32 %v5360, 16
  %v5751 = vrot.slane %v5749, 3
  %v5752 = vshll.u32 %v5360, 16
  %v5754 = vrot.slane %v5752, 4
  %v5755 = vor.u32 %v5751, %v5754
  %v5756 = vshrl.u32 %v5363, 16
  %v5758 = vrot.slane %v5756, 3
  %v5759 = vshll.u32 %v5363, 16
  %v5761 = vrot.slane %v5759, 4
  %v5762 = vor.u32 %v5758, %v5761
  %v5763 = vsel %vm951, %v5755, %v5762
  %v5765 = vshrl.u32 %v5170, 16
  %v5767 = vrot.slane %v5765, 3
  %v5768 = vshll.u32 %v5170, 16
  %v5770 = vrot.slane %v5768, 4
  %v5771 = vor.u32 %v5767, %v5770
  %v5773 = vshrl.u32 %v5171, 16
  %v5775 = vrot.slane %v5773, 3
  %v5776 = vshll.u32 %v5171, 16
  %v5778 = vrot.slane %v5776, 4
  %v5779 = vor.u32 %v5775, %v5778
  %v5780 = vsel %vm951, %v5771, %v5779
  %v5781 = vshrl.u32 %v5375, 16
  %v5783 = vrot.slane %v5781, 3
  %v5784 = vshll.u32 %v5375, 16
  %v5786 = vrot.slane %v5784, 4
  %v5787 = vor.u32 %v5783, %v5786
  %v5788 = vshrl.u32 %v5378, 16
  %v5790 = vrot.slane %v5788, 3
  %v5791 = vshll.u32 %v5378, 16
  %v5793 = vrot.slane %v5791, 4
  %v5794 = vor.u32 %v5790, %v5793
  %v5795 = vsel %vm951, %v5787, %v5794
  %v5796 = vshrl.u32 %v5390, 16
  %v5798 = vrot.slane %v5796, 3
  %v5799 = vshll.u32 %v5390, 16
  %v5801 = vrot.slane %v5799, 4
  %v5802 = vor.u32 %v5798, %v5801
  %v5803 = vshrl.u32 %v5393, 16
  %v5805 = vrot.slane %v5803, 3
  %v5806 = vshll.u32 %v5393, 16
  %v5808 = vrot.slane %v5806, 4
  %v5809 = vor.u32 %v5805, %v5808
  %v5810 = vsel %vm951, %v5802, %v5809
  %v5812 = vshrl.u32 %v5220, 16
  %v5814 = vrot.slane %v5812, 3
  %v5815 = vshll.u32 %v5220, 16
  %v5817 = vrot.slane %v5815, 4
  %v5818 = vor.u32 %v5814, %v5817
  %v5820 = vshrl.u32 %v5221, 16
  %v5822 = vrot.slane %v5820, 3
  %v5823 = vshll.u32 %v5221, 16
  %v5825 = vrot.slane %v5823, 4
  %v5826 = vor.u32 %v5822, %v5825
  %v5827 = vsel %vm951, %v5818, %v5826
  %v5828 = vshrl.u32 %v5405, 16
  %v5830 = vrot.slane %v5828, 3
  %v5831 = vshll.u32 %v5405, 16
  %v5833 = vrot.slane %v5831, 4
  %v5834 = vor.u32 %v5830, %v5833
  %v5835 = vshrl.u32 %v5408, 16
  %v5837 = vrot.slane %v5835, 3
  %v5838 = vshll.u32 %v5408, 16
  %v5840 = vrot.slane %v5838, 4
  %v5841 = vor.u32 %v5837, %v5840
  %v5842 = vsel %vm951, %v5834, %v5841
  %v5843 = vshrl.u32 %v5420, 16
  %v5845 = vrot.slane %v5843, 3
  %v5846 = vshll.u32 %v5420, 16
  %v5848 = vrot.slane %v5846, 4
  %v5849 = vor.u32 %v5845, %v5848
  %v5850 = vshrl.u32 %v5423, 16
  %v5852 = vrot.slane %v5850, 3
  %v5853 = vshll.u32 %v5423, 16
  %v5855 = vrot.slane %v5853, 4
  %v5856 = vor.u32 %v5852, %v5855
  %v5857 = vsel %vm951, %v5849, %v5856
  %v5859 = vshrl.u32 %v5298, 16
  %v5861 = vrot.slane %v5859, 3
  %v5862 = vshll.u32 %v5298, 16
  %v5864 = vrot.slane %v5862, 4
  %v5865 = vor.u32 %v5861, %v5864
  %v5867 = vshrl.u32 %v5299, 16
  %v5869 = vrot.slane %v5867, 3
  %v5870 = vshll.u32 %v5299, 16
  %v5872 = vrot.slane %v5870, 4
  %v5873 = vor.u32 %v5869, %v5872
  %v5874 = vsel %vm951, %v5865, %v5873
  %v5875 = vshrl.u32 %v5435, 16
  %v5877 = vrot.slane %v5875, 3
  %v5878 = vshll.u32 %v5435, 16
  %v5880 = vrot.slane %v5878, 4
  %v5881 = vor.u32 %v5877, %v5880
  %v5882 = vshrl.u32 %v5438, 16
  %v5884 = vrot.slane %v5882, 3
  %v5885 = vshll.u32 %v5438, 16
  %v5887 = vrot.slane %v5885, 4
  %v5888 = vor.u32 %v5884, %v5887
  %v5889 = vsel %vm951, %v5881, %v5888
  %v5891 = vshrl.u32 %v5323, 16
  %v5893 = vrot.slane %v5891, 3
  %v5894 = vshll.u32 %v5323, 16
  %v5896 = vrot.slane %v5894, 4
  %v5897 = vor.u32 %v5893, %v5896
  %v5899 = vshrl.u32 %v5324, 16
  %v5901 = vrot.slane %v5899, 3
  %v5902 = vshll.u32 %v5324, 16
  %v5904 = vrot.slane %v5902, 4
  %v5905 = vor.u32 %v5901, %v5904
  %v5906 = vsel %vm951, %v5897, %v5905
  %v5908 = vshrl.u32 %v5306, 16
  %v5910 = vrot.slane %v5908, 3
  %v5911 = vshll.u32 %v5306, 16
  %v5913 = vrot.slane %v5911, 4
  %v5914 = vor.u32 %v5910, %v5913
  %v5916 = vshrl.u32 %v5310, 16
  %v5918 = vrot.slane %v5916, 3
  %v5919 = vshll.u32 %v5310, 16
  %v5921 = vrot.slane %v5919, 4
  %v5922 = vor.u32 %v5918, %v5921
  %v5923 = vsel %vm951, %v5914, %v5922
  %v5925 = vshrl.u32 %v5004, 16
  %v5927 = vrot.slane %v5925, 3
  %v5928 = vshll.u32 %v5004, 16
  %v5930 = vrot.slane %v5928, 4
  %v5931 = vor.u32 %v5927, %v5930
  %v5932 = vsel %vm951, %v5700, %v5931
  %v5933 = vshrl.u32 %v5336, 16
  %v5935 = vrot.slane %v5933, 3
  %v5936 = vshll.u32 %v5336, 16
  %v5938 = vrot.slane %v5936, 4
  %v5939 = vor.u32 %v5935, %v5938
  %v5940 = vsel %vm951, %v5715, %v5939
  %v5942 = vshrl.u32 %v5052, 16
  %v5944 = vrot.slane %v5942, 3
  %v5945 = vshll.u32 %v5052, 16
  %v5947 = vrot.slane %v5945, 4
  %v5948 = vor.u32 %v5944, %v5947
  %v5949 = vsel %vm951, %v5732, %v5948
  %v5950 = vshrl.u32 %v5351, 16
  %v5952 = vrot.slane %v5950, 3
  %v5953 = vshll.u32 %v5351, 16
  %v5955 = vrot.slane %v5953, 4
  %v5956 = vor.u32 %v5952, %v5955
  %v5957 = vsel %vm951, %v5747, %v5956
  %v5958 = vshrl.u32 %v5366, 16
  %v5960 = vrot.slane %v5958, 3
  %v5961 = vshll.u32 %v5366, 16
  %v5963 = vrot.slane %v5961, 4
  %v5964 = vor.u32 %v5960, %v5963
  %v5965 = vsel %vm951, %v5762, %v5964
  %v5967 = vshrl.u32 %v5172, 16
  %v5969 = vrot.slane %v5967, 3
  %v5970 = vshll.u32 %v5172, 16
  %v5972 = vrot.slane %v5970, 4
  %v5973 = vor.u32 %v5969, %v5972
  %v5974 = vsel %vm951, %v5779, %v5973
  %v5975 = vshrl.u32 %v5381, 16
  %v5977 = vrot.slane %v5975, 3
  %v5978 = vshll.u32 %v5381, 16
  %v5980 = vrot.slane %v5978, 4
  %v5981 = vor.u32 %v5977, %v5980
  %v5982 = vsel %vm951, %v5794, %v5981
  %v5983 = vshrl.u32 %v5396, 16
  %v5985 = vrot.slane %v5983, 3
  %v5986 = vshll.u32 %v5396, 16
  %v5988 = vrot.slane %v5986, 4
  %v5989 = vor.u32 %v5985, %v5988
  %v5990 = vsel %vm951, %v5809, %v5989
  %v5992 = vshrl.u32 %v5222, 16
  %v5994 = vrot.slane %v5992, 3
  %v5995 = vshll.u32 %v5222, 16
  %v5997 = vrot.slane %v5995, 4
  %v5998 = vor.u32 %v5994, %v5997
  %v5999 = vsel %vm951, %v5826, %v5998
  %v6000 = vshrl.u32 %v5411, 16
  %v6002 = vrot.slane %v6000, 3
  %v6003 = vshll.u32 %v5411, 16
  %v6005 = vrot.slane %v6003, 4
  %v6006 = vor.u32 %v6002, %v6005
  %v6007 = vsel %vm951, %v5841, %v6006
  %v6008 = vshrl.u32 %v5426, 16
  %v6010 = vrot.slane %v6008, 3
  %v6011 = vshll.u32 %v5426, 16
  %v6013 = vrot.slane %v6011, 4
  %v6014 = vor.u32 %v6010, %v6013
  %v6015 = vsel %vm951, %v5856, %v6014
  %v6017 = vshrl.u32 %v5300, 16
  %v6019 = vrot.slane %v6017, 3
  %v6020 = vshll.u32 %v5300, 16
  %v6022 = vrot.slane %v6020, 4
  %v6023 = vor.u32 %v6019, %v6022
  %v6024 = vsel %vm951, %v5873, %v6023
  %v6025 = vshrl.u32 %v5441, 16
  %v6027 = vrot.slane %v6025, 3
  %v6028 = vshll.u32 %v5441, 16
  %v6030 = vrot.slane %v6028, 4
  %v6031 = vor.u32 %v6027, %v6030
  %v6032 = vsel %vm951, %v5888, %v6031
  %v6034 = vshrl.u32 %v5325, 16
  %v6036 = vrot.slane %v6034, 3
  %v6037 = vshll.u32 %v5325, 16
  %v6039 = vrot.slane %v6037, 4
  %v6040 = vor.u32 %v6036, %v6039
  %v6041 = vsel %vm951, %v5905, %v6040
  %v6043 = vshrl.u32 %v5314, 16
  %v6045 = vrot.slane %v6043, 3
  %v6046 = vshll.u32 %v5314, 16
  %v6048 = vrot.slane %v6046, 4
  %v6049 = vor.u32 %v6045, %v6048
  %v6050 = vsel %vm951, %v5922, %v6049
  %v6052 = vshrl.u32 %v5006, 16
  %v6054 = vrot.slane %v6052, 3
  %v6055 = vshll.u32 %v5006, 16
  %v6057 = vrot.slane %v6055, 4
  %v6058 = vor.u32 %v6054, %v6057
  %v6059 = vsel %vm951, %v5931, %v6058
  %v6060 = vshrl.u32 %v5339, 16
  %v6062 = vrot.slane %v6060, 3
  %v6063 = vshll.u32 %v5339, 16
  %v6065 = vrot.slane %v6063, 4
  %v6066 = vor.u32 %v6062, %v6065
  %v6067 = vsel %vm951, %v5939, %v6066
  %v6069 = vshrl.u32 %v5053, 16
  %v6071 = vrot.slane %v6069, 3
  %v6072 = vshll.u32 %v5053, 16
  %v6074 = vrot.slane %v6072, 4
  %v6075 = vor.u32 %v6071, %v6074
  %v6076 = vsel %vm951, %v5948, %v6075
  %v6077 = vshrl.u32 %v5354, 16
  %v6079 = vrot.slane %v6077, 3
  %v6080 = vshll.u32 %v5354, 16
  %v6082 = vrot.slane %v6080, 4
  %v6083 = vor.u32 %v6079, %v6082
  %v6084 = vsel %vm951, %v5956, %v6083
  %v6085 = vshrl.u32 %v5369, 16
  %v6087 = vrot.slane %v6085, 3
  %v6088 = vshll.u32 %v5369, 16
  %v6090 = vrot.slane %v6088, 4
  %v6091 = vor.u32 %v6087, %v6090
  %v6092 = vsel %vm951, %v5964, %v6091
  %v6094 = vshrl.u32 %v5173, 16
  %v6096 = vrot.slane %v6094, 3
  %v6097 = vshll.u32 %v5173, 16
  %v6099 = vrot.slane %v6097, 4
  %v6100 = vor.u32 %v6096, %v6099
  %v6101 = vsel %vm951, %v5973, %v6100
  %v6102 = vshrl.u32 %v5384, 16
  %v6104 = vrot.slane %v6102, 3
  %v6105 = vshll.u32 %v5384, 16
  %v6107 = vrot.slane %v6105, 4
  %v6108 = vor.u32 %v6104, %v6107
  %v6109 = vsel %vm951, %v5981, %v6108
  %v6110 = vshrl.u32 %v5399, 16
  %v6112 = vrot.slane %v6110, 3
  %v6113 = vshll.u32 %v5399, 16
  %v6115 = vrot.slane %v6113, 4
  %v6116 = vor.u32 %v6112, %v6115
  %v6117 = vsel %vm951, %v5989, %v6116
  %v6119 = vshrl.u32 %v5223, 16
  %v6121 = vrot.slane %v6119, 3
  %v6122 = vshll.u32 %v5223, 16
  %v6124 = vrot.slane %v6122, 4
  %v6125 = vor.u32 %v6121, %v6124
  %v6126 = vsel %vm951, %v5998, %v6125
  %v6127 = vshrl.u32 %v5414, 16
  %v6129 = vrot.slane %v6127, 3
  %v6130 = vshll.u32 %v5414, 16
  %v6132 = vrot.slane %v6130, 4
  %v6133 = vor.u32 %v6129, %v6132
  %v6134 = vsel %vm951, %v6006, %v6133
  %v6135 = vshrl.u32 %v5429, 16
  %v6137 = vrot.slane %v6135, 3
  %v6138 = vshll.u32 %v5429, 16
  %v6140 = vrot.slane %v6138, 4
  %v6141 = vor.u32 %v6137, %v6140
  %v6142 = vsel %vm951, %v6014, %v6141
  %v6144 = vshrl.u32 %v5301, 16
  %v6146 = vrot.slane %v6144, 3
  %v6147 = vshll.u32 %v5301, 16
  %v6149 = vrot.slane %v6147, 4
  %v6150 = vor.u32 %v6146, %v6149
  %v6151 = vsel %vm951, %v6023, %v6150
  %v6152 = vshrl.u32 %v5444, 16
  %v6154 = vrot.slane %v6152, 3
  %v6155 = vshll.u32 %v5444, 16
  %v6157 = vrot.slane %v6155, 4
  %v6158 = vor.u32 %v6154, %v6157
  %v6159 = vsel %vm951, %v6031, %v6158
  %v6161 = vshrl.u32 %v5326, 16
  %v6163 = vrot.slane %v6161, 3
  %v6164 = vshll.u32 %v5326, 16
  %v6166 = vrot.slane %v6164, 4
  %v6167 = vor.u32 %v6163, %v6166
  %v6168 = vsel %vm951, %v6040, %v6167
  %v6170 = vshrl.u32 %v5318, 16
  %v6172 = vrot.slane %v6170, 3
  %v6173 = vshll.u32 %v5318, 16
  %v6175 = vrot.slane %v6173, 4
  %v6176 = vor.u32 %v6172, %v6175
  %v6177 = vsel %vm951, %v6049, %v6176
  %v6179 = vshrl.u32 %v5008, 16
  %v6181 = vrot.slane %v6179, 3
  %v6182 = vshll.u32 %v5008, 16
  %v6184 = vrot.slane %v6182, 4
  %v6185 = vor.u32 %v6181, %v6184
  %v6186 = vsel %vm951, %v6058, %v6185
  %v6187 = vshrl.u32 %v5342, 16
  %v6189 = vrot.slane %v6187, 3
  %v6190 = vshll.u32 %v5342, 16
  %v6192 = vrot.slane %v6190, 4
  %v6193 = vor.u32 %v6189, %v6192
  %v6194 = vsel %vm951, %v6066, %v6193
  %v6196 = vshrl.u32 %v5054, 16
  %v6198 = vrot.slane %v6196, 3
  %v6199 = vshll.u32 %v5054, 16
  %v6201 = vrot.slane %v6199, 4
  %v6202 = vor.u32 %v6198, %v6201
  %v6203 = vsel %vm951, %v6075, %v6202
  %v6204 = vshrl.u32 %v5357, 16
  %v6206 = vrot.slane %v6204, 3
  %v6207 = vshll.u32 %v5357, 16
  %v6209 = vrot.slane %v6207, 4
  %v6210 = vor.u32 %v6206, %v6209
  %v6211 = vsel %vm951, %v6083, %v6210
  %v6212 = vshrl.u32 %v5372, 16
  %v6214 = vrot.slane %v6212, 3
  %v6215 = vshll.u32 %v5372, 16
  %v6217 = vrot.slane %v6215, 4
  %v6218 = vor.u32 %v6214, %v6217
  %v6219 = vsel %vm951, %v6091, %v6218
  %v6221 = vshrl.u32 %v5174, 16
  %v6223 = vrot.slane %v6221, 3
  %v6224 = vshll.u32 %v5174, 16
  %v6226 = vrot.slane %v6224, 4
  %v6227 = vor.u32 %v6223, %v6226
  %v6228 = vsel %vm951, %v6100, %v6227
  %v6229 = vshrl.u32 %v5387, 16
  %v6231 = vrot.slane %v6229, 3
  %v6232 = vshll.u32 %v5387, 16
  %v6234 = vrot.slane %v6232, 4
  %v6235 = vor.u32 %v6231, %v6234
  %v6236 = vsel %vm951, %v6108, %v6235
  %v6237 = vshrl.u32 %v5402, 16
  %v6239 = vrot.slane %v6237, 3
  %v6240 = vshll.u32 %v5402, 16
  %v6242 = vrot.slane %v6240, 4
  %v6243 = vor.u32 %v6239, %v6242
  %v6244 = vsel %vm951, %v6116, %v6243
  %v6246 = vshrl.u32 %v5224, 16
  %v6248 = vrot.slane %v6246, 3
  %v6249 = vshll.u32 %v5224, 16
  %v6251 = vrot.slane %v6249, 4
  %v6252 = vor.u32 %v6248, %v6251
  %v6253 = vsel %vm951, %v6125, %v6252
  %v6254 = vshrl.u32 %v5417, 16
  %v6256 = vrot.slane %v6254, 3
  %v6257 = vshll.u32 %v5417, 16
  %v6259 = vrot.slane %v6257, 4
  %v6260 = vor.u32 %v6256, %v6259
  %v6261 = vsel %vm951, %v6133, %v6260
  %v6262 = vshrl.u32 %v5432, 16
  %v6264 = vrot.slane %v6262, 3
  %v6265 = vshll.u32 %v5432, 16
  %v6267 = vrot.slane %v6265, 4
  %v6268 = vor.u32 %v6264, %v6267
  %v6269 = vsel %vm951, %v6141, %v6268
  %v6271 = vshrl.u32 %v5302, 16
  %v6273 = vrot.slane %v6271, 3
  %v6274 = vshll.u32 %v5302, 16
  %v6276 = vrot.slane %v6274, 4
  %v6277 = vor.u32 %v6273, %v6276
  %v6278 = vsel %vm951, %v6150, %v6277
  %v6279 = vshrl.u32 %v5447, 16
  %v6281 = vrot.slane %v6279, 3
  %v6282 = vshll.u32 %v5447, 16
  %v6284 = vrot.slane %v6282, 4
  %v6285 = vor.u32 %v6281, %v6284
  %v6286 = vsel %vm951, %v6158, %v6285
  %v6288 = vshrl.u32 %v5327, 16
  %v6290 = vrot.slane %v6288, 3
  %v6291 = vshll.u32 %v5327, 16
  %v6293 = vrot.slane %v6291, 4
  %v6294 = vor.u32 %v6290, %v6293
  %v6295 = vsel %vm951, %v6167, %v6294
  %v6297 = vshrl.u32 %v5322, 16
  %v6299 = vrot.slane %v6297, 3
  %v6300 = vshll.u32 %v5322, 16
  %v6302 = vrot.slane %v6300, 4
  %v6303 = vor.u32 %v6299, %v6302
  %v6304 = vsel %vm951, %v6176, %v6303
  %v6586 = vunpack.c.l.b16 %v5448
  %v6587 = vunpack.c.h.b16 %v5448
  %v6588 = vunpack.c.l.b16 %v5449
  %v6589 = vunpack.c.h.b16 %v5449
  %v6590 = vunpack.c.l.b16 %v5450
  %v6591 = vunpack.c.h.b16 %v5450
  %v6592 = vunpack.c.l.b16 %v5451
  %v6593 = vunpack.c.h.b16 %v5451
  %v6594 = vunpack.c.l.b16 %v5452
  %v6595 = vunpack.c.h.b16 %v5452
  %v6596 = vunpack.c.l.b16 %v5453
  %v6597 = vunpack.c.h.b16 %v5453
  %v6598 = vunpack.c.l.b16 %v5454
  %v6599 = vunpack.c.h.b16 %v5454
  %v6600 = vunpack.c.l.b16 %v5455
  %v6601 = vunpack.c.h.b16 %v5455
  %v6602 = vunpack.c.l.b16 %v5456
  %v6603 = vunpack.c.h.b16 %v5456
  %v6604 = vunpack.c.l.b16 %v5457
  %v6605 = vunpack.c.h.b16 %v5457
  %v6606 = vunpack.c.l.b16 %v5458
  %v6607 = vunpack.c.h.b16 %v5458
  %v6608 = vunpack.c.l.b16 %v5459
  %v6609 = vunpack.c.h.b16 %v5459
  %v6610 = vunpack.c.l.b16 %v5460
  %v6611 = vunpack.c.h.b16 %v5460
  %v6612 = vunpack.c.l.b16 %v5461
  %v6613 = vunpack.c.h.b16 %v5461
  %v6614 = vunpack.c.l.b16 %v5462
  %v6615 = vunpack.c.h.b16 %v5462
  %v6616 = vunpack.c.l.b16 %v5463
  %v6617 = vunpack.c.h.b16 %v5463
  %v6618 = vunpack.c.l.b16 %v5464
  %v6619 = vunpack.c.h.b16 %v5464
  %v6620 = vunpack.c.l.b16 %v5465
  %v6621 = vunpack.c.h.b16 %v5465
  %v6622 = vunpack.c.l.b16 %v5466
  %v6623 = vunpack.c.h.b16 %v5466
  %v6624 = vunpack.c.l.b16 %v5467
  %v6625 = vunpack.c.h.b16 %v5467
  %v6626 = vunpack.c.l.b16 %v5468
  %v6627 = vunpack.c.h.b16 %v5468
  %v6628 = vunpack.c.l.b16 %v5469
  %v6629 = vunpack.c.h.b16 %v5469
  %v6630 = vunpack.c.l.b16 %v5470
  %v6631 = vunpack.c.h.b16 %v5470
  %v6632 = vunpack.c.l.b16 %v5471
  %v6633 = vunpack.c.h.b16 %v5471
  %v6634 = vunpack.c.l.b16 %v5472
  %v6635 = vunpack.c.h.b16 %v5472
  %v6636 = vunpack.c.l.b16 %v5473
  %v6637 = vunpack.c.h.b16 %v5473
  %v6638 = vunpack.c.l.b16 %v5474
  %v6639 = vunpack.c.h.b16 %v5474
  %v6640 = vunpack.c.l.b16 %v5475
  %v6641 = vunpack.c.h.b16 %v5475
  %v6642 = vunpack.c.l.b16 %v5476
  %v6643 = vunpack.c.h.b16 %v5476
  %v6644 = vunpack.c.l.b16 %v5477
  %v6645 = vunpack.c.h.b16 %v5477
  %v6646 = vunpack.c.l.b16 %v5478
  %v6647 = vunpack.c.h.b16 %v5478
  %v6648 = vunpack.c.l.b16 %v5479
  %v6649 = vunpack.c.h.b16 %v5479
  %v6650 = vunpack.c.l.b16 %v5480
  %v6651 = vunpack.c.h.b16 %v5480
  %v6652 = vunpack.c.l.b16 %v5481
  %v6653 = vunpack.c.h.b16 %v5481
  %v6654 = vunpack.c.l.b16 %v5482
  %v6655 = vunpack.c.h.b16 %v5482
  %v6656 = vunpack.c.l.b16 %v5483
  %v6657 = vunpack.c.h.b16 %v5483
  %v6658 = vunpack.c.l.b16 %v5484
  %v6659 = vunpack.c.h.b16 %v5484
  %v6660 = vunpack.c.l.b16 %v5485
  %v6661 = vunpack.c.h.b16 %v5485
  %v6662 = vunpack.c.l.b16 %v5486
  %v6663 = vunpack.c.h.b16 %v5486
  %v6664 = vunpack.c.l.b16 %v5487
  %v6665 = vunpack.c.h.b16 %v5487
  %v6666 = vunpack.c.l.b16 %v5488
  %v6667 = vunpack.c.h.b16 %v5488
  %v6668 = vunpack.c.l.b16 %v5489
  %v6669 = vunpack.c.h.b16 %v5489
  %v6670 = vunpack.c.l.b16 %v5490
  %v6671 = vunpack.c.h.b16 %v5490
  %v6672 = vunpack.c.l.b16 %v5491
  %v6673 = vunpack.c.h.b16 %v5491
  %v6674 = vunpack.c.l.b16 %v5492
  %v6675 = vunpack.c.h.b16 %v5492
  %v6676 = vunpack.c.l.b16 %v5493
  %v6677 = vunpack.c.h.b16 %v5493
  %v6678 = vunpack.c.l.b16 %v5494
  %v6679 = vunpack.c.h.b16 %v5494
  %v6680 = vunpack.c.l.b16 %v5495
  %v6681 = vunpack.c.h.b16 %v5495
  %v6682 = vunpack.c.l.b16 %v5496
  %v6683 = vunpack.c.h.b16 %v5496
  %v6684 = vunpack.c.l.b16 %v5497
  %v6685 = vunpack.c.h.b16 %v5497
  %v6686 = vunpack.c.l.b16 %v5498
  %v6687 = vunpack.c.h.b16 %v5498
  %v6688 = vunpack.c.l.b16 %v5499
  %v6689 = vunpack.c.h.b16 %v5499
  %v6690 = vunpack.c.l.b16 %v5500
  %v6691 = vunpack.c.h.b16 %v5500
  %v6692 = vunpack.c.l.b16 %v5501
  %v6693 = vunpack.c.h.b16 %v5501
  %v6694 = vunpack.c.l.b16 %v5502
  %v6695 = vunpack.c.h.b16 %v5502
  %v6696 = vunpack.c.l.b16 %v5503
  %v6697 = vunpack.c.h.b16 %v5503
  %v6698 = vunpack.c.l.b16 %v5504
  %v6699 = vunpack.c.h.b16 %v5504
  %v6700 = vunpack.c.l.b16 %v5505
  %v6701 = vunpack.c.h.b16 %v5505
  %v6702 = vunpack.c.l.b16 %v5506
  %v6703 = vunpack.c.h.b16 %v5506
  %v6704 = vunpack.c.l.b16 %v5507
  %v6705 = vunpack.c.h.b16 %v5507
  %v6706 = vunpack.c.l.b16 %v5508
  %v6707 = vunpack.c.h.b16 %v5508
  %v6708 = vunpack.c.l.b16 %v5509
  %v6709 = vunpack.c.h.b16 %v5509
  %v6710 = vunpack.c.l.b16 %v5510
  %v6711 = vunpack.c.h.b16 %v5510
  %v6712 = vunpack.c.l.b16 %v5511
  %v6713 = vunpack.c.h.b16 %v5511
  %v6714 = vunpack.c.l.b16 %v5512
  %v6715 = vunpack.c.h.b16 %v5512
  %v6716 = vunpack.c.l.b16 %v5513
  %v6717 = vunpack.c.h.b16 %v5513
  %v6718 = vunpack.c.l.b16 %v5514
  %v6719 = vunpack.c.h.b16 %v5514
  %v6720 = vunpack.c.l.b16 %v5515
  %v6721 = vunpack.c.h.b16 %v5515
  %v6722 = vunpack.c.l.b16 %v5516
  %v6723 = vunpack.c.h.b16 %v5516
  %v6724 = vunpack.c.l.b16 %v5517
  %v6725 = vunpack.c.h.b16 %v5517
  %v6726 = vunpack.c.l.b16 %v5518
  %v6727 = vunpack.c.h.b16 %v5518
  %v6728 = vunpack.c.l.b16 %v5519
  %v6729 = vunpack.c.h.b16 %v5519
  %v6730 = vunpack.c.l.b16 %v5520
  %v6731 = vunpack.c.h.b16 %v5520
  %v6732 = vunpack.c.l.b16 %v5521
  %v6733 = vunpack.c.h.b16 %v5521
  %v6734 = vunpack.c.l.b16 %v5522
  %v6735 = vunpack.c.h.b16 %v5522
  %v6736 = vunpack.c.l.b16 %v5523
  %v6737 = vunpack.c.h.b16 %v5523
  %v6738 = vunpack.c.l.b16 %v5524
  %v6739 = vunpack.c.h.b16 %v5524
  %v6740 = vunpack.c.l.b16 %v5525
  %v6741 = vunpack.c.h.b16 %v5525
  %v6742 = vunpack.c.l.b16 %v5526
  %v6743 = vunpack.c.h.b16 %v5526
  %v6744 = vunpack.c.l.b16 %v5527
  %v6745 = vunpack.c.h.b16 %v5527
  %v6746 = vunpack.c.l.b16 %v5528
  %v6747 = vunpack.c.h.b16 %v5528
  %v6748 = vunpack.c.l.b16 %v5529
  %v6749 = vunpack.c.h.b16 %v5529
  %v6750 = vunpack.c.l.b16 %v5530
  %v6751 = vunpack.c.h.b16 %v5530
  %v6752 = vunpack.c.l.b16 %v5531
  %v6753 = vunpack.c.h.b16 %v5531
  %v6754 = vunpack.c.l.b16 %v5532
  %v6755 = vunpack.c.h.b16 %v5532
  %v6756 = vunpack.c.l.b16 %v5533
  %v6757 = vunpack.c.h.b16 %v5533
  %v6758 = vunpack.c.l.b16 %v5534
  %v6759 = vunpack.c.h.b16 %v5534
  %v6760 = vunpack.c.l.b16 %v5535
  %v6761 = vunpack.c.h.b16 %v5535
  %v6762 = vunpack.c.l.b16 %v5536
  %v6763 = vunpack.c.h.b16 %v5536
  %v6764 = vunpack.c.l.b16 %v5537
  %v6765 = vunpack.c.h.b16 %v5537
  %v6766 = vunpack.c.l.b16 %v5538
  %v6767 = vunpack.c.h.b16 %v5538
  %v6768 = vunpack.c.l.b16 %v5539
  %v6769 = vunpack.c.h.b16 %v5539
  %v6770 = vunpack.c.l.b16 %v5540
  %v6771 = vunpack.c.h.b16 %v5540
  %v6772 = vunpack.c.l.b16 %v5541
  %v6773 = vunpack.c.h.b16 %v5541
  %v6774 = vunpack.c.l.b16 %v5542
  %v6775 = vunpack.c.h.b16 %v5542
  %v6776 = vunpack.c.l.b16 %v5543
  %v6777 = vunpack.c.h.b16 %v5543
  %v6778 = vunpack.c.l.b16 %v5544
  %v6779 = vunpack.c.h.b16 %v5544
  %v6780 = vunpack.c.l.b16 %v5545
  %v6781 = vunpack.c.h.b16 %v5545
  %v6782 = vunpack.c.l.b16 %v5546
  %v6783 = vunpack.c.h.b16 %v5546
  %v6784 = vunpack.c.l.b16 %v5547
  %v6785 = vunpack.c.h.b16 %v5547
  %v6786 = vunpack.c.l.b16 %v5548
  %v6787 = vunpack.c.h.b16 %v5548
  %v6788 = vunpack.c.l.b16 %v5549
  %v6789 = vunpack.c.h.b16 %v5549
  %v6790 = vunpack.c.l.b16 %v5550
  %v6791 = vunpack.c.h.b16 %v5550
  %v6792 = vunpack.c.l.b16 %v5551
  %v6793 = vunpack.c.h.b16 %v5551
  %v6794 = vunpack.c.l.b16 %v5552
  %v6795 = vunpack.c.h.b16 %v5552
  %v6796 = vunpack.c.l.b16 %v5553
  %v6797 = vunpack.c.h.b16 %v5553
  %v6798 = vunpack.c.l.b16 %v5554
  %v6799 = vunpack.c.h.b16 %v5554
  %v6800 = vunpack.c.l.b16 %v5555
  %v6801 = vunpack.c.h.b16 %v5555
  %v6802 = vunpack.c.l.b16 %v5556
  %v6803 = vunpack.c.h.b16 %v5556
  %v6804 = vunpack.c.l.b16 %v5557
  %v6805 = vunpack.c.h.b16 %v5557
  %v6806 = vunpack.c.l.b16 %v5558
  %v6807 = vunpack.c.h.b16 %v5558
  %v6808 = vunpack.c.l.b16 %v5559
  %v6809 = vunpack.c.h.b16 %v5559
  %v6810 = vunpack.c.l.b16 %v5560
  %v6811 = vunpack.c.h.b16 %v5560
  %v6812 = vunpack.c.l.b16 %v5561
  %v6813 = vunpack.c.h.b16 %v5561
  %v6814 = vunpack.c.l.b16 %v5562
  %v6815 = vunpack.c.h.b16 %v5562
  %v6816 = vunpack.c.l.b16 %v5563
  %v6817 = vunpack.c.h.b16 %v5563
  %v6818 = vunpack.c.l.b16 %v5564
  %v6819 = vunpack.c.h.b16 %v5564
  %v6820 = vunpack.c.l.b16 %v5565
  %v6821 = vunpack.c.h.b16 %v5565
  %v6822 = vunpack.c.l.b16 %v5566
  %v6823 = vunpack.c.h.b16 %v5566
  %v6824 = vunpack.c.l.b16 %v5567
  %v6825 = vunpack.c.h.b16 %v5567
  %v6826 = vunpack.c.l.b16 %v5568
  %v6827 = vunpack.c.h.b16 %v5568
  %v6828 = vunpack.c.l.b16 %v5569
  %v6829 = vunpack.c.h.b16 %v5569
  %v6830 = vunpack.c.l.b16 %v5570
  %v6831 = vunpack.c.h.b16 %v5570
  %v6832 = vunpack.c.l.b16 %v5571
  %v6833 = vunpack.c.h.b16 %v5571
  %v6834 = vunpack.c.l.b16 %v5572
  %v6835 = vunpack.c.h.b16 %v5572
  %v6836 = vunpack.c.l.b16 %v5573
  %v6837 = vunpack.c.h.b16 %v5573
  %v6838 = vunpack.c.l.b16 %v5574
  %v6839 = vunpack.c.h.b16 %v5574
  %v6840 = vunpack.c.l.b16 %v5575
  %v6841 = vunpack.c.h.b16 %v5575
  %v6842 = vunpack.c.l.b16 %v5576
  %v6843 = vunpack.c.h.b16 %v5576
  %v6844 = vunpack.c.l.b16 %v5577
  %v6845 = vunpack.c.h.b16 %v5577
  %v6846 = vunpack.c.l.b16 %v5578
  %v6847 = vunpack.c.h.b16 %v5578
  %v6848 = vunpack.c.l.b16 %v5579
  %v6849 = vunpack.c.h.b16 %v5579
  %v6850 = vunpack.c.l.b16 %v5580
  %v6851 = vunpack.c.h.b16 %v5580
  %v6852 = vunpack.c.l.b16 %v5581
  %v6853 = vunpack.c.h.b16 %v5581
  %v6854 = vunpack.c.l.b16 %v5582
  %v6855 = vunpack.c.h.b16 %v5582
  %v6856 = vunpack.c.l.b16 %v5583
  %v6857 = vunpack.c.h.b16 %v5583
  %v6858 = vunpack.c.l.b16 %v5584
  %v6859 = vunpack.c.h.b16 %v5584
  %v6860 = vunpack.c.l.b16 %v5585
  %v6861 = vunpack.c.h.b16 %v5585
  %v6862 = vunpack.c.l.b16 %v5586
  %v6863 = vunpack.c.h.b16 %v5586
  %v6864 = vunpack.c.l.b16 %v5587
  %v6865 = vunpack.c.h.b16 %v5587
  %v6866 = vunpack.c.l.b16 %v5588
  %v6867 = vunpack.c.h.b16 %v5588
  %v6868 = vunpack.c.l.b16 %v5589
  %v6869 = vunpack.c.h.b16 %v5589
  %v6870 = vunpack.c.l.b16 %v5590
  %v6871 = vunpack.c.h.b16 %v5590
  %v6872 = vunpack.c.l.b16 %v5591
  %v6873 = vunpack.c.h.b16 %v5591
  %v6874 = vunpack.c.l.b16 %v5592
  %v6875 = vunpack.c.h.b16 %v5592
  %v6876 = vunpack.c.l.b16 %v5593
  %v6877 = vunpack.c.h.b16 %v5593
  %v6878 = vunpack.c.l.b16 %v5594
  %v6879 = vunpack.c.h.b16 %v5594
  %v6880 = vunpack.c.l.b16 %v5595
  %v6881 = vunpack.c.h.b16 %v5595
  %v6882 = vunpack.c.l.b16 %v5596
  %v6883 = vunpack.c.h.b16 %v5596
  %v6884 = vunpack.c.l.b16 %v5597
  %v6885 = vunpack.c.h.b16 %v5597
  %v6886 = vunpack.c.l.b16 %v5598
  %v6887 = vunpack.c.h.b16 %v5598
  %v6888 = vunpack.c.l.b16 %v5599
  %v6889 = vunpack.c.h.b16 %v5599
  %v6890 = vunpack.c.l.b16 %v5600
  %v6891 = vunpack.c.h.b16 %v5600
  %v6892 = vunpack.c.l.b16 %v5601
  %v6893 = vunpack.c.h.b16 %v5601
  %v6894 = vunpack.c.l.b16 %v5602
  %v6895 = vunpack.c.h.b16 %v5602
  %v6896 = vunpack.c.l.b16 %v5603
  %v6897 = vunpack.c.h.b16 %v5603
  %v6898 = vunpack.c.l.b16 %v5604
  %v6899 = vunpack.c.h.b16 %v5604
  %v6900 = vunpack.c.l.b16 %v5605
  %v6901 = vunpack.c.h.b16 %v5605
  %v6902 = vunpack.c.l.b16 %v5606
  %v6903 = vunpack.c.h.b16 %v5606
  %v6904 = vunpack.c.l.b16 %v5607
  %v6905 = vunpack.c.h.b16 %v5607
  %v6906 = vunpack.c.l.b16 %v5608
  %v6907 = vunpack.c.h.b16 %v5608
  %v6908 = vunpack.c.l.b16 %v5609
  %v6909 = vunpack.c.h.b16 %v5609
  %v6910 = vunpack.c.l.b16 %v5610
  %v6911 = vunpack.c.h.b16 %v5610
  %v6912 = vunpack.c.l.b16 %v5611
  %v6913 = vunpack.c.h.b16 %v5611
  %v6914 = vunpack.c.l.b16 %v5612
  %v6915 = vunpack.c.h.b16 %v5612
  %v6916 = vunpack.c.l.b16 %v5613
  %v6917 = vunpack.c.h.b16 %v5613
  %v6918 = vunpack.c.l.b16 %v5614
  %v6919 = vunpack.c.h.b16 %v5614
  %v6920 = vunpack.c.l.b16 %v5615
  %v6921 = vunpack.c.h.b16 %v5615
  %v6922 = vunpack.c.l.b16 %v5616
  %v6923 = vunpack.c.h.b16 %v5616
  %v6924 = vunpack.c.l.b16 %v5617
  %v6925 = vunpack.c.h.b16 %v5617
  %v6926 = vunpack.c.l.b16 %v5618
  %v6927 = vunpack.c.h.b16 %v5618
  %v6928 = vunpack.c.l.b16 %v5619
  %v6929 = vunpack.c.h.b16 %v5619
  %v6930 = vunpack.c.l.b16 %v5620
  %v6931 = vunpack.c.h.b16 %v5620
  %v6932 = vunpack.c.l.b16 %v5621
  %v6933 = vunpack.c.h.b16 %v5621
  %v6934 = vunpack.c.l.b16 %v5622
  %v6935 = vunpack.c.h.b16 %v5622
  %v6936 = vunpack.c.l.b16 %v5623
  %v6937 = vunpack.c.h.b16 %v5623
  %v6938 = vunpack.c.l.b16 %v5624
  %v6939 = vunpack.c.h.b16 %v5624
  %v6940 = vunpack.c.l.b16 %v5625
  %v6941 = vunpack.c.h.b16 %v5625
  %v6942 = vunpack.c.l.b16 %v5626
  %v6943 = vunpack.c.h.b16 %v5626
  %v6944 = vunpack.c.l.b16 %v5627
  %v6945 = vunpack.c.h.b16 %v5627
  %v6946 = vunpack.c.l.b16 %v5628
  %v6947 = vunpack.c.h.b16 %v5628
  %v6948 = vunpack.c.l.b16 %v5629
  %v6949 = vunpack.c.h.b16 %v5629
  %v6950 = vunpack.c.l.b16 %v5630
  %v6951 = vunpack.c.h.b16 %v5630
  %v6952 = vunpack.c.l.b16 %v5631
  %v6953 = vunpack.c.h.b16 %v5631
  %v6954 = vunpack.c.l.b16 %v5632
  %v6955 = vunpack.c.h.b16 %v5632
  %v6956 = vunpack.c.l.b16 %v5633
  %v6957 = vunpack.c.h.b16 %v5633
  %v6958 = vunpack.c.l.b16 %v5634
  %v6959 = vunpack.c.h.b16 %v5634
  %v6960 = vunpack.c.l.b16 %v5635
  %v6961 = vunpack.c.h.b16 %v5635
  %v6962 = vunpack.c.l.b16 %v5636
  %v6963 = vunpack.c.h.b16 %v5636
  %v6964 = vunpack.c.l.b16 %v5637
  %v6965 = vunpack.c.h.b16 %v5637
  %v6966 = vunpack.c.l.b16 %v5638
  %v6967 = vunpack.c.h.b16 %v5638
  %v6968 = vunpack.c.l.b16 %v5639
  %v6969 = vunpack.c.h.b16 %v5639
  %v6970 = vunpack.c.l.b16 %v5640
  %v6971 = vunpack.c.h.b16 %v5640
  %v6972 = vunpack.c.l.b16 %v5641
  %v6973 = vunpack.c.h.b16 %v5641
  %v6974 = vunpack.c.l.b16 %v5642
  %v6975 = vunpack.c.h.b16 %v5642
  %v6976 = vunpack.c.l.b16 %v5643
  %v6977 = vunpack.c.h.b16 %v5643
  %v6978 = vunpack.c.l.b16 %v5644
  %v6979 = vunpack.c.h.b16 %v5644
  %v6980 = vunpack.c.l.b16 %v5645
  %v6981 = vunpack.c.h.b16 %v5645
  %v6982 = vunpack.c.l.b16 %v5646
  %v6983 = vunpack.c.h.b16 %v5646
  %v6984 = vunpack.c.l.b16 %v5647
  %v6985 = vunpack.c.h.b16 %v5647
  %v6986 = vunpack.c.l.b16 %v5648
  %v6987 = vunpack.c.h.b16 %v5648
  %v6988 = vunpack.c.l.b16 %v5649
  %v6989 = vunpack.c.h.b16 %v5649
  %v6990 = vunpack.c.l.b16 %v5650
  %v6991 = vunpack.c.h.b16 %v5650
  %v6992 = vunpack.c.l.b16 %v5651
  %v6993 = vunpack.c.h.b16 %v5651
  %v6994 = vunpack.c.l.b16 %v5652
  %v6995 = vunpack.c.h.b16 %v5652
  %v6996 = vunpack.c.l.b16 %v5653
  %v6997 = vunpack.c.h.b16 %v5653
  %v6998 = vunpack.c.l.b16 %v5654
  %v6999 = vunpack.c.h.b16 %v5654
  %v7000 = vunpack.c.l.b16 %v5655
  %v7001 = vunpack.c.h.b16 %v5655
  %v7002 = vunpack.c.l.b16 %v5656
  %v7003 = vunpack.c.h.b16 %v5656
  %v7004 = vunpack.c.l.b16 %v5657
  %v7005 = vunpack.c.h.b16 %v5657
  %v7006 = vunpack.c.l.b16 %v5658
  %v7007 = vunpack.c.h.b16 %v5658
  %v7008 = vunpack.c.l.b16 %v5659
  %v7009 = vunpack.c.h.b16 %v5659
  %v7010 = vunpack.c.l.b16 %v5660
  %v7011 = vunpack.c.h.b16 %v5660
  %v7012 = vunpack.c.l.b16 %v5661
  %v7013 = vunpack.c.h.b16 %v5661
  %v7014 = vunpack.c.l.b16 %v5662
  %v7015 = vunpack.c.h.b16 %v5662
  %v7016 = vunpack.c.l.b16 %v5663
  %v7017 = vunpack.c.h.b16 %v5663
  %v7018 = vunpack.c.l.b16 %v5664
  %v7019 = vunpack.c.h.b16 %v5664
  %v7020 = vunpack.c.l.b16 %v5665
  %v7021 = vunpack.c.h.b16 %v5665
  %v7022 = vunpack.c.l.b16 %v5666
  %v7023 = vunpack.c.h.b16 %v5666
  %v7024 = vunpack.c.l.b16 %v5667
  %v7025 = vunpack.c.h.b16 %v5667
  %v7026 = vunpack.c.l.b16 %v5668
  %v7027 = vunpack.c.h.b16 %v5668
  %v7028 = vunpack.c.l.b16 %v5669
  %v7029 = vunpack.c.h.b16 %v5669
  %v7030 = vunpack.c.l.b16 %v5670
  %v7031 = vunpack.c.h.b16 %v5670
  %v7032 = vunpack.c.l.b16 %v5671
  %v7033 = vunpack.c.h.b16 %v5671
  %v7034 = vunpack.c.l.b16 %v5672
  %v7035 = vunpack.c.h.b16 %v5672
  %v7036 = vpack.c.b16 %v6588, %v6586
  %v7037 = vpack.c.b16 %v6589, %v6587
  %v7038 = vpack.c.b16 %v6592, %v6590
  %v7039 = vpack.c.b16 %v6593, %v6591
  %v7040 = vpack.c.b16 %v6596, %v6594
  %v7041 = vpack.c.b16 %v6597, %v6595
  %v7042 = vpack.c.b16 %v6600, %v6598
  %v7043 = vpack.c.b16 %v6601, %v6599
  %v7044 = vpack.c.b16 %v6604, %v6602
  %v7045 = vpack.c.b16 %v6605, %v6603
  %v7046 = vpack.c.b16 %v6608, %v6606
  %v7047 = vpack.c.b16 %v6609, %v6607
  %v7048 = vpack.c.b16 %v6612, %v6610
  %v7049 = vpack.c.b16 %v6613, %v6611
  %v7050 = vpack.c.b16 %v6616, %v6614
  %v7051 = vpack.c.b16 %v6617, %v6615
  %v7052 = vpack.c.b16 %v6620, %v6618
  %v7053 = vpack.c.b16 %v6621, %v6619
  %v7054 = vpack.c.b16 %v6624, %v6622
  %v7055 = vpack.c.b16 %v6625, %v6623
  %v7056 = vpack.c.b16 %v6628, %v6626
  %v7057 = vpack.c.b16 %v6629, %v6627
  %v7058 = vpack.c.b16 %v6632, %v6630
  %v7059 = vpack.c.b16 %v6633, %v6631
  %v7060 = vpack.c.b16 %v6636, %v6634
  %v7061 = vpack.c.b16 %v6637, %v6635
  %v7062 = vpack.c.b16 %v6640, %v6638
  %v7063 = vpack.c.b16 %v6641, %v6639
  %v7064 = vpack.c.b16 %v6644, %v6642
  %v7065 = vpack.c.b16 %v6645, %v6643
  %v7066 = vpack.c.b16 %v6648, %v6646
  %v7067 = vpack.c.b16 %v6649, %v6647
  %v7068 = vpack.c.b16 %v6652, %v6650
  %v7069 = vpack.c.b16 %v6653, %v6651
  %v7070 = vpack.c.b16 %v6656, %v6654
  %v7071 = vpack.c.b16 %v6657, %v6655
  %v7072 = vpack.c.b16 %v6660, %v6658
  %v7073 = vpack.c.b16 %v6661, %v6659
  %v7074 = vpack.c.b16 %v6664, %v6662
  %v7075 = vpack.c.b16 %v6665, %v6663
  %v7076 = vpack.c.b16 %v6668, %v6666
  %v7077 = vpack.c.b16 %v6669, %v6667
  %v7078 = vpack.c.b16 %v6672, %v6670
  %v7079 = vpack.c.b16 %v6673, %v6671
  %v7080 = vpack.c.b16 %v6676, %v6674
  %v7081 = vpack.c.b16 %v6677, %v6675
  %v7082 = vpack.c.b16 %v6680, %v6678
  %v7083 = vpack.c.b16 %v6681, %v6679
  %v7084 = vpack.c.b16 %v6684, %v6682
  %v7085 = vpack.c.b16 %v6685, %v6683
  %v7086 = vpack.c.b16 %v6688, %v6686
  %v7087 = vpack.c.b16 %v6689, %v6687
  %v7088 = vpack.c.b16 %v6692, %v6690
  %v7089 = vpack.c.b16 %v6693, %v6691
  %v7090 = vpack.c.b16 %v6696, %v6694
  %v7091 = vpack.c.b16 %v6697, %v6695
  %v7092 = vpack.c.b16 %v6700, %v6698
  %v7093 = vpack.c.b16 %v6701, %v6699
  %v7094 = vpack.c.b16 %v6704, %v6702
  %v7095 = vpack.c.b16 %v6705, %v6703
  %v7096 = vpack.c.b16 %v6708, %v6706
  %v7097 = vpack.c.b16 %v6709, %v6707
  %v7098 = vpack.c.b16 %v6712, %v6710
  %v7099 = vpack.c.b16 %v6713, %v6711
  %v7100 = vpack.c.b16 %v6716, %v6714
  %v7101 = vpack.c.b16 %v6717, %v6715
  %v7102 = vpack.c.b16 %v6720, %v6718
  %v7103 = vpack.c.b16 %v6721, %v6719
  %v7104 = vpack.c.b16 %v6724, %v6722
  %v7105 = vpack.c.b16 %v6725, %v6723
  %v7106 = vpack.c.b16 %v6728, %v6726
  %v7107 = vpack.c.b16 %v6729, %v6727
  %v7108 = vpack.c.b16 %v6732, %v6730
  %v7109 = vpack.c.b16 %v6733, %v6731
  %v7110 = vpack.c.b16 %v6736, %v6734
  %v7111 = vpack.c.b16 %v6737, %v6735
  %v7112 = vpack.c.b16 %v6740, %v6738
  %v7113 = vpack.c.b16 %v6741, %v6739
  %v7114 = vpack.c.b16 %v6744, %v6742
  %v7115 = vpack.c.b16 %v6745, %v6743
  %v7116 = vpack.c.b16 %v6748, %v6746
  %v7117 = vpack.c.b16 %v6749, %v6747
  %v7118 = vpack.c.b16 %v6752, %v6750
  %v7119 = vpack.c.b16 %v6753, %v6751
  %v7120 = vpack.c.b16 %v6756, %v6754
  %v7121 = vpack.c.b16 %v6757, %v6755
  %v7122 = vpack.c.b16 %v6760, %v6758
  %v7123 = vpack.c.b16 %v6761, %v6759
  %v7124 = vpack.c.b16 %v6764, %v6762
  %v7125 = vpack.c.b16 %v6765, %v6763
  %v7126 = vpack.c.b16 %v6768, %v6766
  %v7127 = vpack.c.b16 %v6769, %v6767
  %v7128 = vpack.c.b16 %v6772, %v6770
  %v7129 = vpack.c.b16 %v6773, %v6771
  %v7130 = vpack.c.b16 %v6776, %v6774
  %v7131 = vpack.c.b16 %v6777, %v6775
  %v7132 = vpack.c.b16 %v6780, %v6778
  %v7133 = vpack.c.b16 %v6781, %v6779
  %v7134 = vpack.c.b16 %v6784, %v6782
  %v7135 = vpack.c.b16 %v6785, %v6783
  %v7136 = vpack.c.b16 %v6788, %v6786
  %v7137 = vpack.c.b16 %v6789, %v6787
  %v7138 = vpack.c.b16 %v6792, %v6790
  %v7139 = vpack.c.b16 %v6793, %v6791
  %v7140 = vpack.c.b16 %v6796, %v6794
  %v7141 = vpack.c.b16 %v6797, %v6795
  %v7142 = vpack.c.b16 %v6800, %v6798
  %v7143 = vpack.c.b16 %v6801, %v6799
  %v7144 = vpack.c.b16 %v6804, %v6802
  %v7145 = vpack.c.b16 %v6805, %v6803
  %v7146 = vpack.c.b16 %v6808, %v6806
  %v7147 = vpack.c.b16 %v6809, %v6807
  %v7148 = vpack.c.b16 %v6812, %v6810
  %v7149 = vpack.c.b16 %v6813, %v6811
  %v7150 = vpack.c.b16 %v6816, %v6814
  %v7151 = vpack.c.b16 %v6817, %v6815
  %v7152 = vpack.c.b16 %v6820, %v6818
  %v7153 = vpack.c.b16 %v6821, %v6819
  %v7154 = vpack.c.b16 %v6824, %v6822
  %v7155 = vpack.c.b16 %v6825, %v6823
  %v7156 = vpack.c.b16 %v6828, %v6826
  %v7157 = vpack.c.b16 %v6829, %v6827
  %v7158 = vpack.c.b16 %v6832, %v6830
  %v7159 = vpack.c.b16 %v6833, %v6831
  %v7160 = vpack.c.b16 %v6836, %v6834
  %v7161 = vpack.c.b16 %v6837, %v6835
  %v7162 = vpack.c.b16 %v6840, %v6838
  %v7163 = vpack.c.b16 %v6841, %v6839
  %v7164 = vpack.c.b16 %v6844, %v6842
  %v7165 = vpack.c.b16 %v6845, %v6843
  %v7166 = vpack.c.b16 %v6848, %v6846
  %v7167 = vpack.c.b16 %v6849, %v6847
  %v7168 = vpack.c.b16 %v6852, %v6850
  %v7169 = vpack.c.b16 %v6853, %v6851
  %v7170 = vpack.c.b16 %v6856, %v6854
  %v7171 = vpack.c.b16 %v6857, %v6855
  %v7172 = vpack.c.b16 %v6860, %v6858
  %v7173 = vpack.c.b16 %v6861, %v6859
  %v7174 = vpack.c.b16 %v6864, %v6862
  %v7175 = vpack.c.b16 %v6865, %v6863
  %v7176 = vpack.c.b16 %v6868, %v6866
  %v7177 = vpack.c.b16 %v6869, %v6867
  %v7178 = vpack.c.b16 %v6872, %v6870
  %v7179 = vpack.c.b16 %v6873, %v6871
  %v7180 = vpack.c.b16 %v6876, %v6874
  %v7181 = vpack.c.b16 %v6877, %v6875
  %v7182 = vpack.c.b16 %v6880, %v6878
  %v7183 = vpack.c.b16 %v6881, %v6879
  %v7184 = vpack.c.b16 %v6884, %v6882
  %v7185 = vpack.c.b16 %v6885, %v6883
  %v7186 = vpack.c.b16 %v6888, %v6886
  %v7187 = vpack.c.b16 %v6889, %v6887
  %v7188 = vpack.c.b16 %v6892, %v6890
  %v7189 = vpack.c.b16 %v6893, %v6891
  %v7190 = vpack.c.b16 %v6896, %v6894
  %v7191 = vpack.c.b16 %v6897, %v6895
  %v7192 = vpack.c.b16 %v6900, %v6898
  %v7193 = vpack.c.b16 %v6901, %v6899
  %v7194 = vpack.c.b16 %v6904, %v6902
  %v7195 = vpack.c.b16 %v6905, %v6903
  %v7196 = vpack.c.b16 %v6908, %v6906
  %v7197 = vpack.c.b16 %v6909, %v6907
  %v7198 = vpack.c.b16 %v6912, %v6910
  %v7199 = vpack.c.b16 %v6913, %v6911
  %v7200 = vpack.c.b16 %v6916, %v6914
  %v7201 = vpack.c.b16 %v6917, %v6915
  %v7202 = vpack.c.b16 %v6920, %v6918
  %v7203 = vpack.c.b16 %v6921, %v6919
  %v7204 = vpack.c.b16 %v6924, %v6922
  %v7205 = vpack.c.b16 %v6925, %v6923
  %v7206 = vpack.c.b16 %v6928, %v6926
  %v7207 = vpack.c.b16 %v6929, %v6927
  %v7208 = vpack.c.b16 %v6932, %v6930
  %v7209 = vpack.c.b16 %v6933, %v6931
  %v7210 = vpack.c.b16 %v6936, %v6934
  %v7211 = vpack.c.b16 %v6937, %v6935
  %v7212 = vpack.c.b16 %v6940, %v6938
  %v7213 = vpack.c.b16 %v6941, %v6939
  %v7214 = vpack.c.b16 %v6944, %v6942
  %v7215 = vpack.c.b16 %v6945, %v6943
  %v7216 = vpack.c.b16 %v6948, %v6946
  %v7217 = vpack.c.b16 %v6949, %v6947
  %v7218 = vpack.c.b16 %v6952, %v6950
  %v7219 = vpack.c.b16 %v6953, %v6951
  %v7220 = vpack.c.b16 %v6956, %v6954
  %v7221 = vpack.c.b16 %v6957, %v6955
  %v7222 = vpack.c.b16 %v6960, %v6958
  %v7223 = vpack.c.b16 %v6961, %v6959
  %v7224 = vpack.c.b16 %v6964, %v6962
  %v7225 = vpack.c.b16 %v6965, %v6963
  %v7226 = vpack.c.b16 %v6968, %v6966
  %v7227 = vpack.c.b16 %v6969, %v6967
  %v7228 = vpack.c.b16 %v6972, %v6970
  %v7229 = vpack.c.b16 %v6973, %v6971
  %v7230 = vpack.c.b16 %v6976, %v6974
  %v7231 = vpack.c.b16 %v6977, %v6975
  %v7232 = vpack.c.b16 %v6980, %v6978
  %v7233 = vpack.c.b16 %v6981, %v6979
  %v7234 = vpack.c.b16 %v6984, %v6982
  %v7235 = vpack.c.b16 %v6985, %v6983
  %v7236 = vpack.c.b16 %v6988, %v6986
  %v7237 = vpack.c.b16 %v6989, %v6987
  %v7238 = vpack.c.b16 %v6992, %v6990
  %v7239 = vpack.c.b16 %v6993, %v6991
  %v7240 = vpack.c.b16 %v6996, %v6994
  %v7241 = vpack.c.b16 %v6997, %v6995
  %v7242 = vpack.c.b16 %v7000, %v6998
  %v7243 = vpack.c.b16 %v7001, %v6999
  %v7244 = vpack.c.b16 %v7004, %v7002
  %v7245 = vpack.c.b16 %v7005, %v7003
  %v7246 = vpack.c.b16 %v7008, %v7006
  %v7247 = vpack.c.b16 %v7009, %v7007
  %v7248 = vpack.c.b16 %v7012, %v7010
  %v7249 = vpack.c.b16 %v7013, %v7011
  %v7250 = vpack.c.b16 %v7016, %v7014
  %v7251 = vpack.c.b16 %v7017, %v7015
  %v7252 = vpack.c.b16 %v7020, %v7018
  %v7253 = vpack.c.b16 %v7021, %v7019
  %v7254 = vpack.c.b16 %v7024, %v7022
  %v7255 = vpack.c.b16 %v7025, %v7023
  %v7256 = vpack.c.b16 %v7028, %v7026
  %v7257 = vpack.c.b16 %v7029, %v7027
  %v7258 = vpack.c.b16 %v7032, %v7030
  %v7259 = vpack.c.b16 %v7033, %v7031
  %v7260 = vpack.c.b16 %v7034, %v7034
  %v7261 = vpack.c.b16 %v7035, %v7035
  %v7487 = vsel %vm3884, %v5923, 0
  %v7490 = vsel %vm3884, %v6050, 0
  %v7493 = vsel %vm3884, %v6177, 0
  %v7496 = vsel %vm3884, %v6304, 0
  %v7499 = vsel %vm3897, %v7260, 0
  %v7502 = vsel %vm3897, %v7261, 0
  %7504 = vmatprep.subr.bf16.mxu0 %v7037
  %7505 = vmatpush1.bf16.msra.mxu0 %v7036
  %7506 = vmatprep.subr.bf16.mxu0 %v7039
  %7507 = vmatpush1.bf16.msra.mxu0 %v7038
  %7508 = vmatprep.subr.bf16.mxu0 %v7041
  %7509 = vmatpush1.bf16.msra.mxu0 %v7040
  %7510 = vmatprep.subr.bf16.mxu0 %v7043
  %7511 = vmatpush1.bf16.msra.mxu0 %v7042
  %7512 = vmatprep.subr.bf16.mxu0 %v7045
  %7513 = vmatpush1.bf16.msra.mxu0 %v7044
  %7514 = vmatprep.subr.bf16.mxu0 %v7047
  %7515 = vmatpush1.bf16.msra.mxu0 %v7046
  %7516 = vmatprep.subr.bf16.mxu0 %v7049
  %7517 = vmatpush1.bf16.msra.mxu0 %v7048
  %7518 = vmatprep.subr.bf16.mxu0 %v7051
  %7519 = vmatpush1.bf16.msra.mxu0 %v7050
  %7520 = vmatprep.subr.bf16.mxu0 %v7053
  %7521 = vmatpush1.bf16.msra.mxu0 %v7052
  %7522 = vmatprep.subr.bf16.mxu0 %v7055
  %7523 = vmatpush1.bf16.msra.mxu0 %v7054
  %7524 = vmatprep.subr.bf16.mxu0 %v7057
  %7525 = vmatpush1.bf16.msra.mxu0 %v7056
  %7526 = vmatprep.subr.bf16.mxu0 %v7059
  %7527 = vmatpush1.bf16.msra.mxu0 %v7058
  %7528 = vmatprep.subr.bf16.mxu0 %v7061
  %7529 = vmatpush1.bf16.msra.mxu0 %v7060
  %7530 = vmatprep.subr.bf16.mxu0 %v7063
  %7531 = vmatpush1.bf16.msra.mxu0 %v7062
  %7532 = vmatprep.subr.bf16.mxu0 %v7065
  %7533 = vmatpush1.bf16.msra.mxu0 %v7064
  %7534 = vmatprep.subr.bf16.mxu0 %v7067
  %7535 = vmatpush1.bf16.msra.mxu0 %v7066
  %7536 = vmatprep.mubr.bf16.mxu0 %v5716
  %7537 = vmatmul.mubr.bf16.gmra.mrb[0].mxu0 %v5701
  %v7538 = vpop.f32.mrb[0].mxu0
  %v7539 = vadd.f32 %v5678, %v7538
  %v7540 = vpop.f32.mrb[0].mxu0
  %v7541 = vadd.f32 %v5682, %v7540
  %v7542 = vpop.f32.mrb[0].mxu0
  %v7543 = vadd.f32 %v5678, %v7542
  %v7544 = vpop.f32.mrb[0].mxu0
  %v7545 = vadd.f32 %v5682, %v7544
  %7546 = vmatprep.mubr.bf16.mxu0 %v5940
  %7547 = vmatmul.mubr.bf16.gmra.mrb[0].mxu0 %v5932
  %v7548 = vpop.f32.mrb[0].mxu0
  %v7549 = vadd.f32 %v5678, %v7548
  %v7550 = vpop.f32.mrb[0].mxu0
  %v7551 = vadd.f32 %v5682, %v7550
  %v7552 = vpop.f32.mrb[0].mxu0
  %v7553 = vadd.f32 %v5678, %v7552
  %v7554 = vpop.f32.mrb[0].mxu0
  %v7555 = vadd.f32 %v5682, %v7554
  %7556 = vmatprep.mubr.bf16.mxu0 %v6067
  %7557 = vmatmul.mubr.bf16.gmra.mrb[0].mxu0 %v6059
  %v7558 = vpop.f32.mrb[0].mxu0
  %v7559 = vadd.f32 %v5678, %v7558
  %v7560 = vpop.f32.mrb[0].mxu0
  %v7561 = vadd.f32 %v5682, %v7560
  %v7562 = vpop.f32.mrb[0].mxu0
  %v7563 = vadd.f32 %v5678, %v7562
  %v7564 = vpop.f32.mrb[0].mxu0
  %v7565 = vadd.f32 %v5682, %v7564
  %7566 = vmatprep.mubr.bf16.mxu0 %v6194
  %7567 = vmatmul.mubr.bf16.gmra.mrb[0].mxu0 %v6186
  %v7568 = vpop.f32.mrb[0].mxu0
  %v7569 = vadd.f32 %v5678, %v7568
  %v7570 = vpop.f32.mrb[0].mxu0
  %v7571 = vadd.f32 %v5682, %v7570
  %v7572 = vpop.f32.mrb[0].mxu0
  %v7573 = vadd.f32 %v5678, %v7572
  %v7574 = vpop.f32.mrb[0].mxu0
  %v7575 = vadd.f32 %v5682, %v7574
  %7576 = vdwg.mxu0
  %7577 = vmatprep.subr.bf16.mxu0 %v7069
  %7578 = vmatpush1.bf16.msra.mxu0 %v7068
  %7579 = vmatprep.subr.bf16.mxu0 %v7071
  %7580 = vmatpush1.bf16.msra.mxu0 %v7070
  %7581 = vmatprep.subr.bf16.mxu0 %v7073
  %7582 = vmatpush1.bf16.msra.mxu0 %v7072
  %7583 = vmatprep.subr.bf16.mxu0 %v7075
  %7584 = vmatpush1.bf16.msra.mxu0 %v7074
  %7585 = vmatprep.subr.bf16.mxu0 %v7077
  %7586 = vmatpush1.bf16.msra.mxu0 %v7076
  %7587 = vmatprep.subr.bf16.mxu0 %v7079
  %7588 = vmatpush1.bf16.msra.mxu0 %v7078
  %7589 = vmatprep.subr.bf16.mxu0 %v7081
  %7590 = vmatpush1.bf16.msra.mxu0 %v7080
  %7591 = vmatprep.subr.bf16.mxu0 %v7083
  %7592 = vmatpush1.bf16.msra.mxu0 %v7082
  %7593 = vmatprep.subr.bf16.mxu0 %v7085
  %7594 = vmatpush1.bf16.msra.mxu0 %v7084
  %7595 = vmatprep.subr.bf16.mxu0 %v7087
  %7596 = vmatpush1.bf16.msra.mxu0 %v7086
  %7597 = vmatprep.subr.bf16.mxu0 %v7089
  %7598 = vmatpush1.bf16.msra.mxu0 %v7088
  %7599 = vmatprep.subr.bf16.mxu0 %v7091
  %7600 = vmatpush1.bf16.msra.mxu0 %v7090
  %7601 = vmatprep.subr.bf16.mxu0 %v7093
  %7602 = vmatpush1.bf16.msra.mxu0 %v7092
  %7603 = vmatprep.subr.bf16.mxu0 %v7095
  %7604 = vmatpush1.bf16.msra.mxu0 %v7094
  %7605 = vmatprep.subr.bf16.mxu0 %v7097
  %7606 = vmatpush1.bf16.msra.mxu0 %v7096
  %7607 = vmatprep.subr.bf16.mxu0 %v7099
  %7608 = vmatpush1.bf16.msra.mxu0 %v7098
  %7609 = vmatprep.mubr.bf16.mxu0 %v5748
  %7610 = vmatmul.mubr.bf16.gmra.mrb[0].mxu0 %v5733
  %v7611 = vpop.f32.mrb[0].mxu0
  %v7612 = vadd.f32 %v7539, %v7611
  %v7613 = vpop.f32.mrb[0].mxu0
  %v7614 = vadd.f32 %v7541, %v7613
  %v7615 = vpop.f32.mrb[0].mxu0
  %v7616 = vadd.f32 %v7543, %v7615
  %v7617 = vpop.f32.mrb[0].mxu0
  %v7618 = vadd.f32 %v7545, %v7617
  %7619 = vmatprep.mubr.bf16.mxu0 %v5957
  %7620 = vmatmul.mubr.bf16.gmra.mrb[0].mxu0 %v5949
  %v7621 = vpop.f32.mrb[0].mxu0
  %v7622 = vadd.f32 %v7549, %v7621
  %v7623 = vpop.f32.mrb[0].mxu0
  %v7624 = vadd.f32 %v7551, %v7623
  %v7625 = vpop.f32.mrb[0].mxu0
  %v7626 = vadd.f32 %v7553, %v7625
  %v7627 = vpop.f32.mrb[0].mxu0
  %v7628 = vadd.f32 %v7555, %v7627
  %7629 = vmatprep.mubr.bf16.mxu0 %v6084
  %7630 = vmatmul.mubr.bf16.gmra.mrb[0].mxu0 %v6076
  %v7631 = vpop.f32.mrb[0].mxu0
  %v7632 = vadd.f32 %v7559, %v7631
  %v7633 = vpop.f32.mrb[0].mxu0
  %v7634 = vadd.f32 %v7561, %v7633
  %v7635 = vpop.f32.mrb[0].mxu0
  %v7636 = vadd.f32 %v7563, %v7635
  %v7637 = vpop.f32.mrb[0].mxu0
  %v7638 = vadd.f32 %v7565, %v7637
  %7639 = vmatprep.mubr.bf16.mxu0 %v6211
  %7640 = vmatmul.mubr.bf16.gmra.mrb[0].mxu0 %v6203
  %v7641 = vpop.f32.mrb[0].mxu0
  %v7642 = vadd.f32 %v7569, %v7641
  %v7643 = vpop.f32.mrb[0].mxu0
  %v7644 = vadd.f32 %v7571, %v7643
  %v7645 = vpop.f32.mrb[0].mxu0
  %v7646 = vadd.f32 %v7573, %v7645
  %v7647 = vpop.f32.mrb[0].mxu0
  %v7648 = vadd.f32 %v7575, %v7647
  %7649 = vdwg.mxu0
  %7650 = vmatprep.subr.bf16.mxu0 %v7101
  %7651 = vmatpush1.bf16.msra.mxu0 %v7100
  %7652 = vmatprep.subr.bf16.mxu0 %v7103
  %7653 = vmatpush1.bf16.msra.mxu0 %v7102
  %7654 = vmatprep.subr.bf16.mxu0 %v7105
  %7655 = vmatpush1.bf16.msra.mxu0 %v7104
  %7656 = vmatprep.subr.bf16.mxu0 %v7107
  %7657 = vmatpush1.bf16.msra.mxu0 %v7106
  %7658 = vmatprep.subr.bf16.mxu0 %v7109
  %7659 = vmatpush1.bf16.msra.mxu0 %v7108
  %7660 = vmatprep.subr.bf16.mxu0 %v7111
  %7661 = vmatpush1.bf16.msra.mxu0 %v7110
  %7662 = vmatprep.subr.bf16.mxu0 %v7113
  %7663 = vmatpush1.bf16.msra.mxu0 %v7112
  %7664 = vmatprep.subr.bf16.mxu0 %v7115
  %7665 = vmatpush1.bf16.msra.mxu0 %v7114
  %7666 = vmatprep.subr.bf16.mxu0 %v7117
  %7667 = vmatpush1.bf16.msra.mxu0 %v7116
  %7668 = vmatprep.subr.bf16.mxu0 %v7119
  %7669 = vmatpush1.bf16.msra.mxu0 %v7118
  %7670 = vmatprep.subr.bf16.mxu0 %v7121
  %7671 = vmatpush1.bf16.msra.mxu0 %v7120
  %7672 = vmatprep.subr.bf16.mxu0 %v7123
  %7673 = vmatpush1.bf16.msra.mxu0 %v7122
  %7674 = vmatprep.subr.bf16.mxu0 %v7125
  %7675 = vmatpush1.bf16.msra.mxu0 %v7124
  %7676 = vmatprep.subr.bf16.mxu0 %v7127
  %7677 = vmatpush1.bf16.msra.mxu0 %v7126
  %7678 = vmatprep.subr.bf16.mxu0 %v7129
  %7679 = vmatpush1.bf16.msra.mxu0 %v7128
  %7680 = vmatprep.subr.bf16.mxu0 %v7131
  %7681 = vmatpush1.bf16.msra.mxu0 %v7130
  %7682 = vmatprep.mubr.bf16.mxu0 %v5780
  %7683 = vmatmul.mubr.bf16.gmra.mrb[0].mxu0 %v5763
  %v7684 = vpop.f32.mrb[0].mxu0
  %v7685 = vadd.f32 %v7612, %v7684
  %v7686 = vpop.f32.mrb[0].mxu0
  %v7687 = vadd.f32 %v7614, %v7686
  %v7688 = vpop.f32.mrb[0].mxu0
  %v7689 = vadd.f32 %v7616, %v7688
  %v7690 = vpop.f32.mrb[0].mxu0
  %v7691 = vadd.f32 %v7618, %v7690
  %7692 = vmatprep.mubr.bf16.mxu0 %v5974
  %7693 = vmatmul.mubr.bf16.gmra.mrb[0].mxu0 %v5965
  %v7694 = vpop.f32.mrb[0].mxu0
  %v7695 = vadd.f32 %v7622, %v7694
  %v7696 = vpop.f32.mrb[0].mxu0
  %v7697 = vadd.f32 %v7624, %v7696
  %v7698 = vpop.f32.mrb[0].mxu0
  %v7699 = vadd.f32 %v7626, %v7698
  %v7700 = vpop.f32.mrb[0].mxu0
  %v7701 = vadd.f32 %v7628, %v7700
  %7702 = vmatprep.mubr.bf16.mxu0 %v6101
  %7703 = vmatmul.mubr.bf16.gmra.mrb[0].mxu0 %v6092
  %v7704 = vpop.f32.mrb[0].mxu0
  %v7705 = vadd.f32 %v7632, %v7704
  %v7706 = vpop.f32.mrb[0].mxu0
  %v7707 = vadd.f32 %v7634, %v7706
  %v7708 = vpop.f32.mrb[0].mxu0
  %v7709 = vadd.f32 %v7636, %v7708
  %v7710 = vpop.f32.mrb[0].mxu0
  %v7711 = vadd.f32 %v7638, %v7710
  %7712 = vmatprep.mubr.bf16.mxu0 %v6228
  %7713 = vmatmul.mubr.bf16.gmra.mrb[0].mxu0 %v6219
  %v7714 = vpop.f32.mrb[0].mxu0
  %v7715 = vadd.f32 %v7642, %v7714
  %v7716 = vpop.f32.mrb[0].mxu0
  %v7717 = vadd.f32 %v7644, %v7716
  %v7718 = vpop.f32.mrb[0].mxu0
  %v7719 = vadd.f32 %v7646, %v7718
  %v7720 = vpop.f32.mrb[0].mxu0
  %v7721 = vadd.f32 %v7648, %v7720
  %7722 = vdwg.mxu0
  %7723 = vmatprep.subr.bf16.mxu0 %v7133
  %7724 = vmatpush1.bf16.msra.mxu0 %v7132
  %7725 = vmatprep.subr.bf16.mxu0 %v7135
  %7726 = vmatpush1.bf16.msra.mxu0 %v7134
  %7727 = vmatprep.subr.bf16.mxu0 %v7137
  %7728 = vmatpush1.bf16.msra.mxu0 %v7136
  %7729 = vmatprep.subr.bf16.mxu0 %v7139
  %7730 = vmatpush1.bf16.msra.mxu0 %v7138
  %7731 = vmatprep.subr.bf16.mxu0 %v7141
  %7732 = vmatpush1.bf16.msra.mxu0 %v7140
  %7733 = vmatprep.subr.bf16.mxu0 %v7143
  %7734 = vmatpush1.bf16.msra.mxu0 %v7142
  %7735 = vmatprep.subr.bf16.mxu0 %v7145
  %7736 = vmatpush1.bf16.msra.mxu0 %v7144
  %7737 = vmatprep.subr.bf16.mxu0 %v7147
  %7738 = vmatpush1.bf16.msra.mxu0 %v7146
  %7739 = vmatprep.subr.bf16.mxu0 %v7149
  %7740 = vmatpush1.bf16.msra.mxu0 %v7148
  %7741 = vmatprep.subr.bf16.mxu0 %v7151
  %7742 = vmatpush1.bf16.msra.mxu0 %v7150
  %7743 = vmatprep.subr.bf16.mxu0 %v7153
  %7744 = vmatpush1.bf16.msra.mxu0 %v7152
  %7745 = vmatprep.subr.bf16.mxu0 %v7155
  %7746 = vmatpush1.bf16.msra.mxu0 %v7154
  %7747 = vmatprep.subr.bf16.mxu0 %v7157
  %7748 = vmatpush1.bf16.msra.mxu0 %v7156
  %7749 = vmatprep.subr.bf16.mxu0 %v7159
  %7750 = vmatpush1.bf16.msra.mxu0 %v7158
  %7751 = vmatprep.subr.bf16.mxu0 %v7161
  %7752 = vmatpush1.bf16.msra.mxu0 %v7160
  %7753 = vmatprep.subr.bf16.mxu0 %v7163
  %7754 = vmatpush1.bf16.msra.mxu0 %v7162
  %7755 = vmatprep.mubr.bf16.mxu0 %v5810
  %7756 = vmatmul.mubr.bf16.gmra.mrb[0].mxu0 %v5795
  %v7757 = vpop.f32.mrb[0].mxu0
  %v7758 = vadd.f32 %v7685, %v7757
  %v7759 = vpop.f32.mrb[0].mxu0
  %v7760 = vadd.f32 %v7687, %v7759
  %v7761 = vpop.f32.mrb[0].mxu0
  %v7762 = vadd.f32 %v7689, %v7761
  %v7763 = vpop.f32.mrb[0].mxu0
  %v7764 = vadd.f32 %v7691, %v7763
  %7765 = vmatprep.mubr.bf16.mxu0 %v5990
  %7766 = vmatmul.mubr.bf16.gmra.mrb[0].mxu0 %v5982
  %v7767 = vpop.f32.mrb[0].mxu0
  %v7768 = vadd.f32 %v7695, %v7767
  %v7769 = vpop.f32.mrb[0].mxu0
  %v7770 = vadd.f32 %v7697, %v7769
  %v7771 = vpop.f32.mrb[0].mxu0
  %v7772 = vadd.f32 %v7699, %v7771
  %v7773 = vpop.f32.mrb[0].mxu0
  %v7774 = vadd.f32 %v7701, %v7773
  %7775 = vmatprep.mubr.bf16.mxu0 %v6117
  %7776 = vmatmul.mubr.bf16.gmra.mrb[0].mxu0 %v6109
  %v7777 = vpop.f32.mrb[0].mxu0
  %v7778 = vadd.f32 %v7705, %v7777
  %v7779 = vpop.f32.mrb[0].mxu0
  %v7780 = vadd.f32 %v7707, %v7779
  %v7781 = vpop.f32.mrb[0].mxu0
  %v7782 = vadd.f32 %v7709, %v7781
  %v7783 = vpop.f32.mrb[0].mxu0
  %v7784 = vadd.f32 %v7711, %v7783
  %7785 = vmatprep.mubr.bf16.mxu0 %v6244
  %7786 = vmatmul.mubr.bf16.gmra.mrb[0].mxu0 %v6236
  %v7787 = vpop.f32.mrb[0].mxu0
  %v7788 = vadd.f32 %v7715, %v7787
  %v7789 = vpop.f32.mrb[0].mxu0
  %v7790 = vadd.f32 %v7717, %v7789
  %v7791 = vpop.f32.mrb[0].mxu0
  %v7792 = vadd.f32 %v7719, %v7791
  %v7793 = vpop.f32.mrb[0].mxu0
  %v7794 = vadd.f32 %v7721, %v7793
  %7795 = vdwg.mxu0
  %7796 = vmatprep.subr.bf16.mxu0 %v7165
  %7797 = vmatpush1.bf16.msra.mxu0 %v7164
  %7798 = vmatprep.subr.bf16.mxu0 %v7167
  %7799 = vmatpush1.bf16.msra.mxu0 %v7166
  %7800 = vmatprep.subr.bf16.mxu0 %v7169
  %7801 = vmatpush1.bf16.msra.mxu0 %v7168
  %7802 = vmatprep.subr.bf16.mxu0 %v7171
  %7803 = vmatpush1.bf16.msra.mxu0 %v7170
  %7804 = vmatprep.subr.bf16.mxu0 %v7173
  %7805 = vmatpush1.bf16.msra.mxu0 %v7172
  %7806 = vmatprep.subr.bf16.mxu0 %v7175
  %7807 = vmatpush1.bf16.msra.mxu0 %v7174
  %7808 = vmatprep.subr.bf16.mxu0 %v7177
  %7809 = vmatpush1.bf16.msra.mxu0 %v7176
  %7810 = vmatprep.subr.bf16.mxu0 %v7179
  %7811 = vmatpush1.bf16.msra.mxu0 %v7178
  %7812 = vmatprep.subr.bf16.mxu0 %v7181
  %7813 = vmatpush1.bf16.msra.mxu0 %v7180
  %7814 = vmatprep.subr.bf16.mxu0 %v7183
  %7815 = vmatpush1.bf16.msra.mxu0 %v7182
  %7816 = vmatprep.subr.bf16.mxu0 %v7185
  %7817 = vmatpush1.bf16.msra.mxu0 %v7184
  %7818 = vmatprep.subr.bf16.mxu0 %v7187
  %7819 = vmatpush1.bf16.msra.mxu0 %v7186
  %7820 = vmatprep.subr.bf16.mxu0 %v7189
  %7821 = vmatpush1.bf16.msra.mxu0 %v7188
  %7822 = vmatprep.subr.bf16.mxu0 %v7191
  %7823 = vmatpush1.bf16.msra.mxu0 %v7190
  %7824 = vmatprep.subr.bf16.mxu0 %v7193
  %7825 = vmatpush1.bf16.msra.mxu0 %v7192
  %7826 = vmatprep.subr.bf16.mxu0 %v7195
  %7827 = vmatpush1.bf16.msra.mxu0 %v7194
  %7828 = vmatprep.mubr.bf16.mxu0 %v5842
  %7829 = vmatmul.mubr.bf16.gmra.mrb[0].mxu0 %v5827
  %v7830 = vpop.f32.mrb[0].mxu0
  %v7831 = vadd.f32 %v7758, %v7830
  %v7832 = vpop.f32.mrb[0].mxu0
  %v7833 = vadd.f32 %v7760, %v7832
  %v7834 = vpop.f32.mrb[0].mxu0
  %v7835 = vadd.f32 %v7762, %v7834
  %v7836 = vpop.f32.mrb[0].mxu0
  %v7837 = vadd.f32 %v7764, %v7836
  %7838 = vmatprep.mubr.bf16.mxu0 %v6007
  %7839 = vmatmul.mubr.bf16.gmra.mrb[0].mxu0 %v5999
  %v7840 = vpop.f32.mrb[0].mxu0
  %v7841 = vadd.f32 %v7768, %v7840
  %v7842 = vpop.f32.mrb[0].mxu0
  %v7843 = vadd.f32 %v7770, %v7842
  %v7844 = vpop.f32.mrb[0].mxu0
  %v7845 = vadd.f32 %v7772, %v7844
  %v7846 = vpop.f32.mrb[0].mxu0
  %v7847 = vadd.f32 %v7774, %v7846
  %7848 = vmatprep.mubr.bf16.mxu0 %v6134
  %7849 = vmatmul.mubr.bf16.gmra.mrb[0].mxu0 %v6126
  %v7850 = vpop.f32.mrb[0].mxu0
  %v7851 = vadd.f32 %v7778, %v7850
  %v7852 = vpop.f32.mrb[0].mxu0
  %v7853 = vadd.f32 %v7780, %v7852
  %v7854 = vpop.f32.mrb[0].mxu0
  %v7855 = vadd.f32 %v7782, %v7854
  %v7856 = vpop.f32.mrb[0].mxu0
  %v7857 = vadd.f32 %v7784, %v7856
  %7858 = vmatprep.mubr.bf16.mxu0 %v6261
  %7859 = vmatmul.mubr.bf16.gmra.mrb[0].mxu0 %v6253
  %v7860 = vpop.f32.mrb[0].mxu0
  %v7861 = vadd.f32 %v7788, %v7860
  %v7862 = vpop.f32.mrb[0].mxu0
  %v7863 = vadd.f32 %v7790, %v7862
  %v7864 = vpop.f32.mrb[0].mxu0
  %v7865 = vadd.f32 %v7792, %v7864
  %v7866 = vpop.f32.mrb[0].mxu0
  %v7867 = vadd.f32 %v7794, %v7866
  %7868 = vdwg.mxu0
  %7869 = vmatprep.subr.bf16.mxu0 %v7197
  %7870 = vmatpush1.bf16.msra.mxu0 %v7196
  %7871 = vmatprep.subr.bf16.mxu0 %v7199
  %7872 = vmatpush1.bf16.msra.mxu0 %v7198
  %7873 = vmatprep.subr.bf16.mxu0 %v7201
  %7874 = vmatpush1.bf16.msra.mxu0 %v7200
  %7875 = vmatprep.subr.bf16.mxu0 %v7203
  %7876 = vmatpush1.bf16.msra.mxu0 %v7202
  %7877 = vmatprep.subr.bf16.mxu0 %v7205
  %7878 = vmatpush1.bf16.msra.mxu0 %v7204
  %7879 = vmatprep.subr.bf16.mxu0 %v7207
  %7880 = vmatpush1.bf16.msra.mxu0 %v7206
  %7881 = vmatprep.subr.bf16.mxu0 %v7209
  %7882 = vmatpush1.bf16.msra.mxu0 %v7208
  %7883 = vmatprep.subr.bf16.mxu0 %v7211
  %7884 = vmatpush1.bf16.msra.mxu0 %v7210
  %7885 = vmatprep.subr.bf16.mxu0 %v7213
  %7886 = vmatpush1.bf16.msra.mxu0 %v7212
  %7887 = vmatprep.subr.bf16.mxu0 %v7215
  %7888 = vmatpush1.bf16.msra.mxu0 %v7214
  %7889 = vmatprep.subr.bf16.mxu0 %v7217
  %7890 = vmatpush1.bf16.msra.mxu0 %v7216
  %7891 = vmatprep.subr.bf16.mxu0 %v7219
  %7892 = vmatpush1.bf16.msra.mxu0 %v7218
  %7893 = vmatprep.subr.bf16.mxu0 %v7221
  %7894 = vmatpush1.bf16.msra.mxu0 %v7220
  %7895 = vmatprep.subr.bf16.mxu0 %v7223
  %7896 = vmatpush1.bf16.msra.mxu0 %v7222
  %7897 = vmatprep.subr.bf16.mxu0 %v7225
  %7898 = vmatpush1.bf16.msra.mxu0 %v7224
  %7899 = vmatprep.subr.bf16.mxu0 %v7227
  %7900 = vmatpush1.bf16.msra.mxu0 %v7226
  %7901 = vmatprep.mubr.bf16.mxu0 %v5874
  %7902 = vmatmul.mubr.bf16.gmra.mrb[0].mxu0 %v5857
  %v7903 = vpop.f32.mrb[0].mxu0
  %v7904 = vadd.f32 %v7831, %v7903
  %v7905 = vpop.f32.mrb[0].mxu0
  %v7906 = vadd.f32 %v7833, %v7905
  %v7907 = vpop.f32.mrb[0].mxu0
  %v7908 = vadd.f32 %v7835, %v7907
  %v7909 = vpop.f32.mrb[0].mxu0
  %v7910 = vadd.f32 %v7837, %v7909
  %7911 = vmatprep.mubr.bf16.mxu0 %v6024
  %7912 = vmatmul.mubr.bf16.gmra.mrb[0].mxu0 %v6015
  %v7913 = vpop.f32.mrb[0].mxu0
  %v7914 = vadd.f32 %v7841, %v7913
  %v7915 = vpop.f32.mrb[0].mxu0
  %v7916 = vadd.f32 %v7843, %v7915
  %v7917 = vpop.f32.mrb[0].mxu0
  %v7918 = vadd.f32 %v7845, %v7917
  %v7919 = vpop.f32.mrb[0].mxu0
  %v7920 = vadd.f32 %v7847, %v7919
  %7921 = vmatprep.mubr.bf16.mxu0 %v6151
  %7922 = vmatmul.mubr.bf16.gmra.mrb[0].mxu0 %v6142
  %v7923 = vpop.f32.mrb[0].mxu0
  %v7924 = vadd.f32 %v7851, %v7923
  %v7925 = vpop.f32.mrb[0].mxu0
  %v7926 = vadd.f32 %v7853, %v7925
  %v7927 = vpop.f32.mrb[0].mxu0
  %v7928 = vadd.f32 %v7855, %v7927
  %v7929 = vpop.f32.mrb[0].mxu0
  %v7930 = vadd.f32 %v7857, %v7929
  %7931 = vmatprep.mubr.bf16.mxu0 %v6278
  %7932 = vmatmul.mubr.bf16.gmra.mrb[0].mxu0 %v6269
  %v7933 = vpop.f32.mrb[0].mxu0
  %v7934 = vadd.f32 %v7861, %v7933
  %v7935 = vpop.f32.mrb[0].mxu0
  %v7936 = vadd.f32 %v7863, %v7935
  %v7937 = vpop.f32.mrb[0].mxu0
  %v7938 = vadd.f32 %v7865, %v7937
  %v7939 = vpop.f32.mrb[0].mxu0
  %v7940 = vadd.f32 %v7867, %v7939
  %7941 = vdwg.mxu0
  %7942 = vmatprep.subr.bf16.mxu0 %v7229
  %7943 = vmatpush1.bf16.msra.mxu0 %v7228
  %7944 = vmatprep.subr.bf16.mxu0 %v7231
  %7945 = vmatpush1.bf16.msra.mxu0 %v7230
  %7946 = vmatprep.subr.bf16.mxu0 %v7233
  %7947 = vmatpush1.bf16.msra.mxu0 %v7232
  %7948 = vmatprep.subr.bf16.mxu0 %v7235
  %7949 = vmatpush1.bf16.msra.mxu0 %v7234
  %7950 = vmatprep.subr.bf16.mxu0 %v7237
  %7951 = vmatpush1.bf16.msra.mxu0 %v7236
  %7952 = vmatprep.subr.bf16.mxu0 %v7239
  %7953 = vmatpush1.bf16.msra.mxu0 %v7238
  %7954 = vmatprep.subr.bf16.mxu0 %v7241
  %7955 = vmatpush1.bf16.msra.mxu0 %v7240
  %7956 = vmatprep.subr.bf16.mxu0 %v7243
  %7957 = vmatpush1.bf16.msra.mxu0 %v7242
  %7958 = vmatprep.subr.bf16.mxu0 %v7245
  %7959 = vmatpush1.bf16.msra.mxu0 %v7244
  %7960 = vmatprep.subr.bf16.mxu0 %v7247
  %7961 = vmatpush1.bf16.msra.mxu0 %v7246
  %7962 = vmatprep.subr.bf16.mxu0 %v7249
  %7963 = vmatpush1.bf16.msra.mxu0 %v7248
  %7964 = vmatprep.subr.bf16.mxu0 %v7251
  %7965 = vmatpush1.bf16.msra.mxu0 %v7250
  %7966 = vmatprep.subr.bf16.mxu0 %v7253
  %7967 = vmatpush1.bf16.msra.mxu0 %v7252
  %7968 = vmatprep.subr.bf16.mxu0 %v7255
  %7969 = vmatpush1.bf16.msra.mxu0 %v7254
  %7970 = vmatprep.subr.bf16.mxu0 %v7257
  %7971 = vmatpush1.bf16.msra.mxu0 %v7256
  %7972 = vmatprep.subr.bf16.mxu0 %v7259
  %7973 = vmatpush1.bf16.msra.mxu0 %v7258
  %7974 = vmatprep.mubr.bf16.mxu0 %v5906
  %7975 = vmatmul.mubr.bf16.gmra.mrb[0].mxu0 %v5889
  %v7976 = vpop.f32.mrb[0].mxu0
  %v7977 = vadd.f32 %v7904, %v7976
  %v7978 = vpop.f32.mrb[0].mxu0
  %v7979 = vadd.f32 %v7906, %v7978
  %v7980 = vpop.f32.mrb[0].mxu0
  %v7981 = vadd.f32 %v7908, %v7980
  %v7982 = vpop.f32.mrb[0].mxu0
  %v7983 = vadd.f32 %v7910, %v7982
  %7984 = vmatprep.mubr.bf16.mxu0 %v6041
  %7985 = vmatmul.mubr.bf16.gmra.mrb[0].mxu0 %v6032
  %v7986 = vpop.f32.mrb[0].mxu0
  %v7987 = vadd.f32 %v7914, %v7986
  %v7988 = vpop.f32.mrb[0].mxu0
  %v7989 = vadd.f32 %v7916, %v7988
  %v7990 = vpop.f32.mrb[0].mxu0
  %v7991 = vadd.f32 %v7918, %v7990
  %v7992 = vpop.f32.mrb[0].mxu0
  %v7993 = vadd.f32 %v7920, %v7992
  %7994 = vmatprep.mubr.bf16.mxu0 %v6168
  %7995 = vmatmul.mubr.bf16.gmra.mrb[0].mxu0 %v6159
  %v7996 = vpop.f32.mrb[0].mxu0
  %v7997 = vadd.f32 %v7924, %v7996
  %v7998 = vpop.f32.mrb[0].mxu0
  %v7999 = vadd.f32 %v7926, %v7998
  %v8000 = vpop.f32.mrb[0].mxu0
  %v8001 = vadd.f32 %v7928, %v8000
  %v8002 = vpop.f32.mrb[0].mxu0
  %v8003 = vadd.f32 %v7930, %v8002
  %8004 = vmatprep.mubr.bf16.mxu0 %v6295
  %8005 = vmatmul.mubr.bf16.gmra.mrb[0].mxu0 %v6286
  %v8006 = vpop.f32.mrb[0].mxu0
  %v8007 = vadd.f32 %v7934, %v8006
  %v8008 = vpop.f32.mrb[0].mxu0
  %v8009 = vadd.f32 %v7936, %v8008
  %v8010 = vpop.f32.mrb[0].mxu0
  %v8011 = vadd.f32 %v7938, %v8010
  %v8012 = vpop.f32.mrb[0].mxu0
  %v8013 = vadd.f32 %v7940, %v8012
  %8014 = vdwg.mxu0
  %8015 = vmatprep.subr.bf16.mxu0 %v7502
  %8016 = vmatpush1.bf16.msra.mxu0 %v7499
  %8017 = vmatprep.subr.bf16.mxu0 0
  %8018 = vmatpush1.bf16.msra.mxu0 0
  %8019 = vmatprep.subr.bf16.mxu0 0
  %8020 = vmatpush1.bf16.msra.mxu0 0
  %8021 = vmatprep.subr.bf16.mxu0 0
  %8022 = vmatpush1.bf16.msra.mxu0 0
  %8023 = vmatprep.subr.bf16.mxu0 0
  %8024 = vmatpush1.bf16.msra.mxu0 0
  %8025 = vmatprep.subr.bf16.mxu0 0
  %8026 = vmatpush1.bf16.msra.mxu0 0
  %8027 = vmatprep.subr.bf16.mxu0 0
  %8028 = vmatpush1.bf16.msra.mxu0 0
  %8029 = vmatprep.subr.bf16.mxu0 0
  %8030 = vmatpush1.bf16.msra.mxu0 0
  %8031 = vmatprep.subr.bf16.mxu0 0
  %8032 = vmatpush1.bf16.msra.mxu0 0
  %8033 = vmatprep.subr.bf16.mxu0 0
  %8034 = vmatpush1.bf16.msra.mxu0 0
  %8035 = vmatprep.subr.bf16.mxu0 0
  %8036 = vmatpush1.bf16.msra.mxu0 0
  %8037 = vmatprep.subr.bf16.mxu0 0
  %8038 = vmatpush1.bf16.msra.mxu0 0
  %8039 = vmatprep.subr.bf16.mxu0 0
  %8040 = vmatpush1.bf16.msra.mxu0 0
  %8041 = vmatprep.subr.bf16.mxu0 0
  %8042 = vmatpush1.bf16.msra.mxu0 0
  %8043 = vmatprep.subr.bf16.mxu0 0
  %8044 = vmatpush1.bf16.msra.mxu0 0
  %8045 = vmatprep.subr.bf16.mxu0 0
  %8046 = vmatpush1.bf16.msra.mxu0 0
  %8047 = vmatprep.mubr.bf16.mxu0 0
  %8048 = vmatmul.mubr.bf16.gmra.mrb[0].mxu0 %v7487
  %v8049 = vpop.f32.mrb[0].mxu0
  %v8050 = vadd.f32 %v7977, %v8049
  %v8051 = vpop.f32.mrb[0].mxu0
  %v8052 = vadd.f32 %v7979, %v8051
  %v8053 = vpop.f32.mrb[0].mxu0
  %v8054 = vadd.f32 %v7981, %v8053
  %v8055 = vpop.f32.mrb[0].mxu0
  %v8056 = vadd.f32 %v7983, %v8055
  %8057 = vmatprep.mubr.bf16.mxu0 0
  %8058 = vmatmul.mubr.bf16.gmra.mrb[0].mxu0 %v7490
  %v8059 = vpop.f32.mrb[0].mxu0
  %v8060 = vadd.f32 %v7987, %v8059
  %v8061 = vpop.f32.mrb[0].mxu0
  %v8062 = vadd.f32 %v7989, %v8061
  %v8063 = vpop.f32.mrb[0].mxu0
  %v8064 = vadd.f32 %v7991, %v8063
  %v8065 = vpop.f32.mrb[0].mxu0
  %v8066 = vadd.f32 %v7993, %v8065
  %8067 = vmatprep.mubr.bf16.mxu0 0
  %8068 = vmatmul.mubr.bf16.gmra.mrb[0].mxu0 %v7493
  %v8069 = vpop.f32.mrb[0].mxu0
  %v8070 = vadd.f32 %v7997, %v8069
  %v8071 = vpop.f32.mrb[0].mxu0
  %v8072 = vadd.f32 %v7999, %v8071
  %v8073 = vpop.f32.mrb[0].mxu0
  %v8074 = vadd.f32 %v8001, %v8073
  %v8075 = vpop.f32.mrb[0].mxu0
  %v8076 = vadd.f32 %v8003, %v8075
  %8077 = vmatprep.mubr.bf16.mxu0 0
  %8078 = vmatmul.mubr.bf16.gmra.mrb[0].mxu0 %v7496
  %v8079 = vpop.f32.mrb[0].mxu0
  %v8080 = vadd.f32 %v8007, %v8079
  %v8081 = vpop.f32.mrb[0].mxu0
  %v8082 = vadd.f32 %v8009, %v8081
  %v8083 = vpop.f32.mrb[0].mxu0
  %v8084 = vadd.f32 %v8011, %v8083
  %v8085 = vpop.f32.mrb[0].mxu0
  %v8086 = vadd.f32 %v8013, %v8085
  %8087 = vdwg.mxu0
  %v8088 = vmax.f32 %v8050, 0.0
  %v8089 = vmax.f32 %v8052, 0.0
  %v8090 = vmax.f32 %v8054, 0.0
  %v8091 = vmax.f32 %v8056, 0.0
  %v8092 = vmax.f32 %v8060, 0.0
  %v8093 = vmax.f32 %v8062, 0.0
  %v8094 = vmax.f32 %v8064, 0.0
  %v8095 = vmax.f32 %v8066, 0.0
  %v8096 = vmax.f32 %v8070, 0.0
  %v8097 = vmax.f32 %v8072, 0.0
  %v8098 = vmax.f32 %v8074, 0.0
  %v8099 = vmax.f32 %v8076, 0.0
  %v8100 = vmax.f32 %v8080, 0.0
  %v8101 = vmax.f32 %v8082, 0.0
  %v8102 = vmax.f32 %v8084, 0.0
  %v8103 = vmax.f32 %v8086, 0.0
  %v8104 = vmul.f32 %v8088, %v320
  %v8105 = vmul.f32 %v8089, %v321
  %v8106 = vmul.f32 %v8090, %v322
  %v8107 = vmul.f32 %v8091, %v323
  %v8108 = vmul.f32 %v8092, %v324
  %v8109 = vmul.f32 %v8093, %v325
  %v8110 = vmul.f32 %v8094, %v326
  %v8111 = vmul.f32 %v8095, %v327
  %v8112 = vmul.f32 %v8096, %v328
  %v8113 = vmul.f32 %v8097, %v329
  %v8114 = vmul.f32 %v8098, %v330
  %v8115 = vmul.f32 %v8099, %v331
  %v8116 = vmul.f32 %v8100, %v332
  %v8117 = vmul.f32 %v8101, %v333
  %v8118 = vmul.f32 %v8102, %v334
  %v8119 = vmul.f32 %v8103, %v335
  %8136 = vrot.lane.b32.xlu0 %v8104, 20
  %v8137 = vpop.permute.xlu0 %8136
  %8138 = vrot.lane.b32.xlu0 %v8105, 20
  %v8139 = vpop.permute.xlu0 %8138
  %8140 = vrot.lane.b32.xlu0 %v8106, 20
  %v8141 = vpop.permute.xlu0 %8140
  %8142 = vrot.lane.b32.xlu0 %v8107, 20
  %v8143 = vpop.permute.xlu0 %8142
  %8144 = vrot.lane.b32.xlu0 %v8108, 20
  %v8145 = vpop.permute.xlu0 %8144
  %8146 = vrot.lane.b32.xlu0 %v8109, 20
  %v8147 = vpop.permute.xlu0 %8146
  %8148 = vrot.lane.b32.xlu0 %v8110, 20
  %v8149 = vpop.permute.xlu0 %8148
  %8150 = vrot.lane.b32.xlu0 %v8111, 20
  %v8151 = vpop.permute.xlu0 %8150
  %8152 = vrot.lane.b32.xlu0 %v8112, 20
  %v8153 = vpop.permute.xlu0 %8152
  %8154 = vrot.lane.b32.xlu0 %v8113, 20
  %v8155 = vpop.permute.xlu0 %8154
  %8156 = vrot.lane.b32.xlu0 %v8114, 20
  %v8157 = vpop.permute.xlu0 %8156
  %8158 = vrot.lane.b32.xlu0 %v8115, 20
  %v8159 = vpop.permute.xlu0 %8158
  %8160 = vrot.lane.b32.xlu0 %v8116, 20
  %v8161 = vpop.permute.xlu0 %8160
  %8162 = vrot.lane.b32.xlu0 %v8117, 20
  %v8163 = vpop.permute.xlu0 %8162
  %8164 = vrot.lane.b32.xlu0 %v8118, 20
  %v8165 = vpop.permute.xlu0 %8164
  %8166 = vrot.lane.b32.xlu0 %v8119, 20
  %v8167 = vpop.permute.xlu0 %8166
  %v8168 = vsel %vm561, %v8137, %v8139
  %v8169 = vsel %vm561, %v8141, %v8143
  %v8170 = vsel %vm561, %v8145, %v8147
  %v8171 = vsel %vm561, %v8149, %v8151
  %v8172 = vsel %vm561, %v8153, %v8155
  %v8173 = vsel %vm561, %v8157, %v8159
  %v8174 = vsel %vm561, %v8161, %v8163
  %v8175 = vsel %vm561, %v8165, %v8167
  %8192 = vst.msk [vmem:[#allocation2 + $0x10] sm:$0xff] %vm1346, %v8137
  %8193 = vst.msk [vmem:[#allocation2 + $0x18] sm:$0xff] %vm1348, %v8168
  %8194 = vst.msk [vmem:[#allocation2 + $0x20] sm:$0xff] %vm1346, %v8141
  %8195 = vst.msk [vmem:[#allocation2 + $0x28] sm:$0xff] %vm1348, %v8169
  %8196 = vst.msk [vmem:[#allocation2 + $0x30] sm:$0xff] %vm1346, %v8145
  %8197 = vst.msk [vmem:[#allocation2 + $0x38] sm:$0xff] %vm1348, %v8170
  %8198 = vst.msk [vmem:[#allocation2 + $0x40] sm:$0xff] %vm1346, %v8149
  %8199 = vst.msk [vmem:[#allocation2 + $0x48] sm:$0xff] %vm1348, %v8171
  %8200 = vst.msk [vmem:[#allocation2 + $0x50] sm:$0xff] %vm1346, %v8153
  %8201 = vst.msk [vmem:[#allocation2 + $0x58] sm:$0xff] %vm1348, %v8172
  %8202 = vst.msk [vmem:[#allocation2 + $0x60] sm:$0xff] %vm1346, %v8157
  %8203 = vst.msk [vmem:[#allocation2 + $0x68] sm:$0xff] %vm1348, %v8173
  %8204 = vst.msk [vmem:[#allocation2 + $0x70] sm:$0xff] %vm1346, %v8161
  %8205 = vst.msk [vmem:[#allocation2 + $0x78] sm:$0xff] %vm1348, %v8174
  %8206 = vst.msk [vmem:[#allocation2 + $0x80] sm:$0xff] %vm1346, %v8165
  %8207 = vst.msk [vmem:[#allocation2 + $0x88] sm:$0xff] %vm1348, %v8175
  %v8208 = vld [vmem:[#allocation2] sm:$0xff]
  %v8209 = vld [vmem:[#allocation2 + $0x8] sm:$0xff]
  %v8210 = vld [vmem:[#allocation2 + $0x10] sm:$0xff]
  %v8211 = vld [vmem:[#allocation2 + $0x18] sm:$0xff]
  %v8212 = vld [vmem:[#allocation2 + $0x20] sm:$0xff]
  %v8213 = vld [vmem:[#allocation2 + $0x28] sm:$0xff]
  %v8214 = vld [vmem:[#allocation2 + $0x30] sm:$0xff]
  %v8215 = vld [vmem:[#allocation2 + $0x38] sm:$0xff]
  %v8216 = vld [vmem:[#allocation2 + $0x40] sm:$0xff]
  %v8217 = vld [vmem:[#allocation2 + $0x48] sm:$0xff]
  %v8218 = vld [vmem:[#allocation2 + $0x50] sm:$0xff]
  %v8219 = vld [vmem:[#allocation2 + $0x58] sm:$0xff]
  %v8220 = vld [vmem:[#allocation2 + $0x60] sm:$0xff]
  %v8221 = vld [vmem:[#allocation2 + $0x68] sm:$0xff]
  %v8222 = vld [vmem:[#allocation2 + $0x70] sm:$0xff]
  %v8223 = vld [vmem:[#allocation2 + $0x78] sm:$0xff]
  %v8224 = vld [vmem:[#allocation2 + $0x80] sm:$0xff]
  %v8225 = vld [vmem:[#allocation2 + $0x88] sm:$0xff]
  %v8226 = vld [vmem:[#allocation2 + $0x90] sm:$0xff]
  %v8227 = vld [vmem:[#allocation2 + $0x98] sm:$0xff]
  %v8228 = vpack.c.bf16 %v8210, %v8208
  %v8229 = vpack.c.bf16 %v8211, %v8209
  %v8230 = vpack.c.bf16 %v8214, %v8212
  %v8231 = vpack.c.bf16 %v8215, %v8213
  %v8232 = vpack.c.bf16 %v8218, %v8216
  %v8233 = vpack.c.bf16 %v8219, %v8217
  %v8234 = vpack.c.bf16 %v8222, %v8220
  %v8235 = vpack.c.bf16 %v8223, %v8221
  %v8236 = vpack.c.bf16 %v8224, %v8224
  %v8237 = vpack.c.bf16 %v8225, %v8225
  %v8238 = vpack.c.bf16 %v8212, %v8210
  %v8239 = vpack.c.bf16 %v8213, %v8211
  %v8240 = vpack.c.bf16 %v8216, %v8214
  %v8241 = vpack.c.bf16 %v8217, %v8215
  %v8242 = vpack.c.bf16 %v8220, %v8218
  %v8243 = vpack.c.bf16 %v8221, %v8219
  %v8244 = vpack.c.bf16 %v8224, %v8222
  %v8245 = vpack.c.bf16 %v8225, %v8223
  %v8246 = vpack.c.bf16 %v8226, %v8226
  %v8247 = vpack.c.bf16 %v8227, %v8227
  %8258 = vrot.lane.b32.xlu0 %v8228, 52
  %v8259 = vpop.permute.xlu0 %8258
  %8260 = vrot.lane.b32.xlu0 %v8229, 52
  %v8261 = vpop.permute.xlu0 %8260
  %8262 = vrot.lane.b32.xlu0 %v8230, 52
  %v8263 = vpop.permute.xlu0 %8262
  %8264 = vrot.lane.b32.xlu0 %v8231, 52
  %v8265 = vpop.permute.xlu0 %8264
  %8266 = vrot.lane.b32.xlu0 %v8232, 52
  %v8267 = vpop.permute.xlu0 %8266
  %8268 = vrot.lane.b32.xlu0 %v8233, 52
  %v8269 = vpop.permute.xlu0 %8268
  %8270 = vrot.lane.b32.xlu0 %v8234, 52
  %v8271 = vpop.permute.xlu0 %8270
  %8272 = vrot.lane.b32.xlu0 %v8235, 52
  %v8273 = vpop.permute.xlu0 %8272
  %8274 = vrot.lane.b32.xlu0 %v8236, 52
  %v8275 = vpop.permute.xlu0 %8274
  %8276 = vrot.lane.b32.xlu0 %v8237, 52
  %v8277 = vpop.permute.xlu0 %8276
  %v8278 = vsel %vm1434, %v8259, %v8261
  %v8279 = vsel %vm1434, %v8263, %v8265
  %v8280 = vsel %vm1434, %v8267, %v8269
  %v8281 = vsel %vm1434, %v8271, %v8273
  %v8282 = vsel %vm1434, %v8275, %v8277
  %8283 = vrot.lane.b32.xlu0 %v8228, 104
  %v8284 = vpop.permute.xlu0 %8283
  %8285 = vrot.lane.b32.xlu0 %v8229, 104
  %v8286 = vpop.permute.xlu0 %8285
  %8287 = vrot.lane.b32.xlu0 %v8230, 104
  %v8288 = vpop.permute.xlu0 %8287
  %8289 = vrot.lane.b32.xlu0 %v8231, 104
  %v8290 = vpop.permute.xlu0 %8289
  %8291 = vrot.lane.b32.xlu0 %v8232, 104
  %v8292 = vpop.permute.xlu0 %8291
  %8293 = vrot.lane.b32.xlu0 %v8233, 104
  %v8294 = vpop.permute.xlu0 %8293
  %8295 = vrot.lane.b32.xlu0 %v8234, 104
  %v8296 = vpop.permute.xlu0 %8295
  %8297 = vrot.lane.b32.xlu0 %v8235, 104
  %v8298 = vpop.permute.xlu0 %8297
  %8299 = vrot.lane.b32.xlu0 %v8236, 104
  %v8300 = vpop.permute.xlu0 %8299
  %8301 = vrot.lane.b32.xlu0 %v8237, 104
  %v8302 = vpop.permute.xlu0 %8301
  %v8303 = vsel %vm1460, %v8284, %v8286
  %v8304 = vsel %vm1460, %v8288, %v8290
  %v8305 = vsel %vm1460, %v8292, %v8294
  %v8306 = vsel %vm1460, %v8296, %v8298
  %v8307 = vsel %vm1460, %v8300, %v8302
  %v8309 = vshrl.u32 %v8238, 16
  %v8311 = vrot.slane %v8309, 4
  %v8312 = vshll.u32 %v8238, 16
  %v8314 = vrot.slane %v8312, 5
  %v8315 = vor.u32 %v8311, %v8314
  %v8317 = vshrl.u32 %v8239, 16
  %v8319 = vrot.slane %v8317, 4
  %v8320 = vshll.u32 %v8239, 16
  %v8322 = vrot.slane %v8320, 5
  %v8323 = vor.u32 %v8319, %v8322
  %v8325 = vshrl.u32 %v8240, 16
  %v8327 = vrot.slane %v8325, 4
  %v8328 = vshll.u32 %v8240, 16
  %v8330 = vrot.slane %v8328, 5
  %v8331 = vor.u32 %v8327, %v8330
  %v8332 = vsel %vm714, %v8315, %v8331
  %v8334 = vshrl.u32 %v8241, 16
  %v8336 = vrot.slane %v8334, 4
  %v8337 = vshll.u32 %v8241, 16
  %v8339 = vrot.slane %v8337, 5
  %v8340 = vor.u32 %v8336, %v8339
  %v8341 = vsel %vm714, %v8323, %v8340
  %v8343 = vshrl.u32 %v8242, 16
  %v8345 = vrot.slane %v8343, 4
  %v8346 = vshll.u32 %v8242, 16
  %v8348 = vrot.slane %v8346, 5
  %v8349 = vor.u32 %v8345, %v8348
  %v8350 = vsel %vm714, %v8331, %v8349
  %v8352 = vshrl.u32 %v8243, 16
  %v8354 = vrot.slane %v8352, 4
  %v8355 = vshll.u32 %v8243, 16
  %v8357 = vrot.slane %v8355, 5
  %v8358 = vor.u32 %v8354, %v8357
  %v8359 = vsel %vm714, %v8340, %v8358
  %v8361 = vshrl.u32 %v8244, 16
  %v8363 = vrot.slane %v8361, 4
  %v8364 = vshll.u32 %v8244, 16
  %v8366 = vrot.slane %v8364, 5
  %v8367 = vor.u32 %v8363, %v8366
  %v8368 = vsel %vm714, %v8349, %v8367
  %v8370 = vshrl.u32 %v8245, 16
  %v8372 = vrot.slane %v8370, 4
  %v8373 = vshll.u32 %v8245, 16
  %v8375 = vrot.slane %v8373, 5
  %v8376 = vor.u32 %v8372, %v8375
  %v8377 = vsel %vm714, %v8358, %v8376
  %8378 = vrot.lane.b32.xlu0 %v8315, 88
  %v8379 = vpop.permute.xlu0 %8378
  %8380 = vrot.lane.b32.xlu0 %v8323, 88
  %v8381 = vpop.permute.xlu0 %8380
  %8382 = vrot.lane.b32.xlu0 %v8332, 88
  %v8383 = vpop.permute.xlu0 %8382
  %8384 = vrot.lane.b32.xlu0 %v8341, 88
  %v8385 = vpop.permute.xlu0 %8384
  %8386 = vrot.lane.b32.xlu0 %v8350, 88
  %v8387 = vpop.permute.xlu0 %8386
  %8388 = vrot.lane.b32.xlu0 %v8359, 88
  %v8389 = vpop.permute.xlu0 %8388
  %8390 = vrot.lane.b32.xlu0 %v8368, 88
  %v8391 = vpop.permute.xlu0 %8390
  %8392 = vrot.lane.b32.xlu0 %v8377, 88
  %v8393 = vpop.permute.xlu0 %8392
  %8394 = vrot.lane.b32.xlu0 %v8367, 88
  %v8395 = vpop.permute.xlu0 %8394
  %8396 = vrot.lane.b32.xlu0 %v8376, 88
  %v8397 = vpop.permute.xlu0 %8396
  %v8398 = vsel %vm1556, %v8379, %v8381
  %v8399 = vsel %vm1556, %v8383, %v8385
  %v8400 = vsel %vm1556, %v8387, %v8389
  %v8401 = vsel %vm1556, %v8391, %v8393
  %v8402 = vsel %vm1556, %v8395, %v8397
  %8403 = vrot.lane.b32.xlu0 %v8315, 12
  %v8404 = vpop.permute.xlu0 %8403
  %8405 = vrot.lane.b32.xlu0 %v8323, 12
  %v8406 = vpop.permute.xlu0 %8405
  %8407 = vrot.lane.b32.xlu0 %v8332, 12
  %v8408 = vpop.permute.xlu0 %8407
  %8409 = vrot.lane.b32.xlu0 %v8341, 12
  %v8410 = vpop.permute.xlu0 %8409
  %8411 = vrot.lane.b32.xlu0 %v8350, 12
  %v8412 = vpop.permute.xlu0 %8411
  %8413 = vrot.lane.b32.xlu0 %v8359, 12
  %v8414 = vpop.permute.xlu0 %8413
  %8415 = vrot.lane.b32.xlu0 %v8368, 12
  %v8416 = vpop.permute.xlu0 %8415
  %8417 = vrot.lane.b32.xlu0 %v8377, 12
  %v8418 = vpop.permute.xlu0 %8417
  %8419 = vrot.lane.b32.xlu0 %v8367, 12
  %v8420 = vpop.permute.xlu0 %8419
  %8421 = vrot.lane.b32.xlu0 %v8376, 12
  %v8422 = vpop.permute.xlu0 %8421
  %v8423 = vsel %vm1582, %v8404, %v8406
  %v8424 = vsel %vm1582, %v8408, %v8410
  %v8425 = vsel %vm1582, %v8412, %v8414
  %v8426 = vsel %vm1582, %v8416, %v8418
  %v8427 = vsel %vm1582, %v8420, %v8422
  %8428 = vrot.lane.b32.xlu0 %v8315, 64
  %v8429 = vpop.permute.xlu0 %8428
  %8430 = vrot.lane.b32.xlu0 %v8323, 64
  %v8431 = vpop.permute.xlu0 %8430
  %8432 = vrot.lane.b32.xlu0 %v8332, 64
  %v8433 = vpop.permute.xlu0 %8432
  %8434 = vrot.lane.b32.xlu0 %v8341, 64
  %v8435 = vpop.permute.xlu0 %8434
  %8436 = vrot.lane.b32.xlu0 %v8350, 64
  %v8437 = vpop.permute.xlu0 %8436
  %8438 = vrot.lane.b32.xlu0 %v8359, 64
  %v8439 = vpop.permute.xlu0 %8438
  %8440 = vrot.lane.b32.xlu0 %v8368, 64
  %v8441 = vpop.permute.xlu0 %8440
  %8442 = vrot.lane.b32.xlu0 %v8377, 64
  %v8443 = vpop.permute.xlu0 %8442
  %8444 = vrot.lane.b32.xlu0 %v8367, 64
  %v8445 = vpop.permute.xlu0 %8444
  %8446 = vrot.lane.b32.xlu0 %v8376, 64
  %v8447 = vpop.permute.xlu0 %8446
  %v8448 = vsel %vm1608, %v8429, %v8431
  %v8449 = vsel %vm1608, %v8433, %v8435
  %v8450 = vsel %vm1608, %v8437, %v8439
  %v8451 = vsel %vm1608, %v8441, %v8443
  %v8452 = vsel %vm1608, %v8445, %v8447
  %v8463 = vrot.slane %v8238, 5
  %v8464 = vrot.slane %v8239, 5
  %v8465 = vrot.slane %v8240, 5
  %v8466 = vsel %vm785, %v8463, %v8465
  %v8467 = vrot.slane %v8241, 5
  %v8468 = vsel %vm785, %v8464, %v8467
  %v8469 = vrot.slane %v8242, 5
  %v8470 = vsel %vm785, %v8465, %v8469
  %v8471 = vrot.slane %v8243, 5
  %v8472 = vsel %vm785, %v8467, %v8471
  %v8473 = vrot.slane %v8244, 5
  %v8474 = vsel %vm785, %v8469, %v8473
  %v8475 = vrot.slane %v8245, 5
  %v8476 = vsel %vm785, %v8471, %v8475
  %v8477 = vrot.slane %v8246, 5
  %v8478 = vsel %vm785, %v8473, %v8477
  %v8479 = vrot.slane %v8247, 5
  %v8480 = vsel %vm785, %v8475, %v8479
  %8481 = vrot.lane.b32.xlu0 %v8463, 48
  %v8482 = vpop.permute.xlu0 %8481
  %8483 = vrot.lane.b32.xlu0 %v8464, 48
  %v8484 = vpop.permute.xlu0 %8483
  %8485 = vrot.lane.b32.xlu0 %v8466, 48
  %v8486 = vpop.permute.xlu0 %8485
  %8487 = vrot.lane.b32.xlu0 %v8468, 48
  %v8488 = vpop.permute.xlu0 %8487
  %8489 = vrot.lane.b32.xlu0 %v8470, 48
  %v8490 = vpop.permute.xlu0 %8489
  %8491 = vrot.lane.b32.xlu0 %v8472, 48
  %v8492 = vpop.permute.xlu0 %8491
  %8493 = vrot.lane.b32.xlu0 %v8474, 48
  %v8494 = vpop.permute.xlu0 %8493
  %8495 = vrot.lane.b32.xlu0 %v8476, 48
  %v8496 = vpop.permute.xlu0 %8495
  %8497 = vrot.lane.b32.xlu0 %v8478, 48
  %v8498 = vpop.permute.xlu0 %8497
  %8499 = vrot.lane.b32.xlu0 %v8480, 48
  %v8500 = vpop.permute.xlu0 %8499
  %v8501 = vsel %vm1662, %v8482, %v8484
  %v8502 = vsel %vm1662, %v8486, %v8488
  %v8503 = vsel %vm1662, %v8490, %v8492
  %v8504 = vsel %vm1662, %v8494, %v8496
  %v8505 = vsel %vm1662, %v8498, %v8500
  %8506 = vrot.lane.b32.xlu0 %v8463, 100
  %v8507 = vpop.permute.xlu0 %8506
  %8508 = vrot.lane.b32.xlu0 %v8464, 100
  %v8509 = vpop.permute.xlu0 %8508
  %8510 = vrot.lane.b32.xlu0 %v8466, 100
  %v8511 = vpop.permute.xlu0 %8510
  %8512 = vrot.lane.b32.xlu0 %v8468, 100
  %v8513 = vpop.permute.xlu0 %8512
  %8514 = vrot.lane.b32.xlu0 %v8470, 100
  %v8515 = vpop.permute.xlu0 %8514
  %8516 = vrot.lane.b32.xlu0 %v8472, 100
  %v8517 = vpop.permute.xlu0 %8516
  %8518 = vrot.lane.b32.xlu0 %v8474, 100
  %v8519 = vpop.permute.xlu0 %8518
  %8520 = vrot.lane.b32.xlu0 %v8476, 100
  %v8521 = vpop.permute.xlu0 %8520
  %8522 = vrot.lane.b32.xlu0 %v8478, 100
  %v8523 = vpop.permute.xlu0 %8522
  %8524 = vrot.lane.b32.xlu0 %v8480, 100
  %v8525 = vpop.permute.xlu0 %8524
  %v8526 = vsel %vm1688, %v8507, %v8509
  %v8527 = vsel %vm1688, %v8511, %v8513
  %v8528 = vsel %vm1688, %v8515, %v8517
  %v8529 = vsel %vm1688, %v8519, %v8521
  %v8530 = vsel %vm1688, %v8523, %v8525
  %8531 = vrot.lane.b32.xlu0 %v8463, 24
  %v8532 = vpop.permute.xlu0 %8531
  %8533 = vrot.lane.b32.xlu0 %v8464, 24
  %v8534 = vpop.permute.xlu0 %8533
  %8535 = vrot.lane.b32.xlu0 %v8466, 24
  %v8536 = vpop.permute.xlu0 %8535
  %8537 = vrot.lane.b32.xlu0 %v8468, 24
  %v8538 = vpop.permute.xlu0 %8537
  %8539 = vrot.lane.b32.xlu0 %v8470, 24
  %v8540 = vpop.permute.xlu0 %8539
  %8541 = vrot.lane.b32.xlu0 %v8472, 24
  %v8542 = vpop.permute.xlu0 %8541
  %8543 = vrot.lane.b32.xlu0 %v8474, 24
  %v8544 = vpop.permute.xlu0 %8543
  %8545 = vrot.lane.b32.xlu0 %v8476, 24
  %v8546 = vpop.permute.xlu0 %8545
  %8547 = vrot.lane.b32.xlu0 %v8478, 24
  %v8548 = vpop.permute.xlu0 %8547
  %8549 = vrot.lane.b32.xlu0 %v8480, 24
  %v8550 = vpop.permute.xlu0 %8549
  %v8551 = vsel %vm1714, %v8532, %v8534
  %v8552 = vsel %vm1714, %v8536, %v8538
  %v8553 = vsel %vm1714, %v8540, %v8542
  %v8554 = vsel %vm1714, %v8544, %v8546
  %v8555 = vsel %vm1714, %v8548, %v8550
  %v8558 = vsel %vm1720, %v8229, %v8259
  %v8561 = vsel %vm1720, %v8231, %v8263
  %v8564 = vsel %vm1720, %v8233, %v8267
  %v8567 = vsel %vm1720, %v8235, %v8271
  %v8570 = vsel %vm1720, %v8237, %v8275
  %v8573 = vsel %vm1736, %v8261, %v8303
  %v8576 = vsel %vm1736, %v8265, %v8304
  %v8579 = vsel %vm1736, %v8269, %v8305
  %v8582 = vsel %vm1736, %v8273, %v8306
  %v8585 = vsel %vm1736, %v8277, %v8307
  %v8588 = vsel %vm1752, %v8286, %v8379
  %v8591 = vsel %vm1752, %v8290, %v8383
  %v8594 = vsel %vm1752, %v8294, %v8387
  %v8597 = vsel %vm1752, %v8298, %v8391
  %v8600 = vsel %vm1752, %v8302, %v8395
  %v8603 = vsel %vm599, %v8381, %v8404
  %v8606 = vsel %vm599, %v8385, %v8408
  %v8609 = vsel %vm599, %v8389, %v8412
  %v8612 = vsel %vm599, %v8393, %v8416
  %v8615 = vsel %vm599, %v8397, %v8420
  %v8618 = vsel %vm1783, %v8423, %v8429
  %v8621 = vsel %vm1783, %v8424, %v8433
  %v8624 = vsel %vm1783, %v8425, %v8437
  %v8627 = vsel %vm1783, %v8426, %v8441
  %v8630 = vsel %vm1783, %v8427, %v8445
  %v8633 = vsel %vm1799, %v8431, %v8482
  %v8636 = vsel %vm1799, %v8435, %v8486
  %v8639 = vsel %vm1799, %v8439, %v8490
  %v8642 = vsel %vm1799, %v8443, %v8494
  %v8645 = vsel %vm1799, %v8447, %v8498
  %v8648 = vsel %vm884, %v8501, %v8507
  %v8651 = vsel %vm884, %v8502, %v8511
  %v8654 = vsel %vm884, %v8503, %v8515
  %v8657 = vsel %vm884, %v8504, %v8519
  %v8660 = vsel %vm884, %v8505, %v8523
  %v8663 = vsel %vm1830, %v8509, %v8532
  %v8666 = vsel %vm1830, %v8513, %v8536
  %v8669 = vsel %vm1830, %v8517, %v8540
  %v8672 = vsel %vm1830, %v8521, %v8544
  %v8675 = vsel %vm1830, %v8525, %v8548
  %v8676 = vld [vmem:[%s19] sm:$0xff]
  %v8677 = vld [vmem:[%s19 + $0x8] sm:$0xff]
  %v8678 = vld [vmem:[%s19 + $0x10] sm:$0xff]
  %v8679 = vld [vmem:[%s19 + $0x18] sm:$0xff]
  %v8680 = vld [vmem:[%s19 + $0x20] sm:$0xff]
  %v8681 = vld [vmem:[%s19 + $0x28] sm:$0xff]
  %v8682 = vld [vmem:[%s19 + $0x30] sm:$0xff]
  %v8683 = vld [vmem:[%s19 + $0x38] sm:$0xff]
  %v8684 = vld [vmem:[%s19 + $0x40] sm:$0xff]
  %v8685 = vld [vmem:[%s19 + $0x48] sm:$0xff]
  %v8686 = vld [vmem:[%s19 + $0x50] sm:$0xff]
  %v8687 = vld [vmem:[%s19 + $0x58] sm:$0xff]
  %v8688 = vld [vmem:[%s19 + $0x60] sm:$0xff]
  %v8689 = vld [vmem:[%s19 + $0x68] sm:$0xff]
  %v8690 = vld [vmem:[%s19 + $0x70] sm:$0xff]
  %v8691 = vld [vmem:[%s19 + $0x78] sm:$0xff]
  %v8692 = vld [vmem:[%s19 + $0x80] sm:$0xff]
  %v8693 = vld [vmem:[%s19 + $0x88] sm:$0xff]
  %v8694 = vld [vmem:[%s19 + $0x90] sm:$0xff]
  %v8695 = vld [vmem:[%s19 + $0x98] sm:$0xff]
  %v8696 = vld [vmem:[%s19 + $0xa0] sm:$0xff]
  %v8697 = vld [vmem:[%s19 + $0xa8] sm:$0xff]
  %v8698 = vld [vmem:[%s19 + $0xb0] sm:$0xff]
  %v8699 = vld [vmem:[%s19 + $0xb8] sm:$0xff]
  %v8700 = vld [vmem:[%s19 + $0xc0] sm:$0xff]
  %v8701 = vld [vmem:[%s19 + $0xc8] sm:$0xff]
  %v8702 = vld [vmem:[%s19 + $0xd0] sm:$0xff]
  %v8703 = vld [vmem:[%s19 + $0xd8] sm:$0xff]
  %v8704 = vld [vmem:[%s19 + $0xe0] sm:$0xff]
  %v8705 = vld [vmem:[%s19 + $0xe8] sm:$0xff]
  %v8706 = vld [vmem:[%s19 + $0xf0] sm:$0xff]
  %v8707 = vld [vmem:[%s19 + $0xf8] sm:$0xff]
  %v8708 = vld [vmem:[%s19 + $0x100] sm:$0xff]
  %v8709 = vld [vmem:[%s19 + $0x108] sm:$0xff]
  %v8710 = vld [vmem:[%s19 + $0x110] sm:$0xff]
  %v8711 = vld [vmem:[%s19 + $0x118] sm:$0xff]
  %v8712 = vld [vmem:[%s19 + $0x120] sm:$0xff]
  %v8713 = vld [vmem:[%s19 + $0x128] sm:$0xff]
  %v8714 = vld [vmem:[%s19 + $0x130] sm:$0xff]
  %v8715 = vld [vmem:[%s19 + $0x138] sm:$0xff]
  %v8716 = vld [vmem:[%s19 + $0x140] sm:$0xff]
  %v8717 = vld [vmem:[%s19 + $0x148] sm:$0xff]
  %v8718 = vld [vmem:[%s19 + $0x150] sm:$0xff]
  %v8719 = vld [vmem:[%s19 + $0x158] sm:$0xff]
  %v8720 = vld [vmem:[%s19 + $0x160] sm:$0xff]
  %v8721 = vld [vmem:[%s19 + $0x168] sm:$0xff]
  %v8722 = vld [vmem:[%s19 + $0x170] sm:$0xff]
  %v8723 = vld [vmem:[%s19 + $0x178] sm:$0xff]
  %v8724 = vld [vmem:[%s19 + $0x180] sm:$0xff]
  %v8725 = vld [vmem:[%s19 + $0x188] sm:$0xff]
  %v8726 = vld [vmem:[%s19 + $0x190] sm:$0xff]
  %v8727 = vld [vmem:[%s19 + $0x198] sm:$0xff]
  %v8728 = vld [vmem:[%s19 + $0x1a0] sm:$0xff]
  %v8729 = vld [vmem:[%s19 + $0x1a8] sm:$0xff]
  %v8730 = vld [vmem:[%s19 + $0x1b0] sm:$0xff]
  %v8731 = vld [vmem:[%s19 + $0x1b8] sm:$0xff]
  %v8732 = vld [vmem:[%s19 + $0x1c0] sm:$0xff]
  %v8733 = vld [vmem:[%s19 + $0x1c8] sm:$0xff]
  %v8734 = vld [vmem:[%s19 + $0x1d0] sm:$0xff]
  %v8735 = vld [vmem:[%s19 + $0x1d8] sm:$0xff]
  %v8736 = vld [vmem:[%s19 + $0x1e0] sm:$0xff]
  %v8737 = vld [vmem:[%s19 + $0x1e8] sm:$0xff]
  %v8738 = vld [vmem:[%s19 + $0x1f0] sm:$0xff]
  %v8739 = vld [vmem:[%s19 + $0x1f8] sm:$0xff]
  %v8740 = vld [vmem:[%s19 + $0x200] sm:$0xff]
  %v8741 = vld [vmem:[%s19 + $0x208] sm:$0xff]
  %v8742 = vld [vmem:[%s19 + $0x210] sm:$0xff]
  %v8743 = vld [vmem:[%s19 + $0x218] sm:$0xff]
  %v8744 = vld [vmem:[%s19 + $0x220] sm:$0xff]
  %v8745 = vld [vmem:[%s19 + $0x228] sm:$0xff]
  %v8746 = vld [vmem:[%s19 + $0x230] sm:$0xff]
  %v8747 = vld [vmem:[%s19 + $0x238] sm:$0xff]
  %v8748 = vld [vmem:[%s19 + $0x240] sm:$0xff]
  %v8749 = vld [vmem:[%s19 + $0x248] sm:$0xff]
  %v8750 = vld [vmem:[%s19 + $0x250] sm:$0xff]
  %v8751 = vld [vmem:[%s19 + $0x258] sm:$0xff]
  %v8752 = vld [vmem:[%s19 + $0x260] sm:$0xff]
  %v8753 = vld [vmem:[%s19 + $0x268] sm:$0xff]
  %v8754 = vld [vmem:[%s19 + $0x270] sm:$0xff]
  %v8755 = vld [vmem:[%s19 + $0x278] sm:$0xff]
  %v8756 = vld [vmem:[%s19 + $0x280] sm:$0xff]
  %v8757 = vld [vmem:[%s19 + $0x288] sm:$0xff]
  %v8758 = vld [vmem:[%s19 + $0x290] sm:$0xff]
  %v8759 = vld [vmem:[%s19 + $0x298] sm:$0xff]
  %v8760 = vld [vmem:[%s19 + $0x2a0] sm:$0xff]
  %v8761 = vld [vmem:[%s19 + $0x2a8] sm:$0xff]
  %v8762 = vld [vmem:[%s19 + $0x2b0] sm:$0xff]
  %v8763 = vld [vmem:[%s19 + $0x2b8] sm:$0xff]
  %v8764 = vld [vmem:[%s19 + $0x2c0] sm:$0xff]
  %v8765 = vld [vmem:[%s19 + $0x2c8] sm:$0xff]
  %v8766 = vld [vmem:[%s19 + $0x2d0] sm:$0xff]
  %v8767 = vld [vmem:[%s19 + $0x2d8] sm:$0xff]
  %v8768 = vld [vmem:[%s19 + $0x2e0] sm:$0xff]
  %v8769 = vld [vmem:[%s19 + $0x2e8] sm:$0xff]
  %v8770 = vld [vmem:[%s19 + $0x2f0] sm:$0xff]
  %v8771 = vld [vmem:[%s19 + $0x2f8] sm:$0xff]
  %v8772 = vld [vmem:[%s19 + $0x300] sm:$0xff]
  %v8773 = vld [vmem:[%s19 + $0x308] sm:$0xff]
  %v8774 = vld [vmem:[%s19 + $0x310] sm:$0xff]
  %v8775 = vld [vmem:[%s19 + $0x318] sm:$0xff]
  %v8776 = vld [vmem:[%s19 + $0x320] sm:$0xff]
  %v8777 = vld [vmem:[%s19 + $0x328] sm:$0xff]
  %v8778 = vld [vmem:[%s19 + $0x330] sm:$0xff]
  %v8779 = vld [vmem:[%s19 + $0x338] sm:$0xff]
  %v8780 = vld [vmem:[%s19 + $0x340] sm:$0xff]
  %v8781 = vld [vmem:[%s19 + $0x348] sm:$0xff]
  %v8782 = vld [vmem:[%s19 + $0x350] sm:$0xff]
  %v8783 = vld [vmem:[%s19 + $0x358] sm:$0xff]
  %v8784 = vld [vmem:[%s19 + $0x360] sm:$0xff]
  %v8785 = vld [vmem:[%s19 + $0x368] sm:$0xff]
  %v8786 = vld [vmem:[%s19 + $0x370] sm:$0xff]
  %v8787 = vld [vmem:[%s19 + $0x378] sm:$0xff]
  %v8788 = vld [vmem:[%s19 + $0x380] sm:$0xff]
  %v8789 = vld [vmem:[%s19 + $0x388] sm:$0xff]
  %v8790 = vld [vmem:[%s19 + $0x390] sm:$0xff]
  %v8791 = vld [vmem:[%s19 + $0x398] sm:$0xff]
  %v8792 = vld [vmem:[%s19 + $0x3a0] sm:$0xff]
  %v8793 = vld [vmem:[%s19 + $0x3a8] sm:$0xff]
  %v8794 = vld [vmem:[%s19 + $0x3b0] sm:$0xff]
  %v8795 = vld [vmem:[%s19 + $0x3b8] sm:$0xff]
  %v8796 = vld [vmem:[%s19 + $0x3c0] sm:$0xff]
  %v8797 = vld [vmem:[%s19 + $0x3c8] sm:$0xff]
  %v8798 = vld [vmem:[%s19 + $0x3d0] sm:$0xff]
  %v8799 = vld [vmem:[%s19 + $0x3d8] sm:$0xff]
  %v8800 = vld [vmem:[%s19 + $0x3e0] sm:$0xff]
  %v8801 = vld [vmem:[%s19 + $0x3e8] sm:$0xff]
  %v8802 = vld [vmem:[%s19 + $0x3f0] sm:$0xff]
  %v8803 = vld [vmem:[%s19 + $0x3f8] sm:$0xff]
  %v8804 = vld [vmem:[%s19 + $0x400] sm:$0xff]
  %v8805 = vld [vmem:[%s19 + $0x408] sm:$0xff]
  %v8806 = vld [vmem:[%s19 + $0x410] sm:$0xff]
  %v8807 = vld [vmem:[%s19 + $0x418] sm:$0xff]
  %v8808 = vld [vmem:[%s19 + $0x420] sm:$0xff]
  %v8809 = vld [vmem:[%s19 + $0x428] sm:$0xff]
  %v8810 = vld [vmem:[%s19 + $0x430] sm:$0xff]
  %v8811 = vld [vmem:[%s19 + $0x438] sm:$0xff]
  %v8812 = vld [vmem:[%s19 + $0x440] sm:$0xff]
  %v8813 = vld [vmem:[%s19 + $0x448] sm:$0xff]
  %v8814 = vld [vmem:[%s19 + $0x450] sm:$0xff]
  %v8815 = vld [vmem:[%s19 + $0x458] sm:$0xff]
  %v8816 = vld [vmem:[%s19 + $0x460] sm:$0xff]
  %v8817 = vld [vmem:[%s19 + $0x468] sm:$0xff]
  %v8818 = vld [vmem:[%s19 + $0x470] sm:$0xff]
  %v8819 = vld [vmem:[%s19 + $0x478] sm:$0xff]
  %v8820 = vld [vmem:[%s19 + $0x480] sm:$0xff]
  %v8821 = vld [vmem:[%s19 + $0x488] sm:$0xff]
  %v8822 = vld [vmem:[%s19 + $0x490] sm:$0xff]
  %v8823 = vld [vmem:[%s19 + $0x498] sm:$0xff]
  %v8824 = vld [vmem:[%s19 + $0x4a0] sm:$0xff]
  %v8825 = vld [vmem:[%s19 + $0x4a8] sm:$0xff]
  %v8826 = vld [vmem:[%s19 + $0x4b0] sm:$0xff]
  %v8827 = vld [vmem:[%s19 + $0x4b8] sm:$0xff]
  %v8828 = vld [vmem:[%s19 + $0x4c0] sm:$0xff]
  %v8829 = vld [vmem:[%s19 + $0x4c8] sm:$0xff]
  %v8830 = vld [vmem:[%s19 + $0x4d0] sm:$0xff]
  %v8831 = vld [vmem:[%s19 + $0x4d8] sm:$0xff]
  %v8832 = vld [vmem:[%s19 + $0x4e0] sm:$0xff]
  %v8833 = vld [vmem:[%s19 + $0x4e8] sm:$0xff]
  %v8834 = vld [vmem:[%s19 + $0x4f0] sm:$0xff]
  %v8835 = vld [vmem:[%s19 + $0x4f8] sm:$0xff]
  %v8836 = vld [vmem:[%s19 + $0x500] sm:$0xff]
  %v8837 = vld [vmem:[%s19 + $0x508] sm:$0xff]
  %v8838 = vld [vmem:[%s19 + $0x510] sm:$0xff]
  %v8839 = vld [vmem:[%s19 + $0x518] sm:$0xff]
  %v8840 = vld [vmem:[%s19 + $0x520] sm:$0xff]
  %v8841 = vld [vmem:[%s19 + $0x528] sm:$0xff]
  %v8842 = vld [vmem:[%s19 + $0x530] sm:$0xff]
  %v8843 = vld [vmem:[%s19 + $0x538] sm:$0xff]
  %v8844 = vld [vmem:[%s19 + $0x540] sm:$0xff]
  %v8845 = vld [vmem:[%s19 + $0x548] sm:$0xff]
  %v8846 = vld [vmem:[%s19 + $0x550] sm:$0xff]
  %v8847 = vld [vmem:[%s19 + $0x558] sm:$0xff]
  %v8848 = vld [vmem:[%s19 + $0x560] sm:$0xff]
  %v8849 = vld [vmem:[%s19 + $0x568] sm:$0xff]
  %v8850 = vld [vmem:[%s19 + $0x570] sm:$0xff]
  %v8851 = vld [vmem:[%s19 + $0x578] sm:$0xff]
  %v8852 = vld [vmem:[%s19 + $0x580] sm:$0xff]
  %v8853 = vld [vmem:[%s19 + $0x588] sm:$0xff]
  %v8854 = vld [vmem:[%s19 + $0x590] sm:$0xff]
  %v8855 = vld [vmem:[%s19 + $0x598] sm:$0xff]
  %v8856 = vld [vmem:[%s19 + $0x5a0] sm:$0xff]
  %v8857 = vld [vmem:[%s19 + $0x5a8] sm:$0xff]
  %v8858 = vld [vmem:[%s19 + $0x5b0] sm:$0xff]
  %v8859 = vld [vmem:[%s19 + $0x5b8] sm:$0xff]
  %v8860 = vld [vmem:[%s19 + $0x5c0] sm:$0xff]
  %v8861 = vld [vmem:[%s19 + $0x5c8] sm:$0xff]
  %v8862 = vld [vmem:[%s19 + $0x5d0] sm:$0xff]
  %v8863 = vld [vmem:[%s19 + $0x5d8] sm:$0xff]
  %v8864 = vld [vmem:[%s19 + $0x5e0] sm:$0xff]
  %v8865 = vld [vmem:[%s19 + $0x5e8] sm:$0xff]
  %v8866 = vld [vmem:[%s19 + $0x5f0] sm:$0xff]
  %v8867 = vld [vmem:[%s19 + $0x5f8] sm:$0xff]
  %v8868 = vld [vmem:[%s19 + $0x600] sm:$0xff]
  %v8869 = vld [vmem:[%s19 + $0x608] sm:$0xff]
  %v8870 = vld [vmem:[%s19 + $0x610] sm:$0xff]
  %v8871 = vld [vmem:[%s19 + $0x618] sm:$0xff]
  %v8872 = vld [vmem:[%s19 + $0x620] sm:$0xff]
  %v8873 = vld [vmem:[%s19 + $0x628] sm:$0xff]
  %v8874 = vld [vmem:[%s19 + $0x630] sm:$0xff]
  %v8875 = vld [vmem:[%s19 + $0x638] sm:$0xff]
  %v8876 = vld [vmem:[%s19 + $0x640] sm:$0xff]
  %v8877 = vld [vmem:[%s19 + $0x648] sm:$0xff]
  %v8878 = vld [vmem:[%s19 + $0x650] sm:$0xff]
  %v8879 = vld [vmem:[%s19 + $0x658] sm:$0xff]
  %v8880 = vld [vmem:[%s19 + $0x660] sm:$0xff]
  %v8881 = vld [vmem:[%s19 + $0x668] sm:$0xff]
  %v8882 = vld [vmem:[%s19 + $0x670] sm:$0xff]
  %v8883 = vld [vmem:[%s19 + $0x678] sm:$0xff]
  %v8884 = vld [vmem:[%s19 + $0x680] sm:$0xff]
  %v8885 = vld [vmem:[%s19 + $0x688] sm:$0xff]
  %v8886 = vld [vmem:[%s19 + $0x690] sm:$0xff]
  %v8887 = vld [vmem:[%s19 + $0x698] sm:$0xff]
  %v8888 = vld [vmem:[%s19 + $0x6a0] sm:$0xff]
  %v8889 = vld [vmem:[%s19 + $0x6a8] sm:$0xff]
  %v8890 = vld [vmem:[%s19 + $0x6b0] sm:$0xff]
  %v8891 = vld [vmem:[%s19 + $0x6b8] sm:$0xff]
  %v8892 = vld [vmem:[%s19 + $0x6c0] sm:$0xff]
  %v8893 = vld [vmem:[%s19 + $0x6c8] sm:$0xff]
  %v8894 = vld [vmem:[%s19 + $0x6d0] sm:$0xff]
  %v8895 = vld [vmem:[%s19 + $0x6d8] sm:$0xff]
  %v8896 = vld [vmem:[%s19 + $0x6e0] sm:$0xff]
  %v8897 = vld [vmem:[%s19 + $0x6e8] sm:$0xff]
  %v8898 = vld [vmem:[%s19 + $0x6f0] sm:$0xff]
  %v8899 = vld [vmem:[%s19 + $0x6f8] sm:$0xff]
  %v8900 = vld [vmem:[%s19 + $0x700] sm:$0xff]
  %v8901 = vld [vmem:[%s21] sm:$0x3]
  %v8903 = vlaneseq
  %v8904 = vshrl.u32 %v8903, 7
  %v8905 = vsub.s32 0, %v8904
  %v8906 = vrot.slane %v8901, %v8905
  %v8907 = vlaneseq
  %v8908 = vshrl.u32 %v8907, 7
  %v8909 = vsub.s32 1, %v8908
  %v8910 = vrot.slane %v8901, %v8909
  %v8914 = vshrl.u32 %v8228, 16
  %v8916 = vrot.slane %v8914, 3
  %v8917 = vshll.u32 %v8228, 16
  %v8919 = vrot.slane %v8917, 4
  %v8920 = vor.u32 %v8916, %v8919
  %v8922 = vshrl.u32 %v8230, 16
  %v8924 = vrot.slane %v8922, 3
  %v8925 = vshll.u32 %v8230, 16
  %v8927 = vrot.slane %v8925, 4
  %v8928 = vor.u32 %v8924, %v8927
  %v8929 = vsel %vm951, %v8920, %v8928
  %v8930 = vshrl.u32 %v8558, 16
  %v8932 = vrot.slane %v8930, 3
  %v8933 = vshll.u32 %v8558, 16
  %v8935 = vrot.slane %v8933, 4
  %v8936 = vor.u32 %v8932, %v8935
  %v8937 = vshrl.u32 %v8561, 16
  %v8939 = vrot.slane %v8937, 3
  %v8940 = vshll.u32 %v8561, 16
  %v8942 = vrot.slane %v8940, 4
  %v8943 = vor.u32 %v8939, %v8942
  %v8944 = vsel %vm951, %v8936, %v8943
  %v8946 = vshrl.u32 %v8278, 16
  %v8948 = vrot.slane %v8946, 3
  %v8949 = vshll.u32 %v8278, 16
  %v8951 = vrot.slane %v8949, 4
  %v8952 = vor.u32 %v8948, %v8951
  %v8954 = vshrl.u32 %v8279, 16
  %v8956 = vrot.slane %v8954, 3
  %v8957 = vshll.u32 %v8279, 16
  %v8959 = vrot.slane %v8957, 4
  %v8960 = vor.u32 %v8956, %v8959
  %v8961 = vsel %vm951, %v8952, %v8960
  %v8962 = vshrl.u32 %v8573, 16
  %v8964 = vrot.slane %v8962, 3
  %v8965 = vshll.u32 %v8573, 16
  %v8967 = vrot.slane %v8965, 4
  %v8968 = vor.u32 %v8964, %v8967
  %v8969 = vshrl.u32 %v8576, 16
  %v8971 = vrot.slane %v8969, 3
  %v8972 = vshll.u32 %v8576, 16
  %v8974 = vrot.slane %v8972, 4
  %v8975 = vor.u32 %v8971, %v8974
  %v8976 = vsel %vm951, %v8968, %v8975
  %v8977 = vshrl.u32 %v8588, 16
  %v8979 = vrot.slane %v8977, 3
  %v8980 = vshll.u32 %v8588, 16
  %v8982 = vrot.slane %v8980, 4
  %v8983 = vor.u32 %v8979, %v8982
  %v8984 = vshrl.u32 %v8591, 16
  %v8986 = vrot.slane %v8984, 3
  %v8987 = vshll.u32 %v8591, 16
  %v8989 = vrot.slane %v8987, 4
  %v8990 = vor.u32 %v8986, %v8989
  %v8991 = vsel %vm951, %v8983, %v8990
  %v8993 = vshrl.u32 %v8398, 16
  %v8995 = vrot.slane %v8993, 3
  %v8996 = vshll.u32 %v8398, 16
  %v8998 = vrot.slane %v8996, 4
  %v8999 = vor.u32 %v8995, %v8998
  %v9001 = vshrl.u32 %v8399, 16
  %v9003 = vrot.slane %v9001, 3
  %v9004 = vshll.u32 %v8399, 16
  %v9006 = vrot.slane %v9004, 4
  %v9007 = vor.u32 %v9003, %v9006
  %v9008 = vsel %vm951, %v8999, %v9007
  %v9009 = vshrl.u32 %v8603, 16
  %v9011 = vrot.slane %v9009, 3
  %v9012 = vshll.u32 %v8603, 16
  %v9014 = vrot.slane %v9012, 4
  %v9015 = vor.u32 %v9011, %v9014
  %v9016 = vshrl.u32 %v8606, 16
  %v9018 = vrot.slane %v9016, 3
  %v9019 = vshll.u32 %v8606, 16
  %v9021 = vrot.slane %v9019, 4
  %v9022 = vor.u32 %v9018, %v9021
  %v9023 = vsel %vm951, %v9015, %v9022
  %v9024 = vshrl.u32 %v8618, 16
  %v9026 = vrot.slane %v9024, 3
  %v9027 = vshll.u32 %v8618, 16
  %v9029 = vrot.slane %v9027, 4
  %v9030 = vor.u32 %v9026, %v9029
  %v9031 = vshrl.u32 %v8621, 16
  %v9033 = vrot.slane %v9031, 3
  %v9034 = vshll.u32 %v8621, 16
  %v9036 = vrot.slane %v9034, 4
  %v9037 = vor.u32 %v9033, %v9036
  %v9038 = vsel %vm951, %v9030, %v9037
  %v9040 = vshrl.u32 %v8448, 16
  %v9042 = vrot.slane %v9040, 3
  %v9043 = vshll.u32 %v8448, 16
  %v9045 = vrot.slane %v9043, 4
  %v9046 = vor.u32 %v9042, %v9045
  %v9048 = vshrl.u32 %v8449, 16
  %v9050 = vrot.slane %v9048, 3
  %v9051 = vshll.u32 %v8449, 16
  %v9053 = vrot.slane %v9051, 4
  %v9054 = vor.u32 %v9050, %v9053
  %v9055 = vsel %vm951, %v9046, %v9054
  %v9056 = vshrl.u32 %v8633, 16
  %v9058 = vrot.slane %v9056, 3
  %v9059 = vshll.u32 %v8633, 16
  %v9061 = vrot.slane %v9059, 4
  %v9062 = vor.u32 %v9058, %v9061
  %v9063 = vshrl.u32 %v8636, 16
  %v9065 = vrot.slane %v9063, 3
  %v9066 = vshll.u32 %v8636, 16
  %v9068 = vrot.slane %v9066, 4
  %v9069 = vor.u32 %v9065, %v9068
  %v9070 = vsel %vm951, %v9062, %v9069
  %v9071 = vshrl.u32 %v8648, 16
  %v9073 = vrot.slane %v9071, 3
  %v9074 = vshll.u32 %v8648, 16
  %v9076 = vrot.slane %v9074, 4
  %v9077 = vor.u32 %v9073, %v9076
  %v9078 = vshrl.u32 %v8651, 16
  %v9080 = vrot.slane %v9078, 3
  %v9081 = vshll.u32 %v8651, 16
  %v9083 = vrot.slane %v9081, 4
  %v9084 = vor.u32 %v9080, %v9083
  %v9085 = vsel %vm951, %v9077, %v9084
  %v9087 = vshrl.u32 %v8526, 16
  %v9089 = vrot.slane %v9087, 3
  %v9090 = vshll.u32 %v8526, 16
  %v9092 = vrot.slane %v9090, 4
  %v9093 = vor.u32 %v9089, %v9092
  %v9095 = vshrl.u32 %v8527, 16
  %v9097 = vrot.slane %v9095, 3
  %v9098 = vshll.u32 %v8527, 16
  %v9100 = vrot.slane %v9098, 4
  %v9101 = vor.u32 %v9097, %v9100
  %v9102 = vsel %vm951, %v9093, %v9101
  %v9103 = vshrl.u32 %v8663, 16
  %v9105 = vrot.slane %v9103, 3
  %v9106 = vshll.u32 %v8663, 16
  %v9108 = vrot.slane %v9106, 4
  %v9109 = vor.u32 %v9105, %v9108
  %v9110 = vshrl.u32 %v8666, 16
  %v9112 = vrot.slane %v9110, 3
  %v9113 = vshll.u32 %v8666, 16
  %v9115 = vrot.slane %v9113, 4
  %v9116 = vor.u32 %v9112, %v9115
  %v9117 = vsel %vm951, %v9109, %v9116
  %v9119 = vshrl.u32 %v8551, 16
  %v9121 = vrot.slane %v9119, 3
  %v9122 = vshll.u32 %v8551, 16
  %v9124 = vrot.slane %v9122, 4
  %v9125 = vor.u32 %v9121, %v9124
  %v9127 = vshrl.u32 %v8552, 16
  %v9129 = vrot.slane %v9127, 3
  %v9130 = vshll.u32 %v8552, 16
  %v9132 = vrot.slane %v9130, 4
  %v9133 = vor.u32 %v9129, %v9132
  %v9134 = vsel %vm951, %v9125, %v9133
  %v9136 = vshrl.u32 %v8534, 16
  %v9138 = vrot.slane %v9136, 3
  %v9139 = vshll.u32 %v8534, 16
  %v9141 = vrot.slane %v9139, 4
  %v9142 = vor.u32 %v9138, %v9141
  %v9144 = vshrl.u32 %v8538, 16
  %v9146 = vrot.slane %v9144, 3
  %v9147 = vshll.u32 %v8538, 16
  %v9149 = vrot.slane %v9147, 4
  %v9150 = vor.u32 %v9146, %v9149
  %v9151 = vsel %vm951, %v9142, %v9150
  %v9153 = vshrl.u32 %v8232, 16
  %v9155 = vrot.slane %v9153, 3
  %v9156 = vshll.u32 %v8232, 16
  %v9158 = vrot.slane %v9156, 4
  %v9159 = vor.u32 %v9155, %v9158
  %v9160 = vsel %vm951, %v8928, %v9159
  %v9161 = vshrl.u32 %v8564, 16
  %v9163 = vrot.slane %v9161, 3
  %v9164 = vshll.u32 %v8564, 16
  %v9166 = vrot.slane %v9164, 4
  %v9167 = vor.u32 %v9163, %v9166
  %v9168 = vsel %vm951, %v8943, %v9167
  %v9170 = vshrl.u32 %v8280, 16
  %v9172 = vrot.slane %v9170, 3
  %v9173 = vshll.u32 %v8280, 16
  %v9175 = vrot.slane %v9173, 4
  %v9176 = vor.u32 %v9172, %v9175
  %v9177 = vsel %vm951, %v8960, %v9176
  %v9178 = vshrl.u32 %v8579, 16
  %v9180 = vrot.slane %v9178, 3
  %v9181 = vshll.u32 %v8579, 16
  %v9183 = vrot.slane %v9181, 4
  %v9184 = vor.u32 %v9180, %v9183
  %v9185 = vsel %vm951, %v8975, %v9184
  %v9186 = vshrl.u32 %v8594, 16
  %v9188 = vrot.slane %v9186, 3
  %v9189 = vshll.u32 %v8594, 16
  %v9191 = vrot.slane %v9189, 4
  %v9192 = vor.u32 %v9188, %v9191
  %v9193 = vsel %vm951, %v8990, %v9192
  %v9195 = vshrl.u32 %v8400, 16
  %v9197 = vrot.slane %v9195, 3
  %v9198 = vshll.u32 %v8400, 16
  %v9200 = vrot.slane %v9198, 4
  %v9201 = vor.u32 %v9197, %v9200
  %v9202 = vsel %vm951, %v9007, %v9201
  %v9203 = vshrl.u32 %v8609, 16
  %v9205 = vrot.slane %v9203, 3
  %v9206 = vshll.u32 %v8609, 16
  %v9208 = vrot.slane %v9206, 4
  %v9209 = vor.u32 %v9205, %v9208
  %v9210 = vsel %vm951, %v9022, %v9209
  %v9211 = vshrl.u32 %v8624, 16
  %v9213 = vrot.slane %v9211, 3
  %v9214 = vshll.u32 %v8624, 16
  %v9216 = vrot.slane %v9214, 4
  %v9217 = vor.u32 %v9213, %v9216
  %v9218 = vsel %vm951, %v9037, %v9217
  %v9220 = vshrl.u32 %v8450, 16
  %v9222 = vrot.slane %v9220, 3
  %v9223 = vshll.u32 %v8450, 16
  %v9225 = vrot.slane %v9223, 4
  %v9226 = vor.u32 %v9222, %v9225
  %v9227 = vsel %vm951, %v9054, %v9226
  %v9228 = vshrl.u32 %v8639, 16
  %v9230 = vrot.slane %v9228, 3
  %v9231 = vshll.u32 %v8639, 16
  %v9233 = vrot.slane %v9231, 4
  %v9234 = vor.u32 %v9230, %v9233
  %v9235 = vsel %vm951, %v9069, %v9234
  %v9236 = vshrl.u32 %v8654, 16
  %v9238 = vrot.slane %v9236, 3
  %v9239 = vshll.u32 %v8654, 16
  %v9241 = vrot.slane %v9239, 4
  %v9242 = vor.u32 %v9238, %v9241
  %v9243 = vsel %vm951, %v9084, %v9242
  %v9245 = vshrl.u32 %v8528, 16
  %v9247 = vrot.slane %v9245, 3
  %v9248 = vshll.u32 %v8528, 16
  %v9250 = vrot.slane %v9248, 4
  %v9251 = vor.u32 %v9247, %v9250
  %v9252 = vsel %vm951, %v9101, %v9251
  %v9253 = vshrl.u32 %v8669, 16
  %v9255 = vrot.slane %v9253, 3
  %v9256 = vshll.u32 %v8669, 16
  %v9258 = vrot.slane %v9256, 4
  %v9259 = vor.u32 %v9255, %v9258
  %v9260 = vsel %vm951, %v9116, %v9259
  %v9262 = vshrl.u32 %v8553, 16
  %v9264 = vrot.slane %v9262, 3
  %v9265 = vshll.u32 %v8553, 16
  %v9267 = vrot.slane %v9265, 4
  %v9268 = vor.u32 %v9264, %v9267
  %v9269 = vsel %vm951, %v9133, %v9268
  %v9271 = vshrl.u32 %v8542, 16
  %v9273 = vrot.slane %v9271, 3
  %v9274 = vshll.u32 %v8542, 16
  %v9276 = vrot.slane %v9274, 4
  %v9277 = vor.u32 %v9273, %v9276
  %v9278 = vsel %vm951, %v9150, %v9277
  %v9280 = vshrl.u32 %v8234, 16
  %v9282 = vrot.slane %v9280, 3
  %v9283 = vshll.u32 %v8234, 16
  %v9285 = vrot.slane %v9283, 4
  %v9286 = vor.u32 %v9282, %v9285
  %v9287 = vsel %vm951, %v9159, %v9286
  %v9288 = vshrl.u32 %v8567, 16
  %v9290 = vrot.slane %v9288, 3
  %v9291 = vshll.u32 %v8567, 16
  %v9293 = vrot.slane %v9291, 4
  %v9294 = vor.u32 %v9290, %v9293
  %v9295 = vsel %vm951, %v9167, %v9294
  %v9297 = vshrl.u32 %v8281, 16
  %v9299 = vrot.slane %v9297, 3
  %v9300 = vshll.u32 %v8281, 16
  %v9302 = vrot.slane %v9300, 4
  %v9303 = vor.u32 %v9299, %v9302
  %v9304 = vsel %vm951, %v9176, %v9303
  %v9305 = vshrl.u32 %v8582, 16
  %v9307 = vrot.slane %v9305, 3
  %v9308 = vshll.u32 %v8582, 16
  %v9310 = vrot.slane %v9308, 4
  %v9311 = vor.u32 %v9307, %v9310
  %v9312 = vsel %vm951, %v9184, %v9311
  %v9313 = vshrl.u32 %v8597, 16
  %v9315 = vrot.slane %v9313, 3
  %v9316 = vshll.u32 %v8597, 16
  %v9318 = vrot.slane %v9316, 4
  %v9319 = vor.u32 %v9315, %v9318
  %v9320 = vsel %vm951, %v9192, %v9319
  %v9322 = vshrl.u32 %v8401, 16
  %v9324 = vrot.slane %v9322, 3
  %v9325 = vshll.u32 %v8401, 16
  %v9327 = vrot.slane %v9325, 4
  %v9328 = vor.u32 %v9324, %v9327
  %v9329 = vsel %vm951, %v9201, %v9328
  %v9330 = vshrl.u32 %v8612, 16
  %v9332 = vrot.slane %v9330, 3
  %v9333 = vshll.u32 %v8612, 16
  %v9335 = vrot.slane %v9333, 4
  %v9336 = vor.u32 %v9332, %v9335
  %v9337 = vsel %vm951, %v9209, %v9336
  %v9338 = vshrl.u32 %v8627, 16
  %v9340 = vrot.slane %v9338, 3
  %v9341 = vshll.u32 %v8627, 16
  %v9343 = vrot.slane %v9341, 4
  %v9344 = vor.u32 %v9340, %v9343
  %v9345 = vsel %vm951, %v9217, %v9344
  %v9347 = vshrl.u32 %v8451, 16
  %v9349 = vrot.slane %v9347, 3
  %v9350 = vshll.u32 %v8451, 16
  %v9352 = vrot.slane %v9350, 4
  %v9353 = vor.u32 %v9349, %v9352
  %v9354 = vsel %vm951, %v9226, %v9353
  %v9355 = vshrl.u32 %v8642, 16
  %v9357 = vrot.slane %v9355, 3
  %v9358 = vshll.u32 %v8642, 16
  %v9360 = vrot.slane %v9358, 4
  %v9361 = vor.u32 %v9357, %v9360
  %v9362 = vsel %vm951, %v9234, %v9361
  %v9363 = vshrl.u32 %v8657, 16
  %v9365 = vrot.slane %v9363, 3
  %v9366 = vshll.u32 %v8657, 16
  %v9368 = vrot.slane %v9366, 4
  %v9369 = vor.u32 %v9365, %v9368
  %v9370 = vsel %vm951, %v9242, %v9369
  %v9372 = vshrl.u32 %v8529, 16
  %v9374 = vrot.slane %v9372, 3
  %v9375 = vshll.u32 %v8529, 16
  %v9377 = vrot.slane %v9375, 4
  %v9378 = vor.u32 %v9374, %v9377
  %v9379 = vsel %vm951, %v9251, %v9378
  %v9380 = vshrl.u32 %v8672, 16
  %v9382 = vrot.slane %v9380, 3
  %v9383 = vshll.u32 %v8672, 16
  %v9385 = vrot.slane %v9383, 4
  %v9386 = vor.u32 %v9382, %v9385
  %v9387 = vsel %vm951, %v9259, %v9386
  %v9389 = vshrl.u32 %v8554, 16
  %v9391 = vrot.slane %v9389, 3
  %v9392 = vshll.u32 %v8554, 16
  %v9394 = vrot.slane %v9392, 4
  %v9395 = vor.u32 %v9391, %v9394
  %v9396 = vsel %vm951, %v9268, %v9395
  %v9398 = vshrl.u32 %v8546, 16
  %v9400 = vrot.slane %v9398, 3
  %v9401 = vshll.u32 %v8546, 16
  %v9403 = vrot.slane %v9401, 4
  %v9404 = vor.u32 %v9400, %v9403
  %v9405 = vsel %vm951, %v9277, %v9404
  %v9407 = vshrl.u32 %v8236, 16
  %v9409 = vrot.slane %v9407, 3
  %v9410 = vshll.u32 %v8236, 16
  %v9412 = vrot.slane %v9410, 4
  %v9413 = vor.u32 %v9409, %v9412
  %v9414 = vsel %vm951, %v9286, %v9413
  %v9415 = vshrl.u32 %v8570, 16
  %v9417 = vrot.slane %v9415, 3
  %v9418 = vshll.u32 %v8570, 16
  %v9420 = vrot.slane %v9418, 4
  %v9421 = vor.u32 %v9417, %v9420
  %v9422 = vsel %vm951, %v9294, %v9421
  %v9424 = vshrl.u32 %v8282, 16
  %v9426 = vrot.slane %v9424, 3
  %v9427 = vshll.u32 %v8282, 16
  %v9429 = vrot.slane %v9427, 4
  %v9430 = vor.u32 %v9426, %v9429
  %v9431 = vsel %vm951, %v9303, %v9430
  %v9432 = vshrl.u32 %v8585, 16
  %v9434 = vrot.slane %v9432, 3
  %v9435 = vshll.u32 %v8585, 16
  %v9437 = vrot.slane %v9435, 4
  %v9438 = vor.u32 %v9434, %v9437
  %v9439 = vsel %vm951, %v9311, %v9438
  %v9440 = vshrl.u32 %v8600, 16
  %v9442 = vrot.slane %v9440, 3
  %v9443 = vshll.u32 %v8600, 16
  %v9445 = vrot.slane %v9443, 4
  %v9446 = vor.u32 %v9442, %v9445
  %v9447 = vsel %vm951, %v9319, %v9446
  %v9449 = vshrl.u32 %v8402, 16
  %v9451 = vrot.slane %v9449, 3
  %v9452 = vshll.u32 %v8402, 16
  %v9454 = vrot.slane %v9452, 4
  %v9455 = vor.u32 %v9451, %v9454
  %v9456 = vsel %vm951, %v9328, %v9455
  %v9457 = vshrl.u32 %v8615, 16
  %v9459 = vrot.slane %v9457, 3
  %v9460 = vshll.u32 %v8615, 16
  %v9462 = vrot.slane %v9460, 4
  %v9463 = vor.u32 %v9459, %v9462
  %v9464 = vsel %vm951, %v9336, %v9463
  %v9465 = vshrl.u32 %v8630, 16
  %v9467 = vrot.slane %v9465, 3
  %v9468 = vshll.u32 %v8630, 16
  %v9470 = vrot.slane %v9468, 4
  %v9471 = vor.u32 %v9467, %v9470
  %v9472 = vsel %vm951, %v9344, %v9471
  %v9474 = vshrl.u32 %v8452, 16
  %v9476 = vrot.slane %v9474, 3
  %v9477 = vshll.u32 %v8452, 16
  %v9479 = vrot.slane %v9477, 4
  %v9480 = vor.u32 %v9476, %v9479
  %v9481 = vsel %vm951, %v9353, %v9480
  %v9482 = vshrl.u32 %v8645, 16
  %v9484 = vrot.slane %v9482, 3
  %v9485 = vshll.u32 %v8645, 16
  %v9487 = vrot.slane %v9485, 4
  %v9488 = vor.u32 %v9484, %v9487
  %v9489 = vsel %vm951, %v9361, %v9488
  %v9490 = vshrl.u32 %v8660, 16
  %v9492 = vrot.slane %v9490, 3
  %v9493 = vshll.u32 %v8660, 16
  %v9495 = vrot.slane %v9493, 4
  %v9496 = vor.u32 %v9492, %v9495
  %v9497 = vsel %vm951, %v9369, %v9496
  %v9499 = vshrl.u32 %v8530, 16
  %v9501 = vrot.slane %v9499, 3
  %v9502 = vshll.u32 %v8530, 16
  %v9504 = vrot.slane %v9502, 4
  %v9505 = vor.u32 %v9501, %v9504
  %v9506 = vsel %vm951, %v9378, %v9505
  %v9507 = vshrl.u32 %v8675, 16
  %v9509 = vrot.slane %v9507, 3
  %v9510 = vshll.u32 %v8675, 16
  %v9512 = vrot.slane %v9510, 4
  %v9513 = vor.u32 %v9509, %v9512
  %v9514 = vsel %vm951, %v9386, %v9513
  %v9516 = vshrl.u32 %v8555, 16
  %v9518 = vrot.slane %v9516, 3
  %v9519 = vshll.u32 %v8555, 16
  %v9521 = vrot.slane %v9519, 4
  %v9522 = vor.u32 %v9518, %v9521
  %v9523 = vsel %vm951, %v9395, %v9522
  %v9525 = vshrl.u32 %v8550, 16
  %v9527 = vrot.slane %v9525, 3
  %v9528 = vshll.u32 %v8550, 16
  %v9530 = vrot.slane %v9528, 4
  %v9531 = vor.u32 %v9527, %v9530
  %v9532 = vsel %vm951, %v9404, %v9531
  %v9814 = vunpack.c.l.b16 %v8676
  %v9815 = vunpack.c.h.b16 %v8676
  %v9816 = vunpack.c.l.b16 %v8677
  %v9817 = vunpack.c.h.b16 %v8677
  %v9818 = vunpack.c.l.b16 %v8678
  %v9819 = vunpack.c.h.b16 %v8678
  %v9820 = vunpack.c.l.b16 %v8679
  %v9821 = vunpack.c.h.b16 %v8679
  %v9822 = vunpack.c.l.b16 %v8680
  %v9823 = vunpack.c.h.b16 %v8680
  %v9824 = vunpack.c.l.b16 %v8681
  %v9825 = vunpack.c.h.b16 %v8681
  %v9826 = vunpack.c.l.b16 %v8682
  %v9827 = vunpack.c.h.b16 %v8682
  %v9828 = vunpack.c.l.b16 %v8683
  %v9829 = vunpack.c.h.b16 %v8683
  %v9830 = vunpack.c.l.b16 %v8684
  %v9831 = vunpack.c.h.b16 %v8684
  %v9832 = vunpack.c.l.b16 %v8685
  %v9833 = vunpack.c.h.b16 %v8685
  %v9834 = vunpack.c.l.b16 %v8686
  %v9835 = vunpack.c.h.b16 %v8686
  %v9836 = vunpack.c.l.b16 %v8687
  %v9837 = vunpack.c.h.b16 %v8687
  %v9838 = vunpack.c.l.b16 %v8688
  %v9839 = vunpack.c.h.b16 %v8688
  %v9840 = vunpack.c.l.b16 %v8689
  %v9841 = vunpack.c.h.b16 %v8689
  %v9842 = vunpack.c.l.b16 %v8690
  %v9843 = vunpack.c.h.b16 %v8690
  %v9844 = vunpack.c.l.b16 %v8691
  %v9845 = vunpack.c.h.b16 %v8691
  %v9846 = vunpack.c.l.b16 %v8692
  %v9847 = vunpack.c.h.b16 %v8692
  %v9848 = vunpack.c.l.b16 %v8693
  %v9849 = vunpack.c.h.b16 %v8693
  %v9850 = vunpack.c.l.b16 %v8694
  %v9851 = vunpack.c.h.b16 %v8694
  %v9852 = vunpack.c.l.b16 %v8695
  %v9853 = vunpack.c.h.b16 %v8695
  %v9854 = vunpack.c.l.b16 %v8696
  %v9855 = vunpack.c.h.b16 %v8696
  %v9856 = vunpack.c.l.b16 %v8697
  %v9857 = vunpack.c.h.b16 %v8697
  %v9858 = vunpack.c.l.b16 %v8698
  %v9859 = vunpack.c.h.b16 %v8698
  %v9860 = vunpack.c.l.b16 %v8699
  %v9861 = vunpack.c.h.b16 %v8699
  %v9862 = vunpack.c.l.b16 %v8700
  %v9863 = vunpack.c.h.b16 %v8700
  %v9864 = vunpack.c.l.b16 %v8701
  %v9865 = vunpack.c.h.b16 %v8701
  %v9866 = vunpack.c.l.b16 %v8702
  %v9867 = vunpack.c.h.b16 %v8702
  %v9868 = vunpack.c.l.b16 %v8703
  %v9869 = vunpack.c.h.b16 %v8703
  %v9870 = vunpack.c.l.b16 %v8704
  %v9871 = vunpack.c.h.b16 %v8704
  %v9872 = vunpack.c.l.b16 %v8705
  %v9873 = vunpack.c.h.b16 %v8705
  %v9874 = vunpack.c.l.b16 %v8706
  %v9875 = vunpack.c.h.b16 %v8706
  %v9876 = vunpack.c.l.b16 %v8707
  %v9877 = vunpack.c.h.b16 %v8707
  %v9878 = vunpack.c.l.b16 %v8708
  %v9879 = vunpack.c.h.b16 %v8708
  %v9880 = vunpack.c.l.b16 %v8709
  %v9881 = vunpack.c.h.b16 %v8709
  %v9882 = vunpack.c.l.b16 %v8710
  %v9883 = vunpack.c.h.b16 %v8710
  %v9884 = vunpack.c.l.b16 %v8711
  %v9885 = vunpack.c.h.b16 %v8711
  %v9886 = vunpack.c.l.b16 %v8712
  %v9887 = vunpack.c.h.b16 %v8712
  %v9888 = vunpack.c.l.b16 %v8713
  %v9889 = vunpack.c.h.b16 %v8713
  %v9890 = vunpack.c.l.b16 %v8714
  %v9891 = vunpack.c.h.b16 %v8714
  %v9892 = vunpack.c.l.b16 %v8715
  %v9893 = vunpack.c.h.b16 %v8715
  %v9894 = vunpack.c.l.b16 %v8716
  %v9895 = vunpack.c.h.b16 %v8716
  %v9896 = vunpack.c.l.b16 %v8717
  %v9897 = vunpack.c.h.b16 %v8717
  %v9898 = vunpack.c.l.b16 %v8718
  %v9899 = vunpack.c.h.b16 %v8718
  %v9900 = vunpack.c.l.b16 %v8719
  %v9901 = vunpack.c.h.b16 %v8719
  %v9902 = vunpack.c.l.b16 %v8720
  %v9903 = vunpack.c.h.b16 %v8720
  %v9904 = vunpack.c.l.b16 %v8721
  %v9905 = vunpack.c.h.b16 %v8721
  %v9906 = vunpack.c.l.b16 %v8722
  %v9907 = vunpack.c.h.b16 %v8722
  %v9908 = vunpack.c.l.b16 %v8723
  %v9909 = vunpack.c.h.b16 %v8723
  %v9910 = vunpack.c.l.b16 %v8724
  %v9911 = vunpack.c.h.b16 %v8724
  %v9912 = vunpack.c.l.b16 %v8725
  %v9913 = vunpack.c.h.b16 %v8725
  %v9914 = vunpack.c.l.b16 %v8726
  %v9915 = vunpack.c.h.b16 %v8726
  %v9916 = vunpack.c.l.b16 %v8727
  %v9917 = vunpack.c.h.b16 %v8727
  %v9918 = vunpack.c.l.b16 %v8728
  %v9919 = vunpack.c.h.b16 %v8728
  %v9920 = vunpack.c.l.b16 %v8729
  %v9921 = vunpack.c.h.b16 %v8729
  %v9922 = vunpack.c.l.b16 %v8730
  %v9923 = vunpack.c.h.b16 %v8730
  %v9924 = vunpack.c.l.b16 %v8731
  %v9925 = vunpack.c.h.b16 %v8731
  %v9926 = vunpack.c.l.b16 %v8732
  %v9927 = vunpack.c.h.b16 %v8732
  %v9928 = vunpack.c.l.b16 %v8733
  %v9929 = vunpack.c.h.b16 %v8733
  %v9930 = vunpack.c.l.b16 %v8734
  %v9931 = vunpack.c.h.b16 %v8734
  %v9932 = vunpack.c.l.b16 %v8735
  %v9933 = vunpack.c.h.b16 %v8735
  %v9934 = vunpack.c.l.b16 %v8736
  %v9935 = vunpack.c.h.b16 %v8736
  %v9936 = vunpack.c.l.b16 %v8737
  %v9937 = vunpack.c.h.b16 %v8737
  %v9938 = vunpack.c.l.b16 %v8738
  %v9939 = vunpack.c.h.b16 %v8738
  %v9940 = vunpack.c.l.b16 %v8739
  %v9941 = vunpack.c.h.b16 %v8739
  %v9942 = vunpack.c.l.b16 %v8740
  %v9943 = vunpack.c.h.b16 %v8740
  %v9944 = vunpack.c.l.b16 %v8741
  %v9945 = vunpack.c.h.b16 %v8741
  %v9946 = vunpack.c.l.b16 %v8742
  %v9947 = vunpack.c.h.b16 %v8742
  %v9948 = vunpack.c.l.b16 %v8743
  %v9949 = vunpack.c.h.b16 %v8743
  %v9950 = vunpack.c.l.b16 %v8744
  %v9951 = vunpack.c.h.b16 %v8744
  %v9952 = vunpack.c.l.b16 %v8745
  %v9953 = vunpack.c.h.b16 %v8745
  %v9954 = vunpack.c.l.b16 %v8746
  %v9955 = vunpack.c.h.b16 %v8746
  %v9956 = vunpack.c.l.b16 %v8747
  %v9957 = vunpack.c.h.b16 %v8747
  %v9958 = vunpack.c.l.b16 %v8748
  %v9959 = vunpack.c.h.b16 %v8748
  %v9960 = vunpack.c.l.b16 %v8749
  %v9961 = vunpack.c.h.b16 %v8749
  %v9962 = vunpack.c.l.b16 %v8750
  %v9963 = vunpack.c.h.b16 %v8750
  %v9964 = vunpack.c.l.b16 %v8751
  %v9965 = vunpack.c.h.b16 %v8751
  %v9966 = vunpack.c.l.b16 %v8752
  %v9967 = vunpack.c.h.b16 %v8752
  %v9968 = vunpack.c.l.b16 %v8753
  %v9969 = vunpack.c.h.b16 %v8753
  %v9970 = vunpack.c.l.b16 %v8754
  %v9971 = vunpack.c.h.b16 %v8754
  %v9972 = vunpack.c.l.b16 %v8755
  %v9973 = vunpack.c.h.b16 %v8755
  %v9974 = vunpack.c.l.b16 %v8756
  %v9975 = vunpack.c.h.b16 %v8756
  %v9976 = vunpack.c.l.b16 %v8757
  %v9977 = vunpack.c.h.b16 %v8757
  %v9978 = vunpack.c.l.b16 %v8758
  %v9979 = vunpack.c.h.b16 %v8758
  %v9980 = vunpack.c.l.b16 %v8759
  %v9981 = vunpack.c.h.b16 %v8759
  %v9982 = vunpack.c.l.b16 %v8760
  %v9983 = vunpack.c.h.b16 %v8760
  %v9984 = vunpack.c.l.b16 %v8761
  %v9985 = vunpack.c.h.b16 %v8761
  %v9986 = vunpack.c.l.b16 %v8762
  %v9987 = vunpack.c.h.b16 %v8762
  %v9988 = vunpack.c.l.b16 %v8763
  %v9989 = vunpack.c.h.b16 %v8763
  %v9990 = vunpack.c.l.b16 %v8764
  %v9991 = vunpack.c.h.b16 %v8764
  %v9992 = vunpack.c.l.b16 %v8765
  %v9993 = vunpack.c.h.b16 %v8765
  %v9994 = vunpack.c.l.b16 %v8766
  %v9995 = vunpack.c.h.b16 %v8766
  %v9996 = vunpack.c.l.b16 %v8767
  %v9997 = vunpack.c.h.b16 %v8767
  %v9998 = vunpack.c.l.b16 %v8768
  %v9999 = vunpack.c.h.b16 %v8768
  %v10000 = vunpack.c.l.b16 %v8769
  %v10001 = vunpack.c.h.b16 %v8769
  %v10002 = vunpack.c.l.b16 %v8770
  %v10003 = vunpack.c.h.b16 %v8770
  %v10004 = vunpack.c.l.b16 %v8771
  %v10005 = vunpack.c.h.b16 %v8771
  %v10006 = vunpack.c.l.b16 %v8772
  %v10007 = vunpack.c.h.b16 %v8772
  %v10008 = vunpack.c.l.b16 %v8773
  %v10009 = vunpack.c.h.b16 %v8773
  %v10010 = vunpack.c.l.b16 %v8774
  %v10011 = vunpack.c.h.b16 %v8774
  %v10012 = vunpack.c.l.b16 %v8775
  %v10013 = vunpack.c.h.b16 %v8775
  %v10014 = vunpack.c.l.b16 %v8776
  %v10015 = vunpack.c.h.b16 %v8776
  %v10016 = vunpack.c.l.b16 %v8777
  %v10017 = vunpack.c.h.b16 %v8777
  %v10018 = vunpack.c.l.b16 %v8778
  %v10019 = vunpack.c.h.b16 %v8778
  %v10020 = vunpack.c.l.b16 %v8779
  %v10021 = vunpack.c.h.b16 %v8779
  %v10022 = vunpack.c.l.b16 %v8780
  %v10023 = vunpack.c.h.b16 %v8780
  %v10024 = vunpack.c.l.b16 %v8781
  %v10025 = vunpack.c.h.b16 %v8781
  %v10026 = vunpack.c.l.b16 %v8782
  %v10027 = vunpack.c.h.b16 %v8782
  %v10028 = vunpack.c.l.b16 %v8783
  %v10029 = vunpack.c.h.b16 %v8783
  %v10030 = vunpack.c.l.b16 %v8784
  %v10031 = vunpack.c.h.b16 %v8784
  %v10032 = vunpack.c.l.b16 %v8785
  %v10033 = vunpack.c.h.b16 %v8785
  %v10034 = vunpack.c.l.b16 %v8786
  %v10035 = vunpack.c.h.b16 %v8786
  %v10036 = vunpack.c.l.b16 %v8787
  %v10037 = vunpack.c.h.b16 %v8787
  %v10038 = vunpack.c.l.b16 %v8788
  %v10039 = vunpack.c.h.b16 %v8788
  %v10040 = vunpack.c.l.b16 %v8789
  %v10041 = vunpack.c.h.b16 %v8789
  %v10042 = vunpack.c.l.b16 %v8790
  %v10043 = vunpack.c.h.b16 %v8790
  %v10044 = vunpack.c.l.b16 %v8791
  %v10045 = vunpack.c.h.b16 %v8791
  %v10046 = vunpack.c.l.b16 %v8792
  %v10047 = vunpack.c.h.b16 %v8792
  %v10048 = vunpack.c.l.b16 %v8793
  %v10049 = vunpack.c.h.b16 %v8793
  %v10050 = vunpack.c.l.b16 %v8794
  %v10051 = vunpack.c.h.b16 %v8794
  %v10052 = vunpack.c.l.b16 %v8795
  %v10053 = vunpack.c.h.b16 %v8795
  %v10054 = vunpack.c.l.b16 %v8796
  %v10055 = vunpack.c.h.b16 %v8796
  %v10056 = vunpack.c.l.b16 %v8797
  %v10057 = vunpack.c.h.b16 %v8797
  %v10058 = vunpack.c.l.b16 %v8798
  %v10059 = vunpack.c.h.b16 %v8798
  %v10060 = vunpack.c.l.b16 %v8799
  %v10061 = vunpack.c.h.b16 %v8799
  %v10062 = vunpack.c.l.b16 %v8800
  %v10063 = vunpack.c.h.b16 %v8800
  %v10064 = vunpack.c.l.b16 %v8801
  %v10065 = vunpack.c.h.b16 %v8801
  %v10066 = vunpack.c.l.b16 %v8802
  %v10067 = vunpack.c.h.b16 %v8802
  %v10068 = vunpack.c.l.b16 %v8803
  %v10069 = vunpack.c.h.b16 %v8803
  %v10070 = vunpack.c.l.b16 %v8804
  %v10071 = vunpack.c.h.b16 %v8804
  %v10072 = vunpack.c.l.b16 %v8805
  %v10073 = vunpack.c.h.b16 %v8805
  %v10074 = vunpack.c.l.b16 %v8806
  %v10075 = vunpack.c.h.b16 %v8806
  %v10076 = vunpack.c.l.b16 %v8807
  %v10077 = vunpack.c.h.b16 %v8807
  %v10078 = vunpack.c.l.b16 %v8808
  %v10079 = vunpack.c.h.b16 %v8808
  %v10080 = vunpack.c.l.b16 %v8809
  %v10081 = vunpack.c.h.b16 %v8809
  %v10082 = vunpack.c.l.b16 %v8810
  %v10083 = vunpack.c.h.b16 %v8810
  %v10084 = vunpack.c.l.b16 %v8811
  %v10085 = vunpack.c.h.b16 %v8811
  %v10086 = vunpack.c.l.b16 %v8812
  %v10087 = vunpack.c.h.b16 %v8812
  %v10088 = vunpack.c.l.b16 %v8813
  %v10089 = vunpack.c.h.b16 %v8813
  %v10090 = vunpack.c.l.b16 %v8814
  %v10091 = vunpack.c.h.b16 %v8814
  %v10092 = vunpack.c.l.b16 %v8815
  %v10093 = vunpack.c.h.b16 %v8815
  %v10094 = vunpack.c.l.b16 %v8816
  %v10095 = vunpack.c.h.b16 %v8816
  %v10096 = vunpack.c.l.b16 %v8817
  %v10097 = vunpack.c.h.b16 %v8817
  %v10098 = vunpack.c.l.b16 %v8818
  %v10099 = vunpack.c.h.b16 %v8818
  %v10100 = vunpack.c.l.b16 %v8819
  %v10101 = vunpack.c.h.b16 %v8819
  %v10102 = vunpack.c.l.b16 %v8820
  %v10103 = vunpack.c.h.b16 %v8820
  %v10104 = vunpack.c.l.b16 %v8821
  %v10105 = vunpack.c.h.b16 %v8821
  %v10106 = vunpack.c.l.b16 %v8822
  %v10107 = vunpack.c.h.b16 %v8822
  %v10108 = vunpack.c.l.b16 %v8823
  %v10109 = vunpack.c.h.b16 %v8823
  %v10110 = vunpack.c.l.b16 %v8824
  %v10111 = vunpack.c.h.b16 %v8824
  %v10112 = vunpack.c.l.b16 %v8825
  %v10113 = vunpack.c.h.b16 %v8825
  %v10114 = vunpack.c.l.b16 %v8826
  %v10115 = vunpack.c.h.b16 %v8826
  %v10116 = vunpack.c.l.b16 %v8827
  %v10117 = vunpack.c.h.b16 %v8827
  %v10118 = vunpack.c.l.b16 %v8828
  %v10119 = vunpack.c.h.b16 %v8828
  %v10120 = vunpack.c.l.b16 %v8829
  %v10121 = vunpack.c.h.b16 %v8829
  %v10122 = vunpack.c.l.b16 %v8830
  %v10123 = vunpack.c.h.b16 %v8830
  %v10124 = vunpack.c.l.b16 %v8831
  %v10125 = vunpack.c.h.b16 %v8831
  %v10126 = vunpack.c.l.b16 %v8832
  %v10127 = vunpack.c.h.b16 %v8832
  %v10128 = vunpack.c.l.b16 %v8833
  %v10129 = vunpack.c.h.b16 %v8833
  %v10130 = vunpack.c.l.b16 %v8834
  %v10131 = vunpack.c.h.b16 %v8834
  %v10132 = vunpack.c.l.b16 %v8835
  %v10133 = vunpack.c.h.b16 %v8835
  %v10134 = vunpack.c.l.b16 %v8836
  %v10135 = vunpack.c.h.b16 %v8836
  %v10136 = vunpack.c.l.b16 %v8837
  %v10137 = vunpack.c.h.b16 %v8837
  %v10138 = vunpack.c.l.b16 %v8838
  %v10139 = vunpack.c.h.b16 %v8838
  %v10140 = vunpack.c.l.b16 %v8839
  %v10141 = vunpack.c.h.b16 %v8839
  %v10142 = vunpack.c.l.b16 %v8840
  %v10143 = vunpack.c.h.b16 %v8840
  %v10144 = vunpack.c.l.b16 %v8841
  %v10145 = vunpack.c.h.b16 %v8841
  %v10146 = vunpack.c.l.b16 %v8842
  %v10147 = vunpack.c.h.b16 %v8842
  %v10148 = vunpack.c.l.b16 %v8843
  %v10149 = vunpack.c.h.b16 %v8843
  %v10150 = vunpack.c.l.b16 %v8844
  %v10151 = vunpack.c.h.b16 %v8844
  %v10152 = vunpack.c.l.b16 %v8845
  %v10153 = vunpack.c.h.b16 %v8845
  %v10154 = vunpack.c.l.b16 %v8846
  %v10155 = vunpack.c.h.b16 %v8846
  %v10156 = vunpack.c.l.b16 %v8847
  %v10157 = vunpack.c.h.b16 %v8847
  %v10158 = vunpack.c.l.b16 %v8848
  %v10159 = vunpack.c.h.b16 %v8848
  %v10160 = vunpack.c.l.b16 %v8849
  %v10161 = vunpack.c.h.b16 %v8849
  %v10162 = vunpack.c.l.b16 %v8850
  %v10163 = vunpack.c.h.b16 %v8850
  %v10164 = vunpack.c.l.b16 %v8851
  %v10165 = vunpack.c.h.b16 %v8851
  %v10166 = vunpack.c.l.b16 %v8852
  %v10167 = vunpack.c.h.b16 %v8852
  %v10168 = vunpack.c.l.b16 %v8853
  %v10169 = vunpack.c.h.b16 %v8853
  %v10170 = vunpack.c.l.b16 %v8854
  %v10171 = vunpack.c.h.b16 %v8854
  %v10172 = vunpack.c.l.b16 %v8855
  %v10173 = vunpack.c.h.b16 %v8855
  %v10174 = vunpack.c.l.b16 %v8856
  %v10175 = vunpack.c.h.b16 %v8856
  %v10176 = vunpack.c.l.b16 %v8857
  %v10177 = vunpack.c.h.b16 %v8857
  %v10178 = vunpack.c.l.b16 %v8858
  %v10179 = vunpack.c.h.b16 %v8858
  %v10180 = vunpack.c.l.b16 %v8859
  %v10181 = vunpack.c.h.b16 %v8859
  %v10182 = vunpack.c.l.b16 %v8860
  %v10183 = vunpack.c.h.b16 %v8860
  %v10184 = vunpack.c.l.b16 %v8861
  %v10185 = vunpack.c.h.b16 %v8861
  %v10186 = vunpack.c.l.b16 %v8862
  %v10187 = vunpack.c.h.b16 %v8862
  %v10188 = vunpack.c.l.b16 %v8863
  %v10189 = vunpack.c.h.b16 %v8863
  %v10190 = vunpack.c.l.b16 %v8864
  %v10191 = vunpack.c.h.b16 %v8864
  %v10192 = vunpack.c.l.b16 %v8865
  %v10193 = vunpack.c.h.b16 %v8865
  %v10194 = vunpack.c.l.b16 %v8866
  %v10195 = vunpack.c.h.b16 %v8866
  %v10196 = vunpack.c.l.b16 %v8867
  %v10197 = vunpack.c.h.b16 %v8867
  %v10198 = vunpack.c.l.b16 %v8868
  %v10199 = vunpack.c.h.b16 %v8868
  %v10200 = vunpack.c.l.b16 %v8869
  %v10201 = vunpack.c.h.b16 %v8869
  %v10202 = vunpack.c.l.b16 %v8870
  %v10203 = vunpack.c.h.b16 %v8870
  %v10204 = vunpack.c.l.b16 %v8871
  %v10205 = vunpack.c.h.b16 %v8871
  %v10206 = vunpack.c.l.b16 %v8872
  %v10207 = vunpack.c.h.b16 %v8872
  %v10208 = vunpack.c.l.b16 %v8873
  %v10209 = vunpack.c.h.b16 %v8873
  %v10210 = vunpack.c.l.b16 %v8874
  %v10211 = vunpack.c.h.b16 %v8874
  %v10212 = vunpack.c.l.b16 %v8875
  %v10213 = vunpack.c.h.b16 %v8875
  %v10214 = vunpack.c.l.b16 %v8876
  %v10215 = vunpack.c.h.b16 %v8876
  %v10216 = vunpack.c.l.b16 %v8877
  %v10217 = vunpack.c.h.b16 %v8877
  %v10218 = vunpack.c.l.b16 %v8878
  %v10219 = vunpack.c.h.b16 %v8878
  %v10220 = vunpack.c.l.b16 %v8879
  %v10221 = vunpack.c.h.b16 %v8879
  %v10222 = vunpack.c.l.b16 %v8880
  %v10223 = vunpack.c.h.b16 %v8880
  %v10224 = vunpack.c.l.b16 %v8881
  %v10225 = vunpack.c.h.b16 %v8881
  %v10226 = vunpack.c.l.b16 %v8882
  %v10227 = vunpack.c.h.b16 %v8882
  %v10228 = vunpack.c.l.b16 %v8883
  %v10229 = vunpack.c.h.b16 %v8883
  %v10230 = vunpack.c.l.b16 %v8884
  %v10231 = vunpack.c.h.b16 %v8884
  %v10232 = vunpack.c.l.b16 %v8885
  %v10233 = vunpack.c.h.b16 %v8885
  %v10234 = vunpack.c.l.b16 %v8886
  %v10235 = vunpack.c.h.b16 %v8886
  %v10236 = vunpack.c.l.b16 %v8887
  %v10237 = vunpack.c.h.b16 %v8887
  %v10238 = vunpack.c.l.b16 %v8888
  %v10239 = vunpack.c.h.b16 %v8888
  %v10240 = vunpack.c.l.b16 %v8889
  %v10241 = vunpack.c.h.b16 %v8889
  %v10242 = vunpack.c.l.b16 %v8890
  %v10243 = vunpack.c.h.b16 %v8890
  %v10244 = vunpack.c.l.b16 %v8891
  %v10245 = vunpack.c.h.b16 %v8891
  %v10246 = vunpack.c.l.b16 %v8892
  %v10247 = vunpack.c.h.b16 %v8892
  %v10248 = vunpack.c.l.b16 %v8893
  %v10249 = vunpack.c.h.b16 %v8893
  %v10250 = vunpack.c.l.b16 %v8894
  %v10251 = vunpack.c.h.b16 %v8894
  %v10252 = vunpack.c.l.b16 %v8895
  %v10253 = vunpack.c.h.b16 %v8895
  %v10254 = vunpack.c.l.b16 %v8896
  %v10255 = vunpack.c.h.b16 %v8896
  %v10256 = vunpack.c.l.b16 %v8897
  %v10257 = vunpack.c.h.b16 %v8897
  %v10258 = vunpack.c.l.b16 %v8898
  %v10259 = vunpack.c.h.b16 %v8898
  %v10260 = vunpack.c.l.b16 %v8899
  %v10261 = vunpack.c.h.b16 %v8899
  %v10262 = vunpack.c.l.b16 %v8900
  %v10263 = vunpack.c.h.b16 %v8900
  %v10264 = vpack.c.b16 %v9816, %v9814
  %v10265 = vpack.c.b16 %v9817, %v9815
  %v10266 = vpack.c.b16 %v9820, %v9818
  %v10267 = vpack.c.b16 %v9821, %v9819
  %v10268 = vpack.c.b16 %v9824, %v9822
  %v10269 = vpack.c.b16 %v9825, %v9823
  %v10270 = vpack.c.b16 %v9828, %v9826
  %v10271 = vpack.c.b16 %v9829, %v9827
  %v10272 = vpack.c.b16 %v9832, %v9830
  %v10273 = vpack.c.b16 %v9833, %v9831
  %v10274 = vpack.c.b16 %v9836, %v9834
  %v10275 = vpack.c.b16 %v9837, %v9835
  %v10276 = vpack.c.b16 %v9840, %v9838
  %v10277 = vpack.c.b16 %v9841, %v9839
  %v10278 = vpack.c.b16 %v9844, %v9842
  %v10279 = vpack.c.b16 %v9845, %v9843
  %v10280 = vpack.c.b16 %v9848, %v9846
  %v10281 = vpack.c.b16 %v9849, %v9847
  %v10282 = vpack.c.b16 %v9852, %v9850
  %v10283 = vpack.c.b16 %v9853, %v9851
  %v10284 = vpack.c.b16 %v9856, %v9854
  %v10285 = vpack.c.b16 %v9857, %v9855
  %v10286 = vpack.c.b16 %v9860, %v9858
  %v10287 = vpack.c.b16 %v9861, %v9859
  %v10288 = vpack.c.b16 %v9864, %v9862
  %v10289 = vpack.c.b16 %v9865, %v9863
  %v10290 = vpack.c.b16 %v9868, %v9866
  %v10291 = vpack.c.b16 %v9869, %v9867
  %v10292 = vpack.c.b16 %v9872, %v9870
  %v10293 = vpack.c.b16 %v9873, %v9871
  %v10294 = vpack.c.b16 %v9876, %v9874
  %v10295 = vpack.c.b16 %v9877, %v9875
  %v10296 = vpack.c.b16 %v9880, %v9878
  %v10297 = vpack.c.b16 %v9881, %v9879
  %v10298 = vpack.c.b16 %v9884, %v9882
  %v10299 = vpack.c.b16 %v9885, %v9883
  %v10300 = vpack.c.b16 %v9888, %v9886
  %v10301 = vpack.c.b16 %v9889, %v9887
  %v10302 = vpack.c.b16 %v9892, %v9890
  %v10303 = vpack.c.b16 %v9893, %v9891
  %v10304 = vpack.c.b16 %v9896, %v9894
  %v10305 = vpack.c.b16 %v9897, %v9895
  %v10306 = vpack.c.b16 %v9900, %v9898
  %v10307 = vpack.c.b16 %v9901, %v9899
  %v10308 = vpack.c.b16 %v9904, %v9902
  %v10309 = vpack.c.b16 %v9905, %v9903
  %v10310 = vpack.c.b16 %v9908, %v9906
  %v10311 = vpack.c.b16 %v9909, %v9907
  %v10312 = vpack.c.b16 %v9912, %v9910
  %v10313 = vpack.c.b16 %v9913, %v9911
  %v10314 = vpack.c.b16 %v9916, %v9914
  %v10315 = vpack.c.b16 %v9917, %v9915
  %v10316 = vpack.c.b16 %v9920, %v9918
  %v10317 = vpack.c.b16 %v9921, %v9919
  %v10318 = vpack.c.b16 %v9924, %v9922
  %v10319 = vpack.c.b16 %v9925, %v9923
  %v10320 = vpack.c.b16 %v9928, %v9926
  %v10321 = vpack.c.b16 %v9929, %v9927
  %v10322 = vpack.c.b16 %v9932, %v9930
  %v10323 = vpack.c.b16 %v9933, %v9931
  %v10324 = vpack.c.b16 %v9936, %v9934
  %v10325 = vpack.c.b16 %v9937, %v9935
  %v10326 = vpack.c.b16 %v9940, %v9938
  %v10327 = vpack.c.b16 %v9941, %v9939
  %v10328 = vpack.c.b16 %v9944, %v9942
  %v10329 = vpack.c.b16 %v9945, %v9943
  %v10330 = vpack.c.b16 %v9948, %v9946
  %v10331 = vpack.c.b16 %v9949, %v9947
  %v10332 = vpack.c.b16 %v9952, %v9950
  %v10333 = vpack.c.b16 %v9953, %v9951
  %v10334 = vpack.c.b16 %v9956, %v9954
  %v10335 = vpack.c.b16 %v9957, %v9955
  %v10336 = vpack.c.b16 %v9960, %v9958
  %v10337 = vpack.c.b16 %v9961, %v9959
  %v10338 = vpack.c.b16 %v9964, %v9962
  %v10339 = vpack.c.b16 %v9965, %v9963
  %v10340 = vpack.c.b16 %v9968, %v9966
  %v10341 = vpack.c.b16 %v9969, %v9967
  %v10342 = vpack.c.b16 %v9972, %v9970
  %v10343 = vpack.c.b16 %v9973, %v9971
  %v10344 = vpack.c.b16 %v9976, %v9974
  %v10345 = vpack.c.b16 %v9977, %v9975
  %v10346 = vpack.c.b16 %v9980, %v9978
  %v10347 = vpack.c.b16 %v9981, %v9979
  %v10348 = vpack.c.b16 %v9984, %v9982
  %v10349 = vpack.c.b16 %v9985, %v9983
  %v10350 = vpack.c.b16 %v9988, %v9986
  %v10351 = vpack.c.b16 %v9989, %v9987
  %v10352 = vpack.c.b16 %v9992, %v9990
  %v10353 = vpack.c.b16 %v9993, %v9991
  %v10354 = vpack.c.b16 %v9996, %v9994
  %v10355 = vpack.c.b16 %v9997, %v9995
  %v10356 = vpack.c.b16 %v10000, %v9998
  %v10357 = vpack.c.b16 %v10001, %v9999
  %v10358 = vpack.c.b16 %v10004, %v10002
  %v10359 = vpack.c.b16 %v10005, %v10003
  %v10360 = vpack.c.b16 %v10008, %v10006
  %v10361 = vpack.c.b16 %v10009, %v10007
  %v10362 = vpack.c.b16 %v10012, %v10010
  %v10363 = vpack.c.b16 %v10013, %v10011
  %v10364 = vpack.c.b16 %v10016, %v10014
  %v10365 = vpack.c.b16 %v10017, %v10015
  %v10366 = vpack.c.b16 %v10020, %v10018
  %v10367 = vpack.c.b16 %v10021, %v10019
  %v10368 = vpack.c.b16 %v10024, %v10022
  %v10369 = vpack.c.b16 %v10025, %v10023
  %v10370 = vpack.c.b16 %v10028, %v10026
  %v10371 = vpack.c.b16 %v10029, %v10027
  %v10372 = vpack.c.b16 %v10032, %v10030
  %v10373 = vpack.c.b16 %v10033, %v10031
  %v10374 = vpack.c.b16 %v10036, %v10034
  %v10375 = vpack.c.b16 %v10037, %v10035
  %v10376 = vpack.c.b16 %v10040, %v10038
  %v10377 = vpack.c.b16 %v10041, %v10039
  %v10378 = vpack.c.b16 %v10044, %v10042
  %v10379 = vpack.c.b16 %v10045, %v10043
  %v10380 = vpack.c.b16 %v10048, %v10046
  %v10381 = vpack.c.b16 %v10049, %v10047
  %v10382 = vpack.c.b16 %v10052, %v10050
  %v10383 = vpack.c.b16 %v10053, %v10051
  %v10384 = vpack.c.b16 %v10056, %v10054
  %v10385 = vpack.c.b16 %v10057, %v10055
  %v10386 = vpack.c.b16 %v10060, %v10058
  %v10387 = vpack.c.b16 %v10061, %v10059
  %v10388 = vpack.c.b16 %v10064, %v10062
  %v10389 = vpack.c.b16 %v10065, %v10063
  %v10390 = vpack.c.b16 %v10068, %v10066
  %v10391 = vpack.c.b16 %v10069, %v10067
  %v10392 = vpack.c.b16 %v10072, %v10070
  %v10393 = vpack.c.b16 %v10073, %v10071
  %v10394 = vpack.c.b16 %v10076, %v10074
  %v10395 = vpack.c.b16 %v10077, %v10075
  %v10396 = vpack.c.b16 %v10080, %v10078
  %v10397 = vpack.c.b16 %v10081, %v10079
  %v10398 = vpack.c.b16 %v10084, %v10082
  %v10399 = vpack.c.b16 %v10085, %v10083
  %v10400 = vpack.c.b16 %v10088, %v10086
  %v10401 = vpack.c.b16 %v10089, %v10087
  %v10402 = vpack.c.b16 %v10092, %v10090
  %v10403 = vpack.c.b16 %v10093, %v10091
  %v10404 = vpack.c.b16 %v10096, %v10094
  %v10405 = vpack.c.b16 %v10097, %v10095
  %v10406 = vpack.c.b16 %v10100, %v10098
  %v10407 = vpack.c.b16 %v10101, %v10099
  %v10408 = vpack.c.b16 %v10104, %v10102
  %v10409 = vpack.c.b16 %v10105, %v10103
  %v10410 = vpack.c.b16 %v10108, %v10106
  %v10411 = vpack.c.b16 %v10109, %v10107
  %v10412 = vpack.c.b16 %v10112, %v10110
  %v10413 = vpack.c.b16 %v10113, %v10111
  %v10414 = vpack.c.b16 %v10116, %v10114
  %v10415 = vpack.c.b16 %v10117, %v10115
  %v10416 = vpack.c.b16 %v10120, %v10118
  %v10417 = vpack.c.b16 %v10121, %v10119
  %v10418 = vpack.c.b16 %v10124, %v10122
  %v10419 = vpack.c.b16 %v10125, %v10123
  %v10420 = vpack.c.b16 %v10128, %v10126
  %v10421 = vpack.c.b16 %v10129, %v10127
  %v10422 = vpack.c.b16 %v10132, %v10130
  %v10423 = vpack.c.b16 %v10133, %v10131
  %v10424 = vpack.c.b16 %v10136, %v10134
  %v10425 = vpack.c.b16 %v10137, %v10135
  %v10426 = vpack.c.b16 %v10140, %v10138
  %v10427 = vpack.c.b16 %v10141, %v10139
  %v10428 = vpack.c.b16 %v10144, %v10142
  %v10429 = vpack.c.b16 %v10145, %v10143
  %v10430 = vpack.c.b16 %v10148, %v10146
  %v10431 = vpack.c.b16 %v10149, %v10147
  %v10432 = vpack.c.b16 %v10152, %v10150
  %v10433 = vpack.c.b16 %v10153, %v10151
  %v10434 = vpack.c.b16 %v10156, %v10154
  %v10435 = vpack.c.b16 %v10157, %v10155
  %v10436 = vpack.c.b16 %v10160, %v10158
  %v10437 = vpack.c.b16 %v10161, %v10159
  %v10438 = vpack.c.b16 %v10164, %v10162
  %v10439 = vpack.c.b16 %v10165, %v10163
  %v10440 = vpack.c.b16 %v10168, %v10166
  %v10441 = vpack.c.b16 %v10169, %v10167
  %v10442 = vpack.c.b16 %v10172, %v10170
  %v10443 = vpack.c.b16 %v10173, %v10171
  %v10444 = vpack.c.b16 %v10176, %v10174
  %v10445 = vpack.c.b16 %v10177, %v10175
  %v10446 = vpack.c.b16 %v10180, %v10178
  %v10447 = vpack.c.b16 %v10181, %v10179
  %v10448 = vpack.c.b16 %v10184, %v10182
  %v10449 = vpack.c.b16 %v10185, %v10183
  %v10450 = vpack.c.b16 %v10188, %v10186
  %v10451 = vpack.c.b16 %v10189, %v10187
  %v10452 = vpack.c.b16 %v10192, %v10190
  %v10453 = vpack.c.b16 %v10193, %v10191
  %v10454 = vpack.c.b16 %v10196, %v10194
  %v10455 = vpack.c.b16 %v10197, %v10195
  %v10456 = vpack.c.b16 %v10200, %v10198
  %v10457 = vpack.c.b16 %v10201, %v10199
  %v10458 = vpack.c.b16 %v10204, %v10202
  %v10459 = vpack.c.b16 %v10205, %v10203
  %v10460 = vpack.c.b16 %v10208, %v10206
  %v10461 = vpack.c.b16 %v10209, %v10207
  %v10462 = vpack.c.b16 %v10212, %v10210
  %v10463 = vpack.c.b16 %v10213, %v10211
  %v10464 = vpack.c.b16 %v10216, %v10214
  %v10465 = vpack.c.b16 %v10217, %v10215
  %v10466 = vpack.c.b16 %v10220, %v10218
  %v10467 = vpack.c.b16 %v10221, %v10219
  %v10468 = vpack.c.b16 %v10224, %v10222
  %v10469 = vpack.c.b16 %v10225, %v10223
  %v10470 = vpack.c.b16 %v10228, %v10226
  %v10471 = vpack.c.b16 %v10229, %v10227
  %v10472 = vpack.c.b16 %v10232, %v10230
  %v10473 = vpack.c.b16 %v10233, %v10231
  %v10474 = vpack.c.b16 %v10236, %v10234
  %v10475 = vpack.c.b16 %v10237, %v10235
  %v10476 = vpack.c.b16 %v10240, %v10238
  %v10477 = vpack.c.b16 %v10241, %v10239
  %v10478 = vpack.c.b16 %v10244, %v10242
  %v10479 = vpack.c.b16 %v10245, %v10243
  %v10480 = vpack.c.b16 %v10248, %v10246
  %v10481 = vpack.c.b16 %v10249, %v10247
  %v10482 = vpack.c.b16 %v10252, %v10250
  %v10483 = vpack.c.b16 %v10253, %v10251
  %v10484 = vpack.c.b16 %v10256, %v10254
  %v10485 = vpack.c.b16 %v10257, %v10255
  %v10486 = vpack.c.b16 %v10260, %v10258
  %v10487 = vpack.c.b16 %v10261, %v10259
  %v10488 = vpack.c.b16 %v10262, %v10262
  %v10489 = vpack.c.b16 %v10263, %v10263
  %v10715 = vsel %vm3884, %v9151, 0
  %v10718 = vsel %vm3884, %v9278, 0
  %v10721 = vsel %vm3884, %v9405, 0
  %v10724 = vsel %vm3884, %v9532, 0
  %v10727 = vsel %vm3897, %v10488, 0
  %v10730 = vsel %vm3897, %v10489, 0
  %10732 = vmatprep.subr.bf16.mxu0 %v10265
  %10733 = vmatpush1.bf16.msra.mxu0 %v10264
  %10734 = vmatprep.subr.bf16.mxu0 %v10267
  %10735 = vmatpush1.bf16.msra.mxu0 %v10266
  %10736 = vmatprep.subr.bf16.mxu0 %v10269
  %10737 = vmatpush1.bf16.msra.mxu0 %v10268
  %10738 = vmatprep.subr.bf16.mxu0 %v10271
  %10739 = vmatpush1.bf16.msra.mxu0 %v10270
  %10740 = vmatprep.subr.bf16.mxu0 %v10273
  %10741 = vmatpush1.bf16.msra.mxu0 %v10272
  %10742 = vmatprep.subr.bf16.mxu0 %v10275
  %10743 = vmatpush1.bf16.msra.mxu0 %v10274
  %10744 = vmatprep.subr.bf16.mxu0 %v10277
  %10745 = vmatpush1.bf16.msra.mxu0 %v10276
  %10746 = vmatprep.subr.bf16.mxu0 %v10279
  %10747 = vmatpush1.bf16.msra.mxu0 %v10278
  %10748 = vmatprep.subr.bf16.mxu0 %v10281
  %10749 = vmatpush1.bf16.msra.mxu0 %v10280
  %10750 = vmatprep.subr.bf16.mxu0 %v10283
  %10751 = vmatpush1.bf16.msra.mxu0 %v10282
  %10752 = vmatprep.subr.bf16.mxu0 %v10285
  %10753 = vmatpush1.bf16.msra.mxu0 %v10284
  %10754 = vmatprep.subr.bf16.mxu0 %v10287
  %10755 = vmatpush1.bf16.msra.mxu0 %v10286
  %10756 = vmatprep.subr.bf16.mxu0 %v10289
  %10757 = vmatpush1.bf16.msra.mxu0 %v10288
  %10758 = vmatprep.subr.bf16.mxu0 %v10291
  %10759 = vmatpush1.bf16.msra.mxu0 %v10290
  %10760 = vmatprep.subr.bf16.mxu0 %v10293
  %10761 = vmatpush1.bf16.msra.mxu0 %v10292
  %10762 = vmatprep.subr.bf16.mxu0 %v10295
  %10763 = vmatpush1.bf16.msra.mxu0 %v10294
  %10764 = vmatprep.mubr.bf16.mxu0 %v8944
  %10765 = vmatmul.mubr.bf16.gmra.mrb[0].mxu0 %v8929
  %v10766 = vpop.f32.mrb[0].mxu0
  %v10767 = vadd.f32 %v8906, %v10766
  %v10768 = vpop.f32.mrb[0].mxu0
  %v10769 = vadd.f32 %v8910, %v10768
  %v10770 = vpop.f32.mrb[0].mxu0
  %v10771 = vadd.f32 %v8906, %v10770
  %v10772 = vpop.f32.mrb[0].mxu0
  %v10773 = vadd.f32 %v8910, %v10772
  %10774 = vmatprep.mubr.bf16.mxu0 %v9168
  %10775 = vmatmul.mubr.bf16.gmra.mrb[0].mxu0 %v9160
  %v10776 = vpop.f32.mrb[0].mxu0
  %v10777 = vadd.f32 %v8906, %v10776
  %v10778 = vpop.f32.mrb[0].mxu0
  %v10779 = vadd.f32 %v8910, %v10778
  %v10780 = vpop.f32.mrb[0].mxu0
  %v10781 = vadd.f32 %v8906, %v10780
  %v10782 = vpop.f32.mrb[0].mxu0
  %v10783 = vadd.f32 %v8910, %v10782
  %10784 = vmatprep.mubr.bf16.mxu0 %v9295
  %10785 = vmatmul.mubr.bf16.gmra.mrb[0].mxu0 %v9287
  %v10786 = vpop.f32.mrb[0].mxu0
  %v10787 = vadd.f32 %v8906, %v10786
  %v10788 = vpop.f32.mrb[0].mxu0
  %v10789 = vadd.f32 %v8910, %v10788
  %v10790 = vpop.f32.mrb[0].mxu0
  %v10791 = vadd.f32 %v8906, %v10790
  %v10792 = vpop.f32.mrb[0].mxu0
  %v10793 = vadd.f32 %v8910, %v10792
  %10794 = vmatprep.mubr.bf16.mxu0 %v9422
  %10795 = vmatmul.mubr.bf16.gmra.mrb[0].mxu0 %v9414
  %v10796 = vpop.f32.mrb[0].mxu0
  %v10797 = vadd.f32 %v8906, %v10796
  %v10798 = vpop.f32.mrb[0].mxu0
  %v10799 = vadd.f32 %v8910, %v10798
  %v10800 = vpop.f32.mrb[0].mxu0
  %v10801 = vadd.f32 %v8906, %v10800
  %v10802 = vpop.f32.mrb[0].mxu0
  %v10803 = vadd.f32 %v8910, %v10802
  %10804 = vdwg.mxu0
  %10805 = vmatprep.subr.bf16.mxu0 %v10297
  %10806 = vmatpush1.bf16.msra.mxu0 %v10296
  %10807 = vmatprep.subr.bf16.mxu0 %v10299
  %10808 = vmatpush1.bf16.msra.mxu0 %v10298
  %10809 = vmatprep.subr.bf16.mxu0 %v10301
  %10810 = vmatpush1.bf16.msra.mxu0 %v10300
  %10811 = vmatprep.subr.bf16.mxu0 %v10303
  %10812 = vmatpush1.bf16.msra.mxu0 %v10302
  %10813 = vmatprep.subr.bf16.mxu0 %v10305
  %10814 = vmatpush1.bf16.msra.mxu0 %v10304
  %10815 = vmatprep.subr.bf16.mxu0 %v10307
  %10816 = vmatpush1.bf16.msra.mxu0 %v10306
  %10817 = vmatprep.subr.bf16.mxu0 %v10309
  %10818 = vmatpush1.bf16.msra.mxu0 %v10308
  %10819 = vmatprep.subr.bf16.mxu0 %v10311
  %10820 = vmatpush1.bf16.msra.mxu0 %v10310
  %10821 = vmatprep.subr.bf16.mxu0 %v10313
  %10822 = vmatpush1.bf16.msra.mxu0 %v10312
  %10823 = vmatprep.subr.bf16.mxu0 %v10315
  %10824 = vmatpush1.bf16.msra.mxu0 %v10314
  %10825 = vmatprep.subr.bf16.mxu0 %v10317
  %10826 = vmatpush1.bf16.msra.mxu0 %v10316
  %10827 = vmatprep.subr.bf16.mxu0 %v10319
  %10828 = vmatpush1.bf16.msra.mxu0 %v10318
  %10829 = vmatprep.subr.bf16.mxu0 %v10321
  %10830 = vmatpush1.bf16.msra.mxu0 %v10320
  %10831 = vmatprep.subr.bf16.mxu0 %v10323
  %10832 = vmatpush1.bf16.msra.mxu0 %v10322
  %10833 = vmatprep.subr.bf16.mxu0 %v10325
  %10834 = vmatpush1.bf16.msra.mxu0 %v10324
  %10835 = vmatprep.subr.bf16.mxu0 %v10327
  %10836 = vmatpush1.bf16.msra.mxu0 %v10326
  %10837 = vmatprep.mubr.bf16.mxu0 %v8976
  %10838 = vmatmul.mubr.bf16.gmra.mrb[0].mxu0 %v8961
  %v10839 = vpop.f32.mrb[0].mxu0
  %v10840 = vadd.f32 %v10767, %v10839
  %v10841 = vpop.f32.mrb[0].mxu0
  %v10842 = vadd.f32 %v10769, %v10841
  %v10843 = vpop.f32.mrb[0].mxu0
  %v10844 = vadd.f32 %v10771, %v10843
  %v10845 = vpop.f32.mrb[0].mxu0
  %v10846 = vadd.f32 %v10773, %v10845
  %10847 = vmatprep.mubr.bf16.mxu0 %v9185
  %10848 = vmatmul.mubr.bf16.gmra.mrb[0].mxu0 %v9177
  %v10849 = vpop.f32.mrb[0].mxu0
  %v10850 = vadd.f32 %v10777, %v10849
  %v10851 = vpop.f32.mrb[0].mxu0
  %v10852 = vadd.f32 %v10779, %v10851
  %v10853 = vpop.f32.mrb[0].mxu0
  %v10854 = vadd.f32 %v10781, %v10853
  %v10855 = vpop.f32.mrb[0].mxu0
  %v10856 = vadd.f32 %v10783, %v10855
  %10857 = vmatprep.mubr.bf16.mxu0 %v9312
  %10858 = vmatmul.mubr.bf16.gmra.mrb[0].mxu0 %v9304
  %v10859 = vpop.f32.mrb[0].mxu0
  %v10860 = vadd.f32 %v10787, %v10859
  %v10861 = vpop.f32.mrb[0].mxu0
  %v10862 = vadd.f32 %v10789, %v10861
  %v10863 = vpop.f32.mrb[0].mxu0
  %v10864 = vadd.f32 %v10791, %v10863
  %v10865 = vpop.f32.mrb[0].mxu0
  %v10866 = vadd.f32 %v10793, %v10865
  %10867 = vmatprep.mubr.bf16.mxu0 %v9439
  %10868 = vmatmul.mubr.bf16.gmra.mrb[0].mxu0 %v9431
  %v10869 = vpop.f32.mrb[0].mxu0
  %v10870 = vadd.f32 %v10797, %v10869
  %v10871 = vpop.f32.mrb[0].mxu0
  %v10872 = vadd.f32 %v10799, %v10871
  %v10873 = vpop.f32.mrb[0].mxu0
  %v10874 = vadd.f32 %v10801, %v10873
  %v10875 = vpop.f32.mrb[0].mxu0
  %v10876 = vadd.f32 %v10803, %v10875
  %10877 = vdwg.mxu0
  %10878 = vmatprep.subr.bf16.mxu0 %v10329
  %10879 = vmatpush1.bf16.msra.mxu0 %v10328
  %10880 = vmatprep.subr.bf16.mxu0 %v10331
  %10881 = vmatpush1.bf16.msra.mxu0 %v10330
  %10882 = vmatprep.subr.bf16.mxu0 %v10333
  %10883 = vmatpush1.bf16.msra.mxu0 %v10332
  %10884 = vmatprep.subr.bf16.mxu0 %v10335
  %10885 = vmatpush1.bf16.msra.mxu0 %v10334
  %10886 = vmatprep.subr.bf16.mxu0 %v10337
  %10887 = vmatpush1.bf16.msra.mxu0 %v10336
  %10888 = vmatprep.subr.bf16.mxu0 %v10339
  %10889 = vmatpush1.bf16.msra.mxu0 %v10338
  %10890 = vmatprep.subr.bf16.mxu0 %v10341
  %10891 = vmatpush1.bf16.msra.mxu0 %v10340
  %10892 = vmatprep.subr.bf16.mxu0 %v10343
  %10893 = vmatpush1.bf16.msra.mxu0 %v10342
  %10894 = vmatprep.subr.bf16.mxu0 %v10345
  %10895 = vmatpush1.bf16.msra.mxu0 %v10344
  %10896 = vmatprep.subr.bf16.mxu0 %v10347
  %10897 = vmatpush1.bf16.msra.mxu0 %v10346
  %10898 = vmatprep.subr.bf16.mxu0 %v10349
  %10899 = vmatpush1.bf16.msra.mxu0 %v10348
  %10900 = vmatprep.subr.bf16.mxu0 %v10351
  %10901 = vmatpush1.bf16.msra.mxu0 %v10350
  %10902 = vmatprep.subr.bf16.mxu0 %v10353
  %10903 = vmatpush1.bf16.msra.mxu0 %v10352
  %10904 = vmatprep.subr.bf16.mxu0 %v10355
  %10905 = vmatpush1.bf16.msra.mxu0 %v10354
  %10906 = vmatprep.subr.bf16.mxu0 %v10357
  %10907 = vmatpush1.bf16.msra.mxu0 %v10356
  %10908 = vmatprep.subr.bf16.mxu0 %v10359
  %10909 = vmatpush1.bf16.msra.mxu0 %v10358
  %10910 = vmatprep.mubr.bf16.mxu0 %v9008
  %10911 = vmatmul.mubr.bf16.gmra.mrb[0].mxu0 %v8991
  %v10912 = vpop.f32.mrb[0].mxu0
  %v10913 = vadd.f32 %v10840, %v10912
  %v10914 = vpop.f32.mrb[0].mxu0
  %v10915 = vadd.f32 %v10842, %v10914
  %v10916 = vpop.f32.mrb[0].mxu0
  %v10917 = vadd.f32 %v10844, %v10916
  %v10918 = vpop.f32.mrb[0].mxu0
  %v10919 = vadd.f32 %v10846, %v10918
  %10920 = vmatprep.mubr.bf16.mxu0 %v9202
  %10921 = vmatmul.mubr.bf16.gmra.mrb[0].mxu0 %v9193
  %v10922 = vpop.f32.mrb[0].mxu0
  %v10923 = vadd.f32 %v10850, %v10922
  %v10924 = vpop.f32.mrb[0].mxu0
  %v10925 = vadd.f32 %v10852, %v10924
  %v10926 = vpop.f32.mrb[0].mxu0
  %v10927 = vadd.f32 %v10854, %v10926
  %v10928 = vpop.f32.mrb[0].mxu0
  %v10929 = vadd.f32 %v10856, %v10928
  %10930 = vmatprep.mubr.bf16.mxu0 %v9329
  %10931 = vmatmul.mubr.bf16.gmra.mrb[0].mxu0 %v9320
  %v10932 = vpop.f32.mrb[0].mxu0
  %v10933 = vadd.f32 %v10860, %v10932
  %v10934 = vpop.f32.mrb[0].mxu0
  %v10935 = vadd.f32 %v10862, %v10934
  %v10936 = vpop.f32.mrb[0].mxu0
  %v10937 = vadd.f32 %v10864, %v10936
  %v10938 = vpop.f32.mrb[0].mxu0
  %v10939 = vadd.f32 %v10866, %v10938
  %10940 = vmatprep.mubr.bf16.mxu0 %v9456
  %10941 = vmatmul.mubr.bf16.gmra.mrb[0].mxu0 %v9447
  %v10942 = vpop.f32.mrb[0].mxu0
  %v10943 = vadd.f32 %v10870, %v10942
  %v10944 = vpop.f32.mrb[0].mxu0
  %v10945 = vadd.f32 %v10872, %v10944
  %v10946 = vpop.f32.mrb[0].mxu0
  %v10947 = vadd.f32 %v10874, %v10946
  %v10948 = vpop.f32.mrb[0].mxu0
  %v10949 = vadd.f32 %v10876, %v10948
  %10950 = vdwg.mxu0
  %10951 = vmatprep.subr.bf16.mxu0 %v10361
  %10952 = vmatpush1.bf16.msra.mxu0 %v10360
  %10953 = vmatprep.subr.bf16.mxu0 %v10363
  %10954 = vmatpush1.bf16.msra.mxu0 %v10362
  %10955 = vmatprep.subr.bf16.mxu0 %v10365
  %10956 = vmatpush1.bf16.msra.mxu0 %v10364
  %10957 = vmatprep.subr.bf16.mxu0 %v10367
  %10958 = vmatpush1.bf16.msra.mxu0 %v10366
  %10959 = vmatprep.subr.bf16.mxu0 %v10369
  %10960 = vmatpush1.bf16.msra.mxu0 %v10368
  %10961 = vmatprep.subr.bf16.mxu0 %v10371
  %10962 = vmatpush1.bf16.msra.mxu0 %v10370
  %10963 = vmatprep.subr.bf16.mxu0 %v10373
  %10964 = vmatpush1.bf16.msra.mxu0 %v10372
  %10965 = vmatprep.subr.bf16.mxu0 %v10375
  %10966 = vmatpush1.bf16.msra.mxu0 %v10374
  %10967 = vmatprep.subr.bf16.mxu0 %v10377
  %10968 = vmatpush1.bf16.msra.mxu0 %v10376
  %10969 = vmatprep.subr.bf16.mxu0 %v10379
  %10970 = vmatpush1.bf16.msra.mxu0 %v10378
  %10971 = vmatprep.subr.bf16.mxu0 %v10381
  %10972 = vmatpush1.bf16.msra.mxu0 %v10380
  %10973 = vmatprep.subr.bf16.mxu0 %v10383
  %10974 = vmatpush1.bf16.msra.mxu0 %v10382
  %10975 = vmatprep.subr.bf16.mxu0 %v10385
  %10976 = vmatpush1.bf16.msra.mxu0 %v10384
  %10977 = vmatprep.subr.bf16.mxu0 %v10387
  %10978 = vmatpush1.bf16.msra.mxu0 %v10386
  %10979 = vmatprep.subr.bf16.mxu0 %v10389
  %10980 = vmatpush1.bf16.msra.mxu0 %v10388
  %10981 = vmatprep.subr.bf16.mxu0 %v10391
  %10982 = vmatpush1.bf16.msra.mxu0 %v10390
  %10983 = vmatprep.mubr.bf16.mxu0 %v9038
  %10984 = vmatmul.mubr.bf16.gmra.mrb[0].mxu0 %v9023
  %v10985 = vpop.f32.mrb[0].mxu0
  %v10986 = vadd.f32 %v10913, %v10985
  %v10987 = vpop.f32.mrb[0].mxu0
  %v10988 = vadd.f32 %v10915, %v10987
  %v10989 = vpop.f32.mrb[0].mxu0
  %v10990 = vadd.f32 %v10917, %v10989
  %v10991 = vpop.f32.mrb[0].mxu0
  %v10992 = vadd.f32 %v10919, %v10991
  %10993 = vmatprep.mubr.bf16.mxu0 %v9218
  %10994 = vmatmul.mubr.bf16.gmra.mrb[0].mxu0 %v9210
  %v10995 = vpop.f32.mrb[0].mxu0
  %v10996 = vadd.f32 %v10923, %v10995
  %v10997 = vpop.f32.mrb[0].mxu0
  %v10998 = vadd.f32 %v10925, %v10997
  %v10999 = vpop.f32.mrb[0].mxu0
  %v11000 = vadd.f32 %v10927, %v10999
  %v11001 = vpop.f32.mrb[0].mxu0
  %v11002 = vadd.f32 %v10929, %v11001
  %11003 = vmatprep.mubr.bf16.mxu0 %v9345
  %11004 = vmatmul.mubr.bf16.gmra.mrb[0].mxu0 %v9337
  %v11005 = vpop.f32.mrb[0].mxu0
  %v11006 = vadd.f32 %v10933, %v11005
  %v11007 = vpop.f32.mrb[0].mxu0
  %v11008 = vadd.f32 %v10935, %v11007
  %v11009 = vpop.f32.mrb[0].mxu0
  %v11010 = vadd.f32 %v10937, %v11009
  %v11011 = vpop.f32.mrb[0].mxu0
  %v11012 = vadd.f32 %v10939, %v11011
  %11013 = vmatprep.mubr.bf16.mxu0 %v9472
  %11014 = vmatmul.mubr.bf16.gmra.mrb[0].mxu0 %v9464
  %v11015 = vpop.f32.mrb[0].mxu0
  %v11016 = vadd.f32 %v10943, %v11015
  %v11017 = vpop.f32.mrb[0].mxu0
  %v11018 = vadd.f32 %v10945, %v11017
  %v11019 = vpop.f32.mrb[0].mxu0
  %v11020 = vadd.f32 %v10947, %v11019
  %v11021 = vpop.f32.mrb[0].mxu0
  %v11022 = vadd.f32 %v10949, %v11021
  %11023 = vdwg.mxu0
  %11024 = vmatprep.subr.bf16.mxu0 %v10393
  %11025 = vmatpush1.bf16.msra.mxu0 %v10392
  %11026 = vmatprep.subr.bf16.mxu0 %v10395
  %11027 = vmatpush1.bf16.msra.mxu0 %v10394
  %11028 = vmatprep.subr.bf16.mxu0 %v10397
  %11029 = vmatpush1.bf16.msra.mxu0 %v10396
  %11030 = vmatprep.subr.bf16.mxu0 %v10399
  %11031 = vmatpush1.bf16.msra.mxu0 %v10398
  %11032 = vmatprep.subr.bf16.mxu0 %v10401
  %11033 = vmatpush1.bf16.msra.mxu0 %v10400
  %11034 = vmatprep.subr.bf16.mxu0 %v10403
  %11035 = vmatpush1.bf16.msra.mxu0 %v10402
  %11036 = vmatprep.subr.bf16.mxu0 %v10405
  %11037 = vmatpush1.bf16.msra.mxu0 %v10404
  %11038 = vmatprep.subr.bf16.mxu0 %v10407
  %11039 = vmatpush1.bf16.msra.mxu0 %v10406
  %11040 = vmatprep.subr.bf16.mxu0 %v10409
  %11041 = vmatpush1.bf16.msra.mxu0 %v10408
  %11042 = vmatprep.subr.bf16.mxu0 %v10411
  %11043 = vmatpush1.bf16.msra.mxu0 %v10410
  %11044 = vmatprep.subr.bf16.mxu0 %v10413
  %11045 = vmatpush1.bf16.msra.mxu0 %v10412
  %11046 = vmatprep.subr.bf16.mxu0 %v10415
  %11047 = vmatpush1.bf16.msra.mxu0 %v10414
  %11048 = vmatprep.subr.bf16.mxu0 %v10417
  %11049 = vmatpush1.bf16.msra.mxu0 %v10416
  %11050 = vmatprep.subr.bf16.mxu0 %v10419
  %11051 = vmatpush1.bf16.msra.mxu0 %v10418
  %11052 = vmatprep.subr.bf16.mxu0 %v10421
  %11053 = vmatpush1.bf16.msra.mxu0 %v10420
  %11054 = vmatprep.subr.bf16.mxu0 %v10423
  %11055 = vmatpush1.bf16.msra.mxu0 %v10422
  %11056 = vmatprep.mubr.bf16.mxu0 %v9070
  %11057 = vmatmul.mubr.bf16.gmra.mrb[0].mxu0 %v9055
  %v11058 = vpop.f32.mrb[0].mxu0
  %v11059 = vadd.f32 %v10986, %v11058
  %v11060 = vpop.f32.mrb[0].mxu0
  %v11061 = vadd.f32 %v10988, %v11060
  %v11062 = vpop.f32.mrb[0].mxu0
  %v11063 = vadd.f32 %v10990, %v11062
  %v11064 = vpop.f32.mrb[0].mxu0
  %v11065 = vadd.f32 %v10992, %v11064
  %11066 = vmatprep.mubr.bf16.mxu0 %v9235
  %11067 = vmatmul.mubr.bf16.gmra.mrb[0].mxu0 %v9227
  %v11068 = vpop.f32.mrb[0].mxu0
  %v11069 = vadd.f32 %v10996, %v11068
  %v11070 = vpop.f32.mrb[0].mxu0
  %v11071 = vadd.f32 %v10998, %v11070
  %v11072 = vpop.f32.mrb[0].mxu0
  %v11073 = vadd.f32 %v11000, %v11072
  %v11074 = vpop.f32.mrb[0].mxu0
  %v11075 = vadd.f32 %v11002, %v11074
  %11076 = vmatprep.mubr.bf16.mxu0 %v9362
  %11077 = vmatmul.mubr.bf16.gmra.mrb[0].mxu0 %v9354
  %v11078 = vpop.f32.mrb[0].mxu0
  %v11079 = vadd.f32 %v11006, %v11078
  %v11080 = vpop.f32.mrb[0].mxu0
  %v11081 = vadd.f32 %v11008, %v11080
  %v11082 = vpop.f32.mrb[0].mxu0
  %v11083 = vadd.f32 %v11010, %v11082
  %v11084 = vpop.f32.mrb[0].mxu0
  %v11085 = vadd.f32 %v11012, %v11084
  %11086 = vmatprep.mubr.bf16.mxu0 %v9489
  %11087 = vmatmul.mubr.bf16.gmra.mrb[0].mxu0 %v9481
  %v11088 = vpop.f32.mrb[0].mxu0
  %v11089 = vadd.f32 %v11016, %v11088
  %v11090 = vpop.f32.mrb[0].mxu0
  %v11091 = vadd.f32 %v11018, %v11090
  %v11092 = vpop.f32.mrb[0].mxu0
  %v11093 = vadd.f32 %v11020, %v11092
  %v11094 = vpop.f32.mrb[0].mxu0
  %v11095 = vadd.f32 %v11022, %v11094
  %11096 = vdwg.mxu0
  %11097 = vmatprep.subr.bf16.mxu0 %v10425
  %11098 = vmatpush1.bf16.msra.mxu0 %v10424
  %11099 = vmatprep.subr.bf16.mxu0 %v10427
  %11100 = vmatpush1.bf16.msra.mxu0 %v10426
  %11101 = vmatprep.subr.bf16.mxu0 %v10429
  %11102 = vmatpush1.bf16.msra.mxu0 %v10428
  %11103 = vmatprep.subr.bf16.mxu0 %v10431
  %11104 = vmatpush1.bf16.msra.mxu0 %v10430
  %11105 = vmatprep.subr.bf16.mxu0 %v10433
  %11106 = vmatpush1.bf16.msra.mxu0 %v10432
  %11107 = vmatprep.subr.bf16.mxu0 %v10435
  %11108 = vmatpush1.bf16.msra.mxu0 %v10434
  %11109 = vmatprep.subr.bf16.mxu0 %v10437
  %11110 = vmatpush1.bf16.msra.mxu0 %v10436
  %11111 = vmatprep.subr.bf16.mxu0 %v10439
  %11112 = vmatpush1.bf16.msra.mxu0 %v10438
  %11113 = vmatprep.subr.bf16.mxu0 %v10441
  %11114 = vmatpush1.bf16.msra.mxu0 %v10440
  %11115 = vmatprep.subr.bf16.mxu0 %v10443
  %11116 = vmatpush1.bf16.msra.mxu0 %v10442
  %11117 = vmatprep.subr.bf16.mxu0 %v10445
  %11118 = vmatpush1.bf16.msra.mxu0 %v10444
  %11119 = vmatprep.subr.bf16.mxu0 %v10447
  %11120 = vmatpush1.bf16.msra.mxu0 %v10446
  %11121 = vmatprep.subr.bf16.mxu0 %v10449
  %11122 = vmatpush1.bf16.msra.mxu0 %v10448
  %11123 = vmatprep.subr.bf16.mxu0 %v10451
  %11124 = vmatpush1.bf16.msra.mxu0 %v10450
  %11125 = vmatprep.subr.bf16.mxu0 %v10453
  %11126 = vmatpush1.bf16.msra.mxu0 %v10452
  %11127 = vmatprep.subr.bf16.mxu0 %v10455
  %11128 = vmatpush1.bf16.msra.mxu0 %v10454
  %11129 = vmatprep.mubr.bf16.mxu0 %v9102
  %11130 = vmatmul.mubr.bf16.gmra.mrb[0].mxu0 %v9085
  %v11131 = vpop.f32.mrb[0].mxu0
  %v11132 = vadd.f32 %v11059, %v11131
  %v11133 = vpop.f32.mrb[0].mxu0
  %v11134 = vadd.f32 %v11061, %v11133
  %v11135 = vpop.f32.mrb[0].mxu0
  %v11136 = vadd.f32 %v11063, %v11135
  %v11137 = vpop.f32.mrb[0].mxu0
  %v11138 = vadd.f32 %v11065, %v11137
  %11139 = vmatprep.mubr.bf16.mxu0 %v9252
  %11140 = vmatmul.mubr.bf16.gmra.mrb[0].mxu0 %v9243
  %v11141 = vpop.f32.mrb[0].mxu0
  %v11142 = vadd.f32 %v11069, %v11141
  %v11143 = vpop.f32.mrb[0].mxu0
  %v11144 = vadd.f32 %v11071, %v11143
  %v11145 = vpop.f32.mrb[0].mxu0
  %v11146 = vadd.f32 %v11073, %v11145
  %v11147 = vpop.f32.mrb[0].mxu0
  %v11148 = vadd.f32 %v11075, %v11147
  %11149 = vmatprep.mubr.bf16.mxu0 %v9379
  %11150 = vmatmul.mubr.bf16.gmra.mrb[0].mxu0 %v9370
  %v11151 = vpop.f32.mrb[0].mxu0
  %v11152 = vadd.f32 %v11079, %v11151
  %v11153 = vpop.f32.mrb[0].mxu0
  %v11154 = vadd.f32 %v11081, %v11153
  %v11155 = vpop.f32.mrb[0].mxu0
  %v11156 = vadd.f32 %v11083, %v11155
  %v11157 = vpop.f32.mrb[0].mxu0
  %v11158 = vadd.f32 %v11085, %v11157
  %11159 = vmatprep.mubr.bf16.mxu0 %v9506
  %11160 = vmatmul.mubr.bf16.gmra.mrb[0].mxu0 %v9497
  %v11161 = vpop.f32.mrb[0].mxu0
  %v11162 = vadd.f32 %v11089, %v11161
  %v11163 = vpop.f32.mrb[0].mxu0
  %v11164 = vadd.f32 %v11091, %v11163
  %v11165 = vpop.f32.mrb[0].mxu0
  %v11166 = vadd.f32 %v11093, %v11165
  %v11167 = vpop.f32.mrb[0].mxu0
  %v11168 = vadd.f32 %v11095, %v11167
  %11169 = vdwg.mxu0
  %11170 = vmatprep.subr.bf16.mxu0 %v10457
  %11171 = vmatpush1.bf16.msra.mxu0 %v10456
  %11172 = vmatprep.subr.bf16.mxu0 %v10459
  %11173 = vmatpush1.bf16.msra.mxu0 %v10458
  %11174 = vmatprep.subr.bf16.mxu0 %v10461
  %11175 = vmatpush1.bf16.msra.mxu0 %v10460
  %11176 = vmatprep.subr.bf16.mxu0 %v10463
  %11177 = vmatpush1.bf16.msra.mxu0 %v10462
  %11178 = vmatprep.subr.bf16.mxu0 %v10465
  %11179 = vmatpush1.bf16.msra.mxu0 %v10464
  %11180 = vmatprep.subr.bf16.mxu0 %v10467
  %11181 = vmatpush1.bf16.msra.mxu0 %v10466
  %11182 = vmatprep.subr.bf16.mxu0 %v10469
  %11183 = vmatpush1.bf16.msra.mxu0 %v10468
  %11184 = vmatprep.subr.bf16.mxu0 %v10471
  %11185 = vmatpush1.bf16.msra.mxu0 %v10470
  %11186 = vmatprep.subr.bf16.mxu0 %v10473
  %11187 = vmatpush1.bf16.msra.mxu0 %v10472
  %11188 = vmatprep.subr.bf16.mxu0 %v10475
  %11189 = vmatpush1.bf16.msra.mxu0 %v10474
  %11190 = vmatprep.subr.bf16.mxu0 %v10477
  %11191 = vmatpush1.bf16.msra.mxu0 %v10476
  %11192 = vmatprep.subr.bf16.mxu0 %v10479
  %11193 = vmatpush1.bf16.msra.mxu0 %v10478
  %11194 = vmatprep.subr.bf16.mxu0 %v10481
  %11195 = vmatpush1.bf16.msra.mxu0 %v10480
  %11196 = vmatprep.subr.bf16.mxu0 %v10483
  %11197 = vmatpush1.bf16.msra.mxu0 %v10482
  %11198 = vmatprep.subr.bf16.mxu0 %v10485
  %11199 = vmatpush1.bf16.msra.mxu0 %v10484
  %11200 = vmatprep.subr.bf16.mxu0 %v10487
  %11201 = vmatpush1.bf16.msra.mxu0 %v10486
  %11202 = vmatprep.mubr.bf16.mxu0 %v9134
  %11203 = vmatmul.mubr.bf16.gmra.mrb[0].mxu0 %v9117
  %v11204 = vpop.f32.mrb[0].mxu0
  %v11205 = vadd.f32 %v11132, %v11204
  %v11206 = vpop.f32.mrb[0].mxu0
  %v11207 = vadd.f32 %v11134, %v11206
  %v11208 = vpop.f32.mrb[0].mxu0
  %v11209 = vadd.f32 %v11136, %v11208
  %v11210 = vpop.f32.mrb[0].mxu0
  %v11211 = vadd.f32 %v11138, %v11210
  %11212 = vmatprep.mubr.bf16.mxu0 %v9269
  %11213 = vmatmul.mubr.bf16.gmra.mrb[0].mxu0 %v9260
  %v11214 = vpop.f32.mrb[0].mxu0
  %v11215 = vadd.f32 %v11142, %v11214
  %v11216 = vpop.f32.mrb[0].mxu0
  %v11217 = vadd.f32 %v11144, %v11216
  %v11218 = vpop.f32.mrb[0].mxu0
  %v11219 = vadd.f32 %v11146, %v11218
  %v11220 = vpop.f32.mrb[0].mxu0
  %v11221 = vadd.f32 %v11148, %v11220
  %11222 = vmatprep.mubr.bf16.mxu0 %v9396
  %11223 = vmatmul.mubr.bf16.gmra.mrb[0].mxu0 %v9387
  %v11224 = vpop.f32.mrb[0].mxu0
  %v11225 = vadd.f32 %v11152, %v11224
  %v11226 = vpop.f32.mrb[0].mxu0
  %v11227 = vadd.f32 %v11154, %v11226
  %v11228 = vpop.f32.mrb[0].mxu0
  %v11229 = vadd.f32 %v11156, %v11228
  %v11230 = vpop.f32.mrb[0].mxu0
  %v11231 = vadd.f32 %v11158, %v11230
  %11232 = vmatprep.mubr.bf16.mxu0 %v9523
  %11233 = vmatmul.mubr.bf16.gmra.mrb[0].mxu0 %v9514
  %v11234 = vpop.f32.mrb[0].mxu0
  %v11235 = vadd.f32 %v11162, %v11234
  %v11236 = vpop.f32.mrb[0].mxu0
  %v11237 = vadd.f32 %v11164, %v11236
  %v11238 = vpop.f32.mrb[0].mxu0
  %v11239 = vadd.f32 %v11166, %v11238
  %v11240 = vpop.f32.mrb[0].mxu0
  %v11241 = vadd.f32 %v11168, %v11240
  %11242 = vdwg.mxu0
  %11243 = vmatprep.subr.bf16.mxu0 %v10730
  %11244 = vmatpush1.bf16.msra.mxu0 %v10727
  %11245 = vmatprep.subr.bf16.mxu0 0
  %11246 = vmatpush1.bf16.msra.mxu0 0
  %11247 = vmatprep.subr.bf16.mxu0 0
  %11248 = vmatpush1.bf16.msra.mxu0 0
  %11249 = vmatprep.subr.bf16.mxu0 0
  %11250 = vmatpush1.bf16.msra.mxu0 0
  %11251 = vmatprep.subr.bf16.mxu0 0
  %11252 = vmatpush1.bf16.msra.mxu0 0
  %11253 = vmatprep.subr.bf16.mxu0 0
  %11254 = vmatpush1.bf16.msra.mxu0 0
  %11255 = vmatprep.subr.bf16.mxu0 0
  %11256 = vmatpush1.bf16.msra.mxu0 0
  %11257 = vmatprep.subr.bf16.mxu0 0
  %11258 = vmatpush1.bf16.msra.mxu0 0
  %11259 = vmatprep.subr.bf16.mxu0 0
  %11260 = vmatpush1.bf16.msra.mxu0 0
  %11261 = vmatprep.subr.bf16.mxu0 0
  %11262 = vmatpush1.bf16.msra.mxu0 0
  %11263 = vmatprep.subr.bf16.mxu0 0
  %11264 = vmatpush1.bf16.msra.mxu0 0
  %11265 = vmatprep.subr.bf16.mxu0 0
  %11266 = vmatpush1.bf16.msra.mxu0 0
  %11267 = vmatprep.subr.bf16.mxu0 0
  %11268 = vmatpush1.bf16.msra.mxu0 0
  %11269 = vmatprep.subr.bf16.mxu0 0
  %11270 = vmatpush1.bf16.msra.mxu0 0
  %11271 = vmatprep.subr.bf16.mxu0 0
  %11272 = vmatpush1.bf16.msra.mxu0 0
  %11273 = vmatprep.subr.bf16.mxu0 0
  %11274 = vmatpush1.bf16.msra.mxu0 0
  %11275 = vmatprep.mubr.bf16.mxu0 0
  %11276 = vmatmul.mubr.bf16.gmra.mrb[0].mxu0 %v10715
  %v11277 = vpop.f32.mrb[0].mxu0
  %v11278 = vadd.f32 %v11205, %v11277
  %v11279 = vpop.f32.mrb[0].mxu0
  %v11280 = vadd.f32 %v11207, %v11279
  %v11281 = vpop.f32.mrb[0].mxu0
  %v11282 = vadd.f32 %v11209, %v11281
  %v11283 = vpop.f32.mrb[0].mxu0
  %v11284 = vadd.f32 %v11211, %v11283
  %11285 = vmatprep.mubr.bf16.mxu0 0
  %11286 = vmatmul.mubr.bf16.gmra.mrb[0].mxu0 %v10718
  %v11287 = vpop.f32.mrb[0].mxu0
  %v11288 = vadd.f32 %v11215, %v11287
  %v11289 = vpop.f32.mrb[0].mxu0
  %v11290 = vadd.f32 %v11217, %v11289
  %v11291 = vpop.f32.mrb[0].mxu0
  %v11292 = vadd.f32 %v11219, %v11291
  %v11293 = vpop.f32.mrb[0].mxu0
  %v11294 = vadd.f32 %v11221, %v11293
  %11295 = vmatprep.mubr.bf16.mxu0 0
  %11296 = vmatmul.mubr.bf16.gmra.mrb[0].mxu0 %v10721
  %v11297 = vpop.f32.mrb[0].mxu0
  %v11298 = vadd.f32 %v11225, %v11297
  %v11299 = vpop.f32.mrb[0].mxu0
  %v11300 = vadd.f32 %v11227, %v11299
  %v11301 = vpop.f32.mrb[0].mxu0
  %v11302 = vadd.f32 %v11229, %v11301
  %v11303 = vpop.f32.mrb[0].mxu0
  %v11304 = vadd.f32 %v11231, %v11303
  %11305 = vmatprep.mubr.bf16.mxu0 0
  %11306 = vmatmul.mubr.bf16.gmra.mrb[0].mxu0 %v10724
  %v11307 = vpop.f32.mrb[0].mxu0
  %v11308 = vadd.f32 %v11235, %v11307
  %v11309 = vpop.f32.mrb[0].mxu0
  %v11310 = vadd.f32 %v11237, %v11309
  %v11311 = vpop.f32.mrb[0].mxu0
  %v11312 = vadd.f32 %v11239, %v11311
  %v11313 = vpop.f32.mrb[0].mxu0
  %v11314 = vadd.f32 %v11241, %v11313
  %11315 = vdwg.mxu0
  %v11316 = vmul.f32 %v11278, %v320
  %v11317 = vmul.f32 %v11280, %v321
  %v11318 = vmul.f32 %v11282, %v322
  %v11319 = vmul.f32 %v11284, %v323
  %v11320 = vmul.f32 %v11288, %v324
  %v11321 = vmul.f32 %v11290, %v325
  %v11322 = vmul.f32 %v11292, %v326
  %v11323 = vmul.f32 %v11294, %v327
  %v11324 = vmul.f32 %v11298, %v328
  %v11325 = vmul.f32 %v11300, %v329
  %v11326 = vmul.f32 %v11302, %v330
  %v11327 = vmul.f32 %v11304, %v331
  %v11328 = vmul.f32 %v11308, %v332
  %v11329 = vmul.f32 %v11310, %v333
  %v11330 = vmul.f32 %v11312, %v334
  %v11331 = vmul.f32 %v11314, %v335
  %v11332 = vadd.f32 %v11316, %v11318
  %v11333 = vadd.f32 %v11332, %v11320
  %v11334 = vadd.f32 %v11333, %v11322
  %v11335 = vadd.f32 %v11334, %v11324
  %v11336 = vadd.f32 %v11335, %v11326
  %v11337 = vadd.f32 %v11336, %v11328
  %v11338 = vadd.f32 %v11337, %v11330
  %v11339 = vrot.slane %v11338, 4
  %v11340 = vadd.f32 %v11338, %v11339
  %v11341 = vrot.slane %v11340, 2
  %v11342 = vadd.f32 %v11340, %v11341
  %v11343 = vrot.slane %v11342, 1
  %v11344 = vadd.f32 %v11342, %v11343
  %v11345 = vsel %vm1720, %v11317, 0.0
  %v11346 = vsel %vm1720, %v11319, 0.0
  %v11347 = vadd.f32 %v11345, %v11346
  %v11348 = vsel %vm1720, %v11321, 0.0
  %v11349 = vadd.f32 %v11347, %v11348
  %v11350 = vsel %vm1720, %v11323, 0.0
  %v11351 = vadd.f32 %v11349, %v11350
  %v11352 = vsel %vm1720, %v11325, 0.0
  %v11353 = vadd.f32 %v11351, %v11352
  %v11354 = vsel %vm1720, %v11327, 0.0
  %v11355 = vadd.f32 %v11353, %v11354
  %v11356 = vsel %vm1720, %v11329, 0.0
  %v11357 = vadd.f32 %v11355, %v11356
  %v11358 = vsel %vm1720, %v11331, 0.0
  %v11359 = vadd.f32 %v11357, %v11358
  %v11360 = vrot.slane %v11359, 4
  %v11361 = vadd.f32 %v11359, %v11360
  %v11362 = vrot.slane %v11361, 2
  %v11363 = vadd.f32 %v11361, %v11362
  %v11364 = vrot.slane %v11363, 1
  %v11365 = vadd.f32 %v11363, %v11364
  %v11366 = vmul.f32 %v11316, %v11316
  %v11367 = vmul.f32 %v11317, %v11317
  %v11368 = vmul.f32 %v11318, %v11318
  %v11369 = vmul.f32 %v11319, %v11319
  %v11370 = vmul.f32 %v11320, %v11320
  %v11371 = vmul.f32 %v11321, %v11321
  %v11372 = vmul.f32 %v11322, %v11322
  %v11373 = vmul.f32 %v11323, %v11323
  %v11374 = vmul.f32 %v11324, %v11324
  %v11375 = vmul.f32 %v11325, %v11325
  %v11376 = vmul.f32 %v11326, %v11326
  %v11377 = vmul.f32 %v11327, %v11327
  %v11378 = vmul.f32 %v11328, %v11328
  %v11379 = vmul.f32 %v11329, %v11329
  %v11380 = vmul.f32 %v11330, %v11330
  %v11381 = vmul.f32 %v11331, %v11331
  %v11382 = vadd.f32 %v11366, %v11368
  %v11383 = vadd.f32 %v11382, %v11370
  %v11384 = vadd.f32 %v11383, %v11372
  %v11385 = vadd.f32 %v11384, %v11374
  %v11386 = vadd.f32 %v11385, %v11376
  %v11387 = vadd.f32 %v11386, %v11378
  %v11388 = vadd.f32 %v11387, %v11380
  %v11389 = vrot.slane %v11388, 4
  %v11390 = vadd.f32 %v11388, %v11389
  %v11391 = vrot.slane %v11390, 2
  %v11392 = vadd.f32 %v11390, %v11391
  %v11393 = vrot.slane %v11392, 1
  %v11394 = vadd.f32 %v11392, %v11393
  %v11395 = vsel %vm1720, %v11367, 0.0
  %v11396 = vsel %vm1720, %v11369, 0.0
  %v11397 = vadd.f32 %v11395, %v11396
  %v11398 = vsel %vm1720, %v11371, 0.0
  %v11399 = vadd.f32 %v11397, %v11398
  %v11400 = vsel %vm1720, %v11373, 0.0
  %v11401 = vadd.f32 %v11399, %v11400
  %v11402 = vsel %vm1720, %v11375, 0.0
  %v11403 = vadd.f32 %v11401, %v11402
  %v11404 = vsel %vm1720, %v11377, 0.0
  %v11405 = vadd.f32 %v11403, %v11404
  %v11406 = vsel %vm1720, %v11379, 0.0
  %v11407 = vadd.f32 %v11405, %v11406
  %v11408 = vsel %vm1720, %v11381, 0.0
  %v11409 = vadd.f32 %v11407, %v11408
  %v11410 = vrot.slane %v11409, 4
  %v11411 = vadd.f32 %v11409, %v11410
  %v11412 = vrot.slane %v11411, 2
  %v11413 = vadd.f32 %v11411, %v11412
  %v11414 = vrot.slane %v11413, 1
  %v11415 = vadd.f32 %v11413, %v11414
  %v11416 = vsel %vm4588, %v11344, %v11394
  %v11417 = vsel %vm4588, %v11365, %v11415
  %v11418 = vld [vmem:[%s27] sm:$0xff]
  %v11419 = vld [vmem:[%s27 + $0x8] sm:$0xff]
  %v11420 = vld [vmem:[%s27 + $0x10] sm:$0xff]
  %v11421 = vld [vmem:[%s27 + $0x18] sm:$0xff]
  %v11422 = vld [vmem:[%s27 + $0x20] sm:$0xff]
  %v11423 = vld [vmem:[%s27 + $0x28] sm:$0xff]
  %v11424 = vld [vmem:[%s27 + $0x30] sm:$0xff]
  %v11425 = vld [vmem:[%s27 + $0x38] sm:$0xff]
  %v11426 = vld [vmem:[%s27 + $0x40] sm:$0xff]
  %v11427 = vld [vmem:[%s27 + $0x48] sm:$0xff]
  %v11428 = vld [vmem:[%s27 + $0x50] sm:$0xff]
  %v11429 = vld [vmem:[%s27 + $0x58] sm:$0xff]
  %v11430 = vld [vmem:[%s27 + $0x60] sm:$0xff]
  %v11431 = vld [vmem:[%s27 + $0x68] sm:$0xff]
  %v11432 = vld [vmem:[%s27 + $0x70] sm:$0xff]
  %v11433 = vld [vmem:[%s27 + $0x78] sm:$0xff]
  %v11434 = vld [vmem:[%s27 + $0x80] sm:$0xff]
  %v11435 = vld [vmem:[%s27 + $0x88] sm:$0xff]
  %v11436 = vld [vmem:[%s27 + $0x90] sm:$0xff]
  %v11437 = vld [vmem:[%s27 + $0x98] sm:$0xff]
  %v11438 = vld [vmem:[%s27 + $0xa0] sm:$0xff]
  %v11439 = vld [vmem:[%s27 + $0xa8] sm:$0xff]
  %v11440 = vld [vmem:[%s27 + $0xb0] sm:$0xff]
  %v11441 = vld [vmem:[%s27 + $0xb8] sm:$0xff]
  %v11442 = vld [vmem:[%s27 + $0xc0] sm:$0xff]
  %v11444 = vsel %vm1720, %v11417, 0
  %11446 = vmatprep.subr.mxu0 0.0
  %11447 = vmatpush1.msra.mxu0 %v11418
  %11448 = vmatprep.subr.mxu0 0.0
  %11449 = vmatpush1.msra.mxu0 %v11419
  %11450 = vmatprep.subr.mxu0 0.0
  %11451 = vmatpush1.msra.mxu0 %v11420
  %11452 = vmatprep.subr.mxu0 0.0
  %11453 = vmatpush1.msra.mxu0 %v11421
  %11454 = vmatprep.subr.mxu0 0.0
  %11455 = vmatpush1.msra.mxu0 %v11422
  %11456 = vmatprep.subr.mxu0 0.0
  %11457 = vmatpush1.msra.mxu0 %v11423
  %11458 = vmatprep.subr.mxu0 0.0
  %11459 = vmatpush1.msra.mxu0 %v11424
  %11460 = vmatprep.subr.mxu0 0.0
  %11461 = vmatpush1.msra.mxu0 %v11425
  %11462 = vmatprep.subr.mxu0 0.0
  %11463 = vmatpush1.msra.mxu0 %v11426
  %11464 = vmatprep.subr.mxu0 0.0
  %11465 = vmatpush1.msra.mxu0 %v11427
  %11466 = vmatprep.subr.mxu0 0.0
  %11467 = vmatpush1.msra.mxu0 %v11428
  %11468 = vmatprep.subr.mxu0 0.0
  %11469 = vmatpush1.msra.mxu0 %v11429
  %11470 = vmatprep.subr.mxu0 0.0
  %11471 = vmatpush1.msra.mxu0 %v11430
  %11472 = vmatprep.subr.mxu0 0.0
  %11473 = vmatpush1.msra.mxu0 %v11431
  %11474 = vmatprep.subr.mxu0 0.0
  %11475 = vmatpush1.msra.mxu0 %v11432
  %11476 = vmatprep.subr.mxu0 0.0
  %11477 = vmatpush1.msra.mxu0 %v11433
  %11478 = vmatprep.subr.mxu0 0.0
  %11479 = vmatpush1.msra.mxu0 %v11434
  %11480 = vmatprep.subr.mxu0 0.0
  %11481 = vmatpush1.msra.mxu0 %v11435
  %11482 = vmatprep.subr.mxu0 0.0
  %11483 = vmatpush1.msra.mxu0 %v11436
  %11484 = vmatprep.subr.mxu0 0.0
  %11485 = vmatpush1.msra.mxu0 %v11437
  %11486 = vmatprep.subr.mxu0 0.0
  %11487 = vmatpush1.msra.mxu0 %v11438
  %11488 = vmatprep.subr.mxu0 0.0
  %11489 = vmatpush1.msra.mxu0 %v11439
  %11490 = vmatprep.subr.mxu0 0.0
  %11491 = vmatpush1.msra.mxu0 %v11440
  %11492 = vmatprep.subr.mxu0 0.0
  %11493 = vmatpush1.msra.mxu0 %v11441
  %11494 = vmatprep.subr.mxu0 0.0
  %11495 = vmatpush1.msra.mxu0 %v11442
  %11496 = vmatprep.subr.mxu0 0.0
  %11497 = vmatpush1.msra.mxu0 0.0
  %11498 = vmatprep.subr.mxu0 0.0
  %11499 = vmatpush1.msra.mxu0 0.0
  %11500 = vmatprep.subr.mxu0 0.0
  %11501 = vmatpush1.msra.mxu0 0.0
  %11502 = vmatprep.subr.mxu0 0.0
  %11503 = vmatpush1.msra.mxu0 0.0
  %11504 = vmatprep.subr.mxu0 0.0
  %11505 = vmatpush1.msra.mxu0 0.0
  %11506 = vmatprep.subr.mxu0 0.0
  %11507 = vmatpush1.msra.mxu0 0.0
  %11508 = vmatprep.subr.mxu0 0.0
  %11509 = vmatpush1.msra.mxu0 0.0
  %11510 = vmatprep.mubr.f32.mxu0 %v11444
  %11511 = vmatmul.mubr.f32.gmra.mrb[0].mxu0 %v11416
  %v11512 = vpop.f32.mrb[0].mxu0
  %v11513 = vadd.f32 0.0, %v11512
  %v11514 = vpop.f32.mrb[0].mxu0
  %11515 = vdwg.mxu0
  %v11516 = vmul.f32 %v11513, 0.00390625
  %v11517 = vmul.f32 %v11516, %v11516
  %v11519 = vrot.slane %v11517, 7
  %v11521 = vsub.f32 %v11516, %v11519
  %v11522 = vld [vmem:[%s23] sm:$0x1]
  %v11523 = vadd.f32 %v11521, 1e-05
  %v11524 = vrsqrt.pop %v11523
  %v11527 = vunpack.c.l.s4 1966171168
  %v11528 = vunpack.c.0.s8 %v11527
  %v11529 = vlaneseq
  %v11530 = vshrl.u32 %v11529, 7
  %v11531 = vsub.s32 %v11528, %v11530
  %v11532 = vrot.slane %v11524, %v11531
  %v11533 = vcombine.high %v11532, %v11532
  %v11535 = vunpack.c.l.s4 1966171168
  %v11536 = vunpack.c.0.s8 %v11535
  %v11537 = vlaneseq
  %v11538 = vshrl.u32 %v11537, 7
  %v11539 = vsub.s32 %v11536, %v11538
  %v11540 = vrot.slane %v11533, %v11539
  %v11542 = vmul.f32 %v11522, %v11540
  %v11543 = vld [vmem:[%s25] sm:$0x1]
  %v11544 = vmul.f32 %v11516, %v11542
  %v11545 = vsub.f32 %v11543, %v11544
  %v11547 = vlaneseq
  %v11548 = vshrl.u32 %v11547, 7
  %v11549 = vsub.s32 0, %v11548
  %v11550 = vrot.slane %v11545, %v11549
  %v11552 = vsel %vm4588, %v11542, %v11550
  %v11553 = vld [vmem:[%s29] sm:$0xff]
  %v11554 = vld [vmem:[%s29 + $0x8] sm:$0xff]
  %v11555 = vld [vmem:[%s29 + $0x10] sm:$0xff]
  %v11556 = vld [vmem:[%s29 + $0x18] sm:$0xff]
  %v11557 = vld [vmem:[%s29 + $0x20] sm:$0xf]
  %v11558 = vld [vmem:[%s29 + $0x28] sm:$0xf]
  %v11560 = vsel %vm561, %v11552, 0
  %v11563 = vsel %vm3897, %v11557, 0
  %v11566 = vsel %vm3897, %v11558, 0
  %11568 = vmatprep.subr.mxu0 %v11554
  %11569 = vmatpush1.msra.mxu0 %v11553
  %11570 = vmatprep.subr.mxu0 %v11556
  %11571 = vmatpush1.msra.mxu0 %v11555
  %11572 = vmatprep.subr.mxu0 %v11566
  %11573 = vmatpush1.msra.mxu0 %v11563
  %11574 = vmatprep.subr.mxu0 0.0
  %11575 = vmatpush1.msra.mxu0 0.0
  %11576 = vmatprep.subr.mxu0 0.0
  %11577 = vmatpush1.msra.mxu0 0.0
  %11578 = vmatprep.subr.mxu0 0.0
  %11579 = vmatpush1.msra.mxu0 0.0
  %11580 = vmatprep.subr.mxu0 0.0
  %11581 = vmatpush1.msra.mxu0 0.0
  %11582 = vmatprep.subr.mxu0 0.0
  %11583 = vmatpush1.msra.mxu0 0.0
  %11584 = vmatprep.subr.mxu0 0.0
  %11585 = vmatpush1.msra.mxu0 0.0
  %11586 = vmatprep.subr.mxu0 0.0
  %11587 = vmatpush1.msra.mxu0 0.0
  %11588 = vmatprep.subr.mxu0 0.0
  %11589 = vmatpush1.msra.mxu0 0.0
  %11590 = vmatprep.subr.mxu0 0.0
  %11591 = vmatpush1.msra.mxu0 0.0
  %11592 = vmatprep.subr.mxu0 0.0
  %11593 = vmatpush1.msra.mxu0 0.0
  %11594 = vmatprep.subr.mxu0 0.0
  %11595 = vmatpush1.msra.mxu0 0.0
  %11596 = vmatprep.subr.mxu0 0.0
  %11597 = vmatpush1.msra.mxu0 0.0
  %11598 = vmatprep.subr.mxu0 0.0
  %11599 = vmatpush1.msra.mxu0 0.0
  %11600 = vmatprep.subr.mxu0 0.0
  %11601 = vmatpush1.msra.mxu0 0.0
  %11602 = vmatprep.subr.mxu0 0.0
  %11603 = vmatpush1.msra.mxu0 0.0
  %11604 = vmatprep.subr.mxu0 0.0
  %11605 = vmatpush1.msra.mxu0 0.0
  %11606 = vmatprep.subr.mxu0 0.0
  %11607 = vmatpush1.msra.mxu0 0.0
  %11608 = vmatprep.subr.mxu0 0.0
  %11609 = vmatpush1.msra.mxu0 0.0
  %11610 = vmatprep.subr.mxu0 0.0
  %11611 = vmatpush1.msra.mxu0 0.0
  %11612 = vmatprep.subr.mxu0 0.0
  %11613 = vmatpush1.msra.mxu0 0.0
  %11614 = vmatprep.subr.mxu0 0.0
  %11615 = vmatpush1.msra.mxu0 0.0
  %11616 = vmatprep.subr.mxu0 0.0
  %11617 = vmatpush1.msra.mxu0 0.0
  %11618 = vmatprep.subr.mxu0 0.0
  %11619 = vmatpush1.msra.mxu0 0.0
  %11620 = vmatprep.subr.mxu0 0.0
  %11621 = vmatpush1.msra.mxu0 0.0
  %11622 = vmatprep.subr.mxu0 0.0
  %11623 = vmatpush1.msra.mxu0 0.0
  %11624 = vmatprep.subr.mxu0 0.0
  %11625 = vmatpush1.msra.mxu0 0.0
  %11626 = vmatprep.subr.mxu0 0.0
  %11627 = vmatpush1.msra.mxu0 0.0
  %11628 = vmatprep.subr.mxu0 0.0
  %11629 = vmatpush1.msra.mxu0 0.0
  %11630 = vmatprep.subr.mxu0 0.0
  %11631 = vmatpush1.msra.mxu0 0.0
  %11632 = vmatprep.mubr.f32.mxu0 0.0
  %11633 = vmatmul.mubr.f32.gmra.mrb[0].mxu0 %v11560
  %v11634 = vpop.f32.mrb[0].mxu0
  %v11635 = vadd.f32 0.0, %v11634
  %v11636 = vpop.f32.mrb[0].mxu0
  %v11637 = vadd.f32 0.0, %v11636
  %11638 = vdwg.mxu0
  %v11639 = vlaneseq
  %v11640 = vshrl.u32 %v11639, 7
  %v11641 = vsub.s32 0, %v11640
  %v11642 = vrot.slane %v11635, %v11641
  %v11643 = vlaneseq
  %v11644 = vshrl.u32 %v11643, 7
  %v11645 = vsub.s32 0, %v11644
  %v11646 = vrot.slane %v11637, %v11645
  %v11647 = vmul.f32 %v11278, %v11642
  %v11648 = vmul.f32 %v11280, %v11646
  %v11649 = vmul.f32 %v11282, %v11642
  %v11650 = vmul.f32 %v11284, %v11646
  %v11651 = vmul.f32 %v11288, %v11642
  %v11652 = vmul.f32 %v11290, %v11646
  %v11653 = vmul.f32 %v11292, %v11642
  %v11654 = vmul.f32 %v11294, %v11646
  %v11655 = vmul.f32 %v11298, %v11642
  %v11656 = vmul.f32 %v11300, %v11646
  %v11657 = vmul.f32 %v11302, %v11642
  %v11658 = vmul.f32 %v11304, %v11646
  %v11659 = vmul.f32 %v11308, %v11642
  %v11660 = vmul.f32 %v11310, %v11646
  %v11661 = vmul.f32 %v11312, %v11642
  %v11662 = vmul.f32 %v11314, %v11646
  %v11663 = vlaneseq
  %v11664 = vshrl.u32 %v11663, 7
  %v11665 = vsub.s32 1, %v11664
  %v11666 = vrot.slane %v11635, %v11665
  %v11667 = vlaneseq
  %v11668 = vshrl.u32 %v11667, 7
  %v11669 = vsub.s32 1, %v11668
  %v11670 = vrot.slane %v11637, %v11669
  %v11671 = vadd.f32 %v11647, %v11666
  %v11672 = vadd.f32 %v11648, %v11670
  %v11673 = vadd.f32 %v11649, %v11666
  %v11674 = vadd.f32 %v11650, %v11670
  %v11675 = vadd.f32 %v11651, %v11666
  %v11676 = vadd.f32 %v11652, %v11670
  %v11677 = vadd.f32 %v11653, %v11666
  %v11678 = vadd.f32 %v11654, %v11670
  %v11679 = vadd.f32 %v11655, %v11666
  %v11680 = vadd.f32 %v11656, %v11670
  %v11681 = vadd.f32 %v11657, %v11666
  %v11682 = vadd.f32 %v11658, %v11670
  %v11683 = vadd.f32 %v11659, %v11666
  %v11684 = vadd.f32 %v11660, %v11670
  %v11685 = vadd.f32 %v11661, %v11666
  %v11686 = vadd.f32 %v11662, %v11670
  %v11687 = vmax.f32 %v11671, 0.0
  %v11688 = vmax.f32 %v11672, 0.0
  %v11689 = vmax.f32 %v11673, 0.0
  %v11690 = vmax.f32 %v11674, 0.0
  %v11691 = vmax.f32 %v11675, 0.0
  %v11692 = vmax.f32 %v11676, 0.0
  %v11693 = vmax.f32 %v11677, 0.0
  %v11694 = vmax.f32 %v11678, 0.0
  %v11695 = vmax.f32 %v11679, 0.0
  %v11696 = vmax.f32 %v11680, 0.0
  %v11697 = vmax.f32 %v11681, 0.0
  %v11698 = vmax.f32 %v11682, 0.0
  %v11699 = vmax.f32 %v11683, 0.0
  %v11700 = vmax.f32 %v11684, 0.0
  %v11701 = vmax.f32 %v11685, 0.0
  %v11702 = vmax.f32 %v11686, 0.0
  %v11703 = vmul.f32 %v11687, %v320
  %v11704 = vmul.f32 %v11688, %v321
  %v11705 = vmul.f32 %v11689, %v322
  %v11706 = vmul.f32 %v11690, %v323
  %v11707 = vmul.f32 %v11691, %v324
  %v11708 = vmul.f32 %v11692, %v325
  %v11709 = vmul.f32 %v11693, %v326
  %v11710 = vmul.f32 %v11694, %v327
  %v11711 = vmul.f32 %v11695, %v328
  %v11712 = vmul.f32 %v11696, %v329
  %v11713 = vmul.f32 %v11697, %v330
  %v11714 = vmul.f32 %v11698, %v331
  %v11715 = vmul.f32 %v11699, %v332
  %v11716 = vmul.f32 %v11700, %v333
  %v11717 = vmul.f32 %v11701, %v334
  %v11718 = vmul.f32 %v11702, %v335
  %11721 = vrot.lane.b32.xlu0 %v11703, 108
  %v11722 = vpop.permute.xlu0 %11721
  %11723 = vrot.lane.b32.xlu0 %v11704, 108
  %v11724 = vpop.permute.xlu0 %11723
  %vm11725 = vcmask 883712
  %v11726 = vsel %vm11725, %v11722, %v11724
  %v11728 = vrot.slane %v11703, 1
  %v11729 = vrot.slane %v11704, 1
  %11730 = vrot.lane.b32.xlu0 %v11728, 12
  %v11731 = vpop.permute.xlu0 %11730
  %11732 = vrot.lane.b32.xlu0 %v11729, 12
  %v11733 = vpop.permute.xlu0 %11732
  %v11734 = vsel %vm895, %v11731, %v11733
  %v11737 = vrot.slane %v11703, 2
  %v11738 = vrot.slane %v11704, 2
  %11739 = vrot.lane.b32.xlu0 %v11737, 44
  %v11740 = vpop.permute.xlu0 %11739
  %11741 = vrot.lane.b32.xlu0 %v11738, 44
  %v11742 = vpop.permute.xlu0 %11741
  %vm11743 = vcmask 359424
  %v11744 = vsel %vm11743, %v11740, %v11742
  %v11747 = vrot.slane %v11703, 3
  %v11748 = vrot.slane %v11704, 3
  %11749 = vrot.lane.b32.xlu0 %v11747, 76
  %v11750 = vpop.permute.xlu0 %11749
  %11751 = vrot.lane.b32.xlu0 %v11748, 76
  %v11752 = vpop.permute.xlu0 %11751
  %vm11753 = vcmask 621568
  %v11754 = vsel %vm11753, %v11750, %v11752
  %v11756 = vrot.slane %v11703, 4
  %v11757 = vrot.slane %v11704, 4
  %11758 = vrot.lane.b32.xlu0 %v11756, 108
  %v11759 = vpop.permute.xlu0 %11758
  %11760 = vrot.lane.b32.xlu0 %v11757, 108
  %v11761 = vpop.permute.xlu0 %11760
  %v11762 = vsel %vm11725, %v11759, %v11761
  %v11764 = vrot.slane %v11703, 5
  %v11765 = vrot.slane %v11704, 5
  %11766 = vrot.lane.b32.xlu0 %v11764, 12
  %v11767 = vpop.permute.xlu0 %11766
  %11768 = vrot.lane.b32.xlu0 %v11765, 12
  %v11769 = vpop.permute.xlu0 %11768
  %v11770 = vsel %vm895, %v11767, %v11769
  %v11773 = vrot.slane %v11703, 6
  %v11774 = vrot.slane %v11704, 6
  %11775 = vrot.lane.b32.xlu0 %v11773, 44
  %v11776 = vpop.permute.xlu0 %11775
  %11777 = vrot.lane.b32.xlu0 %v11774, 44
  %v11778 = vpop.permute.xlu0 %11777
  %v11779 = vsel %vm11743, %v11776, %v11778
  %v11784 = vrot.slane %v11705, 7
  %v11785 = vrot.slane %v11706, 7
  %11786 = vrot.lane.b32.xlu0 %v11784, 76
  %v11787 = vpop.permute.xlu0 %11786
  %11788 = vrot.lane.b32.xlu0 %v11785, 76
  %v11789 = vpop.permute.xlu0 %11788
  %v11790 = vsel %vm11753, %v11787, %v11789
  %v11792 = vsel %vm599, %v11724, %v11731
  %v11793 = vsel %vm1830, %v11734, %v11740
  %vm11794 = vcmask 785408
  %v11795 = vsel %vm11794, %v11744, %v11750
  %v11796 = vsel %vm599, %v11761, %v11767
  %v11797 = vsel %vm1830, %v11770, %v11776
  %v11798 = vsel %vm11794, %v11779, %v11787
  %11801 = vrot.lane.b32.xlu0 %v11707, 108
  %v11802 = vpop.permute.xlu0 %11801
  %11803 = vrot.lane.b32.xlu0 %v11708, 108
  %v11804 = vpop.permute.xlu0 %11803
  %v11805 = vsel %vm11725, %v11802, %v11804
  %v11808 = vrot.slane %v11707, 1
  %v11809 = vrot.slane %v11708, 1
  %11810 = vrot.lane.b32.xlu0 %v11808, 12
  %v11811 = vpop.permute.xlu0 %11810
  %11812 = vrot.lane.b32.xlu0 %v11809, 12
  %v11813 = vpop.permute.xlu0 %11812
  %v11814 = vsel %vm895, %v11811, %v11813
  %v11817 = vrot.slane %v11707, 2
  %v11818 = vrot.slane %v11708, 2
  %11819 = vrot.lane.b32.xlu0 %v11817, 44
  %v11820 = vpop.permute.xlu0 %11819
  %11821 = vrot.lane.b32.xlu0 %v11818, 44
  %v11822 = vpop.permute.xlu0 %11821
  %v11823 = vsel %vm11743, %v11820, %v11822
  %v11826 = vrot.slane %v11707, 3
  %v11827 = vrot.slane %v11708, 3
  %11828 = vrot.lane.b32.xlu0 %v11826, 76
  %v11829 = vpop.permute.xlu0 %11828
  %11830 = vrot.lane.b32.xlu0 %v11827, 76
  %v11831 = vpop.permute.xlu0 %11830
  %v11832 = vsel %vm11753, %v11829, %v11831
  %v11835 = vrot.slane %v11707, 4
  %v11836 = vrot.slane %v11708, 4
  %11837 = vrot.lane.b32.xlu0 %v11835, 108
  %v11838 = vpop.permute.xlu0 %11837
  %11839 = vrot.lane.b32.xlu0 %v11836, 108
  %v11840 = vpop.permute.xlu0 %11839
  %v11841 = vsel %vm11725, %v11838, %v11840
  %v11844 = vrot.slane %v11707, 5
  %v11845 = vrot.slane %v11708, 5
  %11846 = vrot.lane.b32.xlu0 %v11844, 12
  %v11847 = vpop.permute.xlu0 %11846
  %11848 = vrot.lane.b32.xlu0 %v11845, 12
  %v11849 = vpop.permute.xlu0 %11848
  %v11850 = vsel %vm895, %v11847, %v11849
  %v11853 = vrot.slane %v11707, 6
  %v11854 = vrot.slane %v11708, 6
  %11855 = vrot.lane.b32.xlu0 %v11853, 44
  %v11856 = vpop.permute.xlu0 %11855
  %11857 = vrot.lane.b32.xlu0 %v11854, 44
  %v11858 = vpop.permute.xlu0 %11857
  %v11859 = vsel %vm11743, %v11856, %v11858
  %v11864 = vrot.slane %v11709, 7
  %v11865 = vrot.slane %v11710, 7
  %11866 = vrot.lane.b32.xlu0 %v11864, 76
  %v11867 = vpop.permute.xlu0 %11866
  %11868 = vrot.lane.b32.xlu0 %v11865, 76
  %v11869 = vpop.permute.xlu0 %11868
  %v11870 = vsel %vm11753, %v11867, %v11869
  %v11873 = vsel %vm599, %v11804, %v11811
  %v11874 = vsel %vm1830, %v11814, %v11820
  %v11875 = vsel %vm11794, %v11823, %v11829
  %v11876 = vsel %vm599, %v11840, %v11847
  %v11877 = vsel %vm1830, %v11850, %v11856
  %v11878 = vsel %vm11794, %v11859, %v11867
  %11881 = vrot.lane.b32.xlu0 %v11711, 108
  %v11882 = vpop.permute.xlu0 %11881
  %11883 = vrot.lane.b32.xlu0 %v11712, 108
  %v11884 = vpop.permute.xlu0 %11883
  %v11885 = vsel %vm11725, %v11882, %v11884
  %v11887 = vrot.slane %v11711, 1
  %v11888 = vrot.slane %v11712, 1
  %11889 = vrot.lane.b32.xlu0 %v11887, 12
  %v11890 = vpop.permute.xlu0 %11889
  %11891 = vrot.lane.b32.xlu0 %v11888, 12
  %v11892 = vpop.permute.xlu0 %11891
  %v11893 = vsel %vm895, %v11890, %v11892
  %v11896 = vrot.slane %v11711, 2
  %v11897 = vrot.slane %v11712, 2
  %11898 = vrot.lane.b32.xlu0 %v11896, 44
  %v11899 = vpop.permute.xlu0 %11898
  %11900 = vrot.lane.b32.xlu0 %v11897, 44
  %v11901 = vpop.permute.xlu0 %11900
  %v11902 = vsel %vm11743, %v11899, %v11901
  %v11905 = vrot.slane %v11711, 3
  %v11906 = vrot.slane %v11712, 3
  %11907 = vrot.lane.b32.xlu0 %v11905, 76
  %v11908 = vpop.permute.xlu0 %11907
  %11909 = vrot.lane.b32.xlu0 %v11906, 76
  %v11910 = vpop.permute.xlu0 %11909
  %v11911 = vsel %vm11753, %v11908, %v11910
  %v11913 = vrot.slane %v11711, 4
  %v11914 = vrot.slane %v11712, 4
  %11915 = vrot.lane.b32.xlu0 %v11913, 108
  %v11916 = vpop.permute.xlu0 %11915
  %11917 = vrot.lane.b32.xlu0 %v11914, 108
  %v11918 = vpop.permute.xlu0 %11917
  %v11919 = vsel %vm11725, %v11916, %v11918
  %v11921 = vrot.slane %v11711, 5
  %v11922 = vrot.slane %v11712, 5
  %11923 = vrot.lane.b32.xlu0 %v11921, 12
  %v11924 = vpop.permute.xlu0 %11923
  %11925 = vrot.lane.b32.xlu0 %v11922, 12
  %v11926 = vpop.permute.xlu0 %11925
  %v11927 = vsel %vm895, %v11924, %v11926
  %v11930 = vrot.slane %v11711, 6
  %v11931 = vrot.slane %v11712, 6
  %11932 = vrot.lane.b32.xlu0 %v11930, 44
  %v11933 = vpop.permute.xlu0 %11932
  %11934 = vrot.lane.b32.xlu0 %v11931, 44
  %v11935 = vpop.permute.xlu0 %11934
  %v11936 = vsel %vm11743, %v11933, %v11935
  %v11941 = vrot.slane %v11713, 7
  %v11942 = vrot.slane %v11714, 7
  %11943 = vrot.lane.b32.xlu0 %v11941, 76
  %v11944 = vpop.permute.xlu0 %11943
  %11945 = vrot.lane.b32.xlu0 %v11942, 76
  %v11946 = vpop.permute.xlu0 %11945
  %v11947 = vsel %vm11753, %v11944, %v11946
  %v11949 = vsel %vm599, %v11884, %v11890
  %v11950 = vsel %vm1830, %v11893, %v11899
  %v11951 = vsel %vm11794, %v11902, %v11908
  %v11952 = vsel %vm599, %v11918, %v11924
  %v11953 = vsel %vm1830, %v11927, %v11933
  %v11954 = vsel %vm11794, %v11936, %v11944
  %11957 = vrot.lane.b32.xlu0 %v11715, 108
  %v11958 = vpop.permute.xlu0 %11957
  %11959 = vrot.lane.b32.xlu0 %v11716, 108
  %v11960 = vpop.permute.xlu0 %11959
  %v11961 = vsel %vm11725, %v11958, %v11960
  %v11963 = vrot.slane %v11715, 1
  %v11964 = vrot.slane %v11716, 1
  %11965 = vrot.lane.b32.xlu0 %v11963, 12
  %v11966 = vpop.permute.xlu0 %11965
  %11967 = vrot.lane.b32.xlu0 %v11964, 12
  %v11968 = vpop.permute.xlu0 %11967
  %v11969 = vsel %vm895, %v11966, %v11968
  %v11972 = vrot.slane %v11715, 2
  %v11973 = vrot.slane %v11716, 2
  %11974 = vrot.lane.b32.xlu0 %v11972, 44
  %v11975 = vpop.permute.xlu0 %11974
  %11976 = vrot.lane.b32.xlu0 %v11973, 44
  %v11977 = vpop.permute.xlu0 %11976
  %v11978 = vsel %vm11743, %v11975, %v11977
  %v11981 = vrot.slane %v11715, 3
  %v11982 = vrot.slane %v11716, 3
  %11983 = vrot.lane.b32.xlu0 %v11981, 76
  %v11984 = vpop.permute.xlu0 %11983
  %11985 = vrot.lane.b32.xlu0 %v11982, 76
  %v11986 = vpop.permute.xlu0 %11985
  %v11987 = vsel %vm11753, %v11984, %v11986
  %v11989 = vrot.slane %v11715, 4
  %v11990 = vrot.slane %v11716, 4
  %11991 = vrot.lane.b32.xlu0 %v11989, 108
  %v11992 = vpop.permute.xlu0 %11991
  %11993 = vrot.lane.b32.xlu0 %v11990, 108
  %v11994 = vpop.permute.xlu0 %11993
  %v11995 = vsel %vm11725, %v11992, %v11994
  %v11997 = vrot.slane %v11715, 5
  %v11998 = vrot.slane %v11716, 5
  %11999 = vrot.lane.b32.xlu0 %v11997, 12
  %v12000 = vpop.permute.xlu0 %11999
  %12001 = vrot.lane.b32.xlu0 %v11998, 12
  %v12002 = vpop.permute.xlu0 %12001
  %v12003 = vsel %vm895, %v12000, %v12002
  %v12006 = vrot.slane %v11715, 6
  %v12007 = vrot.slane %v11716, 6
  %12008 = vrot.lane.b32.xlu0 %v12006, 44
  %v12009 = vpop.permute.xlu0 %12008
  %12010 = vrot.lane.b32.xlu0 %v12007, 44
  %v12011 = vpop.permute.xlu0 %12010
  %v12012 = vsel %vm11743, %v12009, %v12011
  %v12017 = vrot.slane %v11717, 7
  %v12018 = vrot.slane %v11718, 7
  %12019 = vrot.lane.b32.xlu0 %v12017, 76
  %v12020 = vpop.permute.xlu0 %12019
  %12021 = vrot.lane.b32.xlu0 %v12018, 76
  %v12022 = vpop.permute.xlu0 %12021
  %v12023 = vsel %vm11753, %v12020, %v12022
  %v12025 = vsel %vm599, %v11960, %v11966
  %v12026 = vsel %vm1830, %v11969, %v11975
  %v12027 = vsel %vm11794, %v11978, %v11984
  %v12028 = vsel %vm599, %v11994, %v12000
  %v12029 = vsel %vm1830, %v12003, %v12009
  %v12030 = vsel %vm11794, %v12012, %v12020
  %v12037 = vrot.slane %v11726, 1
  %v12038 = vrot.slane %v11792, 1
  %v12039 = vrot.slane %v11793, 1
  %v12040 = vrot.slane %v11795, 1
  %v12041 = vrot.slane %v11754, 1
  %v12042 = vrot.slane %v11762, 1
  %v12043 = vrot.slane %v11796, 1
  %v12044 = vrot.slane %v11797, 1
  %v12045 = vrot.slane %v11798, 1
  %v12046 = vrot.slane %v11790, 1
  %v12063 = vrot.slane %v11885, 7
  %v12064 = vrot.slane %v11949, 7
  %v12065 = vrot.slane %v11950, 7
  %v12066 = vrot.slane %v11951, 7
  %v12067 = vrot.slane %v11911, 7
  %v12068 = vrot.slane %v11919, 7
  %v12069 = vrot.slane %v11952, 7
  %v12070 = vrot.slane %v11953, 7
  %v12071 = vrot.slane %v11954, 7
  %v12072 = vrot.slane %v11947, 7
  %v12089 = vrot.slane %v11961, 6
  %v12090 = vrot.slane %v12025, 6
  %v12091 = vrot.slane %v12026, 6
  %v12092 = vrot.slane %v12027, 6
  %v12093 = vrot.slane %v11987, 6
  %v12094 = vrot.slane %v11995, 6
  %v12095 = vrot.slane %v12028, 6
  %v12096 = vrot.slane %v12029, 6
  %v12097 = vrot.slane %v12030, 6
  %v12098 = vrot.slane %v12023, 6
  %v12109 = vsel %vm4588, %v12037, %v11805
  %v12110 = vsel %vm4588, %v12038, %v11873
  %v12111 = vsel %vm4588, %v12039, %v11874
  %v12112 = vsel %vm4588, %v12040, %v11875
  %v12113 = vsel %vm4588, %v12041, %v11832
  %v12114 = vsel %vm4588, %v12042, %v11841
  %v12115 = vsel %vm4588, %v12043, %v11876
  %v12116 = vsel %vm4588, %v12044, %v11877
  %v12117 = vsel %vm4588, %v12045, %v11878
  %v12118 = vsel %vm4588, %v12046, %v11870
  %v12119 = vsel %vm1162, %v12109, %v12063
  %v12120 = vsel %vm1162, %v12110, %v12064
  %v12121 = vsel %vm1162, %v12111, %v12065
  %v12122 = vsel %vm1162, %v12112, %v12066
  %v12123 = vsel %vm1162, %v12113, %v12067
  %v12124 = vsel %vm1162, %v12114, %v12068
  %v12125 = vsel %vm1162, %v12115, %v12069
  %v12126 = vsel %vm1162, %v12116, %v12070
  %v12127 = vsel %vm1162, %v12117, %v12071
  %v12128 = vsel %vm1162, %v12118, %v12072
  %vm12129 = vcmask 1042432
  %v12130 = vsel %vm12129, %v12119, %v12089
  %v12131 = vsel %vm12129, %v12120, %v12090
  %v12132 = vsel %vm12129, %v12121, %v12091
  %v12133 = vsel %vm12129, %v12122, %v12092
  %v12134 = vsel %vm12129, %v12123, %v12093
  %v12135 = vsel %vm12129, %v12124, %v12094
  %v12136 = vsel %vm12129, %v12125, %v12095
  %v12137 = vsel %vm12129, %v12126, %v12096
  %v12138 = vsel %vm12129, %v12127, %v12097
  %v12139 = vsel %vm12129, %v12128, %v12098
  %v12140 = vpack.c.bf16 %v12130, %v12130
  %v12141 = vpack.c.bf16 %v12131, %v12131
  %v12142 = vpack.c.bf16 %v12132, %v12132
  %v12143 = vpack.c.bf16 %v12133, %v12133
  %v12144 = vpack.c.bf16 %v12134, %v12134
  %v12145 = vpack.c.bf16 %v12135, %v12135
  %v12146 = vpack.c.bf16 %v12136, %v12136
  %v12147 = vpack.c.bf16 %v12137, %v12137
  %v12148 = vpack.c.bf16 %v12138, %v12138
  %v12149 = vpack.c.bf16 %v12139, %v12139
  %v12150 = vld [vmem:[%s31] sm:$0xff]
  %v12151 = vld [vmem:[%s31 + $0x8] sm:$0xff]
  %v12152 = vld [vmem:[%s31 + $0x10] sm:$0xff]
  %v12153 = vld [vmem:[%s31 + $0x18] sm:$0xff]
  %v12154 = vld [vmem:[%s31 + $0x20] sm:$0xff]
  %v12155 = vld [vmem:[%s31 + $0x28] sm:$0xff]
  %v12156 = vld [vmem:[%s31 + $0x30] sm:$0xff]
  %v12157 = vld [vmem:[%s31 + $0x38] sm:$0xff]
  %v12158 = vld [vmem:[%s31 + $0x40] sm:$0xff]
  %v12159 = vld [vmem:[%s31 + $0x48] sm:$0xff]
  %v12160 = vld [vmem:[%s31 + $0x50] sm:$0xff]
  %v12161 = vld [vmem:[%s31 + $0x58] sm:$0xff]
  %v12162 = vld [vmem:[%s31 + $0x60] sm:$0xff]
  %v12163 = vld [vmem:[%s31 + $0x68] sm:$0xff]
  %v12164 = vld [vmem:[%s31 + $0x70] sm:$0xff]
  %v12165 = vld [vmem:[%s31 + $0x78] sm:$0xff]
  %v12166 = vld [vmem:[%s31 + $0x80] sm:$0xff]
  %v12167 = vld [vmem:[%s31 + $0x88] sm:$0xff]
  %v12168 = vld [vmem:[%s31 + $0x90] sm:$0xff]
  %v12169 = vld [vmem:[%s31 + $0x98] sm:$0xff]
  %v12170 = vld [vmem:[%s31 + $0xa0] sm:$0xff]
  %v12171 = vld [vmem:[%s31 + $0xa8] sm:$0xff]
  %v12172 = vld [vmem:[%s31 + $0xb0] sm:$0xff]
  %v12173 = vld [vmem:[%s31 + $0xb8] sm:$0xff]
  %v12174 = vld [vmem:[%s31 + $0xc0] sm:$0xff]
  %v12175 = vld [vmem:[%s31 + $0xc8] sm:$0xff]
  %v12176 = vld [vmem:[%s31 + $0xd0] sm:$0xff]
  %v12177 = vld [vmem:[%s31 + $0xd8] sm:$0xff]
  %v12178 = vld [vmem:[%s31 + $0xe0] sm:$0xff]
  %v12179 = vld [vmem:[%s31 + $0xe8] sm:$0xff]
  %v12180 = vld [vmem:[%s31 + $0xf0] sm:$0xff]
  %v12181 = vld [vmem:[%s31 + $0xf8] sm:$0xff]
  %v12182 = vld [vmem:[%s31 + $0x100] sm:$0xff]
  %v12183 = vld [vmem:[%s31 + $0x108] sm:$0xff]
  %v12184 = vld [vmem:[%s31 + $0x110] sm:$0xff]
  %v12185 = vld [vmem:[%s31 + $0x118] sm:$0xff]
  %v12186 = vld [vmem:[%s31 + $0x120] sm:$0xff]
  %v12187 = vld [vmem:[%s31 + $0x128] sm:$0xff]
  %v12188 = vld [vmem:[%s31 + $0x130] sm:$0xff]
  %v12189 = vld [vmem:[%s31 + $0x138] sm:$0xff]
  %v12190 = vld [vmem:[%s31 + $0x140] sm:$0xff]
  %v12191 = vld [vmem:[%s31 + $0x148] sm:$0xff]
  %v12192 = vld [vmem:[%s31 + $0x150] sm:$0xff]
  %v12193 = vld [vmem:[%s31 + $0x158] sm:$0xff]
  %v12194 = vld [vmem:[%s31 + $0x160] sm:$0xff]
  %v12195 = vld [vmem:[%s31 + $0x168] sm:$0xff]
  %v12196 = vld [vmem:[%s31 + $0x170] sm:$0xff]
  %v12197 = vld [vmem:[%s31 + $0x178] sm:$0xff]
  %v12198 = vld [vmem:[%s31 + $0x180] sm:$0xff]
  %v12199 = vld [vmem:[%s31 + $0x188] sm:$0xff]
  %v12200 = vld [vmem:[%s31 + $0x190] sm:$0xff]
  %v12201 = vld [vmem:[%s31 + $0x198] sm:$0xff]
  %v12202 = vld [vmem:[%s31 + $0x1a0] sm:$0xff]
  %v12203 = vld [vmem:[%s31 + $0x1a8] sm:$0xff]
  %v12204 = vld [vmem:[%s31 + $0x1b0] sm:$0xff]
  %v12205 = vld [vmem:[%s31 + $0x1b8] sm:$0xff]
  %v12206 = vld [vmem:[%s31 + $0x1c0] sm:$0xff]
  %v12207 = vld [vmem:[%s31 + $0x1c8] sm:$0xff]
  %v12208 = vld [vmem:[%s31 + $0x1d0] sm:$0xff]
  %v12209 = vld [vmem:[%s31 + $0x1d8] sm:$0xff]
  %v12210 = vld [vmem:[%s31 + $0x1e0] sm:$0xff]
  %v12211 = vld [vmem:[%s31 + $0x1e8] sm:$0xff]
  %v12212 = vld [vmem:[%s31 + $0x1f0] sm:$0xff]
  %v12213 = vld [vmem:[%s31 + $0x1f8] sm:$0xff]
  %v12214 = vld [vmem:[%s31 + $0x200] sm:$0xff]
  %v12215 = vld [vmem:[%s31 + $0x208] sm:$0xff]
  %v12216 = vld [vmem:[%s31 + $0x210] sm:$0xff]
  %v12217 = vld [vmem:[%s31 + $0x218] sm:$0xff]
  %v12218 = vld [vmem:[%s31 + $0x220] sm:$0xff]
  %v12219 = vld [vmem:[%s31 + $0x228] sm:$0xff]
  %v12220 = vld [vmem:[%s31 + $0x230] sm:$0xff]
  %v12221 = vld [vmem:[%s31 + $0x238] sm:$0xff]
  %v12222 = vld [vmem:[%s31 + $0x240] sm:$0xff]
  %v12223 = vld [vmem:[%s31 + $0x248] sm:$0xff]
  %v12224 = vld [vmem:[%s31 + $0x250] sm:$0xff]
  %v12225 = vld [vmem:[%s31 + $0x258] sm:$0xff]
  %v12226 = vld [vmem:[%s31 + $0x260] sm:$0xff]
  %v12227 = vld [vmem:[%s31 + $0x268] sm:$0xff]
  %v12228 = vld [vmem:[%s31 + $0x270] sm:$0xff]
  %v12229 = vld [vmem:[%s31 + $0x278] sm:$0xff]
  %v12230 = vld [vmem:[%s31 + $0x280] sm:$0xff]
  %v12231 = vld [vmem:[%s31 + $0x288] sm:$0xff]
  %v12232 = vld [vmem:[%s31 + $0x290] sm:$0xff]
  %v12233 = vld [vmem:[%s31 + $0x298] sm:$0xff]
  %v12234 = vld [vmem:[%s31 + $0x2a0] sm:$0xff]
  %v12235 = vld [vmem:[%s31 + $0x2a8] sm:$0xff]
  %v12236 = vld [vmem:[%s31 + $0x2b0] sm:$0xff]
  %v12237 = vld [vmem:[%s31 + $0x2b8] sm:$0xff]
  %v12238 = vld [vmem:[%s31 + $0x2c0] sm:$0xff]
  %v12239 = vld [vmem:[%s31 + $0x2c8] sm:$0xff]
  %v12240 = vld [vmem:[%s31 + $0x2d0] sm:$0xff]
  %v12241 = vld [vmem:[%s31 + $0x2d8] sm:$0xff]
  %v12242 = vld [vmem:[%s31 + $0x2e0] sm:$0xff]
  %v12243 = vld [vmem:[%s31 + $0x2e8] sm:$0xff]
  %v12244 = vld [vmem:[%s31 + $0x2f0] sm:$0xff]
  %v12245 = vld [vmem:[%s31 + $0x2f8] sm:$0xff]
  %v12246 = vld [vmem:[%s31 + $0x300] sm:$0xff]
  %v12247 = vld [vmem:[%s31 + $0x308] sm:$0xff]
  %v12248 = vld [vmem:[%s31 + $0x310] sm:$0xff]
  %v12249 = vld [vmem:[%s31 + $0x318] sm:$0xff]
  %v12250 = vld [vmem:[%s31 + $0x320] sm:$0xff]
  %v12251 = vld [vmem:[%s31 + $0x328] sm:$0xff]
  %v12252 = vld [vmem:[%s31 + $0x330] sm:$0xff]
  %v12253 = vld [vmem:[%s31 + $0x338] sm:$0xff]
  %v12254 = vld [vmem:[%s31 + $0x340] sm:$0xff]
  %v12255 = vld [vmem:[%s31 + $0x348] sm:$0xff]
  %v12256 = vld [vmem:[%s31 + $0x350] sm:$0xff]
  %v12257 = vld [vmem:[%s31 + $0x358] sm:$0xff]
  %v12258 = vld [vmem:[%s31 + $0x360] sm:$0xff]
  %v12259 = vld [vmem:[%s31 + $0x368] sm:$0xff]
  %v12260 = vld [vmem:[%s31 + $0x370] sm:$0xff]
  %v12261 = vld [vmem:[%s31 + $0x378] sm:$0xff]
  %v12262 = vld [vmem:[%s31 + $0x380] sm:$0xff]
  %v12263 = vld [vmem:[%s31 + $0x388] sm:$0xff]
  %v12264 = vld [vmem:[%s31 + $0x390] sm:$0xff]
  %v12265 = vld [vmem:[%s31 + $0x398] sm:$0xff]
  %v12266 = vld [vmem:[%s31 + $0x3a0] sm:$0xff]
  %v12267 = vld [vmem:[%s31 + $0x3a8] sm:$0xff]
  %v12268 = vld [vmem:[%s31 + $0x3b0] sm:$0xff]
  %v12269 = vld [vmem:[%s31 + $0x3b8] sm:$0xff]
  %v12270 = vld [vmem:[%s31 + $0x3c0] sm:$0xff]
  %v12271 = vld [vmem:[%s31 + $0x3c8] sm:$0xff]
  %v12272 = vld [vmem:[%s31 + $0x3d0] sm:$0xff]
  %v12273 = vld [vmem:[%s31 + $0x3d8] sm:$0xff]
  %v12274 = vld [vmem:[%s31 + $0x3e0] sm:$0xff]
  %v12275 = vld [vmem:[%s31 + $0x3e8] sm:$0xff]
  %v12276 = vld [vmem:[%s31 + $0x3f0] sm:$0xff]
  %v12277 = vld [vmem:[%s31 + $0x3f8] sm:$0xff]
  %v12278 = vld [vmem:[%s31 + $0x400] sm:$0xff]
  %v12279 = vld [vmem:[%s31 + $0x408] sm:$0xff]
  %v12280 = vld [vmem:[%s31 + $0x410] sm:$0xff]
  %v12281 = vld [vmem:[%s31 + $0x418] sm:$0xff]
  %v12282 = vld [vmem:[%s31 + $0x420] sm:$0xff]
  %v12283 = vld [vmem:[%s31 + $0x428] sm:$0xff]
  %v12284 = vld [vmem:[%s31 + $0x430] sm:$0xff]
  %v12285 = vld [vmem:[%s31 + $0x438] sm:$0xff]
  %v12286 = vld [vmem:[%s31 + $0x440] sm:$0xff]
  %v12287 = vld [vmem:[%s31 + $0x448] sm:$0xff]
  %v12288 = vld [vmem:[%s31 + $0x450] sm:$0xff]
  %v12289 = vld [vmem:[%s31 + $0x458] sm:$0xff]
  %v12290 = vld [vmem:[%s31 + $0x460] sm:$0xff]
  %v12291 = vld [vmem:[%s31 + $0x468] sm:$0xff]
  %v12292 = vld [vmem:[%s31 + $0x470] sm:$0xff]
  %v12293 = vld [vmem:[%s31 + $0x478] sm:$0xff]
  %v12294 = vld [vmem:[%s31 + $0x480] sm:$0xff]
  %v12295 = vld [vmem:[%s31 + $0x488] sm:$0xff]
  %v12296 = vld [vmem:[%s31 + $0x490] sm:$0xff]
  %v12297 = vld [vmem:[%s31 + $0x498] sm:$0xff]
  %v12298 = vld [vmem:[%s31 + $0x4a0] sm:$0xff]
  %v12299 = vld [vmem:[%s31 + $0x4a8] sm:$0xff]
  %v12300 = vld [vmem:[%s31 + $0x4b0] sm:$0xff]
  %v12301 = vld [vmem:[%s31 + $0x4b8] sm:$0xff]
  %v12302 = vld [vmem:[%s31 + $0x4c0] sm:$0xff]
  %v12303 = vld [vmem:[%s31 + $0x4c8] sm:$0xff]
  %v12304 = vld [vmem:[%s31 + $0x4d0] sm:$0xff]
  %v12305 = vld [vmem:[%s31 + $0x4d8] sm:$0xff]
  %v12306 = vld [vmem:[%s31 + $0x4e0] sm:$0xff]
  %v12307 = vld [vmem:[%s31 + $0x4e8] sm:$0xff]
  %v12308 = vld [vmem:[%s31 + $0x4f0] sm:$0xff]
  %v12309 = vld [vmem:[%s31 + $0x4f8] sm:$0xff]
  %v12310 = vld [vmem:[%s33] sm:$0x3]
  %v12312 = vlaneseq
  %v12313 = vshrl.u32 %v12312, 7
  %v12314 = vsub.s32 0, %v12313
  %v12315 = vrot.slane %v12310, %v12314
  %v12316 = vlaneseq
  %v12317 = vshrl.u32 %v12316, 7
  %v12318 = vsub.s32 1, %v12317
  %v12319 = vrot.slane %v12310, %v12318
  %v12482 = vunpack.c.l.b16 %v12150
  %v12483 = vunpack.c.h.b16 %v12150
  %v12484 = vunpack.c.l.b16 %v12151
  %v12485 = vunpack.c.h.b16 %v12151
  %v12486 = vunpack.c.l.b16 %v12152
  %v12487 = vunpack.c.h.b16 %v12152
  %v12488 = vunpack.c.l.b16 %v12153
  %v12489 = vunpack.c.h.b16 %v12153
  %v12490 = vunpack.c.l.b16 %v12154
  %v12491 = vunpack.c.h.b16 %v12154
  %v12492 = vunpack.c.l.b16 %v12155
  %v12493 = vunpack.c.h.b16 %v12155
  %v12494 = vunpack.c.l.b16 %v12156
  %v12495 = vunpack.c.h.b16 %v12156
  %v12496 = vunpack.c.l.b16 %v12157
  %v12497 = vunpack.c.h.b16 %v12157
  %v12498 = vunpack.c.l.b16 %v12158
  %v12499 = vunpack.c.h.b16 %v12158
  %v12500 = vunpack.c.l.b16 %v12159
  %v12501 = vunpack.c.h.b16 %v12159
  %v12502 = vunpack.c.l.b16 %v12160
  %v12503 = vunpack.c.h.b16 %v12160
  %v12504 = vunpack.c.l.b16 %v12161
  %v12505 = vunpack.c.h.b16 %v12161
  %v12506 = vunpack.c.l.b16 %v12162
  %v12507 = vunpack.c.h.b16 %v12162
  %v12508 = vunpack.c.l.b16 %v12163
  %v12509 = vunpack.c.h.b16 %v12163
  %v12510 = vunpack.c.l.b16 %v12164
  %v12511 = vunpack.c.h.b16 %v12164
  %v12512 = vunpack.c.l.b16 %v12165
  %v12513 = vunpack.c.h.b16 %v12165
  %v12514 = vunpack.c.l.b16 %v12166
  %v12515 = vunpack.c.h.b16 %v12166
  %v12516 = vunpack.c.l.b16 %v12167
  %v12517 = vunpack.c.h.b16 %v12167
  %v12518 = vunpack.c.l.b16 %v12168
  %v12519 = vunpack.c.h.b16 %v12168
  %v12520 = vunpack.c.l.b16 %v12169
  %v12521 = vunpack.c.h.b16 %v12169
  %v12522 = vunpack.c.l.b16 %v12170
  %v12523 = vunpack.c.h.b16 %v12170
  %v12524 = vunpack.c.l.b16 %v12171
  %v12525 = vunpack.c.h.b16 %v12171
  %v12526 = vunpack.c.l.b16 %v12172
  %v12527 = vunpack.c.h.b16 %v12172
  %v12528 = vunpack.c.l.b16 %v12173
  %v12529 = vunpack.c.h.b16 %v12173
  %v12530 = vunpack.c.l.b16 %v12174
  %v12531 = vunpack.c.h.b16 %v12174
  %v12532 = vunpack.c.l.b16 %v12175
  %v12533 = vunpack.c.h.b16 %v12175
  %v12534 = vunpack.c.l.b16 %v12176
  %v12535 = vunpack.c.h.b16 %v12176
  %v12536 = vunpack.c.l.b16 %v12177
  %v12537 = vunpack.c.h.b16 %v12177
  %v12538 = vunpack.c.l.b16 %v12178
  %v12539 = vunpack.c.h.b16 %v12178
  %v12540 = vunpack.c.l.b16 %v12179
  %v12541 = vunpack.c.h.b16 %v12179
  %v12542 = vunpack.c.l.b16 %v12180
  %v12543 = vunpack.c.h.b16 %v12180
  %v12544 = vunpack.c.l.b16 %v12181
  %v12545 = vunpack.c.h.b16 %v12181
  %v12546 = vunpack.c.l.b16 %v12182
  %v12547 = vunpack.c.h.b16 %v12182
  %v12548 = vunpack.c.l.b16 %v12183
  %v12549 = vunpack.c.h.b16 %v12183
  %v12550 = vunpack.c.l.b16 %v12184
  %v12551 = vunpack.c.h.b16 %v12184
  %v12552 = vunpack.c.l.b16 %v12185
  %v12553 = vunpack.c.h.b16 %v12185
  %v12554 = vunpack.c.l.b16 %v12186
  %v12555 = vunpack.c.h.b16 %v12186
  %v12556 = vunpack.c.l.b16 %v12187
  %v12557 = vunpack.c.h.b16 %v12187
  %v12558 = vunpack.c.l.b16 %v12188
  %v12559 = vunpack.c.h.b16 %v12188
  %v12560 = vunpack.c.l.b16 %v12189
  %v12561 = vunpack.c.h.b16 %v12189
  %v12562 = vunpack.c.l.b16 %v12190
  %v12563 = vunpack.c.h.b16 %v12190
  %v12564 = vunpack.c.l.b16 %v12191
  %v12565 = vunpack.c.h.b16 %v12191
  %v12566 = vunpack.c.l.b16 %v12192
  %v12567 = vunpack.c.h.b16 %v12192
  %v12568 = vunpack.c.l.b16 %v12193
  %v12569 = vunpack.c.h.b16 %v12193
  %v12570 = vunpack.c.l.b16 %v12194
  %v12571 = vunpack.c.h.b16 %v12194
  %v12572 = vunpack.c.l.b16 %v12195
  %v12573 = vunpack.c.h.b16 %v12195
  %v12574 = vunpack.c.l.b16 %v12196
  %v12575 = vunpack.c.h.b16 %v12196
  %v12576 = vunpack.c.l.b16 %v12197
  %v12577 = vunpack.c.h.b16 %v12197
  %v12578 = vunpack.c.l.b16 %v12198
  %v12579 = vunpack.c.h.b16 %v12198
  %v12580 = vunpack.c.l.b16 %v12199
  %v12581 = vunpack.c.h.b16 %v12199
  %v12582 = vunpack.c.l.b16 %v12200
  %v12583 = vunpack.c.h.b16 %v12200
  %v12584 = vunpack.c.l.b16 %v12201
  %v12585 = vunpack.c.h.b16 %v12201
  %v12586 = vunpack.c.l.b16 %v12202
  %v12587 = vunpack.c.h.b16 %v12202
  %v12588 = vunpack.c.l.b16 %v12203
  %v12589 = vunpack.c.h.b16 %v12203
  %v12590 = vunpack.c.l.b16 %v12204
  %v12591 = vunpack.c.h.b16 %v12204
  %v12592 = vunpack.c.l.b16 %v12205
  %v12593 = vunpack.c.h.b16 %v12205
  %v12594 = vunpack.c.l.b16 %v12206
  %v12595 = vunpack.c.h.b16 %v12206
  %v12596 = vunpack.c.l.b16 %v12207
  %v12597 = vunpack.c.h.b16 %v12207
  %v12598 = vunpack.c.l.b16 %v12208
  %v12599 = vunpack.c.h.b16 %v12208
  %v12600 = vunpack.c.l.b16 %v12209
  %v12601 = vunpack.c.h.b16 %v12209
  %v12602 = vunpack.c.l.b16 %v12210
  %v12603 = vunpack.c.h.b16 %v12210
  %v12604 = vunpack.c.l.b16 %v12211
  %v12605 = vunpack.c.h.b16 %v12211
  %v12606 = vunpack.c.l.b16 %v12212
  %v12607 = vunpack.c.h.b16 %v12212
  %v12608 = vunpack.c.l.b16 %v12213
  %v12609 = vunpack.c.h.b16 %v12213
  %v12610 = vunpack.c.l.b16 %v12214
  %v12611 = vunpack.c.h.b16 %v12214
  %v12612 = vunpack.c.l.b16 %v12215
  %v12613 = vunpack.c.h.b16 %v12215
  %v12614 = vunpack.c.l.b16 %v12216
  %v12615 = vunpack.c.h.b16 %v12216
  %v12616 = vunpack.c.l.b16 %v12217
  %v12617 = vunpack.c.h.b16 %v12217
  %v12618 = vunpack.c.l.b16 %v12218
  %v12619 = vunpack.c.h.b16 %v12218
  %v12620 = vunpack.c.l.b16 %v12219
  %v12621 = vunpack.c.h.b16 %v12219
  %v12622 = vunpack.c.l.b16 %v12220
  %v12623 = vunpack.c.h.b16 %v12220
  %v12624 = vunpack.c.l.b16 %v12221
  %v12625 = vunpack.c.h.b16 %v12221
  %v12626 = vunpack.c.l.b16 %v12222
  %v12627 = vunpack.c.h.b16 %v12222
  %v12628 = vunpack.c.l.b16 %v12223
  %v12629 = vunpack.c.h.b16 %v12223
  %v12630 = vunpack.c.l.b16 %v12224
  %v12631 = vunpack.c.h.b16 %v12224
  %v12632 = vunpack.c.l.b16 %v12225
  %v12633 = vunpack.c.h.b16 %v12225
  %v12634 = vunpack.c.l.b16 %v12226
  %v12635 = vunpack.c.h.b16 %v12226
  %v12636 = vunpack.c.l.b16 %v12227
  %v12637 = vunpack.c.h.b16 %v12227
  %v12638 = vunpack.c.l.b16 %v12228
  %v12639 = vunpack.c.h.b16 %v12228
  %v12640 = vunpack.c.l.b16 %v12229
  %v12641 = vunpack.c.h.b16 %v12229
  %v12642 = vunpack.c.l.b16 %v12230
  %v12643 = vunpack.c.h.b16 %v12230
  %v12644 = vunpack.c.l.b16 %v12231
  %v12645 = vunpack.c.h.b16 %v12231
  %v12646 = vunpack.c.l.b16 %v12232
  %v12647 = vunpack.c.h.b16 %v12232
  %v12648 = vunpack.c.l.b16 %v12233
  %v12649 = vunpack.c.h.b16 %v12233
  %v12650 = vunpack.c.l.b16 %v12234
  %v12651 = vunpack.c.h.b16 %v12234
  %v12652 = vunpack.c.l.b16 %v12235
  %v12653 = vunpack.c.h.b16 %v12235
  %v12654 = vunpack.c.l.b16 %v12236
  %v12655 = vunpack.c.h.b16 %v12236
  %v12656 = vunpack.c.l.b16 %v12237
  %v12657 = vunpack.c.h.b16 %v12237
  %v12658 = vunpack.c.l.b16 %v12238
  %v12659 = vunpack.c.h.b16 %v12238
  %v12660 = vunpack.c.l.b16 %v12239
  %v12661 = vunpack.c.h.b16 %v12239
  %v12662 = vunpack.c.l.b16 %v12240
  %v12663 = vunpack.c.h.b16 %v12240
  %v12664 = vunpack.c.l.b16 %v12241
  %v12665 = vunpack.c.h.b16 %v12241
  %v12666 = vunpack.c.l.b16 %v12242
  %v12667 = vunpack.c.h.b16 %v12242
  %v12668 = vunpack.c.l.b16 %v12243
  %v12669 = vunpack.c.h.b16 %v12243
  %v12670 = vunpack.c.l.b16 %v12244
  %v12671 = vunpack.c.h.b16 %v12244
  %v12672 = vunpack.c.l.b16 %v12245
  %v12673 = vunpack.c.h.b16 %v12245
  %v12674 = vunpack.c.l.b16 %v12246
  %v12675 = vunpack.c.h.b16 %v12246
  %v12676 = vunpack.c.l.b16 %v12247
  %v12677 = vunpack.c.h.b16 %v12247
  %v12678 = vunpack.c.l.b16 %v12248
  %v12679 = vunpack.c.h.b16 %v12248
  %v12680 = vunpack.c.l.b16 %v12249
  %v12681 = vunpack.c.h.b16 %v12249
  %v12682 = vunpack.c.l.b16 %v12250
  %v12683 = vunpack.c.h.b16 %v12250
  %v12684 = vunpack.c.l.b16 %v12251
  %v12685 = vunpack.c.h.b16 %v12251
  %v12686 = vunpack.c.l.b16 %v12252
  %v12687 = vunpack.c.h.b16 %v12252
  %v12688 = vunpack.c.l.b16 %v12253
  %v12689 = vunpack.c.h.b16 %v12253
  %v12690 = vunpack.c.l.b16 %v12254
  %v12691 = vunpack.c.h.b16 %v12254
  %v12692 = vunpack.c.l.b16 %v12255
  %v12693 = vunpack.c.h.b16 %v12255
  %v12694 = vunpack.c.l.b16 %v12256
  %v12695 = vunpack.c.h.b16 %v12256
  %v12696 = vunpack.c.l.b16 %v12257
  %v12697 = vunpack.c.h.b16 %v12257
  %v12698 = vunpack.c.l.b16 %v12258
  %v12699 = vunpack.c.h.b16 %v12258
  %v12700 = vunpack.c.l.b16 %v12259
  %v12701 = vunpack.c.h.b16 %v12259
  %v12702 = vunpack.c.l.b16 %v12260
  %v12703 = vunpack.c.h.b16 %v12260
  %v12704 = vunpack.c.l.b16 %v12261
  %v12705 = vunpack.c.h.b16 %v12261
  %v12706 = vunpack.c.l.b16 %v12262
  %v12707 = vunpack.c.h.b16 %v12262
  %v12708 = vunpack.c.l.b16 %v12263
  %v12709 = vunpack.c.h.b16 %v12263
  %v12710 = vunpack.c.l.b16 %v12264
  %v12711 = vunpack.c.h.b16 %v12264
  %v12712 = vunpack.c.l.b16 %v12265
  %v12713 = vunpack.c.h.b16 %v12265
  %v12714 = vunpack.c.l.b16 %v12266
  %v12715 = vunpack.c.h.b16 %v12266
  %v12716 = vunpack.c.l.b16 %v12267
  %v12717 = vunpack.c.h.b16 %v12267
  %v12718 = vunpack.c.l.b16 %v12268
  %v12719 = vunpack.c.h.b16 %v12268
  %v12720 = vunpack.c.l.b16 %v12269
  %v12721 = vunpack.c.h.b16 %v12269
  %v12722 = vunpack.c.l.b16 %v12270
  %v12723 = vunpack.c.h.b16 %v12270
  %v12724 = vunpack.c.l.b16 %v12271
  %v12725 = vunpack.c.h.b16 %v12271
  %v12726 = vunpack.c.l.b16 %v12272
  %v12727 = vunpack.c.h.b16 %v12272
  %v12728 = vunpack.c.l.b16 %v12273
  %v12729 = vunpack.c.h.b16 %v12273
  %v12730 = vunpack.c.l.b16 %v12274
  %v12731 = vunpack.c.h.b16 %v12274
  %v12732 = vunpack.c.l.b16 %v12275
  %v12733 = vunpack.c.h.b16 %v12275
  %v12734 = vunpack.c.l.b16 %v12276
  %v12735 = vunpack.c.h.b16 %v12276
  %v12736 = vunpack.c.l.b16 %v12277
  %v12737 = vunpack.c.h.b16 %v12277
  %v12738 = vunpack.c.l.b16 %v12278
  %v12739 = vunpack.c.h.b16 %v12278
  %v12740 = vunpack.c.l.b16 %v12279
  %v12741 = vunpack.c.h.b16 %v12279
  %v12742 = vunpack.c.l.b16 %v12280
  %v12743 = vunpack.c.h.b16 %v12280
  %v12744 = vunpack.c.l.b16 %v12281
  %v12745 = vunpack.c.h.b16 %v12281
  %v12746 = vunpack.c.l.b16 %v12282
  %v12747 = vunpack.c.h.b16 %v12282
  %v12748 = vunpack.c.l.b16 %v12283
  %v12749 = vunpack.c.h.b16 %v12283
  %v12750 = vunpack.c.l.b16 %v12284
  %v12751 = vunpack.c.h.b16 %v12284
  %v12752 = vunpack.c.l.b16 %v12285
  %v12753 = vunpack.c.h.b16 %v12285
  %v12754 = vunpack.c.l.b16 %v12286
  %v12755 = vunpack.c.h.b16 %v12286
  %v12756 = vunpack.c.l.b16 %v12287
  %v12757 = vunpack.c.h.b16 %v12287
  %v12758 = vunpack.c.l.b16 %v12288
  %v12759 = vunpack.c.h.b16 %v12288
  %v12760 = vunpack.c.l.b16 %v12289
  %v12761 = vunpack.c.h.b16 %v12289
  %v12762 = vunpack.c.l.b16 %v12290
  %v12763 = vunpack.c.h.b16 %v12290
  %v12764 = vunpack.c.l.b16 %v12291
  %v12765 = vunpack.c.h.b16 %v12291
  %v12766 = vunpack.c.l.b16 %v12292
  %v12767 = vunpack.c.h.b16 %v12292
  %v12768 = vunpack.c.l.b16 %v12293
  %v12769 = vunpack.c.h.b16 %v12293
  %v12770 = vunpack.c.l.b16 %v12294
  %v12771 = vunpack.c.h.b16 %v12294
  %v12772 = vunpack.c.l.b16 %v12295
  %v12773 = vunpack.c.h.b16 %v12295
  %v12774 = vunpack.c.l.b16 %v12296
  %v12775 = vunpack.c.h.b16 %v12296
  %v12776 = vunpack.c.l.b16 %v12297
  %v12777 = vunpack.c.h.b16 %v12297
  %v12778 = vunpack.c.l.b16 %v12298
  %v12779 = vunpack.c.h.b16 %v12298
  %v12780 = vunpack.c.l.b16 %v12299
  %v12781 = vunpack.c.h.b16 %v12299
  %v12782 = vunpack.c.l.b16 %v12300
  %v12783 = vunpack.c.h.b16 %v12300
  %v12784 = vunpack.c.l.b16 %v12301
  %v12785 = vunpack.c.h.b16 %v12301
  %v12786 = vunpack.c.l.b16 %v12302
  %v12787 = vunpack.c.h.b16 %v12302
  %v12788 = vunpack.c.l.b16 %v12303
  %v12789 = vunpack.c.h.b16 %v12303
  %v12790 = vunpack.c.l.b16 %v12304
  %v12791 = vunpack.c.h.b16 %v12304
  %v12792 = vunpack.c.l.b16 %v12305
  %v12793 = vunpack.c.h.b16 %v12305
  %v12794 = vunpack.c.l.b16 %v12306
  %v12795 = vunpack.c.h.b16 %v12306
  %v12796 = vunpack.c.l.b16 %v12307
  %v12797 = vunpack.c.h.b16 %v12307
  %v12798 = vunpack.c.l.b16 %v12308
  %v12799 = vunpack.c.h.b16 %v12308
  %v12800 = vunpack.c.l.b16 %v12309
  %v12801 = vunpack.c.h.b16 %v12309
  %v12802 = vpack.c.b16 %v12484, %v12482
  %v12803 = vpack.c.b16 %v12485, %v12483
  %v12804 = vpack.c.b16 %v12488, %v12486
  %v12805 = vpack.c.b16 %v12489, %v12487
  %v12806 = vpack.c.b16 %v12492, %v12490
  %v12807 = vpack.c.b16 %v12493, %v12491
  %v12808 = vpack.c.b16 %v12496, %v12494
  %v12809 = vpack.c.b16 %v12497, %v12495
  %v12810 = vpack.c.b16 %v12500, %v12498
  %v12811 = vpack.c.b16 %v12501, %v12499
  %v12812 = vpack.c.b16 %v12504, %v12502
  %v12813 = vpack.c.b16 %v12505, %v12503
  %v12814 = vpack.c.b16 %v12508, %v12506
  %v12815 = vpack.c.b16 %v12509, %v12507
  %v12816 = vpack.c.b16 %v12512, %v12510
  %v12817 = vpack.c.b16 %v12513, %v12511
  %v12818 = vpack.c.b16 %v12516, %v12514
  %v12819 = vpack.c.b16 %v12517, %v12515
  %v12820 = vpack.c.b16 %v12520, %v12518
  %v12821 = vpack.c.b16 %v12521, %v12519
  %v12822 = vpack.c.b16 %v12524, %v12522
  %v12823 = vpack.c.b16 %v12525, %v12523
  %v12824 = vpack.c.b16 %v12528, %v12526
  %v12825 = vpack.c.b16 %v12529, %v12527
  %v12826 = vpack.c.b16 %v12532, %v12530
  %v12827 = vpack.c.b16 %v12533, %v12531
  %v12828 = vpack.c.b16 %v12536, %v12534
  %v12829 = vpack.c.b16 %v12537, %v12535
  %v12830 = vpack.c.b16 %v12540, %v12538
  %v12831 = vpack.c.b16 %v12541, %v12539
  %v12832 = vpack.c.b16 %v12544, %v12542
  %v12833 = vpack.c.b16 %v12545, %v12543
  %v12834 = vpack.c.b16 %v12548, %v12546
  %v12835 = vpack.c.b16 %v12549, %v12547
  %v12836 = vpack.c.b16 %v12552, %v12550
  %v12837 = vpack.c.b16 %v12553, %v12551
  %v12838 = vpack.c.b16 %v12556, %v12554
  %v12839 = vpack.c.b16 %v12557, %v12555
  %v12840 = vpack.c.b16 %v12560, %v12558
  %v12841 = vpack.c.b16 %v12561, %v12559
  %v12842 = vpack.c.b16 %v12564, %v12562
  %v12843 = vpack.c.b16 %v12565, %v12563
  %v12844 = vpack.c.b16 %v12568, %v12566
  %v12845 = vpack.c.b16 %v12569, %v12567
  %v12846 = vpack.c.b16 %v12572, %v12570
  %v12847 = vpack.c.b16 %v12573, %v12571
  %v12848 = vpack.c.b16 %v12576, %v12574
  %v12849 = vpack.c.b16 %v12577, %v12575
  %v12850 = vpack.c.b16 %v12580, %v12578
  %v12851 = vpack.c.b16 %v12581, %v12579
  %v12852 = vpack.c.b16 %v12584, %v12582
  %v12853 = vpack.c.b16 %v12585, %v12583
  %v12854 = vpack.c.b16 %v12588, %v12586
  %v12855 = vpack.c.b16 %v12589, %v12587
  %v12856 = vpack.c.b16 %v12592, %v12590
  %v12857 = vpack.c.b16 %v12593, %v12591
  %v12858 = vpack.c.b16 %v12596, %v12594
  %v12859 = vpack.c.b16 %v12597, %v12595
  %v12860 = vpack.c.b16 %v12600, %v12598
  %v12861 = vpack.c.b16 %v12601, %v12599
  %v12862 = vpack.c.b16 %v12604, %v12602
  %v12863 = vpack.c.b16 %v12605, %v12603
  %v12864 = vpack.c.b16 %v12608, %v12606
  %v12865 = vpack.c.b16 %v12609, %v12607
  %v12866 = vpack.c.b16 %v12612, %v12610
  %v12867 = vpack.c.b16 %v12613, %v12611
  %v12868 = vpack.c.b16 %v12616, %v12614
  %v12869 = vpack.c.b16 %v12617, %v12615
  %v12870 = vpack.c.b16 %v12620, %v12618
  %v12871 = vpack.c.b16 %v12621, %v12619
  %v12872 = vpack.c.b16 %v12624, %v12622
  %v12873 = vpack.c.b16 %v12625, %v12623
  %v12874 = vpack.c.b16 %v12628, %v12626
  %v12875 = vpack.c.b16 %v12629, %v12627
  %v12876 = vpack.c.b16 %v12632, %v12630
  %v12877 = vpack.c.b16 %v12633, %v12631
  %v12878 = vpack.c.b16 %v12636, %v12634
  %v12879 = vpack.c.b16 %v12637, %v12635
  %v12880 = vpack.c.b16 %v12640, %v12638
  %v12881 = vpack.c.b16 %v12641, %v12639
  %v12882 = vpack.c.b16 %v12644, %v12642
  %v12883 = vpack.c.b16 %v12645, %v12643
  %v12884 = vpack.c.b16 %v12648, %v12646
  %v12885 = vpack.c.b16 %v12649, %v12647
  %v12886 = vpack.c.b16 %v12652, %v12650
  %v12887 = vpack.c.b16 %v12653, %v12651
  %v12888 = vpack.c.b16 %v12656, %v12654
  %v12889 = vpack.c.b16 %v12657, %v12655
  %v12890 = vpack.c.b16 %v12660, %v12658
  %v12891 = vpack.c.b16 %v12661, %v12659
  %v12892 = vpack.c.b16 %v12664, %v12662
  %v12893 = vpack.c.b16 %v12665, %v12663
  %v12894 = vpack.c.b16 %v12668, %v12666
  %v12895 = vpack.c.b16 %v12669, %v12667
  %v12896 = vpack.c.b16 %v12672, %v12670
  %v12897 = vpack.c.b16 %v12673, %v12671
  %v12898 = vpack.c.b16 %v12676, %v12674
  %v12899 = vpack.c.b16 %v12677, %v12675
  %v12900 = vpack.c.b16 %v12680, %v12678
  %v12901 = vpack.c.b16 %v12681, %v12679
  %v12902 = vpack.c.b16 %v12684, %v12682
  %v12903 = vpack.c.b16 %v12685, %v12683
  %v12904 = vpack.c.b16 %v12688, %v12686
  %v12905 = vpack.c.b16 %v12689, %v12687
  %v12906 = vpack.c.b16 %v12692, %v12690
  %v12907 = vpack.c.b16 %v12693, %v12691
  %v12908 = vpack.c.b16 %v12696, %v12694
  %v12909 = vpack.c.b16 %v12697, %v12695
  %v12910 = vpack.c.b16 %v12700, %v12698
  %v12911 = vpack.c.b16 %v12701, %v12699
  %v12912 = vpack.c.b16 %v12704, %v12702
  %v12913 = vpack.c.b16 %v12705, %v12703
  %v12914 = vpack.c.b16 %v12708, %v12706
  %v12915 = vpack.c.b16 %v12709, %v12707
  %v12916 = vpack.c.b16 %v12712, %v12710
  %v12917 = vpack.c.b16 %v12713, %v12711
  %v12918 = vpack.c.b16 %v12716, %v12714
  %v12919 = vpack.c.b16 %v12717, %v12715
  %v12920 = vpack.c.b16 %v12720, %v12718
  %v12921 = vpack.c.b16 %v12721, %v12719
  %v12922 = vpack.c.b16 %v12724, %v12722
  %v12923 = vpack.c.b16 %v12725, %v12723
  %v12924 = vpack.c.b16 %v12728, %v12726
  %v12925 = vpack.c.b16 %v12729, %v12727
  %v12926 = vpack.c.b16 %v12732, %v12730
  %v12927 = vpack.c.b16 %v12733, %v12731
  %v12928 = vpack.c.b16 %v12736, %v12734
  %v12929 = vpack.c.b16 %v12737, %v12735
  %v12930 = vpack.c.b16 %v12740, %v12738
  %v12931 = vpack.c.b16 %v12741, %v12739
  %v12932 = vpack.c.b16 %v12744, %v12742
  %v12933 = vpack.c.b16 %v12745, %v12743
  %v12934 = vpack.c.b16 %v12748, %v12746
  %v12935 = vpack.c.b16 %v12749, %v12747
  %v12936 = vpack.c.b16 %v12752, %v12750
  %v12937 = vpack.c.b16 %v12753, %v12751
  %v12938 = vpack.c.b16 %v12756, %v12754
  %v12939 = vpack.c.b16 %v12757, %v12755
  %v12940 = vpack.c.b16 %v12760, %v12758
  %v12941 = vpack.c.b16 %v12761, %v12759
  %v12942 = vpack.c.b16 %v12764, %v12762
  %v12943 = vpack.c.b16 %v12765, %v12763
  %v12944 = vpack.c.b16 %v12768, %v12766
  %v12945 = vpack.c.b16 %v12769, %v12767
  %v12946 = vpack.c.b16 %v12772, %v12770
  %v12947 = vpack.c.b16 %v12773, %v12771
  %v12948 = vpack.c.b16 %v12776, %v12774
  %v12949 = vpack.c.b16 %v12777, %v12775
  %v12950 = vpack.c.b16 %v12780, %v12778
  %v12951 = vpack.c.b16 %v12781, %v12779
  %v12952 = vpack.c.b16 %v12784, %v12782
  %v12953 = vpack.c.b16 %v12785, %v12783
  %v12954 = vpack.c.b16 %v12788, %v12786
  %v12955 = vpack.c.b16 %v12789, %v12787
  %v12956 = vpack.c.b16 %v12792, %v12790
  %v12957 = vpack.c.b16 %v12793, %v12791
  %v12958 = vpack.c.b16 %v12796, %v12794
  %v12959 = vpack.c.b16 %v12797, %v12795
  %v12960 = vpack.c.b16 %v12800, %v12798
  %v12961 = vpack.c.b16 %v12801, %v12799
  %13122 = vmatprep.subr.bf16.mxu0 %v12803
  %13123 = vmatpush1.bf16.msra.mxu0 %v12802
  %13124 = vmatprep.subr.bf16.mxu0 %v12805
  %13125 = vmatpush1.bf16.msra.mxu0 %v12804
  %13126 = vmatprep.subr.bf16.mxu0 %v12807
  %13127 = vmatpush1.bf16.msra.mxu0 %v12806
  %13128 = vmatprep.subr.bf16.mxu0 %v12809
  %13129 = vmatpush1.bf16.msra.mxu0 %v12808
  %13130 = vmatprep.subr.bf16.mxu0 %v12811
  %13131 = vmatpush1.bf16.msra.mxu0 %v12810
  %13132 = vmatprep.subr.bf16.mxu0 %v12813
  %13133 = vmatpush1.bf16.msra.mxu0 %v12812
  %13134 = vmatprep.subr.bf16.mxu0 %v12815
  %13135 = vmatpush1.bf16.msra.mxu0 %v12814
  %13136 = vmatprep.subr.bf16.mxu0 %v12817
  %13137 = vmatpush1.bf16.msra.mxu0 %v12816
  %13138 = vmatprep.subr.bf16.mxu0 %v12819
  %13139 = vmatpush1.bf16.msra.mxu0 %v12818
  %13140 = vmatprep.subr.bf16.mxu0 %v12821
  %13141 = vmatpush1.bf16.msra.mxu0 %v12820
  %13142 = vmatprep.subr.bf16.mxu0 %v12823
  %13143 = vmatpush1.bf16.msra.mxu0 %v12822
  %13144 = vmatprep.subr.bf16.mxu0 %v12825
  %13145 = vmatpush1.bf16.msra.mxu0 %v12824
  %13146 = vmatprep.subr.bf16.mxu0 %v12827
  %13147 = vmatpush1.bf16.msra.mxu0 %v12826
  %13148 = vmatprep.subr.bf16.mxu0 %v12829
  %13149 = vmatpush1.bf16.msra.mxu0 %v12828
  %13150 = vmatprep.subr.bf16.mxu0 %v12831
  %13151 = vmatpush1.bf16.msra.mxu0 %v12830
  %13152 = vmatprep.subr.bf16.mxu0 %v12833
  %13153 = vmatpush1.bf16.msra.mxu0 %v12832
  %13154 = vmatprep.mubr.bf16.mxu0 %v12141
  %13155 = vmatmul.mubr.bf16.gmra.mrb[0].mxu0 %v12140
  %v13156 = vpop.f32.mrb[0].mxu0
  %v13157 = vadd.f32 %v12315, %v13156
  %v13158 = vpop.f32.mrb[0].mxu0
  %v13159 = vadd.f32 %v12319, %v13158
  %v13160 = vpop.f32.mrb[0].mxu0
  %v13161 = vpop.f32.mrb[0].mxu0
  %13162 = vdwg.mxu0
  %13163 = vmatprep.subr.bf16.mxu0 %v12835
  %13164 = vmatpush1.bf16.msra.mxu0 %v12834
  %13165 = vmatprep.subr.bf16.mxu0 %v12837
  %13166 = vmatpush1.bf16.msra.mxu0 %v12836
  %13167 = vmatprep.subr.bf16.mxu0 %v12839
  %13168 = vmatpush1.bf16.msra.mxu0 %v12838
  %13169 = vmatprep.subr.bf16.mxu0 %v12841
  %13170 = vmatpush1.bf16.msra.mxu0 %v12840
  %13171 = vmatprep.subr.bf16.mxu0 %v12843
  %13172 = vmatpush1.bf16.msra.mxu0 %v12842
  %13173 = vmatprep.subr.bf16.mxu0 %v12845
  %13174 = vmatpush1.bf16.msra.mxu0 %v12844
  %13175 = vmatprep.subr.bf16.mxu0 %v12847
  %13176 = vmatpush1.bf16.msra.mxu0 %v12846
  %13177 = vmatprep.subr.bf16.mxu0 %v12849
  %13178 = vmatpush1.bf16.msra.mxu0 %v12848
  %13179 = vmatprep.subr.bf16.mxu0 %v12851
  %13180 = vmatpush1.bf16.msra.mxu0 %v12850
  %13181 = vmatprep.subr.bf16.mxu0 %v12853
  %13182 = vmatpush1.bf16.msra.mxu0 %v12852
  %13183 = vmatprep.subr.bf16.mxu0 %v12855
  %13184 = vmatpush1.bf16.msra.mxu0 %v12854
  %13185 = vmatprep.subr.bf16.mxu0 %v12857
  %13186 = vmatpush1.bf16.msra.mxu0 %v12856
  %13187 = vmatprep.subr.bf16.mxu0 %v12859
  %13188 = vmatpush1.bf16.msra.mxu0 %v12858
  %13189 = vmatprep.subr.bf16.mxu0 %v12861
  %13190 = vmatpush1.bf16.msra.mxu0 %v12860
  %13191 = vmatprep.subr.bf16.mxu0 %v12863
  %13192 = vmatpush1.bf16.msra.mxu0 %v12862
  %13193 = vmatprep.subr.bf16.mxu0 %v12865
  %13194 = vmatpush1.bf16.msra.mxu0 %v12864
  %13195 = vmatprep.mubr.bf16.mxu0 %v12143
  %13196 = vmatmul.mubr.bf16.gmra.mrb[0].mxu0 %v12142
  %v13197 = vpop.f32.mrb[0].mxu0
  %v13198 = vadd.f32 %v13157, %v13197
  %v13199 = vpop.f32.mrb[0].mxu0
  %v13200 = vadd.f32 %v13159, %v13199
  %v13201 = vpop.f32.mrb[0].mxu0
  %v13202 = vpop.f32.mrb[0].mxu0
  %13203 = vdwg.mxu0
  %13204 = vmatprep.subr.bf16.mxu0 %v12867
  %13205 = vmatpush1.bf16.msra.mxu0 %v12866
  %13206 = vmatprep.subr.bf16.mxu0 %v12869
  %13207 = vmatpush1.bf16.msra.mxu0 %v12868
  %13208 = vmatprep.subr.bf16.mxu0 %v12871
  %13209 = vmatpush1.bf16.msra.mxu0 %v12870
  %13210 = vmatprep.subr.bf16.mxu0 %v12873
  %13211 = vmatpush1.bf16.msra.mxu0 %v12872
  %13212 = vmatprep.subr.bf16.mxu0 %v12875
  %13213 = vmatpush1.bf16.msra.mxu0 %v12874
  %13214 = vmatprep.subr.bf16.mxu0 %v12877
  %13215 = vmatpush1.bf16.msra.mxu0 %v12876
  %13216 = vmatprep.subr.bf16.mxu0 %v12879
  %13217 = vmatpush1.bf16.msra.mxu0 %v12878
  %13218 = vmatprep.subr.bf16.mxu0 %v12881
  %13219 = vmatpush1.bf16.msra.mxu0 %v12880
  %13220 = vmatprep.subr.bf16.mxu0 %v12883
  %13221 = vmatpush1.bf16.msra.mxu0 %v12882
  %13222 = vmatprep.subr.bf16.mxu0 %v12885
  %13223 = vmatpush1.bf16.msra.mxu0 %v12884
  %13224 = vmatprep.subr.bf16.mxu0 %v12887
  %13225 = vmatpush1.bf16.msra.mxu0 %v12886
  %13226 = vmatprep.subr.bf16.mxu0 %v12889
  %13227 = vmatpush1.bf16.msra.mxu0 %v12888
  %13228 = vmatprep.subr.bf16.mxu0 %v12891
  %13229 = vmatpush1.bf16.msra.mxu0 %v12890
  %13230 = vmatprep.subr.bf16.mxu0 %v12893
  %13231 = vmatpush1.bf16.msra.mxu0 %v12892
  %13232 = vmatprep.subr.bf16.mxu0 %v12895
  %13233 = vmatpush1.bf16.msra.mxu0 %v12894
  %13234 = vmatprep.subr.bf16.mxu0 %v12897
  %13235 = vmatpush1.bf16.msra.mxu0 %v12896
  %13236 = vmatprep.mubr.bf16.mxu0 %v12145
  %13237 = vmatmul.mubr.bf16.gmra.mrb[0].mxu0 %v12144
  %v13238 = vpop.f32.mrb[0].mxu0
  %v13239 = vadd.f32 %v13198, %v13238
  %v13240 = vpop.f32.mrb[0].mxu0
  %v13241 = vadd.f32 %v13200, %v13240
  %v13242 = vpop.f32.mrb[0].mxu0
  %v13243 = vpop.f32.mrb[0].mxu0
  %13244 = vdwg.mxu0
  %13245 = vmatprep.subr.bf16.mxu0 %v12899
  %13246 = vmatpush1.bf16.msra.mxu0 %v12898
  %13247 = vmatprep.subr.bf16.mxu0 %v12901
  %13248 = vmatpush1.bf16.msra.mxu0 %v12900
  %13249 = vmatprep.subr.bf16.mxu0 %v12903
  %13250 = vmatpush1.bf16.msra.mxu0 %v12902
  %13251 = vmatprep.subr.bf16.mxu0 %v12905
  %13252 = vmatpush1.bf16.msra.mxu0 %v12904
  %13253 = vmatprep.subr.bf16.mxu0 %v12907
  %13254 = vmatpush1.bf16.msra.mxu0 %v12906
  %13255 = vmatprep.subr.bf16.mxu0 %v12909
  %13256 = vmatpush1.bf16.msra.mxu0 %v12908
  %13257 = vmatprep.subr.bf16.mxu0 %v12911
  %13258 = vmatpush1.bf16.msra.mxu0 %v12910
  %13259 = vmatprep.subr.bf16.mxu0 %v12913
  %13260 = vmatpush1.bf16.msra.mxu0 %v12912
  %13261 = vmatprep.subr.bf16.mxu0 %v12915
  %13262 = vmatpush1.bf16.msra.mxu0 %v12914
  %13263 = vmatprep.subr.bf16.mxu0 %v12917
  %13264 = vmatpush1.bf16.msra.mxu0 %v12916
  %13265 = vmatprep.subr.bf16.mxu0 %v12919
  %13266 = vmatpush1.bf16.msra.mxu0 %v12918
  %13267 = vmatprep.subr.bf16.mxu0 %v12921
  %13268 = vmatpush1.bf16.msra.mxu0 %v12920
  %13269 = vmatprep.subr.bf16.mxu0 %v12923
  %13270 = vmatpush1.bf16.msra.mxu0 %v12922
  %13271 = vmatprep.subr.bf16.mxu0 %v12925
  %13272 = vmatpush1.bf16.msra.mxu0 %v12924
  %13273 = vmatprep.subr.bf16.mxu0 %v12927
  %13274 = vmatpush1.bf16.msra.mxu0 %v12926
  %13275 = vmatprep.subr.bf16.mxu0 %v12929
  %13276 = vmatpush1.bf16.msra.mxu0 %v12928
  %13277 = vmatprep.mubr.bf16.mxu0 %v12147
  %13278 = vmatmul.mubr.bf16.gmra.mrb[0].mxu0 %v12146
  %v13279 = vpop.f32.mrb[0].mxu0
  %v13280 = vadd.f32 %v13239, %v13279
  %v13281 = vpop.f32.mrb[0].mxu0
  %v13282 = vadd.f32 %v13241, %v13281
  %v13283 = vpop.f32.mrb[0].mxu0
  %v13284 = vpop.f32.mrb[0].mxu0
  %13285 = vdwg.mxu0
  %13286 = vmatprep.subr.bf16.mxu0 %v12931
  %13287 = vmatpush1.bf16.msra.mxu0 %v12930
  %13288 = vmatprep.subr.bf16.mxu0 %v12933
  %13289 = vmatpush1.bf16.msra.mxu0 %v12932
  %13290 = vmatprep.subr.bf16.mxu0 %v12935
  %13291 = vmatpush1.bf16.msra.mxu0 %v12934
  %13292 = vmatprep.subr.bf16.mxu0 %v12937
  %13293 = vmatpush1.bf16.msra.mxu0 %v12936
  %13294 = vmatprep.subr.bf16.mxu0 %v12939
  %13295 = vmatpush1.bf16.msra.mxu0 %v12938
  %13296 = vmatprep.subr.bf16.mxu0 %v12941
  %13297 = vmatpush1.bf16.msra.mxu0 %v12940
  %13298 = vmatprep.subr.bf16.mxu0 %v12943
  %13299 = vmatpush1.bf16.msra.mxu0 %v12942
  %13300 = vmatprep.subr.bf16.mxu0 %v12945
  %13301 = vmatpush1.bf16.msra.mxu0 %v12944
  %13302 = vmatprep.subr.bf16.mxu0 %v12947
  %13303 = vmatpush1.bf16.msra.mxu0 %v12946
  %13304 = vmatprep.subr.bf16.mxu0 %v12949
  %13305 = vmatpush1.bf16.msra.mxu0 %v12948
  %13306 = vmatprep.subr.bf16.mxu0 %v12951
  %13307 = vmatpush1.bf16.msra.mxu0 %v12950
  %13308 = vmatprep.subr.bf16.mxu0 %v12953
  %13309 = vmatpush1.bf16.msra.mxu0 %v12952
  %13310 = vmatprep.subr.bf16.mxu0 %v12955
  %13311 = vmatpush1.bf16.msra.mxu0 %v12954
  %13312 = vmatprep.subr.bf16.mxu0 %v12957
  %13313 = vmatpush1.bf16.msra.mxu0 %v12956
  %13314 = vmatprep.subr.bf16.mxu0 %v12959
  %13315 = vmatpush1.bf16.msra.mxu0 %v12958
  %13316 = vmatprep.subr.bf16.mxu0 %v12961
  %13317 = vmatpush1.bf16.msra.mxu0 %v12960
  %13318 = vmatprep.mubr.bf16.mxu0 %v12149
  %13319 = vmatmul.mubr.bf16.gmra.mrb[0].mxu0 %v12148
  %v13320 = vpop.f32.mrb[0].mxu0
  %v13321 = vadd.f32 %v13280, %v13320
  %v13322 = vpop.f32.mrb[0].mxu0
  %v13323 = vadd.f32 %v13282, %v13322
  %v13324 = vpop.f32.mrb[0].mxu0
  %v13325 = vpop.f32.mrb[0].mxu0
  %13326 = vdwg.mxu0
  %v13327 = vsel %vm3897, %v13321, 0.0
  %v13328 = vrot.slane %v13327, 4
  %v13329 = vadd.f32 %v13327, %v13328
  %v13330 = vrot.slane %v13329, 2
  %v13331 = vadd.f32 %v13329, %v13330
  %v13332 = vrot.slane %v13331, 1
  %v13333 = vadd.f32 %v13331, %v13332
  %v13334 = vsel %vm3897, %v13323, 0.0
  %v13335 = vrot.slane %v13334, 4
  %v13336 = vadd.f32 %v13334, %v13335
  %v13337 = vrot.slane %v13336, 2
  %v13338 = vadd.f32 %v13336, %v13337
  %v13339 = vrot.slane %v13338, 1
  %v13340 = vadd.f32 %v13338, %v13339
  %v13341 = vrcp.pop 4.0
  %v13342 = vmul.f32 %v13333, %v13341
  %v13343 = vmul.f32 %v13340, %v13341
  %v13344 = vsub.f32 %v13321, %v13342
  %v13345 = vsub.f32 %v13323, %v13343
  %v13346 = vmul.f32 %v13344, %v13344
  %v13347 = vmul.f32 %v13345, %v13345
  %v13348 = vsel %vm3897, %v13346, 0.0
  %v13349 = vrot.slane %v13348, 4
  %v13350 = vadd.f32 %v13348, %v13349
  %v13351 = vrot.slane %v13350, 2
  %v13352 = vadd.f32 %v13350, %v13351
  %v13353 = vrot.slane %v13352, 1
  %v13354 = vadd.f32 %v13352, %v13353
  %v13355 = vsel %vm3897, %v13347, 0.0
  %v13356 = vrot.slane %v13355, 4
  %v13357 = vadd.f32 %v13355, %v13356
  %v13358 = vrot.slane %v13357, 2
  %v13359 = vadd.f32 %v13357, %v13358
  %v13360 = vrot.slane %v13359, 1
  %v13361 = vadd.f32 %v13359, %v13360
  %v13362 = vmul.f32 %v13354, %v13341
  %v13363 = vmul.f32 %v13361, %v13341
  %v13364 = vadd.f32 %v13362, 1e-05
  %v13365 = vadd.f32 %v13363, 1e-05
  %v13366 = vrsqrt.pop %v13364
  %v13367 = vrsqrt.pop %v13365
  %v13368 = vmul.f32 %v13344, %v13366
  %v13369 = vmul.f32 %v13345, %v13367
  %v13370 = vld [vmem:[%s35] sm:$0x3]
  %v13372 = vlaneseq
  %v13373 = vshrl.u32 %v13372, 7
  %v13374 = vsub.s32 0, %v13373
  %v13375 = vrot.slane %v13370, %v13374
  %v13376 = vlaneseq
  %v13377 = vshrl.u32 %v13376, 7
  %v13378 = vsub.s32 1, %v13377
  %v13379 = vrot.slane %v13370, %v13378
  %v13382 = vmul.f32 %v13368, %v13375
  %v13383 = vmul.f32 %v13369, %v13379
  %v13384 = vld [vmem:[%s37] sm:$0x3]
  %v13386 = vlaneseq
  %v13387 = vshrl.u32 %v13386, 7
  %v13388 = vsub.s32 0, %v13387
  %v13389 = vrot.slane %v13384, %v13388
  %v13390 = vlaneseq
  %v13391 = vshrl.u32 %v13390, 7
  %v13392 = vsub.s32 1, %v13391
  %v13393 = vrot.slane %v13384, %v13392
  %v13396 = vadd.f32 %v13382, %v13389
  %v13397 = vadd.f32 %v13383, %v13393
  %v13398 = vmax.f32 %v13396, 0.0
  %v13399 = vmax.f32 %v13397, 0.0
  %v13400 = vpack.c.bf16 %v13398, %v13398
  %v13401 = vpack.c.bf16 %v13399, %v13399
  %v13402 = vld [vmem:[%s39] sm:$0xff]
  %v13403 = vld [vmem:[%s39 + $0x8] sm:$0xff]
  %v13404 = vld [vmem:[%s39 + $0x10] sm:$0xff]
  %v13405 = vld [vmem:[%s39 + $0x18] sm:$0xff]
  %v13406 = vld [vmem:[%s39 + $0x20] sm:$0xff]
  %v13407 = vld [vmem:[%s39 + $0x28] sm:$0xff]
  %v13408 = vld [vmem:[%s39 + $0x30] sm:$0xff]
  %v13409 = vld [vmem:[%s39 + $0x38] sm:$0xff]
  %v13410 = vld [vmem:[%s39 + $0x40] sm:$0xff]
  %v13411 = vld [vmem:[%s39 + $0x48] sm:$0xff]
  %v13412 = vld [vmem:[%s39 + $0x50] sm:$0xff]
  %v13413 = vld [vmem:[%s39 + $0x58] sm:$0xff]
  %v13414 = vld [vmem:[%s39 + $0x60] sm:$0xff]
  %v13415 = vld [vmem:[%s39 + $0x68] sm:$0xff]
  %v13416 = vld [vmem:[%s39 + $0x70] sm:$0xff]
  %v13417 = vld [vmem:[%s39 + $0x78] sm:$0xff]
  %v13418 = vld [vmem:[%s39 + $0x80] sm:$0xff]
  %v13419 = vld [vmem:[%s39 + $0x88] sm:$0xff]
  %v13420 = vld [vmem:[%s39 + $0x90] sm:$0xff]
  %v13421 = vld [vmem:[%s39 + $0x98] sm:$0xff]
  %v13422 = vld [vmem:[%s39 + $0xa0] sm:$0xff]
  %v13423 = vld [vmem:[%s39 + $0xa8] sm:$0xff]
  %v13424 = vld [vmem:[%s39 + $0xb0] sm:$0xff]
  %v13425 = vld [vmem:[%s39 + $0xb8] sm:$0xff]
  %v13426 = vld [vmem:[%s39 + $0xc0] sm:$0xff]
  %v13427 = vld [vmem:[%s39 + $0xc8] sm:$0xff]
  %v13428 = vld [vmem:[%s39 + $0xd0] sm:$0xff]
  %v13429 = vld [vmem:[%s39 + $0xd8] sm:$0xff]
  %v13430 = vld [vmem:[%s39 + $0xe0] sm:$0xff]
  %v13431 = vld [vmem:[%s39 + $0xe8] sm:$0xff]
  %v13432 = vld [vmem:[%s39 + $0xf0] sm:$0xff]
  %v13433 = vld [vmem:[%s39 + $0xf8] sm:$0xff]
  %v13434 = vld [vmem:[%s41] sm:$0x3]
  %v13436 = vlaneseq
  %v13437 = vshrl.u32 %v13436, 7
  %v13438 = vsub.s32 0, %v13437
  %v13439 = vrot.slane %v13434, %v13438
  %v13440 = vlaneseq
  %v13441 = vshrl.u32 %v13440, 7
  %v13442 = vsub.s32 1, %v13441
  %v13443 = vrot.slane %v13434, %v13442
  %v13478 = vunpack.c.l.b16 %v13402
  %v13479 = vunpack.c.h.b16 %v13402
  %v13480 = vunpack.c.l.b16 %v13403
  %v13481 = vunpack.c.h.b16 %v13403
  %v13482 = vunpack.c.l.b16 %v13404
  %v13483 = vunpack.c.h.b16 %v13404
  %v13484 = vunpack.c.l.b16 %v13405
  %v13485 = vunpack.c.h.b16 %v13405
  %v13486 = vunpack.c.l.b16 %v13406
  %v13487 = vunpack.c.h.b16 %v13406
  %v13488 = vunpack.c.l.b16 %v13407
  %v13489 = vunpack.c.h.b16 %v13407
  %v13490 = vunpack.c.l.b16 %v13408
  %v13491 = vunpack.c.h.b16 %v13408
  %v13492 = vunpack.c.l.b16 %v13409
  %v13493 = vunpack.c.h.b16 %v13409
  %v13494 = vunpack.c.l.b16 %v13410
  %v13495 = vunpack.c.h.b16 %v13410
  %v13496 = vunpack.c.l.b16 %v13411
  %v13497 = vunpack.c.h.b16 %v13411
  %v13498 = vunpack.c.l.b16 %v13412
  %v13499 = vunpack.c.h.b16 %v13412
  %v13500 = vunpack.c.l.b16 %v13413
  %v13501 = vunpack.c.h.b16 %v13413
  %v13502 = vunpack.c.l.b16 %v13414
  %v13503 = vunpack.c.h.b16 %v13414
  %v13504 = vunpack.c.l.b16 %v13415
  %v13505 = vunpack.c.h.b16 %v13415
  %v13506 = vunpack.c.l.b16 %v13416
  %v13507 = vunpack.c.h.b16 %v13416
  %v13508 = vunpack.c.l.b16 %v13417
  %v13509 = vunpack.c.h.b16 %v13417
  %v13510 = vunpack.c.l.b16 %v13418
  %v13511 = vunpack.c.h.b16 %v13418
  %v13512 = vunpack.c.l.b16 %v13419
  %v13513 = vunpack.c.h.b16 %v13419
  %v13514 = vunpack.c.l.b16 %v13420
  %v13515 = vunpack.c.h.b16 %v13420
  %v13516 = vunpack.c.l.b16 %v13421
  %v13517 = vunpack.c.h.b16 %v13421
  %v13518 = vunpack.c.l.b16 %v13422
  %v13519 = vunpack.c.h.b16 %v13422
  %v13520 = vunpack.c.l.b16 %v13423
  %v13521 = vunpack.c.h.b16 %v13423
  %v13522 = vunpack.c.l.b16 %v13424
  %v13523 = vunpack.c.h.b16 %v13424
  %v13524 = vunpack.c.l.b16 %v13425
  %v13525 = vunpack.c.h.b16 %v13425
  %v13526 = vunpack.c.l.b16 %v13426
  %v13527 = vunpack.c.h.b16 %v13426
  %v13528 = vunpack.c.l.b16 %v13427
  %v13529 = vunpack.c.h.b16 %v13427
  %v13530 = vunpack.c.l.b16 %v13428
  %v13531 = vunpack.c.h.b16 %v13428
  %v13532 = vunpack.c.l.b16 %v13429
  %v13533 = vunpack.c.h.b16 %v13429
  %v13534 = vunpack.c.l.b16 %v13430
  %v13535 = vunpack.c.h.b16 %v13430
  %v13536 = vunpack.c.l.b16 %v13431
  %v13537 = vunpack.c.h.b16 %v13431
  %v13538 = vunpack.c.l.b16 %v13432
  %v13539 = vunpack.c.h.b16 %v13432
  %v13540 = vunpack.c.l.b16 %v13433
  %v13541 = vunpack.c.h.b16 %v13433
  %v13542 = vpack.c.b16 %v13480, %v13478
  %v13543 = vpack.c.b16 %v13481, %v13479
  %v13544 = vpack.c.b16 %v13484, %v13482
  %v13545 = vpack.c.b16 %v13485, %v13483
  %v13546 = vpack.c.b16 %v13488, %v13486
  %v13547 = vpack.c.b16 %v13489, %v13487
  %v13548 = vpack.c.b16 %v13492, %v13490
  %v13549 = vpack.c.b16 %v13493, %v13491
  %v13550 = vpack.c.b16 %v13496, %v13494
  %v13551 = vpack.c.b16 %v13497, %v13495
  %v13552 = vpack.c.b16 %v13500, %v13498
  %v13553 = vpack.c.b16 %v13501, %v13499
  %v13554 = vpack.c.b16 %v13504, %v13502
  %v13555 = vpack.c.b16 %v13505, %v13503
  %v13556 = vpack.c.b16 %v13508, %v13506
  %v13557 = vpack.c.b16 %v13509, %v13507
  %v13558 = vpack.c.b16 %v13512, %v13510
  %v13559 = vpack.c.b16 %v13513, %v13511
  %v13560 = vpack.c.b16 %v13516, %v13514
  %v13561 = vpack.c.b16 %v13517, %v13515
  %v13562 = vpack.c.b16 %v13520, %v13518
  %v13563 = vpack.c.b16 %v13521, %v13519
  %v13564 = vpack.c.b16 %v13524, %v13522
  %v13565 = vpack.c.b16 %v13525, %v13523
  %v13566 = vpack.c.b16 %v13528, %v13526
  %v13567 = vpack.c.b16 %v13529, %v13527
  %v13568 = vpack.c.b16 %v13532, %v13530
  %v13569 = vpack.c.b16 %v13533, %v13531
  %v13570 = vpack.c.b16 %v13536, %v13534
  %v13571 = vpack.c.b16 %v13537, %v13535
  %v13572 = vpack.c.b16 %v13540, %v13538
  %v13573 = vpack.c.b16 %v13541, %v13539
  %13606 = vmatprep.subr.bf16.mxu0 %v13543
  %13607 = vmatpush1.bf16.msra.mxu0 %v13542
  %13608 = vmatprep.subr.bf16.mxu0 %v13545
  %13609 = vmatpush1.bf16.msra.mxu0 %v13544
  %13610 = vmatprep.subr.bf16.mxu0 %v13547
  %13611 = vmatpush1.bf16.msra.mxu0 %v13546
  %13612 = vmatprep.subr.bf16.mxu0 %v13549
  %13613 = vmatpush1.bf16.msra.mxu0 %v13548
  %13614 = vmatprep.subr.bf16.mxu0 %v13551
  %13615 = vmatpush1.bf16.msra.mxu0 %v13550
  %13616 = vmatprep.subr.bf16.mxu0 %v13553
  %13617 = vmatpush1.bf16.msra.mxu0 %v13552
  %13618 = vmatprep.subr.bf16.mxu0 %v13555
  %13619 = vmatpush1.bf16.msra.mxu0 %v13554
  %13620 = vmatprep.subr.bf16.mxu0 %v13557
  %13621 = vmatpush1.bf16.msra.mxu0 %v13556
  %13622 = vmatprep.subr.bf16.mxu0 %v13559
  %13623 = vmatpush1.bf16.msra.mxu0 %v13558
  %13624 = vmatprep.subr.bf16.mxu0 %v13561
  %13625 = vmatpush1.bf16.msra.mxu0 %v13560
  %13626 = vmatprep.subr.bf16.mxu0 %v13563
  %13627 = vmatpush1.bf16.msra.mxu0 %v13562
  %13628 = vmatprep.subr.bf16.mxu0 %v13565
  %13629 = vmatpush1.bf16.msra.mxu0 %v13564
  %13630 = vmatprep.subr.bf16.mxu0 %v13567
  %13631 = vmatpush1.bf16.msra.mxu0 %v13566
  %13632 = vmatprep.subr.bf16.mxu0 %v13569
  %13633 = vmatpush1.bf16.msra.mxu0 %v13568
  %13634 = vmatprep.subr.bf16.mxu0 %v13571
  %13635 = vmatpush1.bf16.msra.mxu0 %v13570
  %13636 = vmatprep.subr.bf16.mxu0 %v13573
  %13637 = vmatpush1.bf16.msra.mxu0 %v13572
  %13638 = vmatprep.mubr.bf16.mxu0 %v13401
  %13639 = vmatmul.mubr.bf16.gmra.mrb[0].mxu0 %v13400
  %v13640 = vpop.f32.mrb[0].mxu0
  %v13641 = vadd.f32 %v13439, %v13640
  %v13642 = vpop.f32.mrb[0].mxu0
  %v13643 = vadd.f32 %v13443, %v13642
  %v13644 = vpop.f32.mrb[0].mxu0
  %v13645 = vpop.f32.mrb[0].mxu0
  %13646 = vdwg.mxu0
  %v13647 = vsel %vm3897, %v13641, 0.0
  %v13648 = vrot.slane %v13647, 4
  %v13649 = vadd.f32 %v13647, %v13648
  %v13650 = vrot.slane %v13649, 2
  %v13651 = vadd.f32 %v13649, %v13650
  %v13652 = vrot.slane %v13651, 1
  %v13653 = vadd.f32 %v13651, %v13652
  %v13654 = vsel %vm3897, %v13643, 0.0
  %v13655 = vrot.slane %v13654, 4
  %v13656 = vadd.f32 %v13654, %v13655
  %v13657 = vrot.slane %v13656, 2
  %v13658 = vadd.f32 %v13656, %v13657
  %v13659 = vrot.slane %v13658, 1
  %v13660 = vadd.f32 %v13658, %v13659
  %v13661 = vmul.f32 %v13653, %v13341
  %v13662 = vmul.f32 %v13660, %v13341
  %v13663 = vsub.f32 %v13641, %v13661
  %v13664 = vsub.f32 %v13643, %v13662
  %v13665 = vmul.f32 %v13663, %v13663
  %v13666 = vmul.f32 %v13664, %v13664
  %v13667 = vsel %vm3897, %v13665, 0.0
  %v13668 = vrot.slane %v13667, 4
  %v13669 = vadd.f32 %v13667, %v13668
  %v13670 = vrot.slane %v13669, 2
  %v13671 = vadd.f32 %v13669, %v13670
  %v13672 = vrot.slane %v13671, 1
  %v13673 = vadd.f32 %v13671, %v13672
  %v13674 = vsel %vm3897, %v13666, 0.0
  %v13675 = vrot.slane %v13674, 4
  %v13676 = vadd.f32 %v13674, %v13675
  %v13677 = vrot.slane %v13676, 2
  %v13678 = vadd.f32 %v13676, %v13677
  %v13679 = vrot.slane %v13678, 1
  %v13680 = vadd.f32 %v13678, %v13679
  %v13681 = vmul.f32 %v13673, %v13341
  %v13682 = vmul.f32 %v13680, %v13341
  %v13683 = vadd.f32 %v13681, 1e-05
  %v13684 = vadd.f32 %v13682, 1e-05
  %v13685 = vrsqrt.pop %v13683
  %v13686 = vrsqrt.pop %v13684
  %v13687 = vmul.f32 %v13663, %v13685
  %v13688 = vmul.f32 %v13664, %v13686
  %v13689 = vld [vmem:[%s43] sm:$0x3]
  %v13691 = vlaneseq
  %v13692 = vshrl.u32 %v13691, 7
  %v13693 = vsub.s32 0, %v13692
  %v13694 = vrot.slane %v13689, %v13693
  %v13695 = vlaneseq
  %v13696 = vshrl.u32 %v13695, 7
  %v13697 = vsub.s32 1, %v13696
  %v13698 = vrot.slane %v13689, %v13697
  %v13701 = vmul.f32 %v13687, %v13694
  %v13702 = vmul.f32 %v13688, %v13698
  %v13703 = vld [vmem:[%s45] sm:$0x3]
  %v13705 = vlaneseq
  %v13706 = vshrl.u32 %v13705, 7
  %v13707 = vsub.s32 0, %v13706
  %v13708 = vrot.slane %v13703, %v13707
  %v13709 = vlaneseq
  %v13710 = vshrl.u32 %v13709, 7
  %v13711 = vsub.s32 1, %v13710
  %v13712 = vrot.slane %v13703, %v13711
  %v13715 = vadd.f32 %v13701, %v13708
  %v13716 = vadd.f32 %v13702, %v13712
  %v13717 = vmax.f32 %v13715, 0.0
  %v13718 = vmax.f32 %v13716, 0.0
  %v13719 = vpack.c.bf16 %v13717, %v13717
  %v13720 = vpack.c.bf16 %v13718, %v13718
  %v13721 = vld [vmem:[%s47] sm:$0xff]
  %v13722 = vld [vmem:[%s47 + $0x8] sm:$0xff]
  %v13723 = vld [vmem:[%s47 + $0x10] sm:$0xff]
  %v13724 = vld [vmem:[%s47 + $0x18] sm:$0xff]
  %v13725 = vld [vmem:[%s47 + $0x20] sm:$0xff]
  %v13726 = vld [vmem:[%s47 + $0x28] sm:$0xff]
  %v13727 = vld [vmem:[%s47 + $0x30] sm:$0xff]
  %v13728 = vld [vmem:[%s47 + $0x38] sm:$0xff]
  %v13729 = vld [vmem:[%s47 + $0x40] sm:$0xff]
  %v13730 = vld [vmem:[%s47 + $0x48] sm:$0xff]
  %v13731 = vld [vmem:[%s47 + $0x50] sm:$0xff]
  %v13732 = vld [vmem:[%s47 + $0x58] sm:$0xff]
  %v13733 = vld [vmem:[%s47 + $0x60] sm:$0xff]
  %v13734 = vld [vmem:[%s47 + $0x68] sm:$0xff]
  %v13735 = vld [vmem:[%s47 + $0x70] sm:$0xff]
  %v13736 = vld [vmem:[%s47 + $0x78] sm:$0xff]
  %v13737 = vld [vmem:[%s47 + $0x80] sm:$0xff]
  %v13738 = vld [vmem:[%s47 + $0x88] sm:$0xff]
  %v13739 = vld [vmem:[%s47 + $0x90] sm:$0xff]
  %v13740 = vld [vmem:[%s47 + $0x98] sm:$0xff]
  %v13741 = vld [vmem:[%s47 + $0xa0] sm:$0xff]
  %v13742 = vld [vmem:[%s47 + $0xa8] sm:$0xff]
  %v13743 = vld [vmem:[%s47 + $0xb0] sm:$0xff]
  %v13744 = vld [vmem:[%s47 + $0xb8] sm:$0xff]
  %v13745 = vld [vmem:[%s47 + $0xc0] sm:$0xff]
  %v13746 = vld [vmem:[%s47 + $0xc8] sm:$0xff]
  %v13747 = vld [vmem:[%s47 + $0xd0] sm:$0xff]
  %v13748 = vld [vmem:[%s47 + $0xd8] sm:$0xff]
  %v13749 = vld [vmem:[%s47 + $0xe0] sm:$0xff]
  %v13750 = vld [vmem:[%s47 + $0xe8] sm:$0xff]
  %v13751 = vld [vmem:[%s47 + $0xf0] sm:$0xff]
  %v13752 = vld [vmem:[%s47 + $0xf8] sm:$0xff]
  %v13753 = vld [vmem:[%s49] sm:$0x3]
  %v13755 = vlaneseq
  %v13756 = vshrl.u32 %v13755, 7
  %v13757 = vsub.s32 0, %v13756
  %v13758 = vrot.slane %v13753, %v13757
  %v13759 = vlaneseq
  %v13760 = vshrl.u32 %v13759, 7
  %v13761 = vsub.s32 1, %v13760
  %v13762 = vrot.slane %v13753, %v13761
  %v13797 = vunpack.c.l.b16 %v13721
  %v13798 = vunpack.c.h.b16 %v13721
  %v13799 = vunpack.c.l.b16 %v13722
  %v13800 = vunpack.c.h.b16 %v13722
  %v13801 = vunpack.c.l.b16 %v13723
  %v13802 = vunpack.c.h.b16 %v13723
  %v13803 = vunpack.c.l.b16 %v13724
  %v13804 = vunpack.c.h.b16 %v13724
  %v13805 = vunpack.c.l.b16 %v13725
  %v13806 = vunpack.c.h.b16 %v13725
  %v13807 = vunpack.c.l.b16 %v13726
  %v13808 = vunpack.c.h.b16 %v13726
  %v13809 = vunpack.c.l.b16 %v13727
  %v13810 = vunpack.c.h.b16 %v13727
  %v13811 = vunpack.c.l.b16 %v13728
  %v13812 = vunpack.c.h.b16 %v13728
  %v13813 = vunpack.c.l.b16 %v13729
  %v13814 = vunpack.c.h.b16 %v13729
  %v13815 = vunpack.c.l.b16 %v13730
  %v13816 = vunpack.c.h.b16 %v13730
  %v13817 = vunpack.c.l.b16 %v13731
  %v13818 = vunpack.c.h.b16 %v13731
  %v13819 = vunpack.c.l.b16 %v13732
  %v13820 = vunpack.c.h.b16 %v13732
  %v13821 = vunpack.c.l.b16 %v13733
  %v13822 = vunpack.c.h.b16 %v13733
  %v13823 = vunpack.c.l.b16 %v13734
  %v13824 = vunpack.c.h.b16 %v13734
  %v13825 = vunpack.c.l.b16 %v13735
  %v13826 = vunpack.c.h.b16 %v13735
  %v13827 = vunpack.c.l.b16 %v13736
  %v13828 = vunpack.c.h.b16 %v13736
  %v13829 = vunpack.c.l.b16 %v13737
  %v13830 = vunpack.c.h.b16 %v13737
  %v13831 = vunpack.c.l.b16 %v13738
  %v13832 = vunpack.c.h.b16 %v13738
  %v13833 = vunpack.c.l.b16 %v13739
  %v13834 = vunpack.c.h.b16 %v13739
  %v13835 = vunpack.c.l.b16 %v13740
  %v13836 = vunpack.c.h.b16 %v13740
  %v13837 = vunpack.c.l.b16 %v13741
  %v13838 = vunpack.c.h.b16 %v13741
  %v13839 = vunpack.c.l.b16 %v13742
  %v13840 = vunpack.c.h.b16 %v13742
  %v13841 = vunpack.c.l.b16 %v13743
  %v13842 = vunpack.c.h.b16 %v13743
  %v13843 = vunpack.c.l.b16 %v13744
  %v13844 = vunpack.c.h.b16 %v13744
  %v13845 = vunpack.c.l.b16 %v13745
  %v13846 = vunpack.c.h.b16 %v13745
  %v13847 = vunpack.c.l.b16 %v13746
  %v13848 = vunpack.c.h.b16 %v13746
  %v13849 = vunpack.c.l.b16 %v13747
  %v13850 = vunpack.c.h.b16 %v13747
  %v13851 = vunpack.c.l.b16 %v13748
  %v13852 = vunpack.c.h.b16 %v13748
  %v13853 = vunpack.c.l.b16 %v13749
  %v13854 = vunpack.c.h.b16 %v13749
  %v13855 = vunpack.c.l.b16 %v13750
  %v13856 = vunpack.c.h.b16 %v13750
  %v13857 = vunpack.c.l.b16 %v13751
  %v13858 = vunpack.c.h.b16 %v13751
  %v13859 = vunpack.c.l.b16 %v13752
  %v13860 = vunpack.c.h.b16 %v13752
  %v13861 = vpack.c.b16 %v13799, %v13797
  %v13862 = vpack.c.b16 %v13800, %v13798
  %v13863 = vpack.c.b16 %v13803, %v13801
  %v13864 = vpack.c.b16 %v13804, %v13802
  %v13865 = vpack.c.b16 %v13807, %v13805
  %v13866 = vpack.c.b16 %v13808, %v13806
  %v13867 = vpack.c.b16 %v13811, %v13809
  %v13868 = vpack.c.b16 %v13812, %v13810
  %v13869 = vpack.c.b16 %v13815, %v13813
  %v13870 = vpack.c.b16 %v13816, %v13814
  %v13871 = vpack.c.b16 %v13819, %v13817
  %v13872 = vpack.c.b16 %v13820, %v13818
  %v13873 = vpack.c.b16 %v13823, %v13821
  %v13874 = vpack.c.b16 %v13824, %v13822
  %v13875 = vpack.c.b16 %v13827, %v13825
  %v13876 = vpack.c.b16 %v13828, %v13826
  %v13877 = vpack.c.b16 %v13831, %v13829
  %v13878 = vpack.c.b16 %v13832, %v13830
  %v13879 = vpack.c.b16 %v13835, %v13833
  %v13880 = vpack.c.b16 %v13836, %v13834
  %v13881 = vpack.c.b16 %v13839, %v13837
  %v13882 = vpack.c.b16 %v13840, %v13838
  %v13883 = vpack.c.b16 %v13843, %v13841
  %v13884 = vpack.c.b16 %v13844, %v13842
  %v13885 = vpack.c.b16 %v13847, %v13845
  %v13886 = vpack.c.b16 %v13848, %v13846
  %v13887 = vpack.c.b16 %v13851, %v13849
  %v13888 = vpack.c.b16 %v13852, %v13850
  %v13889 = vpack.c.b16 %v13855, %v13853
  %v13890 = vpack.c.b16 %v13856, %v13854
  %v13891 = vpack.c.b16 %v13859, %v13857
  %v13892 = vpack.c.b16 %v13860, %v13858
  %13925 = vmatprep.subr.bf16.mxu0 %v13862
  %13926 = vmatpush1.bf16.msra.mxu0 %v13861
  %13927 = vmatprep.subr.bf16.mxu0 %v13864
  %13928 = vmatpush1.bf16.msra.mxu0 %v13863
  %13929 = vmatprep.subr.bf16.mxu0 %v13866
  %13930 = vmatpush1.bf16.msra.mxu0 %v13865
  %13931 = vmatprep.subr.bf16.mxu0 %v13868
  %13932 = vmatpush1.bf16.msra.mxu0 %v13867
  %13933 = vmatprep.subr.bf16.mxu0 %v13870
  %13934 = vmatpush1.bf16.msra.mxu0 %v13869
  %13935 = vmatprep.subr.bf16.mxu0 %v13872
  %13936 = vmatpush1.bf16.msra.mxu0 %v13871
  %13937 = vmatprep.subr.bf16.mxu0 %v13874
  %13938 = vmatpush1.bf16.msra.mxu0 %v13873
  %13939 = vmatprep.subr.bf16.mxu0 %v13876
  %13940 = vmatpush1.bf16.msra.mxu0 %v13875
  %13941 = vmatprep.subr.bf16.mxu0 %v13878
  %13942 = vmatpush1.bf16.msra.mxu0 %v13877
  %13943 = vmatprep.subr.bf16.mxu0 %v13880
  %13944 = vmatpush1.bf16.msra.mxu0 %v13879
  %13945 = vmatprep.subr.bf16.mxu0 %v13882
  %13946 = vmatpush1.bf16.msra.mxu0 %v13881
  %13947 = vmatprep.subr.bf16.mxu0 %v13884
  %13948 = vmatpush1.bf16.msra.mxu0 %v13883
  %13949 = vmatprep.subr.bf16.mxu0 %v13886
  %13950 = vmatpush1.bf16.msra.mxu0 %v13885
  %13951 = vmatprep.subr.bf16.mxu0 %v13888
  %13952 = vmatpush1.bf16.msra.mxu0 %v13887
  %13953 = vmatprep.subr.bf16.mxu0 %v13890
  %13954 = vmatpush1.bf16.msra.mxu0 %v13889
  %13955 = vmatprep.subr.bf16.mxu0 %v13892
  %13956 = vmatpush1.bf16.msra.mxu0 %v13891
  %13957 = vmatprep.mubr.bf16.mxu0 %v13720
  %13958 = vmatmul.mubr.bf16.gmra.mrb[0].mxu0 %v13719
  %v13959 = vpop.f32.mrb[0].mxu0
  %v13960 = vadd.f32 %v13758, %v13959
  %v13961 = vpop.f32.mrb[0].mxu0
  %v13962 = vadd.f32 %v13762, %v13961
  %v13963 = vpop.f32.mrb[0].mxu0
  %v13964 = vpop.f32.mrb[0].mxu0
  %13965 = vdwg.mxu0
  %v13966 = vsel %vm3897, %v13960, 0.0
  %v13967 = vrot.slane %v13966, 4
  %v13968 = vadd.f32 %v13966, %v13967
  %v13969 = vrot.slane %v13968, 2
  %v13970 = vadd.f32 %v13968, %v13969
  %v13971 = vrot.slane %v13970, 1
  %v13972 = vadd.f32 %v13970, %v13971
  %v13973 = vsel %vm3897, %v13962, 0.0
  %v13974 = vrot.slane %v13973, 4
  %v13975 = vadd.f32 %v13973, %v13974
  %v13976 = vrot.slane %v13975, 2
  %v13977 = vadd.f32 %v13975, %v13976
  %v13978 = vrot.slane %v13977, 1
  %v13979 = vadd.f32 %v13977, %v13978
  %v13980 = vmul.f32 %v13972, %v13341
  %v13981 = vmul.f32 %v13979, %v13341
  %v13982 = vsub.f32 %v13960, %v13980
  %v13983 = vsub.f32 %v13962, %v13981
  %v13984 = vmul.f32 %v13982, %v13982
  %v13985 = vmul.f32 %v13983, %v13983
  %v13986 = vsel %vm3897, %v13984, 0.0
  %v13987 = vrot.slane %v13986, 4
  %v13988 = vadd.f32 %v13986, %v13987
  %v13989 = vrot.slane %v13988, 2
  %v13990 = vadd.f32 %v13988, %v13989
  %v13991 = vrot.slane %v13990, 1
  %v13992 = vadd.f32 %v13990, %v13991
  %v13993 = vsel %vm3897, %v13985, 0.0
  %v13994 = vrot.slane %v13993, 4
  %v13995 = vadd.f32 %v13993, %v13994
  %v13996 = vrot.slane %v13995, 2
  %v13997 = vadd.f32 %v13995, %v13996
  %v13998 = vrot.slane %v13997, 1
  %v13999 = vadd.f32 %v13997, %v13998
  %v14000 = vmul.f32 %v13992, %v13341
  %v14001 = vmul.f32 %v13999, %v13341
  %v14002 = vadd.f32 %v14000, 1e-05
  %v14003 = vadd.f32 %v14001, 1e-05
  %v14004 = vrsqrt.pop %v14002
  %v14005 = vrsqrt.pop %v14003
  %v14006 = vmul.f32 %v13982, %v14004
  %v14007 = vmul.f32 %v13983, %v14005
  %v14008 = vld [vmem:[%s51] sm:$0x3]
  %v14010 = vlaneseq
  %v14011 = vshrl.u32 %v14010, 7
  %v14012 = vsub.s32 0, %v14011
  %v14013 = vrot.slane %v14008, %v14012
  %v14014 = vlaneseq
  %v14015 = vshrl.u32 %v14014, 7
  %v14016 = vsub.s32 1, %v14015
  %v14017 = vrot.slane %v14008, %v14016
  %v14020 = vmul.f32 %v14006, %v14013
  %v14021 = vmul.f32 %v14007, %v14017
  %v14022 = vld [vmem:[%s53] sm:$0x3]
  %v14024 = vlaneseq
  %v14025 = vshrl.u32 %v14024, 7
  %v14026 = vsub.s32 0, %v14025
  %v14027 = vrot.slane %v14022, %v14026
  %v14028 = vlaneseq
  %v14029 = vshrl.u32 %v14028, 7
  %v14030 = vsub.s32 1, %v14029
  %v14031 = vrot.slane %v14022, %v14030
  %v14034 = vadd.f32 %v14020, %v14027
  %v14035 = vadd.f32 %v14021, %v14031
  %v14036 = vmax.f32 %v14034, 0.0
  %v14037 = vmax.f32 %v14035, 0.0
  %v14038 = vpack.c.bf16 %v14036, %v14036
  %v14039 = vpack.c.bf16 %v14037, %v14037
  %v14040 = vld [vmem:[%s55] sm:$0xf]
  %v14041 = vld [vmem:[%s55 + $0x4] sm:$0xf]
  %v14042 = vld [vmem:[%s55 + $0x8] sm:$0xf]
  %v14043 = vld [vmem:[%s55 + $0xc] sm:$0xf]
  %v14044 = vld [vmem:[%s55 + $0x10] sm:$0xf]
  %v14045 = vld [vmem:[%s55 + $0x14] sm:$0xf]
  %v14046 = vld [vmem:[%s55 + $0x18] sm:$0xf]
  %v14047 = vld [vmem:[%s55 + $0x1c] sm:$0xf]
  %v14048 = vld [vmem:[%s55 + $0x20] sm:$0xf]
  %v14049 = vld [vmem:[%s55 + $0x24] sm:$0xf]
  %v14050 = vld [vmem:[%s55 + $0x28] sm:$0xf]
  %v14051 = vld [vmem:[%s55 + $0x2c] sm:$0xf]
  %v14052 = vld [vmem:[%s55 + $0x30] sm:$0xf]
  %v14053 = vld [vmem:[%s55 + $0x34] sm:$0xf]
  %v14054 = vld [vmem:[%s55 + $0x38] sm:$0xf]
  %v14055 = vld [vmem:[%s55 + $0x3c] sm:$0xf]
  %v14056 = vld [vmem:[%s55 + $0x40] sm:$0xf]
  %v14057 = vld [vmem:[%s55 + $0x44] sm:$0xf]
  %v14058 = vld [vmem:[%s55 + $0x48] sm:$0xf]
  %v14059 = vld [vmem:[%s55 + $0x4c] sm:$0xf]
  %v14060 = vld [vmem:[%s55 + $0x50] sm:$0xf]
  %v14061 = vld [vmem:[%s55 + $0x54] sm:$0xf]
  %v14062 = vld [vmem:[%s55 + $0x58] sm:$0xf]
  %v14063 = vld [vmem:[%s55 + $0x5c] sm:$0xf]
  %v14064 = vld [vmem:[%s55 + $0x60] sm:$0xf]
  %v14065 = vld [vmem:[%s55 + $0x64] sm:$0xf]
  %v14066 = vld [vmem:[%s55 + $0x68] sm:$0xf]
  %v14067 = vld [vmem:[%s55 + $0x6c] sm:$0xf]
  %v14068 = vld [vmem:[%s55 + $0x70] sm:$0xf]
  %v14069 = vld [vmem:[%s55 + $0x74] sm:$0xf]
  %v14070 = vld [vmem:[%s55 + $0x78] sm:$0xf]
  %v14071 = vld [vmem:[%s55 + $0x7c] sm:$0xf]
  %v14072 = vld [vmem:[%s57] sm:$0x1]
  %v14074 = vlaneseq
  %v14075 = vshrl.u32 %v14074, 7
  %v14076 = vsub.s32 0, %v14075
  %v14077 = vrot.slane %v14072, %v14076
  %v14111 = vunpack.c.l.b16 %v14040
  %v14112 = vunpack.c.l.b16 %v14041
  %v14113 = vunpack.c.l.b16 %v14042
  %v14114 = vunpack.c.l.b16 %v14043
  %v14115 = vunpack.c.l.b16 %v14044
  %v14116 = vunpack.c.l.b16 %v14045
  %v14117 = vunpack.c.l.b16 %v14046
  %v14118 = vunpack.c.l.b16 %v14047
  %v14119 = vunpack.c.l.b16 %v14048
  %v14120 = vunpack.c.l.b16 %v14049
  %v14121 = vunpack.c.l.b16 %v14050
  %v14122 = vunpack.c.l.b16 %v14051
  %v14123 = vunpack.c.l.b16 %v14052
  %v14124 = vunpack.c.l.b16 %v14053
  %v14125 = vunpack.c.l.b16 %v14054
  %v14126 = vunpack.c.l.b16 %v14055
  %v14127 = vunpack.c.l.b16 %v14056
  %v14128 = vunpack.c.l.b16 %v14057
  %v14129 = vunpack.c.l.b16 %v14058
  %v14130 = vunpack.c.l.b16 %v14059
  %v14131 = vunpack.c.l.b16 %v14060
  %v14132 = vunpack.c.l.b16 %v14061
  %v14133 = vunpack.c.l.b16 %v14062
  %v14134 = vunpack.c.l.b16 %v14063
  %v14135 = vunpack.c.l.b16 %v14064
  %v14136 = vunpack.c.l.b16 %v14065
  %v14137 = vunpack.c.l.b16 %v14066
  %v14138 = vunpack.c.l.b16 %v14067
  %v14139 = vunpack.c.l.b16 %v14068
  %v14140 = vunpack.c.l.b16 %v14069
  %v14141 = vunpack.c.l.b16 %v14070
  %v14142 = vunpack.c.l.b16 %v14071
  %v14143 = vpack.c.b16 %v14112, %v14111
  %v14144 = vpack.c.b16 %v14114, %v14113
  %v14145 = vpack.c.b16 %v14116, %v14115
  %v14146 = vpack.c.b16 %v14118, %v14117
  %v14147 = vpack.c.b16 %v14120, %v14119
  %v14148 = vpack.c.b16 %v14122, %v14121
  %v14149 = vpack.c.b16 %v14124, %v14123
  %v14150 = vpack.c.b16 %v14126, %v14125
  %v14151 = vpack.c.b16 %v14128, %v14127
  %v14152 = vpack.c.b16 %v14130, %v14129
  %v14153 = vpack.c.b16 %v14132, %v14131
  %v14154 = vpack.c.b16 %v14134, %v14133
  %v14155 = vpack.c.b16 %v14136, %v14135
  %v14156 = vpack.c.b16 %v14138, %v14137
  %v14157 = vpack.c.b16 %v14140, %v14139
  %v14158 = vpack.c.b16 %v14142, %v14141
  %14175 = vmatprep.subr.bf16.mxu0 0
  %14176 = vmatpush1.bf16.msra.mxu0 %v14143
  %14177 = vmatprep.subr.bf16.mxu0 0
  %14178 = vmatpush1.bf16.msra.mxu0 %v14144
  %14179 = vmatprep.subr.bf16.mxu0 0
  %14180 = vmatpush1.bf16.msra.mxu0 %v14145
  %14181 = vmatprep.subr.bf16.mxu0 0
  %14182 = vmatpush1.bf16.msra.mxu0 %v14146
  %14183 = vmatprep.subr.bf16.mxu0 0
  %14184 = vmatpush1.bf16.msra.mxu0 %v14147
  %14185 = vmatprep.subr.bf16.mxu0 0
  %14186 = vmatpush1.bf16.msra.mxu0 %v14148
  %14187 = vmatprep.subr.bf16.mxu0 0
  %14188 = vmatpush1.bf16.msra.mxu0 %v14149
  %14189 = vmatprep.subr.bf16.mxu0 0
  %14190 = vmatpush1.bf16.msra.mxu0 %v14150
  %14191 = vmatprep.subr.bf16.mxu0 0
  %14192 = vmatpush1.bf16.msra.mxu0 %v14151
  %14193 = vmatprep.subr.bf16.mxu0 0
  %14194 = vmatpush1.bf16.msra.mxu0 %v14152
  %14195 = vmatprep.subr.bf16.mxu0 0
  %14196 = vmatpush1.bf16.msra.mxu0 %v14153
  %14197 = vmatprep.subr.bf16.mxu0 0
  %14198 = vmatpush1.bf16.msra.mxu0 %v14154
  %14199 = vmatprep.subr.bf16.mxu0 0
  %14200 = vmatpush1.bf16.msra.mxu0 %v14155
  %14201 = vmatprep.subr.bf16.mxu0 0
  %14202 = vmatpush1.bf16.msra.mxu0 %v14156
  %14203 = vmatprep.subr.bf16.mxu0 0
  %14204 = vmatpush1.bf16.msra.mxu0 %v14157
  %14205 = vmatprep.subr.bf16.mxu0 0
  %14206 = vmatpush1.bf16.msra.mxu0 %v14158
  %14207 = vmatprep.mubr.bf16.mxu0 %v14039
  %14208 = vmatmul.mubr.bf16.gmra.mrb[0].mxu0 %v14038
  %v14209 = vpop.f32.mrb[0].mxu0
  %v14210 = vadd.f32 %v14077, %v14209
  %v14211 = vpop.f32.mrb[0].mxu0
  %v14212 = vpop.f32.mrb[0].mxu0
  %v14213 = vpop.f32.mrb[0].mxu0
  %14214 = vdwg.mxu0
  %vm14215 = vcmask 216064
  %14216 = vst.msk [vmem:[%s61] sm:$0xf] %vm14215, %v14210
  %v14217 = vld [vmem:[%s59] sm:$0xff]
  %v14218 = vld [vmem:[%s59 + $0x8] sm:$0xff]
  %v14219 = vld [vmem:[%s59 + $0x10] sm:$0xff]
  %v14220 = vld [vmem:[%s59 + $0x18] sm:$0x7]
  %vm14221 = vcmask 220160
  %v14223 = vsel %vm14221, %v14210, 0
  %v14226 = vsel %vm12129, %v14220, 0
  %14228 = vmatprep.subr.mxu0 0.0
  %14229 = vmatpush1.msra.mxu0 %v14217
  %14230 = vmatprep.subr.mxu0 0.0
  %14231 = vmatpush1.msra.mxu0 %v14218
  %14232 = vmatprep.subr.mxu0 0.0
  %14233 = vmatpush1.msra.mxu0 %v14219
  %14234 = vmatprep.subr.mxu0 0.0
  %14235 = vmatpush1.msra.mxu0 %v14226
  %14236 = vmatprep.subr.mxu0 0.0
  %14237 = vmatpush1.msra.mxu0 0.0
  %14238 = vmatprep.subr.mxu0 0.0
  %14239 = vmatpush1.msra.mxu0 0.0
  %14240 = vmatprep.subr.mxu0 0.0
  %14241 = vmatpush1.msra.mxu0 0.0
  %14242 = vmatprep.subr.mxu0 0.0
  %14243 = vmatpush1.msra.mxu0 0.0
  %14244 = vmatprep.subr.mxu0 0.0
  %14245 = vmatpush1.msra.mxu0 0.0
  %14246 = vmatprep.subr.mxu0 0.0
  %14247 = vmatpush1.msra.mxu0 0.0
  %14248 = vmatprep.subr.mxu0 0.0
  %14249 = vmatpush1.msra.mxu0 0.0
  %14250 = vmatprep.subr.mxu0 0.0
  %14251 = vmatpush1.msra.mxu0 0.0
  %14252 = vmatprep.subr.mxu0 0.0
  %14253 = vmatpush1.msra.mxu0 0.0
  %14254 = vmatprep.subr.mxu0 0.0
  %14255 = vmatpush1.msra.mxu0 0.0
  %14256 = vmatprep.subr.mxu0 0.0
  %14257 = vmatpush1.msra.mxu0 0.0
  %14258 = vmatprep.subr.mxu0 0.0
  %14259 = vmatpush1.msra.mxu0 0.0
  %14260 = vmatprep.subr.mxu0 0.0
  %14261 = vmatpush1.msra.mxu0 0.0
  %14262 = vmatprep.subr.mxu0 0.0
  %14263 = vmatpush1.msra.mxu0 0.0
  %14264 = vmatprep.subr.mxu0 0.0
  %14265 = vmatpush1.msra.mxu0 0.0
  %14266 = vmatprep.subr.mxu0 0.0
  %14267 = vmatpush1.msra.mxu0 0.0
  %14268 = vmatprep.subr.mxu0 0.0
  %14269 = vmatpush1.msra.mxu0 0.0
  %14270 = vmatprep.subr.mxu0 0.0
  %14271 = vmatpush1.msra.mxu0 0.0
  %14272 = vmatprep.subr.mxu0 0.0
  %14273 = vmatpush1.msra.mxu0 0.0
  %14274 = vmatprep.subr.mxu0 0.0
  %14275 = vmatpush1.msra.mxu0 0.0
  %14276 = vmatprep.subr.mxu0 0.0
  %14277 = vmatpush1.msra.mxu0 0.0
  %14278 = vmatprep.subr.mxu0 0.0
  %14279 = vmatpush1.msra.mxu0 0.0
  %14280 = vmatprep.subr.mxu0 0.0
  %14281 = vmatpush1.msra.mxu0 0.0
  %14282 = vmatprep.subr.mxu0 0.0
  %14283 = vmatpush1.msra.mxu0 0.0
  %14284 = vmatprep.subr.mxu0 0.0
  %14285 = vmatpush1.msra.mxu0 0.0
  %14286 = vmatprep.subr.mxu0 0.0
  %14287 = vmatpush1.msra.mxu0 0.0
  %14288 = vmatprep.subr.mxu0 0.0
  %14289 = vmatpush1.msra.mxu0 0.0
  %14290 = vmatprep.subr.mxu0 0.0
  %14291 = vmatpush1.msra.mxu0 0.0
  %14292 = vmatprep.mubr.f32.mxu0 0.0
  %14293 = vmatmul.mubr.f32.gmra.mrb[0].mxu0 %v14223
  %v14294 = vpop.f32.mrb[0].mxu0
  %v14295 = vadd.f32 0.0, %v14294
  %v14296 = vpop.f32.mrb[0].mxu0
  %14297 = vdwg.mxu0
  %vm14298 = vcmask 19456
  %v14299 = vsel %vm14298, %v14295, -inf
  %14300 = vmax.xlane.f32.xlu0 %v14299
  %v14301 = vpop.xlane.xlu0 %14300
  %v14302 = vsub.f32 %v14295, %v14301
  %v14303 = vmul.f32 %v14302, 1.442695
  %v14304 = vpow.pop %v14303
  %v14305 = vsel %vm14298, %v14304, 0.0
  %14306 = vadd.xlane.f32.xlu0 %v14305
  %v14307 = vpop.xlane.xlu0 %14306
  %v14308 = vlog2.pop %v14307
  %v14309 = vmul.f32 %v14308, 0.6931472
  %v14310 = vsub.f32 %v14302, %v14309
  %14311 = vst.msk [vmem:[%s63] sm:$0xf] %vm14298, %v14310
  // Predicated region
  $region122: #{star_encoder_forward.1} parent=0 // pred_check
    _
  $region123: #{star_encoder_forward.1} parent=0 // pred_check_branch
    %14313 = sbr.rel (0) target = $region125
  $region124: #{star_encoder_forward.1} parent=0 // pred_region
    _
  $region125: #{star_encoder_forward.1} parent=0 // pred_fallthru
    _
  // Predicated region
  $region126: #{star_encoder_forward.1} parent=0 // pred_check
    _
  $region127: #{star_encoder_forward.1} parent=0 // pred_check_branch
    %14315 = sbr.rel (0) target = $region129
  $region128: #{star_encoder_forward.1} parent=0 // pred_region
    _
  $region129: #{star_encoder_forward.1} parent=0 // pred_fallthru
    _
  // Predicated region
  $region130: #{star_encoder_forward.1} parent=0 // pred_check
    _
  $region131: #{star_encoder_forward.1} parent=0 // pred_check_branch
    %14317 = sbr.rel (0) target = $region133
  $region132: #{star_encoder_forward.1} parent=0 // pred_region
    _
  $region133: #{star_encoder_forward.1} parent=0 // pred_fallthru
    _
  // Predicated region
  $region134: #{star_encoder_forward.1} parent=0 // pred_check
    _
  $region135: #{star_encoder_forward.1} parent=0 // pred_check_branch
    %14319 = sbr.rel (0) target = $region137
  $region136: #{star_encoder_forward.1} parent=0 // pred_region
    _
  $region137: #{star_encoder_forward.1} parent=0 // pred_fallthru
    _

</llo_original>
